<compile_context>
chip_gen: v7x
topology: tpu7x:2x2x1
jax: 0.10.0
libtpu: 0.0.40
codegen_flags: <defaults>
</compile_context>

<pallas_src>
import functools

import jax
import jax.numpy as jnp
from jax.experimental import pallas as pl
from jax.experimental.pallas import tpu as pltpu

D_BN = 16           # bottleneck channels (module arg d_bn)
D_INSIDE = 32       # d_inside (128 in the original; small here)
D_SKIP = 16         # d_skip = cfg.AUDIO.FBANK_NUM (chosen constant here)
N_TCN_LAYERS = 8
EPS = 1e-16         # GroupNorm eps in the module (kept for parity)


def tcn_fused_kernel(x_ref, w1_ref, pc_ref, wosg_ref, ob_ref, out_ref, skip_ref,
                     *, dilations, d_bn):
    x = x_ref[0]                                   # (d_bn, K)
    d_in = w1_ref.shape[1]
    d_skip = skip_ref.shape[1]
    k_len = x.shape[-1]
    inv_n = 1.0 / float(d_in * k_len)

    # Hoisted constants (JAX does not CSE broadcast_in_dim):
    #  - pos: (1, K) lane iota, sublane-broadcast inside the wheres (2 vregs, not 8)
    #  - ones_c / ones_k: operands that push the GN reductions onto the MXU.
    pos = jax.lax.broadcasted_iota(jnp.int32, (1, k_len), 1)
    ones_c = jnp.ones((1, d_in), jnp.float32)      # sum over channels (sublanes)
    ones_k = jnp.ones((k_len, 1), jnp.float32)     # sum over time (lanes)

    def gn_stats(h):
        # Channel sums as a ones-matmul (MXU), then collapse the K lanes with a
        # second tiny matmul; everything accumulates in f32.  Keeps the XLU free
        # for the depthwise-conv rolls.
        row = jnp.dot(ones_c, h, preferred_element_type=jnp.float32)        # (1, K)
        row2 = jnp.dot(ones_c, h * h, preferred_element_type=jnp.float32)   # (1, K)
        s = jnp.dot(row, ones_k, preferred_element_type=jnp.float32)[0, 0]
        ss = jnp.dot(row2, ones_k, preferred_element_type=jnp.float32)[0, 0]
        mean = s * inv_n
        # Single-pass variance (E[x^2]-mean^2), clamped at 0; eps kept for parity.
        var = jnp.maximum(ss * inv_n - mean * mean, 0.0)
        return mean, jax.lax.rsqrt(var + EPS)

    out = x                                         # residual / layer input (f32)
    skip = jnp.zeros((d_skip, k_len), jnp.float32)  # running skip accumulator (f32)

    # Static unroll over the 8 layers; dilations are compile-time Python ints.
    for l, d in enumerate(dilations):
        pc = pc_ref[l]                              # (d_in, 7) packed per-channel params
        a1, g1w, g1b = pc[:, 0:1], pc[:, 1:2], pc[:, 2:3]
        wd0, wd1, wd2 = pc[:, 3:4], pc[:, 4:5], pc[:, 5:6]
        a2 = pc[:, 6:7]

        # ---- 1x1 conv (pointwise, no bias): bf16 operands, f32 accumulation ----
        h = jnp.dot(w1_ref[l], out.astype(jnp.bfloat16),
                    preferred_element_type=jnp.float32)          # (d_in, K)

        # ---- PReLU (per-channel slope) ----
        h = jnp.where(h >= 0.0, h, a1 * h)

        # ---- GroupNorm(1, d_in): stats on MXU, normalize+affine as one FMA ----
        mean1, r1 = gn_stats(h)
        scale1 = g1w * r1
        shift1 = g1b - mean1 * scale1
        h = h * scale1 + shift1

        # ---- depthwise dilated conv, kernel=3, 'same' padding = dilation ----
        # out[c,t] = wd0[c]*h[c,t-d] + wd1[c]*h[c,t] + wd2[c]*h[c,t+d] (zero outside)
        # pltpu.roll needs a non-negative shift: left roll by d == right roll by
        # (K - d); the (1,K) mask zeroes the wrapped lanes either way.
        acc = wd1 * h
        acc = acc + wd0 * jnp.where(pos >= d, pltpu.roll(h, d, axis=1), 0.0)
        acc = acc + wd2 * jnp.where(pos < k_len - d,
                                    pltpu.roll(h, k_len - d, axis=1), 0.0)

        # ---- PReLU ----
        h = jnp.where(acc >= 0.0, acc, a2 * acc)

        # ---- GroupNorm(1, d_in) #2: stats only; affine folded into wosg/ob ----
        mean2, r2 = gn_stats(h)

        # ---- fused output+skip 1x1 convs on the raw (un-normalized) h ----
        # os = (wos*g2w^T) @ h, then the folded GN2 scale/shift is applied on the
        # much narrower (d_bn+d_skip, K) result:
        #   os*r2 + (wos@g2b - mean2*r2*(wos@g2w))
        os = jnp.dot(wosg_ref[l], h.astype(jnp.bfloat16),
                     preferred_element_type=jnp.float32)         # (d_bn+d_skip, K)
        wb = ob_ref[l]                                           # (d_bn+d_skip, 2)
        bias = wb[:, 1:2] - (mean2 * r2) * wb[:, 0:1]
        os = os * r2 + bias
        out = os[:d_bn] + out                       # residual (f32)
        skip = skip + os[d_bn:]                     # accumulate skip connection (f32)

    out_ref[0] = out
    skip_ref[0] = skip


def pack_params(layer_params):
    """Stack per-layer params for the fused kernel (GN2 affine folded into wos)."""
    w1_all = jnp.stack([p["w1"] for p in layer_params]).astype(jnp.bfloat16)  # (L, d_in, d_bn)
    pc_all = jnp.stack([
        jnp.concatenate([p["a1"], p["g1w"], p["g1b"],
                         p["wd"][0], p["wd"][1], p["wd"][2],
                         p["a2"]], axis=1)
        for p in layer_params])                                               # (L, d_in, 7)
    wosg, ob = [], []
    for p in layer_params:
        wos = jnp.concatenate([p["wo"], p["ws"]], axis=0)       # (d_bn+d_skip, d_in)
        wosg.append(wos * p["g2w"].T)                           # fold GN2 scale
        ob.append(jnp.concatenate([wos @ p["g2w"],              # col0: wos@g2w
                                   wos @ p["g2b"]], axis=1))    # col1: wos@g2b
    wosg_all = jnp.stack(wosg).astype(jnp.bfloat16)             # (L, d_bn+d_skip, d_in)
    ob_all = jnp.stack(ob)                                      # (L, d_bn+d_skip, 2) f32
    return w1_all, pc_all, wosg_all, ob_all


def tcn_block(x, layer_params):
    """TCNBlock.forward: returns (skip_connection, output). x: (B, d_bn, K)."""
    B, d_bn, K = x.shape
    L = len(layer_params)
    d_in = layer_params[0]["w1"].shape[0]
    d_skip = layer_params[0]["ws"].shape[0]
    dilations = tuple(2 ** l for l in range(L))
    w1_all, pc_all, wosg_all, ob_all = pack_params(layer_params)

    def full(shape):
        # Grid-invariant weight input (constant index_map → no per-step re-fetch).
        n = len(shape)
        return pl.BlockSpec(shape, lambda b, n=n: (0,) * n)

    grid_spec = pltpu.PrefetchScalarGridSpec(
        num_scalar_prefetch=0,
        grid=(B,),                      # B even keeps both v7x TensorCores busy
        in_specs=[
            pl.BlockSpec((1, d_bn, K), lambda b: (b, 0, 0)),    # x (one sample/step)
            full((L, d_in, d_bn)),                              # stacked 1x1 conv weights (bf16)
            full((L, d_in, 7)),                                 # packed per-channel params
            full((L, d_bn + d_skip, d_in)),                     # stacked [wo;ws]*g2w^T (bf16)
            full((L, d_bn + d_skip, 2)),                        # folded GN2 bias terms
        ],
        out_specs=[
            pl.BlockSpec((1, d_bn, K), lambda b: (b, 0, 0)),
            pl.BlockSpec((1, d_skip, K), lambda b: (b, 0, 0)),
        ],
    )

    out, skip = pl.pallas_call(
        functools.partial(tcn_fused_kernel, dilations=dilations, d_bn=d_bn),
        out_shape=(jax.ShapeDtypeStruct((B, d_bn, K), jnp.float32),
                   jax.ShapeDtypeStruct((B, d_skip, K), jnp.float32)),
        grid_spec=grid_spec,
        compiler_params=pltpu.CompilerParams(
            dimension_semantics=("parallel",)),
    )(x, w1_all, pc_all, wosg_all, ob_all)
    return skip, out


# ---------------- pure-JAX reference (for correctness check only) ----------------
def _ref_block(x, p, d):
    h = jnp.einsum('oc,bck->bok', p["w1"], x)
    h = jnp.where(h >= 0, h, p["a1"][None] * h)
    mean = jnp.mean(h, axis=(1, 2), keepdims=True)
    var = jnp.mean((h - mean) ** 2, axis=(1, 2), keepdims=True)
    h = (h - mean) / jnp.sqrt(var + EPS) * p["g1w"][None] + p["g1b"][None]
    K = x.shape[-1]
    hp = jnp.pad(h, ((0, 0), (0, 0), (d, d)))
    h = (p["wd"][0][None] * hp[:, :, 0:K]
         + p["wd"][1][None] * hp[:, :, d:d + K]
         + p["wd"][2][None] * hp[:, :, 2 * d:2 * d + K])
    h = jnp.where(h >= 0, h, p["a2"][None] * h)
    mean = jnp.mean(h, axis=(1, 2), keepdims=True)
    var = jnp.mean((h - mean) ** 2, axis=(1, 2), keepdims=True)
    h = (h - mean) / jnp.sqrt(var + EPS) * p["g2w"][None] + p["g2b"][None]
    out = jnp.einsum('oc,bck->bok', p["wo"], h) + x
    skip = jnp.einsum('oc,bck->bok', p["ws"], h)
    return skip, out


def tcn_block_ref(x, layer_params):
    out = x
    skip_sum = 0.0
    for l, p in enumerate(layer_params):
        skip, out = _ref_block(out, p, 2 ** l)
        skip_sum = skip + skip_sum
    return skip_sum, out


# ---------------- deterministic parameter init ----------------
def init_params(key, n_layers, d_bn, d_in, d_skip):
    layers = []
    for _ in range(n_layers):
        key, *ks = jax.random.split(key, 9)
        layers.append(dict(
            w1=0.1 * jax.random.normal(ks[0], (d_in, d_bn), jnp.float32),
            a1=jnp.full((d_in, 1), 0.25, jnp.float32),             # PReLU default init
            g1w=1.0 + 0.1 * jax.random.normal(ks[1], (d_in, 1), jnp.float32),
            g1b=0.1 * jax.random.normal(ks[2], (d_in, 1), jnp.float32),
            wd=0.1 * jax.random.normal(ks[3], (3, d_in, 1), jnp.float32),
            a2=jnp.full((d_in, 1), 0.25, jnp.float32),
            g2w=1.0 + 0.1 * jax.random.normal(ks[4], (d_in, 1), jnp.float32),
            g2b=0.1 * jax.random.normal(ks[5], (d_in, 1), jnp.float32),
            wo=0.1 * jax.random.normal(ks[6], (d_bn, d_in), jnp.float32),
            ws=0.1 * jax.random.normal(ks[7], (d_skip, d_in), jnp.float32),
        ))
    return layers


def _check_close(name, got, want, tol=5e-2):
    # bf16 matmul operands (f32 accumulation) → compare with a max-norm-relative
    # tolerance rather than element-wise rtol on near-zero entries.
    err = float(jnp.max(jnp.abs(got - want)))
    scale = max(float(jnp.max(jnp.abs(want))), 1.0)
    assert err <= tol * scale, f"{name}: max|err|={err:.5f} vs scale={scale:.3f}"


if __name__ == "__main__":
    B, K = 2, 256   # K >= 2 * max_dilation (=128) so 'same' padding is well-defined
    key = jax.random.PRNGKey(0)
    k_x, k_p = jax.random.split(key)
    x = jax.random.normal(k_x, (B, D_BN, K), jnp.float32)
    layer_params = init_params(k_p, N_TCN_LAYERS, D_BN, D_INSIDE, D_SKIP)

    skip, out = tcn_block(x, layer_params)
    jax.block_until_ready((skip, out))

    skip_r, out_r = tcn_block_ref(x, layer_params)
    assert skip.shape == (B, D_SKIP, K) and out.shape == (B, D_BN, K)
    _check_close("skip", skip, skip_r)
    _check_close("out", out, out_r)
    print("KERNEL_OK")
</pallas_src>

<mosaic_0001>
module attributes {stable_mosaic.version = 11 : i64} {
  func.func @tcn_fused_kernel(%arg0: i32, %arg1: memref<1x16x256xf32, #tpu.memory_space<vmem>>, %arg2: memref<8x32x16xbf16, #tpu.memory_space<vmem>>, %arg3: memref<8x32x7xf32, #tpu.memory_space<vmem>>, %arg4: memref<8x32x32xbf16, #tpu.memory_space<vmem>>, %arg5: memref<8x32x2xf32, #tpu.memory_space<vmem>>, %arg6: memref<1x16x256xf32, #tpu.memory_space<vmem>>, %arg7: memref<1x16x256xf32, #tpu.memory_space<vmem>>) attributes {dimension_semantics = [#tpu.dimension_semantics<parallel>], iteration_bounds = array<i64: 2>, scalar_prefetch = 0 : i64, scratch_operands = 0 : i64, tpu.core_type = #tpu.core_type<tc>, window_params = [{transform_indices = @transform_0, window_bounds = array<i64: 1, 16, 256>}, {pipeline_mode = #tpu.pipeline_mode<synchronous>, transform_indices = @transform_1, window_bounds = array<i64: 8, 32, 16>}, {pipeline_mode = #tpu.pipeline_mode<synchronous>, transform_indices = @transform_2, window_bounds = array<i64: 8, 32, 7>}, {pipeline_mode = #tpu.pipeline_mode<synchronous>, transform_indices = @transform_3, window_bounds = array<i64: 8, 32, 32>}, {pipeline_mode = #tpu.pipeline_mode<synchronous>, transform_indices = @transform_4, window_bounds = array<i64: 8, 32, 2>}, {transform_indices = @transform_5, window_bounds = array<i64: 1, 16, 256>}, {transform_indices = @transform_6, window_bounds = array<i64: 1, 16, 256>}]} {
    %c0 = arith.constant 0 : index
    %c0_0 = arith.constant 0 : index
    %c0_1 = arith.constant 0 : index
    %0 = vector.load %arg1[%c0, %c0_0, %c0_1] : memref<1x16x256xf32, #tpu.memory_space<vmem>>, vector<1x16x256xf32>
    %1 = vector.shape_cast %0 : vector<1x16x256xf32> to vector<16x256xf32>
    %2 = tpu.iota {dimensions = array<i32: 1>} : vector<1x256xi32>
    %cst = arith.constant 1.000000e+00 : f32
    %3 = vector.broadcast %cst : f32 to vector<1x32xf32>
    %cst_2 = arith.constant 1.000000e+00 : f32
    %4 = vector.broadcast %cst_2 : f32 to vector<256x1xf32>
    %cst_3 = arith.constant 0.000000e+00 : f32
    %5 = vector.broadcast %cst_3 : f32 to vector<16x256xf32>
    %c0_4 = arith.constant 0 : index
    %c0_5 = arith.constant 0 : index
    %c0_6 = arith.constant 0 : index
    %6 = vector.load %arg3[%c0_4, %c0_5, %c0_6] : memref<8x32x7xf32, #tpu.memory_space<vmem>>, vector<1x32x7xf32>
    %7 = vector.shape_cast %6 : vector<1x32x7xf32> to vector<32x7xf32>
    %8 = vector.extract_strided_slice %7 {offsets = [0, 0], sizes = [32, 1], strides = [1, 1]} : vector<32x7xf32> to vector<32x1xf32>
    %9 = vector.extract_strided_slice %7 {offsets = [0, 1], sizes = [32, 1], strides = [1, 1]} : vector<32x7xf32> to vector<32x1xf32>
    %10 = vector.extract_strided_slice %7 {offsets = [0, 2], sizes = [32, 1], strides = [1, 1]} : vector<32x7xf32> to vector<32x1xf32>
    %11 = vector.extract_strided_slice %7 {offsets = [0, 3], sizes = [32, 1], strides = [1, 1]} : vector<32x7xf32> to vector<32x1xf32>
    %12 = vector.extract_strided_slice %7 {offsets = [0, 4], sizes = [32, 1], strides = [1, 1]} : vector<32x7xf32> to vector<32x1xf32>
    %13 = vector.extract_strided_slice %7 {offsets = [0, 5], sizes = [32, 1], strides = [1, 1]} : vector<32x7xf32> to vector<32x1xf32>
    %14 = vector.extract_strided_slice %7 {offsets = [0, 6], sizes = [32, 1], strides = [1, 1]} : vector<32x7xf32> to vector<32x1xf32>
    %c0_7 = arith.constant 0 : index
    %c0_8 = arith.constant 0 : index
    %c0_9 = arith.constant 0 : index
    %15 = vector.load %arg2[%c0_7, %c0_8, %c0_9] : memref<8x32x16xbf16, #tpu.memory_space<vmem>>, vector<1x32x16xbf16>
    %16 = vector.shape_cast %15 : vector<1x32x16xbf16> to vector<32x16xbf16>
    %17 = arith.truncf %1 : vector<16x256xf32> to vector<16x256xbf16>
    %cst_10 = arith.constant dense<0.000000e+00> : vector<32x256xf32>
    %18 = tpu.matmul %16, %17, %cst_10 {dimension_numbers = #tpu.dot_dimension_numbers<[1], [0], [0], [1], [0, 0, 1, 1], [], []>} : vector<32x16xbf16>, vector<16x256xbf16>, vector<32x256xf32> -> vector<32x256xf32>
    %cst_11 = arith.constant 0.000000e+00 : f32
    %19 = vector.broadcast %cst_11 : f32 to vector<32x256xf32>
    %20 = arith.cmpf oge, %18, %19 : vector<32x256xf32>
    %21 = vector.broadcast %8 : vector<32x1xf32> to vector<32x256xf32>
    %22 = arith.mulf %21, %18 : vector<32x256xf32>
    %23 = arith.select %20, %18, %22 : vector<32x256xi1>, vector<32x256xf32>
    %cst_12 = arith.constant dense<0.000000e+00> : vector<1x256xf32>
    %24 = tpu.matmul %3, %23, %cst_12 {dimension_numbers = #tpu.dot_dimension_numbers<[1], [0], [0], [1], [0, 0, 1, 1], [], []>} : vector<1x32xf32>, vector<32x256xf32>, vector<1x256xf32> -> vector<1x256xf32>
    %25 = arith.mulf %23, %23 : vector<32x256xf32>
    %cst_13 = arith.constant dense<0.000000e+00> : vector<1x256xf32>
    %26 = tpu.matmul %3, %25, %cst_13 {dimension_numbers = #tpu.dot_dimension_numbers<[1], [0], [0], [1], [0, 0, 1, 1], [], []>} : vector<1x32xf32>, vector<32x256xf32>, vector<1x256xf32> -> vector<1x256xf32>
    %cst_14 = arith.constant dense<0.000000e+00> : vector<1x1xf32>
    %27 = tpu.matmul %24, %4, %cst_14 {dimension_numbers = #tpu.dot_dimension_numbers<[1], [0], [0], [1], [0, 0, 1, 1], [], []>} : vector<1x256xf32>, vector<256x1xf32>, vector<1x1xf32> -> vector<1x1xf32>
    %28 = vector.extract %27[0, 0] : f32 from vector<1x1xf32>
    %cst_15 = arith.constant dense<0.000000e+00> : vector<1x1xf32>
    %29 = tpu.matmul %26, %4, %cst_15 {dimension_numbers = #tpu.dot_dimension_numbers<[1], [0], [0], [1], [0, 0, 1, 1], [], []>} : vector<1x256xf32>, vector<256x1xf32>, vector<1x1xf32> -> vector<1x1xf32>
    %30 = vector.extract %29[0, 0] : f32 from vector<1x1xf32>
    %cst_16 = arith.constant 1.22070313E-4 : f32
    %31 = arith.mulf %28, %cst_16 : f32
    %cst_17 = arith.constant 1.22070313E-4 : f32
    %32 = arith.mulf %30, %cst_17 : f32
    %33 = arith.mulf %31, %31 : f32
    %34 = arith.subf %32, %33 : f32
    %cst_18 = arith.constant 0.000000e+00 : f32
    %35 = arith.maximumf %34, %cst_18 : f32
    %cst_19 = arith.constant 1.000000e-16 : f32
    %36 = arith.addf %35, %cst_19 : f32
    %37 = math.rsqrt %36 : f32
    %38 = vector.broadcast %37 : f32 to vector<32x1xf32>
    %39 = arith.mulf %9, %38 : vector<32x1xf32>
    %40 = vector.broadcast %31 : f32 to vector<32x1xf32>
    %41 = arith.mulf %40, %39 : vector<32x1xf32>
    %42 = arith.subf %10, %41 : vector<32x1xf32>
    %43 = vector.broadcast %39 : vector<32x1xf32> to vector<32x256xf32>
    %44 = arith.mulf %23, %43 : vector<32x256xf32>
    %45 = vector.broadcast %42 : vector<32x1xf32> to vector<32x256xf32>
    %46 = arith.addf %44, %45 : vector<32x256xf32>
    %47 = vector.broadcast %12 : vector<32x1xf32> to vector<32x256xf32>
    %48 = arith.mulf %47, %46 : vector<32x256xf32>
    %c1_i32 = arith.constant 1 : i32
    %49 = vector.broadcast %c1_i32 : i32 to vector<1x256xi32>
    %50 = arith.cmpi sge, %2, %49 : vector<1x256xi32>
    %c1_i32_20 = arith.constant 1 : i32
    %51 = tpu.dynamic_rotate %46 by %c1_i32_20 dim 1 : vector<32x256xf32>, i32 -> vector<32x256xf32>
    %cst_21 = arith.constant 0.000000e+00 : f32
    %52 = vector.shape_cast %50 : vector<1x256xi1> to vector<1x256xi1>
    %53 = vector.broadcast %52 : vector<1x256xi1> to vector<32x256xi1>
    %54 = vector.broadcast %cst_21 : f32 to vector<32x256xf32>
    %55 = arith.select %53, %51, %54 : vector<32x256xi1>, vector<32x256xf32>
    %56 = vector.broadcast %11 : vector<32x1xf32> to vector<32x256xf32>
    %57 = arith.mulf %56, %55 : vector<32x256xf32>
    %58 = arith.addf %48, %57 : vector<32x256xf32>
    %c255_i32 = arith.constant 255 : i32
    %59 = vector.broadcast %c255_i32 : i32 to vector<1x256xi32>
    %60 = arith.cmpi slt, %2, %59 : vector<1x256xi32>
    %c255_i32_22 = arith.constant 255 : i32
    %61 = tpu.dynamic_rotate %46 by %c255_i32_22 dim 1 : vector<32x256xf32>, i32 -> vector<32x256xf32>
    %cst_23 = arith.constant 0.000000e+00 : f32
    %62 = vector.shape_cast %60 : vector<1x256xi1> to vector<1x256xi1>
    %63 = vector.broadcast %62 : vector<1x256xi1> to vector<32x256xi1>
    %64 = vector.broadcast %cst_23 : f32 to vector<32x256xf32>
    %65 = arith.select %63, %61, %64 : vector<32x256xi1>, vector<32x256xf32>
    %66 = vector.broadcast %13 : vector<32x1xf32> to vector<32x256xf32>
    %67 = arith.mulf %66, %65 : vector<32x256xf32>
    %68 = arith.addf %58, %67 : vector<32x256xf32>
    %cst_24 = arith.constant 0.000000e+00 : f32
    %69 = vector.broadcast %cst_24 : f32 to vector<32x256xf32>
    %70 = arith.cmpf oge, %68, %69 : vector<32x256xf32>
    %71 = vector.broadcast %14 : vector<32x1xf32> to vector<32x256xf32>
    %72 = arith.mulf %71, %68 : vector<32x256xf32>
    %73 = arith.select %70, %68, %72 : vector<32x256xi1>, vector<32x256xf32>
    %cst_25 = arith.constant dense<0.000000e+00> : vector<1x256xf32>
    %74 = tpu.matmul %3, %73, %cst_25 {dimension_numbers = #tpu.dot_dimension_numbers<[1], [0], [0], [1], [0, 0, 1, 1], [], []>} : vector<1x32xf32>, vector<32x256xf32>, vector<1x256xf32> -> vector<1x256xf32>
    %75 = arith.mulf %73, %73 : vector<32x256xf32>
    %cst_26 = arith.constant dense<0.000000e+00> : vector<1x256xf32>
    %76 = tpu.matmul %3, %75, %cst_26 {dimension_numbers = #tpu.dot_dimension_numbers<[1], [0], [0], [1], [0, 0, 1, 1], [], []>} : vector<1x32xf32>, vector<32x256xf32>, vector<1x256xf32> -> vector<1x256xf32>
    %cst_27 = arith.constant dense<0.000000e+00> : vector<1x1xf32>
    %77 = tpu.matmul %74, %4, %cst_27 {dimension_numbers = #tpu.dot_dimension_numbers<[1], [0], [0], [1], [0, 0, 1, 1], [], []>} : vector<1x256xf32>, vector<256x1xf32>, vector<1x1xf32> -> vector<1x1xf32>
    %78 = vector.extract %77[0, 0] : f32 from vector<1x1xf32>
    %cst_28 = arith.constant dense<0.000000e+00> : vector<1x1xf32>
    %79 = tpu.matmul %76, %4, %cst_28 {dimension_numbers = #tpu.dot_dimension_numbers<[1], [0], [0], [1], [0, 0, 1, 1], [], []>} : vector<1x256xf32>, vector<256x1xf32>, vector<1x1xf32> -> vector<1x1xf32>
    %80 = vector.extract %79[0, 0] : f32 from vector<1x1xf32>
    %cst_29 = arith.constant 1.22070313E-4 : f32
    %81 = arith.mulf %78, %cst_29 : f32
    %cst_30 = arith.constant 1.22070313E-4 : f32
    %82 = arith.mulf %80, %cst_30 : f32
    %83 = arith.mulf %81, %81 : f32
    %84 = arith.subf %82, %83 : f32
    %cst_31 = arith.constant 0.000000e+00 : f32
    %85 = arith.maximumf %84, %cst_31 : f32
    %cst_32 = arith.constant 1.000000e-16 : f32
    %86 = arith.addf %85, %cst_32 : f32
    %87 = math.rsqrt %86 : f32
    %c0_33 = arith.constant 0 : index
    %c0_34 = arith.constant 0 : index
    %c0_35 = arith.constant 0 : index
    %88 = vector.load %arg4[%c0_33, %c0_34, %c0_35] : memref<8x32x32xbf16, #tpu.memory_space<vmem>>, vector<1x32x32xbf16>
    %89 = vector.shape_cast %88 : vector<1x32x32xbf16> to vector<32x32xbf16>
    %90 = arith.truncf %73 : vector<32x256xf32> to vector<32x256xbf16>
    %cst_36 = arith.constant dense<0.000000e+00> : vector<32x256xf32>
    %91 = tpu.matmul %89, %90, %cst_36 {dimension_numbers = #tpu.dot_dimension_numbers<[1], [0], [0], [1], [0, 0, 1, 1], [], []>} : vector<32x32xbf16>, vector<32x256xbf16>, vector<32x256xf32> -> vector<32x256xf32>
    %c0_37 = arith.constant 0 : index
    %c0_38 = arith.constant 0 : index
    %c0_39 = arith.constant 0 : index
    %92 = vector.load %arg5[%c0_37, %c0_38, %c0_39] : memref<8x32x2xf32, #tpu.memory_space<vmem>>, vector<1x32x2xf32>
    %93 = vector.shape_cast %92 : vector<1x32x2xf32> to vector<32x2xf32>
    %94 = vector.extract_strided_slice %93 {offsets = [0, 1], sizes = [32, 1], strides = [1, 1]} : vector<32x2xf32> to vector<32x1xf32>
    %95 = arith.mulf %81, %87 : f32
    %96 = vector.extract_strided_slice %93 {offsets = [0, 0], sizes = [32, 1], strides = [1, 1]} : vector<32x2xf32> to vector<32x1xf32>
    %97 = vector.broadcast %95 : f32 to vector<32x1xf32>
    %98 = arith.mulf %97, %96 : vector<32x1xf32>
    %99 = arith.subf %94, %98 : vector<32x1xf32>
    %100 = vector.broadcast %87 : f32 to vector<32x256xf32>
    %101 = arith.mulf %91, %100 : vector<32x256xf32>
    %102 = vector.broadcast %99 : vector<32x1xf32> to vector<32x256xf32>
    %103 = arith.addf %101, %102 : vector<32x256xf32>
    %104 = vector.extract_strided_slice %103 {offsets = [0, 0], sizes = [16, 256], strides = [1, 1]} : vector<32x256xf32> to vector<16x256xf32>
    %105 = arith.addf %104, %1 : vector<16x256xf32>
    %106 = vector.extract_strided_slice %103 {offsets = [16, 0], sizes = [16, 256], strides = [1, 1]} : vector<32x256xf32> to vector<16x256xf32>
    %107 = arith.addf %5, %106 : vector<16x256xf32>
    %c1 = arith.constant 1 : index
    %c0_40 = arith.constant 0 : index
    %c0_41 = arith.constant 0 : index
    %108 = vector.load %arg3[%c1, %c0_40, %c0_41] : memref<8x32x7xf32, #tpu.memory_space<vmem>>, vector<1x32x7xf32>
    %109 = vector.shape_cast %108 : vector<1x32x7xf32> to vector<32x7xf32>
    %110 = vector.extract_strided_slice %109 {offsets = [0, 0], sizes = [32, 1], strides = [1, 1]} : vector<32x7xf32> to vector<32x1xf32>
    %111 = vector.extract_strided_slice %109 {offsets = [0, 1], sizes = [32, 1], strides = [1, 1]} : vector<32x7xf32> to vector<32x1xf32>
    %112 = vector.extract_strided_slice %109 {offsets = [0, 2], sizes = [32, 1], strides = [1, 1]} : vector<32x7xf32> to vector<32x1xf32>
    %113 = vector.extract_strided_slice %109 {offsets = [0, 3], sizes = [32, 1], strides = [1, 1]} : vector<32x7xf32> to vector<32x1xf32>
    %114 = vector.extract_strided_slice %109 {offsets = [0, 4], sizes = [32, 1], strides = [1, 1]} : vector<32x7xf32> to vector<32x1xf32>
    %115 = vector.extract_strided_slice %109 {offsets = [0, 5], sizes = [32, 1], strides = [1, 1]} : vector<32x7xf32> to vector<32x1xf32>
    %116 = vector.extract_strided_slice %109 {offsets = [0, 6], sizes = [32, 1], strides = [1, 1]} : vector<32x7xf32> to vector<32x1xf32>
    %c1_42 = arith.constant 1 : index
    %c0_43 = arith.constant 0 : index
    %c0_44 = arith.constant 0 : index
    %117 = vector.load %arg2[%c1_42, %c0_43, %c0_44] : memref<8x32x16xbf16, #tpu.memory_space<vmem>>, vector<1x32x16xbf16>
    %118 = vector.shape_cast %117 : vector<1x32x16xbf16> to vector<32x16xbf16>
    %119 = arith.truncf %105 : vector<16x256xf32> to vector<16x256xbf16>
    %cst_45 = arith.constant dense<0.000000e+00> : vector<32x256xf32>
    %120 = tpu.matmul %118, %119, %cst_45 {dimension_numbers = #tpu.dot_dimension_numbers<[1], [0], [0], [1], [0, 0, 1, 1], [], []>} : vector<32x16xbf16>, vector<16x256xbf16>, vector<32x256xf32> -> vector<32x256xf32>
    %cst_46 = arith.constant 0.000000e+00 : f32
    %121 = vector.broadcast %cst_46 : f32 to vector<32x256xf32>
    %122 = arith.cmpf oge, %120, %121 : vector<32x256xf32>
    %123 = vector.broadcast %110 : vector<32x1xf32> to vector<32x256xf32>
    %124 = arith.mulf %123, %120 : vector<32x256xf32>
    %125 = arith.select %122, %120, %124 : vector<32x256xi1>, vector<32x256xf32>
    %cst_47 = arith.constant dense<0.000000e+00> : vector<1x256xf32>
    %126 = tpu.matmul %3, %125, %cst_47 {dimension_numbers = #tpu.dot_dimension_numbers<[1], [0], [0], [1], [0, 0, 1, 1], [], []>} : vector<1x32xf32>, vector<32x256xf32>, vector<1x256xf32> -> vector<1x256xf32>
    %127 = arith.mulf %125, %125 : vector<32x256xf32>
    %cst_48 = arith.constant dense<0.000000e+00> : vector<1x256xf32>
    %128 = tpu.matmul %3, %127, %cst_48 {dimension_numbers = #tpu.dot_dimension_numbers<[1], [0], [0], [1], [0, 0, 1, 1], [], []>} : vector<1x32xf32>, vector<32x256xf32>, vector<1x256xf32> -> vector<1x256xf32>
    %cst_49 = arith.constant dense<0.000000e+00> : vector<1x1xf32>
    %129 = tpu.matmul %126, %4, %cst_49 {dimension_numbers = #tpu.dot_dimension_numbers<[1], [0], [0], [1], [0, 0, 1, 1], [], []>} : vector<1x256xf32>, vector<256x1xf32>, vector<1x1xf32> -> vector<1x1xf32>
    %130 = vector.extract %129[0, 0] : f32 from vector<1x1xf32>
    %cst_50 = arith.constant dense<0.000000e+00> : vector<1x1xf32>
    %131 = tpu.matmul %128, %4, %cst_50 {dimension_numbers = #tpu.dot_dimension_numbers<[1], [0], [0], [1], [0, 0, 1, 1], [], []>} : vector<1x256xf32>, vector<256x1xf32>, vector<1x1xf32> -> vector<1x1xf32>
    %132 = vector.extract %131[0, 0] : f32 from vector<1x1xf32>
    %cst_51 = arith.constant 1.22070313E-4 : f32
    %133 = arith.mulf %130, %cst_51 : f32
    %cst_52 = arith.constant 1.22070313E-4 : f32
    %134 = arith.mulf %132, %cst_52 : f32
    %135 = arith.mulf %133, %133 : f32
    %136 = arith.subf %134, %135 : f32
    %cst_53 = arith.constant 0.000000e+00 : f32
    %137 = arith.maximumf %136, %cst_53 : f32
    %cst_54 = arith.constant 1.000000e-16 : f32
    %138 = arith.addf %137, %cst_54 : f32
    %139 = math.rsqrt %138 : f32
    %140 = vector.broadcast %139 : f32 to vector<32x1xf32>
    %141 = arith.mulf %111, %140 : vector<32x1xf32>
    %142 = vector.broadcast %133 : f32 to vector<32x1xf32>
    %143 = arith.mulf %142, %141 : vector<32x1xf32>
    %144 = arith.subf %112, %143 : vector<32x1xf32>
    %145 = vector.broadcast %141 : vector<32x1xf32> to vector<32x256xf32>
    %146 = arith.mulf %125, %145 : vector<32x256xf32>
    %147 = vector.broadcast %144 : vector<32x1xf32> to vector<32x256xf32>
    %148 = arith.addf %146, %147 : vector<32x256xf32>
    %149 = vector.broadcast %114 : vector<32x1xf32> to vector<32x256xf32>
    %150 = arith.mulf %149, %148 : vector<32x256xf32>
    %c2_i32 = arith.constant 2 : i32
    %151 = vector.broadcast %c2_i32 : i32 to vector<1x256xi32>
    %152 = arith.cmpi sge, %2, %151 : vector<1x256xi32>
    %c2_i32_55 = arith.constant 2 : i32
    %153 = tpu.dynamic_rotate %148 by %c2_i32_55 dim 1 : vector<32x256xf32>, i32 -> vector<32x256xf32>
    %cst_56 = arith.constant 0.000000e+00 : f32
    %154 = vector.shape_cast %152 : vector<1x256xi1> to vector<1x256xi1>
    %155 = vector.broadcast %154 : vector<1x256xi1> to vector<32x256xi1>
    %156 = vector.broadcast %cst_56 : f32 to vector<32x256xf32>
    %157 = arith.select %155, %153, %156 : vector<32x256xi1>, vector<32x256xf32>
    %158 = vector.broadcast %113 : vector<32x1xf32> to vector<32x256xf32>
    %159 = arith.mulf %158, %157 : vector<32x256xf32>
    %160 = arith.addf %150, %159 : vector<32x256xf32>
    %c254_i32 = arith.constant 254 : i32
    %161 = vector.broadcast %c254_i32 : i32 to vector<1x256xi32>
    %162 = arith.cmpi slt, %2, %161 : vector<1x256xi32>
    %c254_i32_57 = arith.constant 254 : i32
    %163 = tpu.dynamic_rotate %148 by %c254_i32_57 dim 1 : vector<32x256xf32>, i32 -> vector<32x256xf32>
    %cst_58 = arith.constant 0.000000e+00 : f32
    %164 = vector.shape_cast %162 : vector<1x256xi1> to vector<1x256xi1>
    %165 = vector.broadcast %164 : vector<1x256xi1> to vector<32x256xi1>
    %166 = vector.broadcast %cst_58 : f32 to vector<32x256xf32>
    %167 = arith.select %165, %163, %166 : vector<32x256xi1>, vector<32x256xf32>
    %168 = vector.broadcast %115 : vector<32x1xf32> to vector<32x256xf32>
    %169 = arith.mulf %168, %167 : vector<32x256xf32>
    %170 = arith.addf %160, %169 : vector<32x256xf32>
    %cst_59 = arith.constant 0.000000e+00 : f32
    %171 = vector.broadcast %cst_59 : f32 to vector<32x256xf32>
    %172 = arith.cmpf oge, %170, %171 : vector<32x256xf32>
    %173 = vector.broadcast %116 : vector<32x1xf32> to vector<32x256xf32>
    %174 = arith.mulf %173, %170 : vector<32x256xf32>
    %175 = arith.select %172, %170, %174 : vector<32x256xi1>, vector<32x256xf32>
    %cst_60 = arith.constant dense<0.000000e+00> : vector<1x256xf32>
    %176 = tpu.matmul %3, %175, %cst_60 {dimension_numbers = #tpu.dot_dimension_numbers<[1], [0], [0], [1], [0, 0, 1, 1], [], []>} : vector<1x32xf32>, vector<32x256xf32>, vector<1x256xf32> -> vector<1x256xf32>
    %177 = arith.mulf %175, %175 : vector<32x256xf32>
    %cst_61 = arith.constant dense<0.000000e+00> : vector<1x256xf32>
    %178 = tpu.matmul %3, %177, %cst_61 {dimension_numbers = #tpu.dot_dimension_numbers<[1], [0], [0], [1], [0, 0, 1, 1], [], []>} : vector<1x32xf32>, vector<32x256xf32>, vector<1x256xf32> -> vector<1x256xf32>
    %cst_62 = arith.constant dense<0.000000e+00> : vector<1x1xf32>
    %179 = tpu.matmul %176, %4, %cst_62 {dimension_numbers = #tpu.dot_dimension_numbers<[1], [0], [0], [1], [0, 0, 1, 1], [], []>} : vector<1x256xf32>, vector<256x1xf32>, vector<1x1xf32> -> vector<1x1xf32>
    %180 = vector.extract %179[0, 0] : f32 from vector<1x1xf32>
    %cst_63 = arith.constant dense<0.000000e+00> : vector<1x1xf32>
    %181 = tpu.matmul %178, %4, %cst_63 {dimension_numbers = #tpu.dot_dimension_numbers<[1], [0], [0], [1], [0, 0, 1, 1], [], []>} : vector<1x256xf32>, vector<256x1xf32>, vector<1x1xf32> -> vector<1x1xf32>
    %182 = vector.extract %181[0, 0] : f32 from vector<1x1xf32>
    %cst_64 = arith.constant 1.22070313E-4 : f32
    %183 = arith.mulf %180, %cst_64 : f32
    %cst_65 = arith.constant 1.22070313E-4 : f32
    %184 = arith.mulf %182, %cst_65 : f32
    %185 = arith.mulf %183, %183 : f32
    %186 = arith.subf %184, %185 : f32
    %cst_66 = arith.constant 0.000000e+00 : f32
    %187 = arith.maximumf %186, %cst_66 : f32
    %cst_67 = arith.constant 1.000000e-16 : f32
    %188 = arith.addf %187, %cst_67 : f32
    %189 = math.rsqrt %188 : f32
    %c1_68 = arith.constant 1 : index
    %c0_69 = arith.constant 0 : index
    %c0_70 = arith.constant 0 : index
    %190 = vector.load %arg4[%c1_68, %c0_69, %c0_70] : memref<8x32x32xbf16, #tpu.memory_space<vmem>>, vector<1x32x32xbf16>
    %191 = vector.shape_cast %190 : vector<1x32x32xbf16> to vector<32x32xbf16>
    %192 = arith.truncf %175 : vector<32x256xf32> to vector<32x256xbf16>
    %cst_71 = arith.constant dense<0.000000e+00> : vector<32x256xf32>
    %193 = tpu.matmul %191, %192, %cst_71 {dimension_numbers = #tpu.dot_dimension_numbers<[1], [0], [0], [1], [0, 0, 1, 1], [], []>} : vector<32x32xbf16>, vector<32x256xbf16>, vector<32x256xf32> -> vector<32x256xf32>
    %c1_72 = arith.constant 1 : index
    %c0_73 = arith.constant 0 : index
    %c0_74 = arith.constant 0 : index
    %194 = vector.load %arg5[%c1_72, %c0_73, %c0_74] : memref<8x32x2xf32, #tpu.memory_space<vmem>>, vector<1x32x2xf32>
    %195 = vector.shape_cast %194 : vector<1x32x2xf32> to vector<32x2xf32>
    %196 = vector.extract_strided_slice %195 {offsets = [0, 1], sizes = [32, 1], strides = [1, 1]} : vector<32x2xf32> to vector<32x1xf32>
    %197 = arith.mulf %183, %189 : f32
    %198 = vector.extract_strided_slice %195 {offsets = [0, 0], sizes = [32, 1], strides = [1, 1]} : vector<32x2xf32> to vector<32x1xf32>
    %199 = vector.broadcast %197 : f32 to vector<32x1xf32>
    %200 = arith.mulf %199, %198 : vector<32x1xf32>
    %201 = arith.subf %196, %200 : vector<32x1xf32>
    %202 = vector.broadcast %189 : f32 to vector<32x256xf32>
    %203 = arith.mulf %193, %202 : vector<32x256xf32>
    %204 = vector.broadcast %201 : vector<32x1xf32> to vector<32x256xf32>
    %205 = arith.addf %203, %204 : vector<32x256xf32>
    %206 = vector.extract_strided_slice %205 {offsets = [0, 0], sizes = [16, 256], strides = [1, 1]} : vector<32x256xf32> to vector<16x256xf32>
    %207 = arith.addf %206, %105 : vector<16x256xf32>
    %208 = vector.extract_strided_slice %205 {offsets = [16, 0], sizes = [16, 256], strides = [1, 1]} : vector<32x256xf32> to vector<16x256xf32>
    %209 = arith.addf %107, %208 : vector<16x256xf32>
    %c2 = arith.constant 2 : index
    %c0_75 = arith.constant 0 : index
    %c0_76 = arith.constant 0 : index
    %210 = vector.load %arg3[%c2, %c0_75, %c0_76] : memref<8x32x7xf32, #tpu.memory_space<vmem>>, vector<1x32x7xf32>
    %211 = vector.shape_cast %210 : vector<1x32x7xf32> to vector<32x7xf32>
    %212 = vector.extract_strided_slice %211 {offsets = [0, 0], sizes = [32, 1], strides = [1, 1]} : vector<32x7xf32> to vector<32x1xf32>
    %213 = vector.extract_strided_slice %211 {offsets = [0, 1], sizes = [32, 1], strides = [1, 1]} : vector<32x7xf32> to vector<32x1xf32>
    %214 = vector.extract_strided_slice %211 {offsets = [0, 2], sizes = [32, 1], strides = [1, 1]} : vector<32x7xf32> to vector<32x1xf32>
    %215 = vector.extract_strided_slice %211 {offsets = [0, 3], sizes = [32, 1], strides = [1, 1]} : vector<32x7xf32> to vector<32x1xf32>
    %216 = vector.extract_strided_slice %211 {offsets = [0, 4], sizes = [32, 1], strides = [1, 1]} : vector<32x7xf32> to vector<32x1xf32>
    %217 = vector.extract_strided_slice %211 {offsets = [0, 5], sizes = [32, 1], strides = [1, 1]} : vector<32x7xf32> to vector<32x1xf32>
    %218 = vector.extract_strided_slice %211 {offsets = [0, 6], sizes = [32, 1], strides = [1, 1]} : vector<32x7xf32> to vector<32x1xf32>
    %c2_77 = arith.constant 2 : index
    %c0_78 = arith.constant 0 : index
    %c0_79 = arith.constant 0 : index
    %219 = vector.load %arg2[%c2_77, %c0_78, %c0_79] : memref<8x32x16xbf16, #tpu.memory_space<vmem>>, vector<1x32x16xbf16>
    %220 = vector.shape_cast %219 : vector<1x32x16xbf16> to vector<32x16xbf16>
    %221 = arith.truncf %207 : vector<16x256xf32> to vector<16x256xbf16>
    %cst_80 = arith.constant dense<0.000000e+00> : vector<32x256xf32>
    %222 = tpu.matmul %220, %221, %cst_80 {dimension_numbers = #tpu.dot_dimension_numbers<[1], [0], [0], [1], [0, 0, 1, 1], [], []>} : vector<32x16xbf16>, vector<16x256xbf16>, vector<32x256xf32> -> vector<32x256xf32>
    %cst_81 = arith.constant 0.000000e+00 : f32
    %223 = vector.broadcast %cst_81 : f32 to vector<32x256xf32>
    %224 = arith.cmpf oge, %222, %223 : vector<32x256xf32>
    %225 = vector.broadcast %212 : vector<32x1xf32> to vector<32x256xf32>
    %226 = arith.mulf %225, %222 : vector<32x256xf32>
    %227 = arith.select %224, %222, %226 : vector<32x256xi1>, vector<32x256xf32>
    %cst_82 = arith.constant dense<0.000000e+00> : vector<1x256xf32>
    %228 = tpu.matmul %3, %227, %cst_82 {dimension_numbers = #tpu.dot_dimension_numbers<[1], [0], [0], [1], [0, 0, 1, 1], [], []>} : vector<1x32xf32>, vector<32x256xf32>, vector<1x256xf32> -> vector<1x256xf32>
    %229 = arith.mulf %227, %227 : vector<32x256xf32>
    %cst_83 = arith.constant dense<0.000000e+00> : vector<1x256xf32>
    %230 = tpu.matmul %3, %229, %cst_83 {dimension_numbers = #tpu.dot_dimension_numbers<[1], [0], [0], [1], [0, 0, 1, 1], [], []>} : vector<1x32xf32>, vector<32x256xf32>, vector<1x256xf32> -> vector<1x256xf32>
    %cst_84 = arith.constant dense<0.000000e+00> : vector<1x1xf32>
    %231 = tpu.matmul %228, %4, %cst_84 {dimension_numbers = #tpu.dot_dimension_numbers<[1], [0], [0], [1], [0, 0, 1, 1], [], []>} : vector<1x256xf32>, vector<256x1xf32>, vector<1x1xf32> -> vector<1x1xf32>
    %232 = vector.extract %231[0, 0] : f32 from vector<1x1xf32>
    %cst_85 = arith.constant dense<0.000000e+00> : vector<1x1xf32>
    %233 = tpu.matmul %230, %4, %cst_85 {dimension_numbers = #tpu.dot_dimension_numbers<[1], [0], [0], [1], [0, 0, 1, 1], [], []>} : vector<1x256xf32>, vector<256x1xf32>, vector<1x1xf32> -> vector<1x1xf32>
    %234 = vector.extract %233[0, 0] : f32 from vector<1x1xf32>
    %cst_86 = arith.constant 1.22070313E-4 : f32
    %235 = arith.mulf %232, %cst_86 : f32
    %cst_87 = arith.constant 1.22070313E-4 : f32
    %236 = arith.mulf %234, %cst_87 : f32
    %237 = arith.mulf %235, %235 : f32
    %238 = arith.subf %236, %237 : f32
    %cst_88 = arith.constant 0.000000e+00 : f32
    %239 = arith.maximumf %238, %cst_88 : f32
    %cst_89 = arith.constant 1.000000e-16 : f32
    %240 = arith.addf %239, %cst_89 : f32
    %241 = math.rsqrt %240 : f32
    %242 = vector.broadcast %241 : f32 to vector<32x1xf32>
    %243 = arith.mulf %213, %242 : vector<32x1xf32>
    %244 = vector.broadcast %235 : f32 to vector<32x1xf32>
    %245 = arith.mulf %244, %243 : vector<32x1xf32>
    %246 = arith.subf %214, %245 : vector<32x1xf32>
    %247 = vector.broadcast %243 : vector<32x1xf32> to vector<32x256xf32>
    %248 = arith.mulf %227, %247 : vector<32x256xf32>
    %249 = vector.broadcast %246 : vector<32x1xf32> to vector<32x256xf32>
    %250 = arith.addf %248, %249 : vector<32x256xf32>
    %251 = vector.broadcast %216 : vector<32x1xf32> to vector<32x256xf32>
    %252 = arith.mulf %251, %250 : vector<32x256xf32>
    %c4_i32 = arith.constant 4 : i32
    %253 = vector.broadcast %c4_i32 : i32 to vector<1x256xi32>
    %254 = arith.cmpi sge, %2, %253 : vector<1x256xi32>
    %c4_i32_90 = arith.constant 4 : i32
    %255 = tpu.dynamic_rotate %250 by %c4_i32_90 dim 1 : vector<32x256xf32>, i32 -> vector<32x256xf32>
    %cst_91 = arith.constant 0.000000e+00 : f32
    %256 = vector.shape_cast %254 : vector<1x256xi1> to vector<1x256xi1>
    %257 = vector.broadcast %256 : vector<1x256xi1> to vector<32x256xi1>
    %258 = vector.broadcast %cst_91 : f32 to vector<32x256xf32>
    %259 = arith.select %257, %255, %258 : vector<32x256xi1>, vector<32x256xf32>
    %260 = vector.broadcast %215 : vector<32x1xf32> to vector<32x256xf32>
    %261 = arith.mulf %260, %259 : vector<32x256xf32>
    %262 = arith.addf %252, %261 : vector<32x256xf32>
    %c252_i32 = arith.constant 252 : i32
    %263 = vector.broadcast %c252_i32 : i32 to vector<1x256xi32>
    %264 = arith.cmpi slt, %2, %263 : vector<1x256xi32>
    %c252_i32_92 = arith.constant 252 : i32
    %265 = tpu.dynamic_rotate %250 by %c252_i32_92 dim 1 : vector<32x256xf32>, i32 -> vector<32x256xf32>
    %cst_93 = arith.constant 0.000000e+00 : f32
    %266 = vector.shape_cast %264 : vector<1x256xi1> to vector<1x256xi1>
    %267 = vector.broadcast %266 : vector<1x256xi1> to vector<32x256xi1>
    %268 = vector.broadcast %cst_93 : f32 to vector<32x256xf32>
    %269 = arith.select %267, %265, %268 : vector<32x256xi1>, vector<32x256xf32>
    %270 = vector.broadcast %217 : vector<32x1xf32> to vector<32x256xf32>
    %271 = arith.mulf %270, %269 : vector<32x256xf32>
    %272 = arith.addf %262, %271 : vector<32x256xf32>
    %cst_94 = arith.constant 0.000000e+00 : f32
    %273 = vector.broadcast %cst_94 : f32 to vector<32x256xf32>
    %274 = arith.cmpf oge, %272, %273 : vector<32x256xf32>
    %275 = vector.broadcast %218 : vector<32x1xf32> to vector<32x256xf32>
    %276 = arith.mulf %275, %272 : vector<32x256xf32>
    %277 = arith.select %274, %272, %276 : vector<32x256xi1>, vector<32x256xf32>
    %cst_95 = arith.constant dense<0.000000e+00> : vector<1x256xf32>
    %278 = tpu.matmul %3, %277, %cst_95 {dimension_numbers = #tpu.dot_dimension_numbers<[1], [0], [0], [1], [0, 0, 1, 1], [], []>} : vector<1x32xf32>, vector<32x256xf32>, vector<1x256xf32> -> vector<1x256xf32>
    %279 = arith.mulf %277, %277 : vector<32x256xf32>
    %cst_96 = arith.constant dense<0.000000e+00> : vector<1x256xf32>
    %280 = tpu.matmul %3, %279, %cst_96 {dimension_numbers = #tpu.dot_dimension_numbers<[1], [0], [0], [1], [0, 0, 1, 1], [], []>} : vector<1x32xf32>, vector<32x256xf32>, vector<1x256xf32> -> vector<1x256xf32>
    %cst_97 = arith.constant dense<0.000000e+00> : vector<1x1xf32>
    %281 = tpu.matmul %278, %4, %cst_97 {dimension_numbers = #tpu.dot_dimension_numbers<[1], [0], [0], [1], [0, 0, 1, 1], [], []>} : vector<1x256xf32>, vector<256x1xf32>, vector<1x1xf32> -> vector<1x1xf32>
    %282 = vector.extract %281[0, 0] : f32 from vector<1x1xf32>
    %cst_98 = arith.constant dense<0.000000e+00> : vector<1x1xf32>
    %283 = tpu.matmul %280, %4, %cst_98 {dimension_numbers = #tpu.dot_dimension_numbers<[1], [0], [0], [1], [0, 0, 1, 1], [], []>} : vector<1x256xf32>, vector<256x1xf32>, vector<1x1xf32> -> vector<1x1xf32>
    %284 = vector.extract %283[0, 0] : f32 from vector<1x1xf32>
    %cst_99 = arith.constant 1.22070313E-4 : f32
    %285 = arith.mulf %282, %cst_99 : f32
    %cst_100 = arith.constant 1.22070313E-4 : f32
    %286 = arith.mulf %284, %cst_100 : f32
    %287 = arith.mulf %285, %285 : f32
    %288 = arith.subf %286, %287 : f32
    %cst_101 = arith.constant 0.000000e+00 : f32
    %289 = arith.maximumf %288, %cst_101 : f32
    %cst_102 = arith.constant 1.000000e-16 : f32
    %290 = arith.addf %289, %cst_102 : f32
    %291 = math.rsqrt %290 : f32
    %c2_103 = arith.constant 2 : index
    %c0_104 = arith.constant 0 : index
    %c0_105 = arith.constant 0 : index
    %292 = vector.load %arg4[%c2_103, %c0_104, %c0_105] : memref<8x32x32xbf16, #tpu.memory_space<vmem>>, vector<1x32x32xbf16>
    %293 = vector.shape_cast %292 : vector<1x32x32xbf16> to vector<32x32xbf16>
    %294 = arith.truncf %277 : vector<32x256xf32> to vector<32x256xbf16>
    %cst_106 = arith.constant dense<0.000000e+00> : vector<32x256xf32>
    %295 = tpu.matmul %293, %294, %cst_106 {dimension_numbers = #tpu.dot_dimension_numbers<[1], [0], [0], [1], [0, 0, 1, 1], [], []>} : vector<32x32xbf16>, vector<32x256xbf16>, vector<32x256xf32> -> vector<32x256xf32>
    %c2_107 = arith.constant 2 : index
    %c0_108 = arith.constant 0 : index
    %c0_109 = arith.constant 0 : index
    %296 = vector.load %arg5[%c2_107, %c0_108, %c0_109] : memref<8x32x2xf32, #tpu.memory_space<vmem>>, vector<1x32x2xf32>
    %297 = vector.shape_cast %296 : vector<1x32x2xf32> to vector<32x2xf32>
    %298 = vector.extract_strided_slice %297 {offsets = [0, 1], sizes = [32, 1], strides = [1, 1]} : vector<32x2xf32> to vector<32x1xf32>
    %299 = arith.mulf %285, %291 : f32
    %300 = vector.extract_strided_slice %297 {offsets = [0, 0], sizes = [32, 1], strides = [1, 1]} : vector<32x2xf32> to vector<32x1xf32>
    %301 = vector.broadcast %299 : f32 to vector<32x1xf32>
    %302 = arith.mulf %301, %300 : vector<32x1xf32>
    %303 = arith.subf %298, %302 : vector<32x1xf32>
    %304 = vector.broadcast %291 : f32 to vector<32x256xf32>
    %305 = arith.mulf %295, %304 : vector<32x256xf32>
    %306 = vector.broadcast %303 : vector<32x1xf32> to vector<32x256xf32>
    %307 = arith.addf %305, %306 : vector<32x256xf32>
    %308 = vector.extract_strided_slice %307 {offsets = [0, 0], sizes = [16, 256], strides = [1, 1]} : vector<32x256xf32> to vector<16x256xf32>
    %309 = arith.addf %308, %207 : vector<16x256xf32>
    %310 = vector.extract_strided_slice %307 {offsets = [16, 0], sizes = [16, 256], strides = [1, 1]} : vector<32x256xf32> to vector<16x256xf32>
    %311 = arith.addf %209, %310 : vector<16x256xf32>
    %c3 = arith.constant 3 : index
    %c0_110 = arith.constant 0 : index
    %c0_111 = arith.constant 0 : index
    %312 = vector.load %arg3[%c3, %c0_110, %c0_111] : memref<8x32x7xf32, #tpu.memory_space<vmem>>, vector<1x32x7xf32>
    %313 = vector.shape_cast %312 : vector<1x32x7xf32> to vector<32x7xf32>
    %314 = vector.extract_strided_slice %313 {offsets = [0, 0], sizes = [32, 1], strides = [1, 1]} : vector<32x7xf32> to vector<32x1xf32>
    %315 = vector.extract_strided_slice %313 {offsets = [0, 1], sizes = [32, 1], strides = [1, 1]} : vector<32x7xf32> to vector<32x1xf32>
    %316 = vector.extract_strided_slice %313 {offsets = [0, 2], sizes = [32, 1], strides = [1, 1]} : vector<32x7xf32> to vector<32x1xf32>
    %317 = vector.extract_strided_slice %313 {offsets = [0, 3], sizes = [32, 1], strides = [1, 1]} : vector<32x7xf32> to vector<32x1xf32>
    %318 = vector.extract_strided_slice %313 {offsets = [0, 4], sizes = [32, 1], strides = [1, 1]} : vector<32x7xf32> to vector<32x1xf32>
    %319 = vector.extract_strided_slice %313 {offsets = [0, 5], sizes = [32, 1], strides = [1, 1]} : vector<32x7xf32> to vector<32x1xf32>
    %320 = vector.extract_strided_slice %313 {offsets = [0, 6], sizes = [32, 1], strides = [1, 1]} : vector<32x7xf32> to vector<32x1xf32>
    %c3_112 = arith.constant 3 : index
    %c0_113 = arith.constant 0 : index
    %c0_114 = arith.constant 0 : index
    %321 = vector.load %arg2[%c3_112, %c0_113, %c0_114] : memref<8x32x16xbf16, #tpu.memory_space<vmem>>, vector<1x32x16xbf16>
    %322 = vector.shape_cast %321 : vector<1x32x16xbf16> to vector<32x16xbf16>
    %323 = arith.truncf %309 : vector<16x256xf32> to vector<16x256xbf16>
    %cst_115 = arith.constant dense<0.000000e+00> : vector<32x256xf32>
    %324 = tpu.matmul %322, %323, %cst_115 {dimension_numbers = #tpu.dot_dimension_numbers<[1], [0], [0], [1], [0, 0, 1, 1], [], []>} : vector<32x16xbf16>, vector<16x256xbf16>, vector<32x256xf32> -> vector<32x256xf32>
    %cst_116 = arith.constant 0.000000e+00 : f32
    %325 = vector.broadcast %cst_116 : f32 to vector<32x256xf32>
    %326 = arith.cmpf oge, %324, %325 : vector<32x256xf32>
    %327 = vector.broadcast %314 : vector<32x1xf32> to vector<32x256xf32>
    %328 = arith.mulf %327, %324 : vector<32x256xf32>
    %329 = arith.select %326, %324, %328 : vector<32x256xi1>, vector<32x256xf32>
    %cst_117 = arith.constant dense<0.000000e+00> : vector<1x256xf32>
    %330 = tpu.matmul %3, %329, %cst_117 {dimension_numbers = #tpu.dot_dimension_numbers<[1], [0], [0], [1], [0, 0, 1, 1], [], []>} : vector<1x32xf32>, vector<32x256xf32>, vector<1x256xf32> -> vector<1x256xf32>
    %331 = arith.mulf %329, %329 : vector<32x256xf32>
    %cst_118 = arith.constant dense<0.000000e+00> : vector<1x256xf32>
    %332 = tpu.matmul %3, %331, %cst_118 {dimension_numbers = #tpu.dot_dimension_numbers<[1], [0], [0], [1], [0, 0, 1, 1], [], []>} : vector<1x32xf32>, vector<32x256xf32>, vector<1x256xf32> -> vector<1x256xf32>
    %cst_119 = arith.constant dense<0.000000e+00> : vector<1x1xf32>
    %333 = tpu.matmul %330, %4, %cst_119 {dimension_numbers = #tpu.dot_dimension_numbers<[1], [0], [0], [1], [0, 0, 1, 1], [], []>} : vector<1x256xf32>, vector<256x1xf32>, vector<1x1xf32> -> vector<1x1xf32>
    %334 = vector.extract %333[0, 0] : f32 from vector<1x1xf32>
    %cst_120 = arith.constant dense<0.000000e+00> : vector<1x1xf32>
    %335 = tpu.matmul %332, %4, %cst_120 {dimension_numbers = #tpu.dot_dimension_numbers<[1], [0], [0], [1], [0, 0, 1, 1], [], []>} : vector<1x256xf32>, vector<256x1xf32>, vector<1x1xf32> -> vector<1x1xf32>
    %336 = vector.extract %335[0, 0] : f32 from vector<1x1xf32>
    %cst_121 = arith.constant 1.22070313E-4 : f32
    %337 = arith.mulf %334, %cst_121 : f32
    %cst_122 = arith.constant 1.22070313E-4 : f32
    %338 = arith.mulf %336, %cst_122 : f32
    %339 = arith.mulf %337, %337 : f32
    %340 = arith.subf %338, %339 : f32
    %cst_123 = arith.constant 0.000000e+00 : f32
    %341 = arith.maximumf %340, %cst_123 : f32
    %cst_124 = arith.constant 1.000000e-16 : f32
    %342 = arith.addf %341, %cst_124 : f32
    %343 = math.rsqrt %342 : f32
    %344 = vector.broadcast %343 : f32 to vector<32x1xf32>
    %345 = arith.mulf %315, %344 : vector<32x1xf32>
    %346 = vector.broadcast %337 : f32 to vector<32x1xf32>
    %347 = arith.mulf %346, %345 : vector<32x1xf32>
    %348 = arith.subf %316, %347 : vector<32x1xf32>
    %349 = vector.broadcast %345 : vector<32x1xf32> to vector<32x256xf32>
    %350 = arith.mulf %329, %349 : vector<32x256xf32>
    %351 = vector.broadcast %348 : vector<32x1xf32> to vector<32x256xf32>
    %352 = arith.addf %350, %351 : vector<32x256xf32>
    %353 = vector.broadcast %318 : vector<32x1xf32> to vector<32x256xf32>
    %354 = arith.mulf %353, %352 : vector<32x256xf32>
    %c8_i32 = arith.constant 8 : i32
    %355 = vector.broadcast %c8_i32 : i32 to vector<1x256xi32>
    %356 = arith.cmpi sge, %2, %355 : vector<1x256xi32>
    %c8_i32_125 = arith.constant 8 : i32
    %357 = tpu.dynamic_rotate %352 by %c8_i32_125 dim 1 : vector<32x256xf32>, i32 -> vector<32x256xf32>
    %cst_126 = arith.constant 0.000000e+00 : f32
    %358 = vector.shape_cast %356 : vector<1x256xi1> to vector<1x256xi1>
    %359 = vector.broadcast %358 : vector<1x256xi1> to vector<32x256xi1>
    %360 = vector.broadcast %cst_126 : f32 to vector<32x256xf32>
    %361 = arith.select %359, %357, %360 : vector<32x256xi1>, vector<32x256xf32>
    %362 = vector.broadcast %317 : vector<32x1xf32> to vector<32x256xf32>
    %363 = arith.mulf %362, %361 : vector<32x256xf32>
    %364 = arith.addf %354, %363 : vector<32x256xf32>
    %c248_i32 = arith.constant 248 : i32
    %365 = vector.broadcast %c248_i32 : i32 to vector<1x256xi32>
    %366 = arith.cmpi slt, %2, %365 : vector<1x256xi32>
    %c248_i32_127 = arith.constant 248 : i32
    %367 = tpu.dynamic_rotate %352 by %c248_i32_127 dim 1 : vector<32x256xf32>, i32 -> vector<32x256xf32>
    %cst_128 = arith.constant 0.000000e+00 : f32
    %368 = vector.shape_cast %366 : vector<1x256xi1> to vector<1x256xi1>
    %369 = vector.broadcast %368 : vector<1x256xi1> to vector<32x256xi1>
    %370 = vector.broadcast %cst_128 : f32 to vector<32x256xf32>
    %371 = arith.select %369, %367, %370 : vector<32x256xi1>, vector<32x256xf32>
    %372 = vector.broadcast %319 : vector<32x1xf32> to vector<32x256xf32>
    %373 = arith.mulf %372, %371 : vector<32x256xf32>
    %374 = arith.addf %364, %373 : vector<32x256xf32>
    %cst_129 = arith.constant 0.000000e+00 : f32
    %375 = vector.broadcast %cst_129 : f32 to vector<32x256xf32>
    %376 = arith.cmpf oge, %374, %375 : vector<32x256xf32>
    %377 = vector.broadcast %320 : vector<32x1xf32> to vector<32x256xf32>
    %378 = arith.mulf %377, %374 : vector<32x256xf32>
    %379 = arith.select %376, %374, %378 : vector<32x256xi1>, vector<32x256xf32>
    %cst_130 = arith.constant dense<0.000000e+00> : vector<1x256xf32>
    %380 = tpu.matmul %3, %379, %cst_130 {dimension_numbers = #tpu.dot_dimension_numbers<[1], [0], [0], [1], [0, 0, 1, 1], [], []>} : vector<1x32xf32>, vector<32x256xf32>, vector<1x256xf32> -> vector<1x256xf32>
    %381 = arith.mulf %379, %379 : vector<32x256xf32>
    %cst_131 = arith.constant dense<0.000000e+00> : vector<1x256xf32>
    %382 = tpu.matmul %3, %381, %cst_131 {dimension_numbers = #tpu.dot_dimension_numbers<[1], [0], [0], [1], [0, 0, 1, 1], [], []>} : vector<1x32xf32>, vector<32x256xf32>, vector<1x256xf32> -> vector<1x256xf32>
    %cst_132 = arith.constant dense<0.000000e+00> : vector<1x1xf32>
    %383 = tpu.matmul %380, %4, %cst_132 {dimension_numbers = #tpu.dot_dimension_numbers<[1], [0], [0], [1], [0, 0, 1, 1], [], []>} : vector<1x256xf32>, vector<256x1xf32>, vector<1x1xf32> -> vector<1x1xf32>
    %384 = vector.extract %383[0, 0] : f32 from vector<1x1xf32>
    %cst_133 = arith.constant dense<0.000000e+00> : vector<1x1xf32>
    %385 = tpu.matmul %382, %4, %cst_133 {dimension_numbers = #tpu.dot_dimension_numbers<[1], [0], [0], [1], [0, 0, 1, 1], [], []>} : vector<1x256xf32>, vector<256x1xf32>, vector<1x1xf32> -> vector<1x1xf32>
    %386 = vector.extract %385[0, 0] : f32 from vector<1x1xf32>
    %cst_134 = arith.constant 1.22070313E-4 : f32
    %387 = arith.mulf %384, %cst_134 : f32
    %cst_135 = arith.constant 1.22070313E-4 : f32
    %388 = arith.mulf %386, %cst_135 : f32
    %389 = arith.mulf %387, %387 : f32
    %390 = arith.subf %388, %389 : f32
    %cst_136 = arith.constant 0.000000e+00 : f32
    %391 = arith.maximumf %390, %cst_136 : f32
    %cst_137 = arith.constant 1.000000e-16 : f32
    %392 = arith.addf %391, %cst_137 : f32
    %393 = math.rsqrt %392 : f32
    %c3_138 = arith.constant 3 : index
    %c0_139 = arith.constant 0 : index
    %c0_140 = arith.constant 0 : index
    %394 = vector.load %arg4[%c3_138, %c0_139, %c0_140] : memref<8x32x32xbf16, #tpu.memory_space<vmem>>, vector<1x32x32xbf16>
    %395 = vector.shape_cast %394 : vector<1x32x32xbf16> to vector<32x32xbf16>
    %396 = arith.truncf %379 : vector<32x256xf32> to vector<32x256xbf16>
    %cst_141 = arith.constant dense<0.000000e+00> : vector<32x256xf32>
    %397 = tpu.matmul %395, %396, %cst_141 {dimension_numbers = #tpu.dot_dimension_numbers<[1], [0], [0], [1], [0, 0, 1, 1], [], []>} : vector<32x32xbf16>, vector<32x256xbf16>, vector<32x256xf32> -> vector<32x256xf32>
    %c3_142 = arith.constant 3 : index
    %c0_143 = arith.constant 0 : index
    %c0_144 = arith.constant 0 : index
    %398 = vector.load %arg5[%c3_142, %c0_143, %c0_144] : memref<8x32x2xf32, #tpu.memory_space<vmem>>, vector<1x32x2xf32>
    %399 = vector.shape_cast %398 : vector<1x32x2xf32> to vector<32x2xf32>
    %400 = vector.extract_strided_slice %399 {offsets = [0, 1], sizes = [32, 1], strides = [1, 1]} : vector<32x2xf32> to vector<32x1xf32>
    %401 = arith.mulf %387, %393 : f32
    %402 = vector.extract_strided_slice %399 {offsets = [0, 0], sizes = [32, 1], strides = [1, 1]} : vector<32x2xf32> to vector<32x1xf32>
    %403 = vector.broadcast %401 : f32 to vector<32x1xf32>
    %404 = arith.mulf %403, %402 : vector<32x1xf32>
    %405 = arith.subf %400, %404 : vector<32x1xf32>
    %406 = vector.broadcast %393 : f32 to vector<32x256xf32>
    %407 = arith.mulf %397, %406 : vector<32x256xf32>
    %408 = vector.broadcast %405 : vector<32x1xf32> to vector<32x256xf32>
    %409 = arith.addf %407, %408 : vector<32x256xf32>
    %410 = vector.extract_strided_slice %409 {offsets = [0, 0], sizes = [16, 256], strides = [1, 1]} : vector<32x256xf32> to vector<16x256xf32>
    %411 = arith.addf %410, %309 : vector<16x256xf32>
    %412 = vector.extract_strided_slice %409 {offsets = [16, 0], sizes = [16, 256], strides = [1, 1]} : vector<32x256xf32> to vector<16x256xf32>
    %413 = arith.addf %311, %412 : vector<16x256xf32>
    %c4 = arith.constant 4 : index
    %c0_145 = arith.constant 0 : index
    %c0_146 = arith.constant 0 : index
    %414 = vector.load %arg3[%c4, %c0_145, %c0_146] : memref<8x32x7xf32, #tpu.memory_space<vmem>>, vector<1x32x7xf32>
    %415 = vector.shape_cast %414 : vector<1x32x7xf32> to vector<32x7xf32>
    %416 = vector.extract_strided_slice %415 {offsets = [0, 0], sizes = [32, 1], strides = [1, 1]} : vector<32x7xf32> to vector<32x1xf32>
    %417 = vector.extract_strided_slice %415 {offsets = [0, 1], sizes = [32, 1], strides = [1, 1]} : vector<32x7xf32> to vector<32x1xf32>
    %418 = vector.extract_strided_slice %415 {offsets = [0, 2], sizes = [32, 1], strides = [1, 1]} : vector<32x7xf32> to vector<32x1xf32>
    %419 = vector.extract_strided_slice %415 {offsets = [0, 3], sizes = [32, 1], strides = [1, 1]} : vector<32x7xf32> to vector<32x1xf32>
    %420 = vector.extract_strided_slice %415 {offsets = [0, 4], sizes = [32, 1], strides = [1, 1]} : vector<32x7xf32> to vector<32x1xf32>
    %421 = vector.extract_strided_slice %415 {offsets = [0, 5], sizes = [32, 1], strides = [1, 1]} : vector<32x7xf32> to vector<32x1xf32>
    %422 = vector.extract_strided_slice %415 {offsets = [0, 6], sizes = [32, 1], strides = [1, 1]} : vector<32x7xf32> to vector<32x1xf32>
    %c4_147 = arith.constant 4 : index
    %c0_148 = arith.constant 0 : index
    %c0_149 = arith.constant 0 : index
    %423 = vector.load %arg2[%c4_147, %c0_148, %c0_149] : memref<8x32x16xbf16, #tpu.memory_space<vmem>>, vector<1x32x16xbf16>
    %424 = vector.shape_cast %423 : vector<1x32x16xbf16> to vector<32x16xbf16>
    %425 = arith.truncf %411 : vector<16x256xf32> to vector<16x256xbf16>
    %cst_150 = arith.constant dense<0.000000e+00> : vector<32x256xf32>
    %426 = tpu.matmul %424, %425, %cst_150 {dimension_numbers = #tpu.dot_dimension_numbers<[1], [0], [0], [1], [0, 0, 1, 1], [], []>} : vector<32x16xbf16>, vector<16x256xbf16>, vector<32x256xf32> -> vector<32x256xf32>
    %cst_151 = arith.constant 0.000000e+00 : f32
    %427 = vector.broadcast %cst_151 : f32 to vector<32x256xf32>
    %428 = arith.cmpf oge, %426, %427 : vector<32x256xf32>
    %429 = vector.broadcast %416 : vector<32x1xf32> to vector<32x256xf32>
    %430 = arith.mulf %429, %426 : vector<32x256xf32>
    %431 = arith.select %428, %426, %430 : vector<32x256xi1>, vector<32x256xf32>
    %cst_152 = arith.constant dense<0.000000e+00> : vector<1x256xf32>
    %432 = tpu.matmul %3, %431, %cst_152 {dimension_numbers = #tpu.dot_dimension_numbers<[1], [0], [0], [1], [0, 0, 1, 1], [], []>} : vector<1x32xf32>, vector<32x256xf32>, vector<1x256xf32> -> vector<1x256xf32>
    %433 = arith.mulf %431, %431 : vector<32x256xf32>
    %cst_153 = arith.constant dense<0.000000e+00> : vector<1x256xf32>
    %434 = tpu.matmul %3, %433, %cst_153 {dimension_numbers = #tpu.dot_dimension_numbers<[1], [0], [0], [1], [0, 0, 1, 1], [], []>} : vector<1x32xf32>, vector<32x256xf32>, vector<1x256xf32> -> vector<1x256xf32>
    %cst_154 = arith.constant dense<0.000000e+00> : vector<1x1xf32>
    %435 = tpu.matmul %432, %4, %cst_154 {dimension_numbers = #tpu.dot_dimension_numbers<[1], [0], [0], [1], [0, 0, 1, 1], [], []>} : vector<1x256xf32>, vector<256x1xf32>, vector<1x1xf32> -> vector<1x1xf32>
    %436 = vector.extract %435[0, 0] : f32 from vector<1x1xf32>
    %cst_155 = arith.constant dense<0.000000e+00> : vector<1x1xf32>
    %437 = tpu.matmul %434, %4, %cst_155 {dimension_numbers = #tpu.dot_dimension_numbers<[1], [0], [0], [1], [0, 0, 1, 1], [], []>} : vector<1x256xf32>, vector<256x1xf32>, vector<1x1xf32> -> vector<1x1xf32>
    %438 = vector.extract %437[0, 0] : f32 from vector<1x1xf32>
    %cst_156 = arith.constant 1.22070313E-4 : f32
    %439 = arith.mulf %436, %cst_156 : f32
    %cst_157 = arith.constant 1.22070313E-4 : f32
    %440 = arith.mulf %438, %cst_157 : f32
    %441 = arith.mulf %439, %439 : f32
    %442 = arith.subf %440, %441 : f32
    %cst_158 = arith.constant 0.000000e+00 : f32
    %443 = arith.maximumf %442, %cst_158 : f32
    %cst_159 = arith.constant 1.000000e-16 : f32
    %444 = arith.addf %443, %cst_159 : f32
    %445 = math.rsqrt %444 : f32
    %446 = vector.broadcast %445 : f32 to vector<32x1xf32>
    %447 = arith.mulf %417, %446 : vector<32x1xf32>
    %448 = vector.broadcast %439 : f32 to vector<32x1xf32>
    %449 = arith.mulf %448, %447 : vector<32x1xf32>
    %450 = arith.subf %418, %449 : vector<32x1xf32>
    %451 = vector.broadcast %447 : vector<32x1xf32> to vector<32x256xf32>
    %452 = arith.mulf %431, %451 : vector<32x256xf32>
    %453 = vector.broadcast %450 : vector<32x1xf32> to vector<32x256xf32>
    %454 = arith.addf %452, %453 : vector<32x256xf32>
    %455 = vector.broadcast %420 : vector<32x1xf32> to vector<32x256xf32>
    %456 = arith.mulf %455, %454 : vector<32x256xf32>
    %c16_i32 = arith.constant 16 : i32
    %457 = vector.broadcast %c16_i32 : i32 to vector<1x256xi32>
    %458 = arith.cmpi sge, %2, %457 : vector<1x256xi32>
    %c16_i32_160 = arith.constant 16 : i32
    %459 = tpu.dynamic_rotate %454 by %c16_i32_160 dim 1 : vector<32x256xf32>, i32 -> vector<32x256xf32>
    %cst_161 = arith.constant 0.000000e+00 : f32
    %460 = vector.shape_cast %458 : vector<1x256xi1> to vector<1x256xi1>
    %461 = vector.broadcast %460 : vector<1x256xi1> to vector<32x256xi1>
    %462 = vector.broadcast %cst_161 : f32 to vector<32x256xf32>
    %463 = arith.select %461, %459, %462 : vector<32x256xi1>, vector<32x256xf32>
    %464 = vector.broadcast %419 : vector<32x1xf32> to vector<32x256xf32>
    %465 = arith.mulf %464, %463 : vector<32x256xf32>
    %466 = arith.addf %456, %465 : vector<32x256xf32>
    %c240_i32 = arith.constant 240 : i32
    %467 = vector.broadcast %c240_i32 : i32 to vector<1x256xi32>
    %468 = arith.cmpi slt, %2, %467 : vector<1x256xi32>
    %c240_i32_162 = arith.constant 240 : i32
    %469 = tpu.dynamic_rotate %454 by %c240_i32_162 dim 1 : vector<32x256xf32>, i32 -> vector<32x256xf32>
    %cst_163 = arith.constant 0.000000e+00 : f32
    %470 = vector.shape_cast %468 : vector<1x256xi1> to vector<1x256xi1>
    %471 = vector.broadcast %470 : vector<1x256xi1> to vector<32x256xi1>
    %472 = vector.broadcast %cst_163 : f32 to vector<32x256xf32>
    %473 = arith.select %471, %469, %472 : vector<32x256xi1>, vector<32x256xf32>
    %474 = vector.broadcast %421 : vector<32x1xf32> to vector<32x256xf32>
    %475 = arith.mulf %474, %473 : vector<32x256xf32>
    %476 = arith.addf %466, %475 : vector<32x256xf32>
    %cst_164 = arith.constant 0.000000e+00 : f32
    %477 = vector.broadcast %cst_164 : f32 to vector<32x256xf32>
    %478 = arith.cmpf oge, %476, %477 : vector<32x256xf32>
    %479 = vector.broadcast %422 : vector<32x1xf32> to vector<32x256xf32>
    %480 = arith.mulf %479, %476 : vector<32x256xf32>
    %481 = arith.select %478, %476, %480 : vector<32x256xi1>, vector<32x256xf32>
    %cst_165 = arith.constant dense<0.000000e+00> : vector<1x256xf32>
    %482 = tpu.matmul %3, %481, %cst_165 {dimension_numbers = #tpu.dot_dimension_numbers<[1], [0], [0], [1], [0, 0, 1, 1], [], []>} : vector<1x32xf32>, vector<32x256xf32>, vector<1x256xf32> -> vector<1x256xf32>
    %483 = arith.mulf %481, %481 : vector<32x256xf32>
    %cst_166 = arith.constant dense<0.000000e+00> : vector<1x256xf32>
    %484 = tpu.matmul %3, %483, %cst_166 {dimension_numbers = #tpu.dot_dimension_numbers<[1], [0], [0], [1], [0, 0, 1, 1], [], []>} : vector<1x32xf32>, vector<32x256xf32>, vector<1x256xf32> -> vector<1x256xf32>
    %cst_167 = arith.constant dense<0.000000e+00> : vector<1x1xf32>
    %485 = tpu.matmul %482, %4, %cst_167 {dimension_numbers = #tpu.dot_dimension_numbers<[1], [0], [0], [1], [0, 0, 1, 1], [], []>} : vector<1x256xf32>, vector<256x1xf32>, vector<1x1xf32> -> vector<1x1xf32>
    %486 = vector.extract %485[0, 0] : f32 from vector<1x1xf32>
    %cst_168 = arith.constant dense<0.000000e+00> : vector<1x1xf32>
    %487 = tpu.matmul %484, %4, %cst_168 {dimension_numbers = #tpu.dot_dimension_numbers<[1], [0], [0], [1], [0, 0, 1, 1], [], []>} : vector<1x256xf32>, vector<256x1xf32>, vector<1x1xf32> -> vector<1x1xf32>
    %488 = vector.extract %487[0, 0] : f32 from vector<1x1xf32>
    %cst_169 = arith.constant 1.22070313E-4 : f32
    %489 = arith.mulf %486, %cst_169 : f32
    %cst_170 = arith.constant 1.22070313E-4 : f32
    %490 = arith.mulf %488, %cst_170 : f32
    %491 = arith.mulf %489, %489 : f32
    %492 = arith.subf %490, %491 : f32
    %cst_171 = arith.constant 0.000000e+00 : f32
    %493 = arith.maximumf %492, %cst_171 : f32
    %cst_172 = arith.constant 1.000000e-16 : f32
    %494 = arith.addf %493, %cst_172 : f32
    %495 = math.rsqrt %494 : f32
    %c4_173 = arith.constant 4 : index
    %c0_174 = arith.constant 0 : index
    %c0_175 = arith.constant 0 : index
    %496 = vector.load %arg4[%c4_173, %c0_174, %c0_175] : memref<8x32x32xbf16, #tpu.memory_space<vmem>>, vector<1x32x32xbf16>
    %497 = vector.shape_cast %496 : vector<1x32x32xbf16> to vector<32x32xbf16>
    %498 = arith.truncf %481 : vector<32x256xf32> to vector<32x256xbf16>
    %cst_176 = arith.constant dense<0.000000e+00> : vector<32x256xf32>
    %499 = tpu.matmul %497, %498, %cst_176 {dimension_numbers = #tpu.dot_dimension_numbers<[1], [0], [0], [1], [0, 0, 1, 1], [], []>} : vector<32x32xbf16>, vector<32x256xbf16>, vector<32x256xf32> -> vector<32x256xf32>
    %c4_177 = arith.constant 4 : index
    %c0_178 = arith.constant 0 : index
    %c0_179 = arith.constant 0 : index
    %500 = vector.load %arg5[%c4_177, %c0_178, %c0_179] : memref<8x32x2xf32, #tpu.memory_space<vmem>>, vector<1x32x2xf32>
    %501 = vector.shape_cast %500 : vector<1x32x2xf32> to vector<32x2xf32>
    %502 = vector.extract_strided_slice %501 {offsets = [0, 1], sizes = [32, 1], strides = [1, 1]} : vector<32x2xf32> to vector<32x1xf32>
    %503 = arith.mulf %489, %495 : f32
    %504 = vector.extract_strided_slice %501 {offsets = [0, 0], sizes = [32, 1], strides = [1, 1]} : vector<32x2xf32> to vector<32x1xf32>
    %505 = vector.broadcast %503 : f32 to vector<32x1xf32>
    %506 = arith.mulf %505, %504 : vector<32x1xf32>
    %507 = arith.subf %502, %506 : vector<32x1xf32>
    %508 = vector.broadcast %495 : f32 to vector<32x256xf32>
    %509 = arith.mulf %499, %508 : vector<32x256xf32>
    %510 = vector.broadcast %507 : vector<32x1xf32> to vector<32x256xf32>
    %511 = arith.addf %509, %510 : vector<32x256xf32>
    %512 = vector.extract_strided_slice %511 {offsets = [0, 0], sizes = [16, 256], strides = [1, 1]} : vector<32x256xf32> to vector<16x256xf32>
    %513 = arith.addf %512, %411 : vector<16x256xf32>
    %514 = vector.extract_strided_slice %511 {offsets = [16, 0], sizes = [16, 256], strides = [1, 1]} : vector<32x256xf32> to vector<16x256xf32>
    %515 = arith.addf %413, %514 : vector<16x256xf32>
    %c5 = arith.constant 5 : index
    %c0_180 = arith.constant 0 : index
    %c0_181 = arith.constant 0 : index
    %516 = vector.load %arg3[%c5, %c0_180, %c0_181] : memref<8x32x7xf32, #tpu.memory_space<vmem>>, vector<1x32x7xf32>
    %517 = vector.shape_cast %516 : vector<1x32x7xf32> to vector<32x7xf32>
    %518 = vector.extract_strided_slice %517 {offsets = [0, 0], sizes = [32, 1], strides = [1, 1]} : vector<32x7xf32> to vector<32x1xf32>
    %519 = vector.extract_strided_slice %517 {offsets = [0, 1], sizes = [32, 1], strides = [1, 1]} : vector<32x7xf32> to vector<32x1xf32>
    %520 = vector.extract_strided_slice %517 {offsets = [0, 2], sizes = [32, 1], strides = [1, 1]} : vector<32x7xf32> to vector<32x1xf32>
    %521 = vector.extract_strided_slice %517 {offsets = [0, 3], sizes = [32, 1], strides = [1, 1]} : vector<32x7xf32> to vector<32x1xf32>
    %522 = vector.extract_strided_slice %517 {offsets = [0, 4], sizes = [32, 1], strides = [1, 1]} : vector<32x7xf32> to vector<32x1xf32>
    %523 = vector.extract_strided_slice %517 {offsets = [0, 5], sizes = [32, 1], strides = [1, 1]} : vector<32x7xf32> to vector<32x1xf32>
    %524 = vector.extract_strided_slice %517 {offsets = [0, 6], sizes = [32, 1], strides = [1, 1]} : vector<32x7xf32> to vector<32x1xf32>
    %c5_182 = arith.constant 5 : index
    %c0_183 = arith.constant 0 : index
    %c0_184 = arith.constant 0 : index
    %525 = vector.load %arg2[%c5_182, %c0_183, %c0_184] : memref<8x32x16xbf16, #tpu.memory_space<vmem>>, vector<1x32x16xbf16>
    %526 = vector.shape_cast %525 : vector<1x32x16xbf16> to vector<32x16xbf16>
    %527 = arith.truncf %513 : vector<16x256xf32> to vector<16x256xbf16>
    %cst_185 = arith.constant dense<0.000000e+00> : vector<32x256xf32>
    %528 = tpu.matmul %526, %527, %cst_185 {dimension_numbers = #tpu.dot_dimension_numbers<[1], [0], [0], [1], [0, 0, 1, 1], [], []>} : vector<32x16xbf16>, vector<16x256xbf16>, vector<32x256xf32> -> vector<32x256xf32>
    %cst_186 = arith.constant 0.000000e+00 : f32
    %529 = vector.broadcast %cst_186 : f32 to vector<32x256xf32>
    %530 = arith.cmpf oge, %528, %529 : vector<32x256xf32>
    %531 = vector.broadcast %518 : vector<32x1xf32> to vector<32x256xf32>
    %532 = arith.mulf %531, %528 : vector<32x256xf32>
    %533 = arith.select %530, %528, %532 : vector<32x256xi1>, vector<32x256xf32>
    %cst_187 = arith.constant dense<0.000000e+00> : vector<1x256xf32>
    %534 = tpu.matmul %3, %533, %cst_187 {dimension_numbers = #tpu.dot_dimension_numbers<[1], [0], [0], [1], [0, 0, 1, 1], [], []>} : vector<1x32xf32>, vector<32x256xf32>, vector<1x256xf32> -> vector<1x256xf32>
    %535 = arith.mulf %533, %533 : vector<32x256xf32>
    %cst_188 = arith.constant dense<0.000000e+00> : vector<1x256xf32>
    %536 = tpu.matmul %3, %535, %cst_188 {dimension_numbers = #tpu.dot_dimension_numbers<[1], [0], [0], [1], [0, 0, 1, 1], [], []>} : vector<1x32xf32>, vector<32x256xf32>, vector<1x256xf32> -> vector<1x256xf32>
    %cst_189 = arith.constant dense<0.000000e+00> : vector<1x1xf32>
    %537 = tpu.matmul %534, %4, %cst_189 {dimension_numbers = #tpu.dot_dimension_numbers<[1], [0], [0], [1], [0, 0, 1, 1], [], []>} : vector<1x256xf32>, vector<256x1xf32>, vector<1x1xf32> -> vector<1x1xf32>
    %538 = vector.extract %537[0, 0] : f32 from vector<1x1xf32>
    %cst_190 = arith.constant dense<0.000000e+00> : vector<1x1xf32>
    %539 = tpu.matmul %536, %4, %cst_190 {dimension_numbers = #tpu.dot_dimension_numbers<[1], [0], [0], [1], [0, 0, 1, 1], [], []>} : vector<1x256xf32>, vector<256x1xf32>, vector<1x1xf32> -> vector<1x1xf32>
    %540 = vector.extract %539[0, 0] : f32 from vector<1x1xf32>
    %cst_191 = arith.constant 1.22070313E-4 : f32
    %541 = arith.mulf %538, %cst_191 : f32
    %cst_192 = arith.constant 1.22070313E-4 : f32
    %542 = arith.mulf %540, %cst_192 : f32
    %543 = arith.mulf %541, %541 : f32
    %544 = arith.subf %542, %543 : f32
    %cst_193 = arith.constant 0.000000e+00 : f32
    %545 = arith.maximumf %544, %cst_193 : f32
    %cst_194 = arith.constant 1.000000e-16 : f32
    %546 = arith.addf %545, %cst_194 : f32
    %547 = math.rsqrt %546 : f32
    %548 = vector.broadcast %547 : f32 to vector<32x1xf32>
    %549 = arith.mulf %519, %548 : vector<32x1xf32>
    %550 = vector.broadcast %541 : f32 to vector<32x1xf32>
    %551 = arith.mulf %550, %549 : vector<32x1xf32>
    %552 = arith.subf %520, %551 : vector<32x1xf32>
    %553 = vector.broadcast %549 : vector<32x1xf32> to vector<32x256xf32>
    %554 = arith.mulf %533, %553 : vector<32x256xf32>
    %555 = vector.broadcast %552 : vector<32x1xf32> to vector<32x256xf32>
    %556 = arith.addf %554, %555 : vector<32x256xf32>
    %557 = vector.broadcast %522 : vector<32x1xf32> to vector<32x256xf32>
    %558 = arith.mulf %557, %556 : vector<32x256xf32>
    %c32_i32 = arith.constant 32 : i32
    %559 = vector.broadcast %c32_i32 : i32 to vector<1x256xi32>
    %560 = arith.cmpi sge, %2, %559 : vector<1x256xi32>
    %c32_i32_195 = arith.constant 32 : i32
    %561 = tpu.dynamic_rotate %556 by %c32_i32_195 dim 1 : vector<32x256xf32>, i32 -> vector<32x256xf32>
    %cst_196 = arith.constant 0.000000e+00 : f32
    %562 = vector.shape_cast %560 : vector<1x256xi1> to vector<1x256xi1>
    %563 = vector.broadcast %562 : vector<1x256xi1> to vector<32x256xi1>
    %564 = vector.broadcast %cst_196 : f32 to vector<32x256xf32>
    %565 = arith.select %563, %561, %564 : vector<32x256xi1>, vector<32x256xf32>
    %566 = vector.broadcast %521 : vector<32x1xf32> to vector<32x256xf32>
    %567 = arith.mulf %566, %565 : vector<32x256xf32>
    %568 = arith.addf %558, %567 : vector<32x256xf32>
    %c224_i32 = arith.constant 224 : i32
    %569 = vector.broadcast %c224_i32 : i32 to vector<1x256xi32>
    %570 = arith.cmpi slt, %2, %569 : vector<1x256xi32>
    %c224_i32_197 = arith.constant 224 : i32
    %571 = tpu.dynamic_rotate %556 by %c224_i32_197 dim 1 : vector<32x256xf32>, i32 -> vector<32x256xf32>
    %cst_198 = arith.constant 0.000000e+00 : f32
    %572 = vector.shape_cast %570 : vector<1x256xi1> to vector<1x256xi1>
    %573 = vector.broadcast %572 : vector<1x256xi1> to vector<32x256xi1>
    %574 = vector.broadcast %cst_198 : f32 to vector<32x256xf32>
    %575 = arith.select %573, %571, %574 : vector<32x256xi1>, vector<32x256xf32>
    %576 = vector.broadcast %523 : vector<32x1xf32> to vector<32x256xf32>
    %577 = arith.mulf %576, %575 : vector<32x256xf32>
    %578 = arith.addf %568, %577 : vector<32x256xf32>
    %cst_199 = arith.constant 0.000000e+00 : f32
    %579 = vector.broadcast %cst_199 : f32 to vector<32x256xf32>
    %580 = arith.cmpf oge, %578, %579 : vector<32x256xf32>
    %581 = vector.broadcast %524 : vector<32x1xf32> to vector<32x256xf32>
    %582 = arith.mulf %581, %578 : vector<32x256xf32>
    %583 = arith.select %580, %578, %582 : vector<32x256xi1>, vector<32x256xf32>
    %cst_200 = arith.constant dense<0.000000e+00> : vector<1x256xf32>
    %584 = tpu.matmul %3, %583, %cst_200 {dimension_numbers = #tpu.dot_dimension_numbers<[1], [0], [0], [1], [0, 0, 1, 1], [], []>} : vector<1x32xf32>, vector<32x256xf32>, vector<1x256xf32> -> vector<1x256xf32>
    %585 = arith.mulf %583, %583 : vector<32x256xf32>
    %cst_201 = arith.constant dense<0.000000e+00> : vector<1x256xf32>
    %586 = tpu.matmul %3, %585, %cst_201 {dimension_numbers = #tpu.dot_dimension_numbers<[1], [0], [0], [1], [0, 0, 1, 1], [], []>} : vector<1x32xf32>, vector<32x256xf32>, vector<1x256xf32> -> vector<1x256xf32>
    %cst_202 = arith.constant dense<0.000000e+00> : vector<1x1xf32>
    %587 = tpu.matmul %584, %4, %cst_202 {dimension_numbers = #tpu.dot_dimension_numbers<[1], [0], [0], [1], [0, 0, 1, 1], [], []>} : vector<1x256xf32>, vector<256x1xf32>, vector<1x1xf32> -> vector<1x1xf32>
    %588 = vector.extract %587[0, 0] : f32 from vector<1x1xf32>
    %cst_203 = arith.constant dense<0.000000e+00> : vector<1x1xf32>
    %589 = tpu.matmul %586, %4, %cst_203 {dimension_numbers = #tpu.dot_dimension_numbers<[1], [0], [0], [1], [0, 0, 1, 1], [], []>} : vector<1x256xf32>, vector<256x1xf32>, vector<1x1xf32> -> vector<1x1xf32>
    %590 = vector.extract %589[0, 0] : f32 from vector<1x1xf32>
    %cst_204 = arith.constant 1.22070313E-4 : f32
    %591 = arith.mulf %588, %cst_204 : f32
    %cst_205 = arith.constant 1.22070313E-4 : f32
    %592 = arith.mulf %590, %cst_205 : f32
    %593 = arith.mulf %591, %591 : f32
    %594 = arith.subf %592, %593 : f32
    %cst_206 = arith.constant 0.000000e+00 : f32
    %595 = arith.maximumf %594, %cst_206 : f32
    %cst_207 = arith.constant 1.000000e-16 : f32
    %596 = arith.addf %595, %cst_207 : f32
    %597 = math.rsqrt %596 : f32
    %c5_208 = arith.constant 5 : index
    %c0_209 = arith.constant 0 : index
    %c0_210 = arith.constant 0 : index
    %598 = vector.load %arg4[%c5_208, %c0_209, %c0_210] : memref<8x32x32xbf16, #tpu.memory_space<vmem>>, vector<1x32x32xbf16>
    %599 = vector.shape_cast %598 : vector<1x32x32xbf16> to vector<32x32xbf16>
    %600 = arith.truncf %583 : vector<32x256xf32> to vector<32x256xbf16>
    %cst_211 = arith.constant dense<0.000000e+00> : vector<32x256xf32>
    %601 = tpu.matmul %599, %600, %cst_211 {dimension_numbers = #tpu.dot_dimension_numbers<[1], [0], [0], [1], [0, 0, 1, 1], [], []>} : vector<32x32xbf16>, vector<32x256xbf16>, vector<32x256xf32> -> vector<32x256xf32>
    %c5_212 = arith.constant 5 : index
    %c0_213 = arith.constant 0 : index
    %c0_214 = arith.constant 0 : index
    %602 = vector.load %arg5[%c5_212, %c0_213, %c0_214] : memref<8x32x2xf32, #tpu.memory_space<vmem>>, vector<1x32x2xf32>
    %603 = vector.shape_cast %602 : vector<1x32x2xf32> to vector<32x2xf32>
    %604 = vector.extract_strided_slice %603 {offsets = [0, 1], sizes = [32, 1], strides = [1, 1]} : vector<32x2xf32> to vector<32x1xf32>
    %605 = arith.mulf %591, %597 : f32
    %606 = vector.extract_strided_slice %603 {offsets = [0, 0], sizes = [32, 1], strides = [1, 1]} : vector<32x2xf32> to vector<32x1xf32>
    %607 = vector.broadcast %605 : f32 to vector<32x1xf32>
    %608 = arith.mulf %607, %606 : vector<32x1xf32>
    %609 = arith.subf %604, %608 : vector<32x1xf32>
    %610 = vector.broadcast %597 : f32 to vector<32x256xf32>
    %611 = arith.mulf %601, %610 : vector<32x256xf32>
    %612 = vector.broadcast %609 : vector<32x1xf32> to vector<32x256xf32>
    %613 = arith.addf %611, %612 : vector<32x256xf32>
    %614 = vector.extract_strided_slice %613 {offsets = [0, 0], sizes = [16, 256], strides = [1, 1]} : vector<32x256xf32> to vector<16x256xf32>
    %615 = arith.addf %614, %513 : vector<16x256xf32>
    %616 = vector.extract_strided_slice %613 {offsets = [16, 0], sizes = [16, 256], strides = [1, 1]} : vector<32x256xf32> to vector<16x256xf32>
    %617 = arith.addf %515, %616 : vector<16x256xf32>
    %c6 = arith.constant 6 : index
    %c0_215 = arith.constant 0 : index
    %c0_216 = arith.constant 0 : index
    %618 = vector.load %arg3[%c6, %c0_215, %c0_216] : memref<8x32x7xf32, #tpu.memory_space<vmem>>, vector<1x32x7xf32>
    %619 = vector.shape_cast %618 : vector<1x32x7xf32> to vector<32x7xf32>
    %620 = vector.extract_strided_slice %619 {offsets = [0, 0], sizes = [32, 1], strides = [1, 1]} : vector<32x7xf32> to vector<32x1xf32>
    %621 = vector.extract_strided_slice %619 {offsets = [0, 1], sizes = [32, 1], strides = [1, 1]} : vector<32x7xf32> to vector<32x1xf32>
    %622 = vector.extract_strided_slice %619 {offsets = [0, 2], sizes = [32, 1], strides = [1, 1]} : vector<32x7xf32> to vector<32x1xf32>
    %623 = vector.extract_strided_slice %619 {offsets = [0, 3], sizes = [32, 1], strides = [1, 1]} : vector<32x7xf32> to vector<32x1xf32>
    %624 = vector.extract_strided_slice %619 {offsets = [0, 4], sizes = [32, 1], strides = [1, 1]} : vector<32x7xf32> to vector<32x1xf32>
    %625 = vector.extract_strided_slice %619 {offsets = [0, 5], sizes = [32, 1], strides = [1, 1]} : vector<32x7xf32> to vector<32x1xf32>
    %626 = vector.extract_strided_slice %619 {offsets = [0, 6], sizes = [32, 1], strides = [1, 1]} : vector<32x7xf32> to vector<32x1xf32>
    %c6_217 = arith.constant 6 : index
    %c0_218 = arith.constant 0 : index
    %c0_219 = arith.constant 0 : index
    %627 = vector.load %arg2[%c6_217, %c0_218, %c0_219] : memref<8x32x16xbf16, #tpu.memory_space<vmem>>, vector<1x32x16xbf16>
    %628 = vector.shape_cast %627 : vector<1x32x16xbf16> to vector<32x16xbf16>
    %629 = arith.truncf %615 : vector<16x256xf32> to vector<16x256xbf16>
    %cst_220 = arith.constant dense<0.000000e+00> : vector<32x256xf32>
    %630 = tpu.matmul %628, %629, %cst_220 {dimension_numbers = #tpu.dot_dimension_numbers<[1], [0], [0], [1], [0, 0, 1, 1], [], []>} : vector<32x16xbf16>, vector<16x256xbf16>, vector<32x256xf32> -> vector<32x256xf32>
    %cst_221 = arith.constant 0.000000e+00 : f32
    %631 = vector.broadcast %cst_221 : f32 to vector<32x256xf32>
    %632 = arith.cmpf oge, %630, %631 : vector<32x256xf32>
    %633 = vector.broadcast %620 : vector<32x1xf32> to vector<32x256xf32>
    %634 = arith.mulf %633, %630 : vector<32x256xf32>
    %635 = arith.select %632, %630, %634 : vector<32x256xi1>, vector<32x256xf32>
    %cst_222 = arith.constant dense<0.000000e+00> : vector<1x256xf32>
    %636 = tpu.matmul %3, %635, %cst_222 {dimension_numbers = #tpu.dot_dimension_numbers<[1], [0], [0], [1], [0, 0, 1, 1], [], []>} : vector<1x32xf32>, vector<32x256xf32>, vector<1x256xf32> -> vector<1x256xf32>
    %637 = arith.mulf %635, %635 : vector<32x256xf32>
    %cst_223 = arith.constant dense<0.000000e+00> : vector<1x256xf32>
    %638 = tpu.matmul %3, %637, %cst_223 {dimension_numbers = #tpu.dot_dimension_numbers<[1], [0], [0], [1], [0, 0, 1, 1], [], []>} : vector<1x32xf32>, vector<32x256xf32>, vector<1x256xf32> -> vector<1x256xf32>
    %cst_224 = arith.constant dense<0.000000e+00> : vector<1x1xf32>
    %639 = tpu.matmul %636, %4, %cst_224 {dimension_numbers = #tpu.dot_dimension_numbers<[1], [0], [0], [1], [0, 0, 1, 1], [], []>} : vector<1x256xf32>, vector<256x1xf32>, vector<1x1xf32> -> vector<1x1xf32>
    %640 = vector.extract %639[0, 0] : f32 from vector<1x1xf32>
    %cst_225 = arith.constant dense<0.000000e+00> : vector<1x1xf32>
    %641 = tpu.matmul %638, %4, %cst_225 {dimension_numbers = #tpu.dot_dimension_numbers<[1], [0], [0], [1], [0, 0, 1, 1], [], []>} : vector<1x256xf32>, vector<256x1xf32>, vector<1x1xf32> -> vector<1x1xf32>
    %642 = vector.extract %641[0, 0] : f32 from vector<1x1xf32>
    %cst_226 = arith.constant 1.22070313E-4 : f32
    %643 = arith.mulf %640, %cst_226 : f32
    %cst_227 = arith.constant 1.22070313E-4 : f32
    %644 = arith.mulf %642, %cst_227 : f32
    %645 = arith.mulf %643, %643 : f32
    %646 = arith.subf %644, %645 : f32
    %cst_228 = arith.constant 0.000000e+00 : f32
    %647 = arith.maximumf %646, %cst_228 : f32
    %cst_229 = arith.constant 1.000000e-16 : f32
    %648 = arith.addf %647, %cst_229 : f32
    %649 = math.rsqrt %648 : f32
    %650 = vector.broadcast %649 : f32 to vector<32x1xf32>
    %651 = arith.mulf %621, %650 : vector<32x1xf32>
    %652 = vector.broadcast %643 : f32 to vector<32x1xf32>
    %653 = arith.mulf %652, %651 : vector<32x1xf32>
    %654 = arith.subf %622, %653 : vector<32x1xf32>
    %655 = vector.broadcast %651 : vector<32x1xf32> to vector<32x256xf32>
    %656 = arith.mulf %635, %655 : vector<32x256xf32>
    %657 = vector.broadcast %654 : vector<32x1xf32> to vector<32x256xf32>
    %658 = arith.addf %656, %657 : vector<32x256xf32>
    %659 = vector.broadcast %624 : vector<32x1xf32> to vector<32x256xf32>
    %660 = arith.mulf %659, %658 : vector<32x256xf32>
    %c64_i32 = arith.constant 64 : i32
    %661 = vector.broadcast %c64_i32 : i32 to vector<1x256xi32>
    %662 = arith.cmpi sge, %2, %661 : vector<1x256xi32>
    %c64_i32_230 = arith.constant 64 : i32
    %663 = tpu.dynamic_rotate %658 by %c64_i32_230 dim 1 : vector<32x256xf32>, i32 -> vector<32x256xf32>
    %cst_231 = arith.constant 0.000000e+00 : f32
    %664 = vector.shape_cast %662 : vector<1x256xi1> to vector<1x256xi1>
    %665 = vector.broadcast %664 : vector<1x256xi1> to vector<32x256xi1>
    %666 = vector.broadcast %cst_231 : f32 to vector<32x256xf32>
    %667 = arith.select %665, %663, %666 : vector<32x256xi1>, vector<32x256xf32>
    %668 = vector.broadcast %623 : vector<32x1xf32> to vector<32x256xf32>
    %669 = arith.mulf %668, %667 : vector<32x256xf32>
    %670 = arith.addf %660, %669 : vector<32x256xf32>
    %c192_i32 = arith.constant 192 : i32
    %671 = vector.broadcast %c192_i32 : i32 to vector<1x256xi32>
    %672 = arith.cmpi slt, %2, %671 : vector<1x256xi32>
    %c192_i32_232 = arith.constant 192 : i32
    %673 = tpu.dynamic_rotate %658 by %c192_i32_232 dim 1 : vector<32x256xf32>, i32 -> vector<32x256xf32>
    %cst_233 = arith.constant 0.000000e+00 : f32
    %674 = vector.shape_cast %672 : vector<1x256xi1> to vector<1x256xi1>
    %675 = vector.broadcast %674 : vector<1x256xi1> to vector<32x256xi1>
    %676 = vector.broadcast %cst_233 : f32 to vector<32x256xf32>
    %677 = arith.select %675, %673, %676 : vector<32x256xi1>, vector<32x256xf32>
    %678 = vector.broadcast %625 : vector<32x1xf32> to vector<32x256xf32>
    %679 = arith.mulf %678, %677 : vector<32x256xf32>
    %680 = arith.addf %670, %679 : vector<32x256xf32>
    %cst_234 = arith.constant 0.000000e+00 : f32
    %681 = vector.broadcast %cst_234 : f32 to vector<32x256xf32>
    %682 = arith.cmpf oge, %680, %681 : vector<32x256xf32>
    %683 = vector.broadcast %626 : vector<32x1xf32> to vector<32x256xf32>
    %684 = arith.mulf %683, %680 : vector<32x256xf32>
    %685 = arith.select %682, %680, %684 : vector<32x256xi1>, vector<32x256xf32>
    %cst_235 = arith.constant dense<0.000000e+00> : vector<1x256xf32>
    %686 = tpu.matmul %3, %685, %cst_235 {dimension_numbers = #tpu.dot_dimension_numbers<[1], [0], [0], [1], [0, 0, 1, 1], [], []>} : vector<1x32xf32>, vector<32x256xf32>, vector<1x256xf32> -> vector<1x256xf32>
    %687 = arith.mulf %685, %685 : vector<32x256xf32>
    %cst_236 = arith.constant dense<0.000000e+00> : vector<1x256xf32>
    %688 = tpu.matmul %3, %687, %cst_236 {dimension_numbers = #tpu.dot_dimension_numbers<[1], [0], [0], [1], [0, 0, 1, 1], [], []>} : vector<1x32xf32>, vector<32x256xf32>, vector<1x256xf32> -> vector<1x256xf32>
    %cst_237 = arith.constant dense<0.000000e+00> : vector<1x1xf32>
    %689 = tpu.matmul %686, %4, %cst_237 {dimension_numbers = #tpu.dot_dimension_numbers<[1], [0], [0], [1], [0, 0, 1, 1], [], []>} : vector<1x256xf32>, vector<256x1xf32>, vector<1x1xf32> -> vector<1x1xf32>
    %690 = vector.extract %689[0, 0] : f32 from vector<1x1xf32>
    %cst_238 = arith.constant dense<0.000000e+00> : vector<1x1xf32>
    %691 = tpu.matmul %688, %4, %cst_238 {dimension_numbers = #tpu.dot_dimension_numbers<[1], [0], [0], [1], [0, 0, 1, 1], [], []>} : vector<1x256xf32>, vector<256x1xf32>, vector<1x1xf32> -> vector<1x1xf32>
    %692 = vector.extract %691[0, 0] : f32 from vector<1x1xf32>
    %cst_239 = arith.constant 1.22070313E-4 : f32
    %693 = arith.mulf %690, %cst_239 : f32
    %cst_240 = arith.constant 1.22070313E-4 : f32
    %694 = arith.mulf %692, %cst_240 : f32
    %695 = arith.mulf %693, %693 : f32
    %696 = arith.subf %694, %695 : f32
    %cst_241 = arith.constant 0.000000e+00 : f32
    %697 = arith.maximumf %696, %cst_241 : f32
    %cst_242 = arith.constant 1.000000e-16 : f32
    %698 = arith.addf %697, %cst_242 : f32
    %699 = math.rsqrt %698 : f32
    %c6_243 = arith.constant 6 : index
    %c0_244 = arith.constant 0 : index
    %c0_245 = arith.constant 0 : index
    %700 = vector.load %arg4[%c6_243, %c0_244, %c0_245] : memref<8x32x32xbf16, #tpu.memory_space<vmem>>, vector<1x32x32xbf16>
    %701 = vector.shape_cast %700 : vector<1x32x32xbf16> to vector<32x32xbf16>
    %702 = arith.truncf %685 : vector<32x256xf32> to vector<32x256xbf16>
    %cst_246 = arith.constant dense<0.000000e+00> : vector<32x256xf32>
    %703 = tpu.matmul %701, %702, %cst_246 {dimension_numbers = #tpu.dot_dimension_numbers<[1], [0], [0], [1], [0, 0, 1, 1], [], []>} : vector<32x32xbf16>, vector<32x256xbf16>, vector<32x256xf32> -> vector<32x256xf32>
    %c6_247 = arith.constant 6 : index
    %c0_248 = arith.constant 0 : index
    %c0_249 = arith.constant 0 : index
    %704 = vector.load %arg5[%c6_247, %c0_248, %c0_249] : memref<8x32x2xf32, #tpu.memory_space<vmem>>, vector<1x32x2xf32>
    %705 = vector.shape_cast %704 : vector<1x32x2xf32> to vector<32x2xf32>
    %706 = vector.extract_strided_slice %705 {offsets = [0, 1], sizes = [32, 1], strides = [1, 1]} : vector<32x2xf32> to vector<32x1xf32>
    %707 = arith.mulf %693, %699 : f32
    %708 = vector.extract_strided_slice %705 {offsets = [0, 0], sizes = [32, 1], strides = [1, 1]} : vector<32x2xf32> to vector<32x1xf32>
    %709 = vector.broadcast %707 : f32 to vector<32x1xf32>
    %710 = arith.mulf %709, %708 : vector<32x1xf32>
    %711 = arith.subf %706, %710 : vector<32x1xf32>
    %712 = vector.broadcast %699 : f32 to vector<32x256xf32>
    %713 = arith.mulf %703, %712 : vector<32x256xf32>
    %714 = vector.broadcast %711 : vector<32x1xf32> to vector<32x256xf32>
    %715 = arith.addf %713, %714 : vector<32x256xf32>
    %716 = vector.extract_strided_slice %715 {offsets = [0, 0], sizes = [16, 256], strides = [1, 1]} : vector<32x256xf32> to vector<16x256xf32>
    %717 = arith.addf %716, %615 : vector<16x256xf32>
    %718 = vector.extract_strided_slice %715 {offsets = [16, 0], sizes = [16, 256], strides = [1, 1]} : vector<32x256xf32> to vector<16x256xf32>
    %719 = arith.addf %617, %718 : vector<16x256xf32>
    %c7 = arith.constant 7 : index
    %c0_250 = arith.constant 0 : index
    %c0_251 = arith.constant 0 : index
    %720 = vector.load %arg3[%c7, %c0_250, %c0_251] : memref<8x32x7xf32, #tpu.memory_space<vmem>>, vector<1x32x7xf32>
    %721 = vector.shape_cast %720 : vector<1x32x7xf32> to vector<32x7xf32>
    %722 = vector.extract_strided_slice %721 {offsets = [0, 0], sizes = [32, 1], strides = [1, 1]} : vector<32x7xf32> to vector<32x1xf32>
    %723 = vector.extract_strided_slice %721 {offsets = [0, 1], sizes = [32, 1], strides = [1, 1]} : vector<32x7xf32> to vector<32x1xf32>
    %724 = vector.extract_strided_slice %721 {offsets = [0, 2], sizes = [32, 1], strides = [1, 1]} : vector<32x7xf32> to vector<32x1xf32>
    %725 = vector.extract_strided_slice %721 {offsets = [0, 3], sizes = [32, 1], strides = [1, 1]} : vector<32x7xf32> to vector<32x1xf32>
    %726 = vector.extract_strided_slice %721 {offsets = [0, 4], sizes = [32, 1], strides = [1, 1]} : vector<32x7xf32> to vector<32x1xf32>
    %727 = vector.extract_strided_slice %721 {offsets = [0, 5], sizes = [32, 1], strides = [1, 1]} : vector<32x7xf32> to vector<32x1xf32>
    %728 = vector.extract_strided_slice %721 {offsets = [0, 6], sizes = [32, 1], strides = [1, 1]} : vector<32x7xf32> to vector<32x1xf32>
    %c7_252 = arith.constant 7 : index
    %c0_253 = arith.constant 0 : index
    %c0_254 = arith.constant 0 : index
    %729 = vector.load %arg2[%c7_252, %c0_253, %c0_254] : memref<8x32x16xbf16, #tpu.memory_space<vmem>>, vector<1x32x16xbf16>
    %730 = vector.shape_cast %729 : vector<1x32x16xbf16> to vector<32x16xbf16>
    %731 = arith.truncf %717 : vector<16x256xf32> to vector<16x256xbf16>
    %cst_255 = arith.constant dense<0.000000e+00> : vector<32x256xf32>
    %732 = tpu.matmul %730, %731, %cst_255 {dimension_numbers = #tpu.dot_dimension_numbers<[1], [0], [0], [1], [0, 0, 1, 1], [], []>} : vector<32x16xbf16>, vector<16x256xbf16>, vector<32x256xf32> -> vector<32x256xf32>
    %cst_256 = arith.constant 0.000000e+00 : f32
    %733 = vector.broadcast %cst_256 : f32 to vector<32x256xf32>
    %734 = arith.cmpf oge, %732, %733 : vector<32x256xf32>
    %735 = vector.broadcast %722 : vector<32x1xf32> to vector<32x256xf32>
    %736 = arith.mulf %735, %732 : vector<32x256xf32>
    %737 = arith.select %734, %732, %736 : vector<32x256xi1>, vector<32x256xf32>
    %cst_257 = arith.constant dense<0.000000e+00> : vector<1x256xf32>
    %738 = tpu.matmul %3, %737, %cst_257 {dimension_numbers = #tpu.dot_dimension_numbers<[1], [0], [0], [1], [0, 0, 1, 1], [], []>} : vector<1x32xf32>, vector<32x256xf32>, vector<1x256xf32> -> vector<1x256xf32>
    %739 = arith.mulf %737, %737 : vector<32x256xf32>
    %cst_258 = arith.constant dense<0.000000e+00> : vector<1x256xf32>
    %740 = tpu.matmul %3, %739, %cst_258 {dimension_numbers = #tpu.dot_dimension_numbers<[1], [0], [0], [1], [0, 0, 1, 1], [], []>} : vector<1x32xf32>, vector<32x256xf32>, vector<1x256xf32> -> vector<1x256xf32>
    %cst_259 = arith.constant dense<0.000000e+00> : vector<1x1xf32>
    %741 = tpu.matmul %738, %4, %cst_259 {dimension_numbers = #tpu.dot_dimension_numbers<[1], [0], [0], [1], [0, 0, 1, 1], [], []>} : vector<1x256xf32>, vector<256x1xf32>, vector<1x1xf32> -> vector<1x1xf32>
    %742 = vector.extract %741[0, 0] : f32 from vector<1x1xf32>
    %cst_260 = arith.constant dense<0.000000e+00> : vector<1x1xf32>
    %743 = tpu.matmul %740, %4, %cst_260 {dimension_numbers = #tpu.dot_dimension_numbers<[1], [0], [0], [1], [0, 0, 1, 1], [], []>} : vector<1x256xf32>, vector<256x1xf32>, vector<1x1xf32> -> vector<1x1xf32>
    %744 = vector.extract %743[0, 0] : f32 from vector<1x1xf32>
    %cst_261 = arith.constant 1.22070313E-4 : f32
    %745 = arith.mulf %742, %cst_261 : f32
    %cst_262 = arith.constant 1.22070313E-4 : f32
    %746 = arith.mulf %744, %cst_262 : f32
    %747 = arith.mulf %745, %745 : f32
    %748 = arith.subf %746, %747 : f32
    %cst_263 = arith.constant 0.000000e+00 : f32
    %749 = arith.maximumf %748, %cst_263 : f32
    %cst_264 = arith.constant 1.000000e-16 : f32
    %750 = arith.addf %749, %cst_264 : f32
    %751 = math.rsqrt %750 : f32
    %752 = vector.broadcast %751 : f32 to vector<32x1xf32>
    %753 = arith.mulf %723, %752 : vector<32x1xf32>
    %754 = vector.broadcast %745 : f32 to vector<32x1xf32>
    %755 = arith.mulf %754, %753 : vector<32x1xf32>
    %756 = arith.subf %724, %755 : vector<32x1xf32>
    %757 = vector.broadcast %753 : vector<32x1xf32> to vector<32x256xf32>
    %758 = arith.mulf %737, %757 : vector<32x256xf32>
    %759 = vector.broadcast %756 : vector<32x1xf32> to vector<32x256xf32>
    %760 = arith.addf %758, %759 : vector<32x256xf32>
    %761 = vector.broadcast %726 : vector<32x1xf32> to vector<32x256xf32>
    %762 = arith.mulf %761, %760 : vector<32x256xf32>
    %c128_i32 = arith.constant 128 : i32
    %763 = vector.broadcast %c128_i32 : i32 to vector<1x256xi32>
    %764 = arith.cmpi sge, %2, %763 : vector<1x256xi32>
    %c128_i32_265 = arith.constant 128 : i32
    %765 = tpu.dynamic_rotate %760 by %c128_i32_265 dim 1 : vector<32x256xf32>, i32 -> vector<32x256xf32>
    %cst_266 = arith.constant 0.000000e+00 : f32
    %766 = vector.shape_cast %764 : vector<1x256xi1> to vector<1x256xi1>
    %767 = vector.broadcast %766 : vector<1x256xi1> to vector<32x256xi1>
    %768 = vector.broadcast %cst_266 : f32 to vector<32x256xf32>
    %769 = arith.select %767, %765, %768 : vector<32x256xi1>, vector<32x256xf32>
    %770 = vector.broadcast %725 : vector<32x1xf32> to vector<32x256xf32>
    %771 = arith.mulf %770, %769 : vector<32x256xf32>
    %772 = arith.addf %762, %771 : vector<32x256xf32>
    %c128_i32_267 = arith.constant 128 : i32
    %773 = vector.broadcast %c128_i32_267 : i32 to vector<1x256xi32>
    %774 = arith.cmpi slt, %2, %773 : vector<1x256xi32>
    %c128_i32_268 = arith.constant 128 : i32
    %775 = tpu.dynamic_rotate %760 by %c128_i32_268 dim 1 : vector<32x256xf32>, i32 -> vector<32x256xf32>
    %cst_269 = arith.constant 0.000000e+00 : f32
    %776 = vector.shape_cast %774 : vector<1x256xi1> to vector<1x256xi1>
    %777 = vector.broadcast %776 : vector<1x256xi1> to vector<32x256xi1>
    %778 = vector.broadcast %cst_269 : f32 to vector<32x256xf32>
    %779 = arith.select %777, %775, %778 : vector<32x256xi1>, vector<32x256xf32>
    %780 = vector.broadcast %727 : vector<32x1xf32> to vector<32x256xf32>
    %781 = arith.mulf %780, %779 : vector<32x256xf32>
    %782 = arith.addf %772, %781 : vector<32x256xf32>
    %cst_270 = arith.constant 0.000000e+00 : f32
    %783 = vector.broadcast %cst_270 : f32 to vector<32x256xf32>
    %784 = arith.cmpf oge, %782, %783 : vector<32x256xf32>
    %785 = vector.broadcast %728 : vector<32x1xf32> to vector<32x256xf32>
    %786 = arith.mulf %785, %782 : vector<32x256xf32>
    %787 = arith.select %784, %782, %786 : vector<32x256xi1>, vector<32x256xf32>
    %cst_271 = arith.constant dense<0.000000e+00> : vector<1x256xf32>
    %788 = tpu.matmul %3, %787, %cst_271 {dimension_numbers = #tpu.dot_dimension_numbers<[1], [0], [0], [1], [0, 0, 1, 1], [], []>} : vector<1x32xf32>, vector<32x256xf32>, vector<1x256xf32> -> vector<1x256xf32>
    %789 = arith.mulf %787, %787 : vector<32x256xf32>
    %cst_272 = arith.constant dense<0.000000e+00> : vector<1x256xf32>
    %790 = tpu.matmul %3, %789, %cst_272 {dimension_numbers = #tpu.dot_dimension_numbers<[1], [0], [0], [1], [0, 0, 1, 1], [], []>} : vector<1x32xf32>, vector<32x256xf32>, vector<1x256xf32> -> vector<1x256xf32>
    %cst_273 = arith.constant dense<0.000000e+00> : vector<1x1xf32>
    %791 = tpu.matmul %788, %4, %cst_273 {dimension_numbers = #tpu.dot_dimension_numbers<[1], [0], [0], [1], [0, 0, 1, 1], [], []>} : vector<1x256xf32>, vector<256x1xf32>, vector<1x1xf32> -> vector<1x1xf32>
    %792 = vector.extract %791[0, 0] : f32 from vector<1x1xf32>
    %cst_274 = arith.constant dense<0.000000e+00> : vector<1x1xf32>
    %793 = tpu.matmul %790, %4, %cst_274 {dimension_numbers = #tpu.dot_dimension_numbers<[1], [0], [0], [1], [0, 0, 1, 1], [], []>} : vector<1x256xf32>, vector<256x1xf32>, vector<1x1xf32> -> vector<1x1xf32>
    %794 = vector.extract %793[0, 0] : f32 from vector<1x1xf32>
    %cst_275 = arith.constant 1.22070313E-4 : f32
    %795 = arith.mulf %792, %cst_275 : f32
    %cst_276 = arith.constant 1.22070313E-4 : f32
    %796 = arith.mulf %794, %cst_276 : f32
    %797 = arith.mulf %795, %795 : f32
    %798 = arith.subf %796, %797 : f32
    %cst_277 = arith.constant 0.000000e+00 : f32
    %799 = arith.maximumf %798, %cst_277 : f32
    %cst_278 = arith.constant 1.000000e-16 : f32
    %800 = arith.addf %799, %cst_278 : f32
    %801 = math.rsqrt %800 : f32
    %c7_279 = arith.constant 7 : index
    %c0_280 = arith.constant 0 : index
    %c0_281 = arith.constant 0 : index
    %802 = vector.load %arg4[%c7_279, %c0_280, %c0_281] : memref<8x32x32xbf16, #tpu.memory_space<vmem>>, vector<1x32x32xbf16>
    %803 = vector.shape_cast %802 : vector<1x32x32xbf16> to vector<32x32xbf16>
    %804 = arith.truncf %787 : vector<32x256xf32> to vector<32x256xbf16>
    %cst_282 = arith.constant dense<0.000000e+00> : vector<32x256xf32>
    %805 = tpu.matmul %803, %804, %cst_282 {dimension_numbers = #tpu.dot_dimension_numbers<[1], [0], [0], [1], [0, 0, 1, 1], [], []>} : vector<32x32xbf16>, vector<32x256xbf16>, vector<32x256xf32> -> vector<32x256xf32>
    %c7_283 = arith.constant 7 : index
    %c0_284 = arith.constant 0 : index
    %c0_285 = arith.constant 0 : index
    %806 = vector.load %arg5[%c7_283, %c0_284, %c0_285] : memref<8x32x2xf32, #tpu.memory_space<vmem>>, vector<1x32x2xf32>
    %807 = vector.shape_cast %806 : vector<1x32x2xf32> to vector<32x2xf32>
    %808 = vector.extract_strided_slice %807 {offsets = [0, 1], sizes = [32, 1], strides = [1, 1]} : vector<32x2xf32> to vector<32x1xf32>
    %809 = arith.mulf %795, %801 : f32
    %810 = vector.extract_strided_slice %807 {offsets = [0, 0], sizes = [32, 1], strides = [1, 1]} : vector<32x2xf32> to vector<32x1xf32>
    %811 = vector.broadcast %809 : f32 to vector<32x1xf32>
    %812 = arith.mulf %811, %810 : vector<32x1xf32>
    %813 = arith.subf %808, %812 : vector<32x1xf32>
    %814 = vector.broadcast %801 : f32 to vector<32x256xf32>
    %815 = arith.mulf %805, %814 : vector<32x256xf32>
    %816 = vector.broadcast %813 : vector<32x1xf32> to vector<32x256xf32>
    %817 = arith.addf %815, %816 : vector<32x256xf32>
    %818 = vector.extract_strided_slice %817 {offsets = [0, 0], sizes = [16, 256], strides = [1, 1]} : vector<32x256xf32> to vector<16x256xf32>
    %819 = arith.addf %818, %717 : vector<16x256xf32>
    %820 = vector.extract_strided_slice %817 {offsets = [16, 0], sizes = [16, 256], strides = [1, 1]} : vector<32x256xf32> to vector<16x256xf32>
    %821 = arith.addf %719, %820 : vector<16x256xf32>
    %c0_286 = arith.constant 0 : index
    %c0_287 = arith.constant 0 : index
    %c0_288 = arith.constant 0 : index
    %822 = vector.load %arg6[%c0_286, %c0_287, %c0_288] : memref<1x16x256xf32, #tpu.memory_space<vmem>>, vector<1x16x256xf32>
    %823 = vector.shape_cast %822 : vector<1x16x256xf32> to vector<16x256xf32>
    %824 = vector.shape_cast %819 : vector<16x256xf32> to vector<1x16x256xf32>
    tpu.vector_store %arg6[%c0_286, %c0_287, %c0_288], %824 {strides = array<i32>} : memref<1x16x256xf32, #tpu.memory_space<vmem>>, vector<1x16x256xf32>,
    %c0_289 = arith.constant 0 : index
    %c0_290 = arith.constant 0 : index
    %c0_291 = arith.constant 0 : index
    %825 = vector.load %arg7[%c0_289, %c0_290, %c0_291] : memref<1x16x256xf32, #tpu.memory_space<vmem>>, vector<1x16x256xf32>
    %826 = vector.shape_cast %825 : vector<1x16x256xf32> to vector<16x256xf32>
    %827 = vector.shape_cast %821 : vector<16x256xf32> to vector<1x16x256xf32>
    tpu.vector_store %arg7[%c0_289, %c0_290, %c0_291], %827 {strides = array<i32>} : memref<1x16x256xf32, #tpu.memory_space<vmem>>, vector<1x16x256xf32>,
    return
  }
  func.func @transform_0(%arg0: i32) -> (i32, i32, i32) {
    %c0_i32 = arith.constant 0 : i32
    %c0_i32_0 = arith.constant 0 : i32
    %c0_i32_1 = arith.constant 0 : i32
    return %arg0, %c0_i32, %c0_i32_0 : i32, i32, i32
  }
  func.func @transform_1(%arg0: i32) -> (i32, i32, i32) {
    %c0_i32 = arith.constant 0 : i32
    %c0_i32_0 = arith.constant 0 : i32
    %c0_i32_1 = arith.constant 0 : i32
    %c0_i32_2 = arith.constant 0 : i32
    return %c0_i32, %c0_i32_0, %c0_i32_1 : i32, i32, i32
  }
  func.func @transform_2(%arg0: i32) -> (i32, i32, i32) {
    %c0_i32 = arith.constant 0 : i32
    %c0_i32_0 = arith.constant 0 : i32
    %c0_i32_1 = arith.constant 0 : i32
    %c0_i32_2 = arith.constant 0 : i32
    return %c0_i32, %c0_i32_0, %c0_i32_1 : i32, i32, i32
  }
  func.func @transform_3(%arg0: i32) -> (i32, i32, i32) {
    %c0_i32 = arith.constant 0 : i32
    %c0_i32_0 = arith.constant 0 : i32
    %c0_i32_1 = arith.constant 0 : i32
    %c0_i32_2 = arith.constant 0 : i32
    return %c0_i32, %c0_i32_0, %c0_i32_1 : i32, i32, i32
  }
  func.func @transform_4(%arg0: i32) -> (i32, i32, i32) {
    %c0_i32 = arith.constant 0 : i32
    %c0_i32_0 = arith.constant 0 : i32
    %c0_i32_1 = arith.constant 0 : i32
    %c0_i32_2 = arith.constant 0 : i32
    return %c0_i32, %c0_i32_0, %c0_i32_1 : i32, i32, i32
  }
  func.func @transform_5(%arg0: i32) -> (i32, i32, i32) {
    %c0_i32 = arith.constant 0 : i32
    %c0_i32_0 = arith.constant 0 : i32
    %c0_i32_1 = arith.constant 0 : i32
    return %arg0, %c0_i32, %c0_i32_0 : i32, i32, i32
  }
  func.func @transform_6(%arg0: i32) -> (i32, i32, i32) {
    %c0_i32 = arith.constant 0 : i32
    %c0_i32_0 = arith.constant 0 : i32
    %c0_i32_1 = arith.constant 0 : i32
    return %arg0, %c0_i32, %c0_i32_0 : i32, i32, i32
  }
}

</mosaic_0001>

<llo_original>
// kernel: tpu_custom_call.1
$region0: #{tpu_custom_call.1}
  #allocation0 [shape = 'u32[]', space=smem, size = 0x4, offset = 0x4, fixed_abs, tag = 'smem constant byte address 0x4 - core index']
  #allocation1 [shape = 'u32[144,128]{1,0:T(1,128)}', space=vmem, size = 0x12000, scoped, tag = 'internal scratch']
  %s0 = inlined_call_operand.vmem [shape: f32[2,16,256], index: 0, kind: input, shape index: {}]
  %s1 = inlined_call_operand.vmem [shape: bf16[8,32,16], index: 1, kind: input, shape index: {}]
  %s2 = inlined_call_operand.vmem [shape: f32[8,32,7], index: 2, kind: input, shape index: {}]
  %s3 = inlined_call_operand.vmem [shape: bf16[8,32,32], index: 3, kind: input, shape index: {}]
  %s4 = inlined_call_operand.vmem [shape: f32[8,32,2], index: 4, kind: input, shape index: {}]
  %s5 = inlined_call_operand.hbm [shape: f32[2,16,256], index: 5, kind: output, shape index: {0}]
  %s6 = inlined_call_operand.hbm [shape: f32[2,16,256], index: 6, kind: output, shape index: {1}]
  %7 = xla_tuple %s5, %s6
  %s8 = sld [smem:[#allocation0]]
  $region61: #{tpu_custom_call.1} parent=0
    _
  %s10 = ssub.s32 1, %s8
  %s11 = scalar_select 0, %s10, %s8
  $region1: #{tpu_custom_call.1} parent=0
    #allocation2 [shape = 'u8[32768]{0}', space=vmem, size = 0x8000, scoped, tag = 'output window, operand 0']
    #allocation3 [shape = 's32[2]{0}', space=sflag, size = 0x8, scoped, tag = 'scoped memory for tpu_custom_call.1']
    #allocation4 [shape = 'u8[32768]{0}', space=vmem, size = 0x8000, scoped, tag = 'output window, operand 1']
    #allocation5 [shape = 's32[2]{0}', space=sflag, size = 0x8, scoped, tag = 'scoped memory for tpu_custom_call.1']
    %12 = vsyncpa [#allocation3], 0
    %s13 = scalar_lea.sflag [#allocation3], 1
    %14 = vsyncpa %s13, 0
    %15 = vsyncpa [#allocation5], 0
    %s16 = scalar_lea.sflag [#allocation5], 1
    %17 = vsyncpa %s16, 0
    loop: start=0, step=1, limit=4
    $region2: #{tpu_custom_call.1} parent=1 // loop_pre_header
      _
    $region3: #{tpu_custom_call.1} parent=1 // loop_header
      %s19 = sphi 0, %s23
      %p20 = scmp.ge.s32.totalorder %s19, 4
      %s29 = sphi 0, %s31
      %s32 = sphi 0, %s29
      %s33 = sphi 0, %s32
      %s49 = sphi 0, %s33
      %s53 = sphi 0, %s53
      %s55 = sphi 0, %s53
      %s56 = sphi 0, %s55
      %s70 = sphi 0, %s56
      %s74 = sphi 0, %s74
      %s76 = sphi 0, %s74
      %s77 = sphi 0, %s76
      %s91 = sphi 0, %s77
      %s95 = sphi 0, %s95
      %s97 = sphi 0, %s95
      %s98 = sphi 0, %s97
      %s112 = sphi 0, %s98
      %s116 = sphi 0, %s116
      %s118 = sphi 0, %s116
      %s119 = sphi 0, %s118
      %s133 = sphi 0, %s119
      %s139 = sphi 0, %s141
      %s142 = sphi 0, %s139
      %s143 = sphi 0, %s142
      %s159 = sphi 0, %s143
      %s165 = sphi 0, %s167
      %s168 = sphi 0, %s165
      %s169 = sphi 0, %s168
      %s185 = sphi 0, %s169
    $region4: #{tpu_custom_call.1} parent=1 // loop_header_branch
      %22 = sbr.rel (%p20) target = $region8
    $region5: #{tpu_custom_call.1} parent=1 // loop_body
      %s24 = ssub.s32 %s19, 1
      %s25 = ssub.s32 %s19, 2
      %s26 = sadd.s32 %s19, 1
      %s27 = ssub.s32 %s19, %s26
      %p28 = scmp.eq.s32.totalorder %s27, 0
      %s30 = sadd.s32 %s29, 1
      %s31 = scalar_select %p28, %s29, %s30
      %p34 = pneg %p28
      %p35 = scmp.eq.s32.totalorder %s19, 1
      %p36 = por %p34, %p35
      %p37 = scmp.ne.s32.totalorder %s29, %s32
      %p38 = scmp.eq.s32.totalorder %s19, 0
      %p39 = por %p37, %p38
      %p40 = scmp.ne.s32.totalorder %s29, %s32
      %p41 = scmp.eq.s32.totalorder %s24, 1
      %p42 = por %p40, %p41
      %p43 = scmp.ne.s32.totalorder %s32, %s33
      %p44 = scmp.eq.s32.totalorder %s24, 0
      %p45 = por %p43, %p44
      %p46 = scmp.ne.s32.totalorder %s32, %s33
      %p47 = scmp.eq.s32.totalorder %s25, 1
      %p48 = por %p46, %p47
      %p50 = scmp.ne.s32.totalorder %s33, %s49
      %p51 = scmp.eq.s32.totalorder %s25, 0
      %p52 = por %p50, %p51
      %s54 = sadd.s32 %s53, 1
      %p57 = scmp.eq.s32.totalorder %s19, 1
      %p58 = scmp.ne.s32.totalorder %s53, %s55
      %p59 = scmp.eq.s32.totalorder %s19, 0
      %p60 = por %p58, %p59
      %p61 = scmp.ne.s32.totalorder %s53, %s55
      %p62 = scmp.eq.s32.totalorder %s24, 1
      %p63 = por %p61, %p62
      %p64 = scmp.ne.s32.totalorder %s55, %s56
      %p65 = scmp.eq.s32.totalorder %s24, 0
      %p66 = por %p64, %p65
      %p67 = scmp.ne.s32.totalorder %s55, %s56
      %p68 = scmp.eq.s32.totalorder %s25, 1
      %p69 = por %p67, %p68
      %p71 = scmp.ne.s32.totalorder %s56, %s70
      %p72 = scmp.eq.s32.totalorder %s25, 0
      %p73 = por %p71, %p72
      %s75 = sadd.s32 %s74, 1
      %p78 = scmp.eq.s32.totalorder %s19, 1
      %p79 = scmp.ne.s32.totalorder %s74, %s76
      %p80 = scmp.eq.s32.totalorder %s19, 0
      %p81 = por %p79, %p80
      %p82 = scmp.ne.s32.totalorder %s74, %s76
      %p83 = scmp.eq.s32.totalorder %s24, 1
      %p84 = por %p82, %p83
      %p85 = scmp.ne.s32.totalorder %s76, %s77
      %p86 = scmp.eq.s32.totalorder %s24, 0
      %p87 = por %p85, %p86
      %p88 = scmp.ne.s32.totalorder %s76, %s77
      %p89 = scmp.eq.s32.totalorder %s25, 1
      %p90 = por %p88, %p89
      %p92 = scmp.ne.s32.totalorder %s77, %s91
      %p93 = scmp.eq.s32.totalorder %s25, 0
      %p94 = por %p92, %p93
      %s96 = sadd.s32 %s95, 1
      %p99 = scmp.eq.s32.totalorder %s19, 1
      %p100 = scmp.ne.s32.totalorder %s95, %s97
      %p101 = scmp.eq.s32.totalorder %s19, 0
      %p102 = por %p100, %p101
      %p103 = scmp.ne.s32.totalorder %s95, %s97
      %p104 = scmp.eq.s32.totalorder %s24, 1
      %p105 = por %p103, %p104
      %p106 = scmp.ne.s32.totalorder %s97, %s98
      %p107 = scmp.eq.s32.totalorder %s24, 0
      %p108 = por %p106, %p107
      %p109 = scmp.ne.s32.totalorder %s97, %s98
      %p110 = scmp.eq.s32.totalorder %s25, 1
      %p111 = por %p109, %p110
      %p113 = scmp.ne.s32.totalorder %s98, %s112
      %p114 = scmp.eq.s32.totalorder %s25, 0
      %p115 = por %p113, %p114
      %s117 = sadd.s32 %s116, 1
      %p120 = scmp.eq.s32.totalorder %s19, 1
      %p121 = scmp.ne.s32.totalorder %s116, %s118
      %p122 = scmp.eq.s32.totalorder %s19, 0
      %p123 = por %p121, %p122
      %p124 = scmp.ne.s32.totalorder %s116, %s118
      %p125 = scmp.eq.s32.totalorder %s24, 1
      %p126 = por %p124, %p125
      %p127 = scmp.ne.s32.totalorder %s118, %s119
      %p128 = scmp.eq.s32.totalorder %s24, 0
      %p129 = por %p127, %p128
      %p130 = scmp.ne.s32.totalorder %s118, %s119
      %p131 = scmp.eq.s32.totalorder %s25, 1
      %p132 = por %p130, %p131
      %p134 = scmp.ne.s32.totalorder %s119, %s133
      %p135 = scmp.eq.s32.totalorder %s25, 0
      %p136 = por %p134, %p135
      %s137 = ssub.s32 %s19, %s26
      %p138 = scmp.eq.s32.totalorder %s137, 0
      %s140 = sadd.s32 %s139, 1
      %s141 = scalar_select %p138, %s139, %s140
      %p144 = pneg %p138
      %p145 = scmp.eq.s32.totalorder %s19, 1
      %p146 = por %p144, %p145
      %p147 = scmp.ne.s32.totalorder %s139, %s142
      %p148 = scmp.eq.s32.totalorder %s19, 0
      %p149 = por %p147, %p148
      %p150 = scmp.ne.s32.totalorder %s139, %s142
      %p151 = scmp.eq.s32.totalorder %s24, 1
      %p152 = por %p150, %p151
      %p153 = scmp.ne.s32.totalorder %s142, %s143
      %p154 = scmp.eq.s32.totalorder %s24, 0
      %p155 = por %p153, %p154
      %p156 = scmp.ne.s32.totalorder %s142, %s143
      %p157 = scmp.eq.s32.totalorder %s25, 1
      %p158 = por %p156, %p157
      %p160 = scmp.ne.s32.totalorder %s143, %s159
      %p161 = scmp.eq.s32.totalorder %s25, 0
      %p162 = por %p160, %p161
      %s163 = ssub.s32 %s19, %s26
      %p164 = scmp.eq.s32.totalorder %s163, 0
      %s166 = sadd.s32 %s165, 1
      %s167 = scalar_select %p164, %s165, %s166
      %p170 = pneg %p164
      %p171 = scmp.eq.s32.totalorder %s19, 1
      %p172 = por %p170, %p171
      %p173 = scmp.ne.s32.totalorder %s165, %s168
      %p174 = scmp.eq.s32.totalorder %s19, 0
      %p175 = por %p173, %p174
      %p176 = scmp.ne.s32.totalorder %s165, %s168
      %p177 = scmp.eq.s32.totalorder %s24, 1
      %p178 = por %p176, %p177
      %p179 = scmp.ne.s32.totalorder %s168, %s169
      %p180 = scmp.eq.s32.totalorder %s24, 0
      %p181 = por %p179, %p180
      %p182 = scmp.ne.s32.totalorder %s168, %s169
      %p183 = scmp.eq.s32.totalorder %s25, 1
      %p184 = por %p182, %p183
      %p186 = scmp.ne.s32.totalorder %s169, %s185
      %p187 = scmp.eq.s32.totalorder %s25, 0
      %p188 = por %p186, %p187
      %p189 = scmp.le.s32.totalorder 1, %s19
      %p190 = scmp.lt.s32.totalorder %s19, 3
      %p191 = pnand %p189, %p190
      %p192 = pneg %p191
      // Predicated region
      $region9: #{tpu_custom_call.1} parent=5 // pred_check
        _
      $region10: #{tpu_custom_call.1} parent=5 // pred_check_branch
        %194 = sbr.rel (%p191) target = $region12
      $region11: #{tpu_custom_call.1} parent=5 // pred_region
        %s195 = ssub.s32 %s19, 1
        // Predicated region
        $region13: #{tpu_custom_call.1} parent=11 // pred_check
          %p196 = pneg %p66
        $region14: #{tpu_custom_call.1} parent=11 // pred_check_branch
          %198 = sbr.rel (%p196) target = $region16
        $region15: #{tpu_custom_call.1} parent=11 // pred_region
          _
        $region16: #{tpu_custom_call.1} parent=11 // pred_fallthru
          _
        // Predicated region
        $region17: #{tpu_custom_call.1} parent=11 // pred_check
          %p199 = pneg %p87
        $region18: #{tpu_custom_call.1} parent=11 // pred_check_branch
          %201 = sbr.rel (%p199) target = $region20
        $region19: #{tpu_custom_call.1} parent=11 // pred_region
          _
        $region20: #{tpu_custom_call.1} parent=11 // pred_fallthru
          _
        // Predicated region
        $region21: #{tpu_custom_call.1} parent=11 // pred_check
          %p202 = pneg %p108
        $region22: #{tpu_custom_call.1} parent=11 // pred_check_branch
          %204 = sbr.rel (%p202) target = $region24
        $region23: #{tpu_custom_call.1} parent=11 // pred_region
          _
        $region24: #{tpu_custom_call.1} parent=11 // pred_fallthru
          _
        // Predicated region
        $region25: #{tpu_custom_call.1} parent=11 // pred_check
          %p205 = pneg %p129
        $region26: #{tpu_custom_call.1} parent=11 // pred_check_branch
          %207 = sbr.rel (%p205) target = $region28
        $region27: #{tpu_custom_call.1} parent=11 // pred_region
          _
        $region28: #{tpu_custom_call.1} parent=11 // pred_fallthru
          _
      $region12: #{tpu_custom_call.1} parent=5 // pred_fallthru
        _
      %p208 = scmp.lt.s32.totalorder %s19, 2
      // Predicated region
      $region29: #{tpu_custom_call.1} parent=5 // pred_check
        %p209 = pneg %p208
      $region30: #{tpu_custom_call.1} parent=5 // pred_check_branch
        %211 = sbr.rel (%p209) target = $region32
      $region31: #{tpu_custom_call.1} parent=5 // pred_region
        // Predicated region
        $region33: #{tpu_custom_call.1} parent=31 // pred_check
          %p212 = pneg %p39
        $region34: #{tpu_custom_call.1} parent=31 // pred_check_branch
          %214 = sbr.rel (%p212) target = $region36
        $region35: #{tpu_custom_call.1} parent=31 // pred_region
          %p215 = scmp.lt.s32.totalorder %s19, 1
          %s216 = scalar_select %p215, %s19, 1
          %s217 = smul.addr %s216, 4
          %s218 = smul.addr %s217, 8
          %s219 = scalar_lea.vmem %s0, %s218
        $region36: #{tpu_custom_call.1} parent=31 // pred_fallthru
          _
      $region32: #{tpu_custom_call.1} parent=5 // pred_fallthru
        _
      %p220 = scmp.le.s32.totalorder 1, %s19
      %p221 = scmp.lt.s32.totalorder %s19, 3
      %p222 = pnand %p220, %p221
      %p223 = pneg %p222
      // Predicated region
      $region37: #{tpu_custom_call.1} parent=5 // pred_check
        _
      $region38: #{tpu_custom_call.1} parent=5 // pred_check_branch
        %225 = sbr.rel (%p222) target = $region40
      $region39: #{tpu_custom_call.1} parent=5 // pred_region
        %s226 = ssub.s32 %s19, 1
        %p227 = scmp.lt.s32.totalorder %s24, 1
        %s228 = scalar_select %p227, %s24, 1
        %s229 = smul.addr %s228, 4
        %s230 = smul.addr %s229, 8
        %s231 = scalar_lea.vmem %s0, %s230
        %p232 = pneg %p45
        %p233 = pneg %p42
        %p234 = pneg %p66
        %p235 = pneg %p63
        %p236 = pneg %p87
        %p237 = pneg %p84
        %p238 = pneg %p108
        %p239 = pneg %p105
        %p240 = pneg %p129
        %p241 = pneg %p126
        %p242 = pneg %p155
        %p243 = pneg %p152
        %s244 = sand.u32 %s142, 1
        %s245 = scalar_lea.sflag [#allocation3], %s244
        %s246 = sand.u32 %s142, 1
        %s247 = smul.addr %s246, 32
        %s248 = scalar_lea.vmem [#allocation2], %s247
        %p249 = pneg %p181
        %p250 = pneg %p178
        %s251 = sand.u32 %s168, 1
        %s252 = scalar_lea.sflag [#allocation5], %s251
        %s253 = sand.u32 %s168, 1
        %s254 = smul.addr %s253, 32
        %s255 = scalar_lea.vmem [#allocation4], %s254
        %p256 = scmp.lt.s32.totalorder %s24, 1
        %s257 = scalar_select %p256, %s24, 1
        %s258 = smul.addr %s257, 4
        %s259 = smul.addr %s258, 8
        %s260 = scalar_lea.vmem %s0, %s259
        %v262 = vld [vmem:[%s260] sm:$0xff]
        %v263 = vld [vmem:[%s260 + $0x8] sm:$0xff]
        %v264 = vld [vmem:[%s260 + $0x10] sm:$0xff]
        %v265 = vld [vmem:[%s260 + $0x18] sm:$0xff]
        %v266 = vlaneseq
        %v267 = vand.u32 %v266, 127
        %v268 = vadd.s32 %v267, 128
        %v269 = vld [vmem:[%s2] sm:$0xff]
        %v270 = vld [vmem:[%s2 + $0x8] sm:$0xff]
        %v271 = vld [vmem:[%s2 + $0x10] sm:$0xff]
        %v272 = vld [vmem:[%s2 + $0x18] sm:$0xff]
        %v273 = vld [vmem:[%s1] sm:$0xf]
        %v274 = vld [vmem:[%s1 + $0x4] sm:$0xf]
        %v275 = vld [vmem:[%s1 + $0x8] sm:$0xf]
        %v276 = vld [vmem:[%s1 + $0xc] sm:$0xf]
        %v277 = vpack.c.bf16 %v264, %v262
        %v278 = vpack.c.bf16 %v265, %v263
        %v283 = vunpack.c.l.b16 %v273
        %v284 = vunpack.c.l.b16 %v274
        %v285 = vunpack.c.l.b16 %v275
        %v286 = vunpack.c.l.b16 %v276
        %v287 = vpack.c.b16 %v284, %v283
        %v288 = vpack.c.b16 %v286, %v285
        %vm289 = vcmask 130048
        %v291 = vsel %vm289, %v287, 0
        %v294 = vsel %vm289, %v288, 0
        %296 = vmatprep.subr.bf16.mxu0 %v278
        %297 = vmatpush1.bf16.msra.mxu0 %v277
        %298 = vmatprep.subr.bf16.mxu0 0
        %299 = vmatpush1.bf16.msra.mxu0 0
        %300 = vmatprep.subr.bf16.mxu0 0
        %301 = vmatpush1.bf16.msra.mxu0 0
        %302 = vmatprep.subr.bf16.mxu0 0
        %303 = vmatpush1.bf16.msra.mxu0 0
        %304 = vmatprep.subr.bf16.mxu0 0
        %305 = vmatpush1.bf16.msra.mxu0 0
        %306 = vmatprep.subr.bf16.mxu0 0
        %307 = vmatpush1.bf16.msra.mxu0 0
        %308 = vmatprep.subr.bf16.mxu0 0
        %309 = vmatpush1.bf16.msra.mxu0 0
        %310 = vmatprep.subr.bf16.mxu0 0
        %311 = vmatpush1.bf16.msra.mxu0 0
        %312 = vmatprep.subr.bf16.mxu0 0
        %313 = vmatpush1.bf16.msra.mxu0 0
        %314 = vmatprep.subr.bf16.mxu0 0
        %315 = vmatpush1.bf16.msra.mxu0 0
        %316 = vmatprep.subr.bf16.mxu0 0
        %317 = vmatpush1.bf16.msra.mxu0 0
        %318 = vmatprep.subr.bf16.mxu0 0
        %319 = vmatpush1.bf16.msra.mxu0 0
        %320 = vmatprep.subr.bf16.mxu0 0
        %321 = vmatpush1.bf16.msra.mxu0 0
        %322 = vmatprep.subr.bf16.mxu0 0
        %323 = vmatpush1.bf16.msra.mxu0 0
        %324 = vmatprep.subr.bf16.mxu0 0
        %325 = vmatpush1.bf16.msra.mxu0 0
        %326 = vmatprep.subr.bf16.mxu0 0
        %327 = vmatpush1.bf16.msra.mxu0 0
        %328 = vmatprep.mubr.bf16.mxu0 0
        %329 = vmatmul.mubr.bf16.gmra.mrb[0].mxu0 %v291
        %v330 = vpop.f32.mrb[0].mxu0
        %v331 = vadd.f32 0.0, %v330
        %v332 = vpop.f32.mrb[0].mxu0
        %v333 = vadd.f32 0.0, %v332
        %v334 = vpop.f32.mrb[0].mxu0
        %v335 = vadd.f32 0.0, %v334
        %v336 = vpop.f32.mrb[0].mxu0
        %v337 = vadd.f32 0.0, %v336
        %338 = vmatprep.mubr.bf16.mxu0 0
        %339 = vmatmul.mubr.bf16.gmra.mrb[0].mxu0 %v294
        %v340 = vpop.f32.mrb[0].mxu0
        %v341 = vadd.f32 0.0, %v340
        %v342 = vpop.f32.mrb[0].mxu0
        %v343 = vadd.f32 0.0, %v342
        %v344 = vpop.f32.mrb[0].mxu0
        %v345 = vadd.f32 0.0, %v344
        %v346 = vpop.f32.mrb[0].mxu0
        %v347 = vadd.f32 0.0, %v346
        %348 = vdwg.mxu0
        %vm349 = vcmp.ge.f32.partialorder %v331, 0.0
        %vm350 = vcmp.ge.f32.partialorder %v333, 0.0
        %vm351 = vcmp.ge.f32.partialorder %v335, 0.0
        %vm352 = vcmp.ge.f32.partialorder %v337, 0.0
        %vm353 = vcmp.ge.f32.partialorder %v341, 0.0
        %vm354 = vcmp.ge.f32.partialorder %v343, 0.0
        %vm355 = vcmp.ge.f32.partialorder %v345, 0.0
        %vm356 = vcmp.ge.f32.partialorder %v347, 0.0
        %358 = vset.pattern.permute.xlu0 0
        %359 = vperm.xlu0 %358, %v269
        %v360 = vpop.permute.xlu0 %359
        %363 = vset.pattern.permute.xlu0 0
        %364 = vperm.xlu0 %363, %v270
        %v365 = vpop.permute.xlu0 %364
        %368 = vset.pattern.permute.xlu0 0
        %369 = vperm.xlu0 %368, %v271
        %v370 = vpop.permute.xlu0 %369
        %373 = vset.pattern.permute.xlu0 0
        %374 = vperm.xlu0 %373, %v272
        %v375 = vpop.permute.xlu0 %374
        %v377 = vmul.f32 %v360, %v331
        %v378 = vmul.f32 %v360, %v333
        %v379 = vmul.f32 %v365, %v335
        %v380 = vmul.f32 %v365, %v337
        %v381 = vmul.f32 %v370, %v341
        %v382 = vmul.f32 %v370, %v343
        %v383 = vmul.f32 %v375, %v345
        %v384 = vmul.f32 %v375, %v347
        %v385 = vsel %vm349, %v331, %v377
        %v386 = vsel %vm350, %v333, %v378
        %v387 = vsel %vm351, %v335, %v379
        %v388 = vsel %vm352, %v337, %v380
        %v389 = vsel %vm353, %v341, %v381
        %v390 = vsel %vm354, %v343, %v382
        %v391 = vsel %vm355, %v345, %v383
        %v392 = vsel %vm356, %v347, %v384
        %vm393 = vcmask 261120
        %v395 = vsel %vm393, 1.0, 0
        %397 = vmatprep.subr.mxu0 %v386
        %398 = vmatpush1.msra.mxu0 %v385
        %399 = vmatprep.subr.mxu0 %v388
        %400 = vmatpush1.msra.mxu0 %v387
        %401 = vmatprep.subr.mxu0 %v390
        %402 = vmatpush1.msra.mxu0 %v389
        %403 = vmatprep.subr.mxu0 %v392
        %404 = vmatpush1.msra.mxu0 %v391
        %405 = vmatprep.subr.mxu0 0.0
        %406 = vmatpush1.msra.mxu0 0.0
        %407 = vmatprep.subr.mxu0 0.0
        %408 = vmatpush1.msra.mxu0 0.0
        %409 = vmatprep.subr.mxu0 0.0
        %410 = vmatpush1.msra.mxu0 0.0
        %411 = vmatprep.subr.mxu0 0.0
        %412 = vmatpush1.msra.mxu0 0.0
        %413 = vmatprep.subr.mxu0 0.0
        %414 = vmatpush1.msra.mxu0 0.0
        %415 = vmatprep.subr.mxu0 0.0
        %416 = vmatpush1.msra.mxu0 0.0
        %417 = vmatprep.subr.mxu0 0.0
        %418 = vmatpush1.msra.mxu0 0.0
        %419 = vmatprep.subr.mxu0 0.0
        %420 = vmatpush1.msra.mxu0 0.0
        %421 = vmatprep.subr.mxu0 0.0
        %422 = vmatpush1.msra.mxu0 0.0
        %423 = vmatprep.subr.mxu0 0.0
        %424 = vmatpush1.msra.mxu0 0.0
        %425 = vmatprep.subr.mxu0 0.0
        %426 = vmatpush1.msra.mxu0 0.0
        %427 = vmatprep.subr.mxu0 0.0
        %428 = vmatpush1.msra.mxu0 0.0
        %429 = vmatprep.subr.mxu0 0.0
        %430 = vmatpush1.msra.mxu0 0.0
        %431 = vmatprep.subr.mxu0 0.0
        %432 = vmatpush1.msra.mxu0 0.0
        %433 = vmatprep.subr.mxu0 0.0
        %434 = vmatpush1.msra.mxu0 0.0
        %435 = vmatprep.subr.mxu0 0.0
        %436 = vmatpush1.msra.mxu0 0.0
        %437 = vmatprep.subr.mxu0 0.0
        %438 = vmatpush1.msra.mxu0 0.0
        %439 = vmatprep.subr.mxu0 0.0
        %440 = vmatpush1.msra.mxu0 0.0
        %441 = vmatprep.subr.mxu0 0.0
        %442 = vmatpush1.msra.mxu0 0.0
        %443 = vmatprep.subr.mxu0 0.0
        %444 = vmatpush1.msra.mxu0 0.0
        %445 = vmatprep.subr.mxu0 0.0
        %446 = vmatpush1.msra.mxu0 0.0
        %447 = vmatprep.subr.mxu0 0.0
        %448 = vmatpush1.msra.mxu0 0.0
        %449 = vmatprep.subr.mxu0 0.0
        %450 = vmatpush1.msra.mxu0 0.0
        %451 = vmatprep.subr.mxu0 0.0
        %452 = vmatpush1.msra.mxu0 0.0
        %453 = vmatprep.subr.mxu0 0.0
        %454 = vmatpush1.msra.mxu0 0.0
        %455 = vmatprep.subr.mxu0 0.0
        %456 = vmatpush1.msra.mxu0 0.0
        %457 = vmatprep.subr.mxu0 0.0
        %458 = vmatpush1.msra.mxu0 0.0
        %459 = vmatprep.subr.mxu0 0.0
        %460 = vmatpush1.msra.mxu0 0.0
        %461 = vmatprep.mubr.f32.mxu0 0.0
        %462 = vmatmul.mubr.f32.gmra.mrb[0].mxu0 %v395
        %v463 = vpop.f32.mrb[0].mxu0
        %v464 = vadd.f32 0.0, %v463
        %v465 = vpop.f32.mrb[0].mxu0
        %v466 = vadd.f32 0.0, %v465
        %467 = vdwg.mxu0
        %v468 = vmul.f32 %v385, %v385
        %v469 = vmul.f32 %v386, %v386
        %v470 = vmul.f32 %v387, %v387
        %v471 = vmul.f32 %v388, %v388
        %v472 = vmul.f32 %v389, %v389
        %v473 = vmul.f32 %v390, %v390
        %v474 = vmul.f32 %v391, %v391
        %v475 = vmul.f32 %v392, %v392
        %476 = vmatprep.subr.mxu0 %v469
        %477 = vmatpush1.msra.mxu0 %v468
        %478 = vmatprep.subr.mxu0 %v471
        %479 = vmatpush1.msra.mxu0 %v470
        %480 = vmatprep.subr.mxu0 %v473
        %481 = vmatpush1.msra.mxu0 %v472
        %482 = vmatprep.subr.mxu0 %v475
        %483 = vmatpush1.msra.mxu0 %v474
        %484 = vmatprep.subr.mxu0 0.0
        %485 = vmatpush1.msra.mxu0 0.0
        %486 = vmatprep.subr.mxu0 0.0
        %487 = vmatpush1.msra.mxu0 0.0
        %488 = vmatprep.subr.mxu0 0.0
        %489 = vmatpush1.msra.mxu0 0.0
        %490 = vmatprep.subr.mxu0 0.0
        %491 = vmatpush1.msra.mxu0 0.0
        %492 = vmatprep.subr.mxu0 0.0
        %493 = vmatpush1.msra.mxu0 0.0
        %494 = vmatprep.subr.mxu0 0.0
        %495 = vmatpush1.msra.mxu0 0.0
        %496 = vmatprep.subr.mxu0 0.0
        %497 = vmatpush1.msra.mxu0 0.0
        %498 = vmatprep.subr.mxu0 0.0
        %499 = vmatpush1.msra.mxu0 0.0
        %500 = vmatprep.subr.mxu0 0.0
        %501 = vmatpush1.msra.mxu0 0.0
        %502 = vmatprep.subr.mxu0 0.0
        %503 = vmatpush1.msra.mxu0 0.0
        %504 = vmatprep.subr.mxu0 0.0
        %505 = vmatpush1.msra.mxu0 0.0
        %506 = vmatprep.subr.mxu0 0.0
        %507 = vmatpush1.msra.mxu0 0.0
        %508 = vmatprep.subr.mxu0 0.0
        %509 = vmatpush1.msra.mxu0 0.0
        %510 = vmatprep.subr.mxu0 0.0
        %511 = vmatpush1.msra.mxu0 0.0
        %512 = vmatprep.subr.mxu0 0.0
        %513 = vmatpush1.msra.mxu0 0.0
        %514 = vmatprep.subr.mxu0 0.0
        %515 = vmatpush1.msra.mxu0 0.0
        %516 = vmatprep.subr.mxu0 0.0
        %517 = vmatpush1.msra.mxu0 0.0
        %518 = vmatprep.subr.mxu0 0.0
        %519 = vmatpush1.msra.mxu0 0.0
        %520 = vmatprep.subr.mxu0 0.0
        %521 = vmatpush1.msra.mxu0 0.0
        %522 = vmatprep.subr.mxu0 0.0
        %523 = vmatpush1.msra.mxu0 0.0
        %524 = vmatprep.subr.mxu0 0.0
        %525 = vmatpush1.msra.mxu0 0.0
        %526 = vmatprep.subr.mxu0 0.0
        %527 = vmatpush1.msra.mxu0 0.0
        %528 = vmatprep.subr.mxu0 0.0
        %529 = vmatpush1.msra.mxu0 0.0
        %530 = vmatprep.subr.mxu0 0.0
        %531 = vmatpush1.msra.mxu0 0.0
        %532 = vmatprep.subr.mxu0 0.0
        %533 = vmatpush1.msra.mxu0 0.0
        %534 = vmatprep.subr.mxu0 0.0
        %535 = vmatpush1.msra.mxu0 0.0
        %536 = vmatprep.subr.mxu0 0.0
        %537 = vmatpush1.msra.mxu0 0.0
        %538 = vmatprep.subr.mxu0 0.0
        %539 = vmatpush1.msra.mxu0 0.0
        %540 = vmatprep.mubr.f32.mxu0 0.0
        %541 = vmatmul.mubr.f32.gmra.mrb[0].mxu0 %v395
        %v542 = vpop.f32.mrb[0].mxu0
        %v543 = vadd.f32 0.0, %v542
        %v544 = vpop.f32.mrb[0].mxu0
        %v545 = vadd.f32 0.0, %v544
        %546 = vdwg.mxu0
        %547 = vmatprep.subr.mxu0 0.0
        %548 = vmatpush1.msra.mxu0 1.0
        %549 = vmatprep.subr.mxu0 0.0
        %550 = vmatpush1.msra.mxu0 1.0
        %551 = vmatprep.subr.mxu0 0.0
        %552 = vmatpush1.msra.mxu0 1.0
        %553 = vmatprep.subr.mxu0 0.0
        %554 = vmatpush1.msra.mxu0 1.0
        %555 = vmatprep.subr.mxu0 0.0
        %556 = vmatpush1.msra.mxu0 1.0
        %557 = vmatprep.subr.mxu0 0.0
        %558 = vmatpush1.msra.mxu0 1.0
        %559 = vmatprep.subr.mxu0 0.0
        %560 = vmatpush1.msra.mxu0 1.0
        %561 = vmatprep.subr.mxu0 0.0
        %562 = vmatpush1.msra.mxu0 1.0
        %563 = vmatprep.subr.mxu0 0.0
        %564 = vmatpush1.msra.mxu0 1.0
        %565 = vmatprep.subr.mxu0 0.0
        %566 = vmatpush1.msra.mxu0 1.0
        %567 = vmatprep.subr.mxu0 0.0
        %568 = vmatpush1.msra.mxu0 1.0
        %569 = vmatprep.subr.mxu0 0.0
        %570 = vmatpush1.msra.mxu0 1.0
        %571 = vmatprep.subr.mxu0 0.0
        %572 = vmatpush1.msra.mxu0 1.0
        %573 = vmatprep.subr.mxu0 0.0
        %574 = vmatpush1.msra.mxu0 1.0
        %575 = vmatprep.subr.mxu0 0.0
        %576 = vmatpush1.msra.mxu0 1.0
        %577 = vmatprep.subr.mxu0 0.0
        %578 = vmatpush1.msra.mxu0 1.0
        %579 = vmatprep.subr.mxu0 0.0
        %580 = vmatpush1.msra.mxu0 1.0
        %581 = vmatprep.subr.mxu0 0.0
        %582 = vmatpush1.msra.mxu0 1.0
        %583 = vmatprep.subr.mxu0 0.0
        %584 = vmatpush1.msra.mxu0 1.0
        %585 = vmatprep.subr.mxu0 0.0
        %586 = vmatpush1.msra.mxu0 1.0
        %587 = vmatprep.subr.mxu0 0.0
        %588 = vmatpush1.msra.mxu0 1.0
        %589 = vmatprep.subr.mxu0 0.0
        %590 = vmatpush1.msra.mxu0 1.0
        %591 = vmatprep.subr.mxu0 0.0
        %592 = vmatpush1.msra.mxu0 1.0
        %593 = vmatprep.subr.mxu0 0.0
        %594 = vmatpush1.msra.mxu0 1.0
        %595 = vmatprep.subr.mxu0 0.0
        %596 = vmatpush1.msra.mxu0 1.0
        %597 = vmatprep.subr.mxu0 0.0
        %598 = vmatpush1.msra.mxu0 1.0
        %599 = vmatprep.subr.mxu0 0.0
        %600 = vmatpush1.msra.mxu0 1.0
        %601 = vmatprep.subr.mxu0 0.0
        %602 = vmatpush1.msra.mxu0 1.0
        %603 = vmatprep.subr.mxu0 0.0
        %604 = vmatpush1.msra.mxu0 1.0
        %605 = vmatprep.subr.mxu0 0.0
        %606 = vmatpush1.msra.mxu0 1.0
        %607 = vmatprep.subr.mxu0 0.0
        %608 = vmatpush1.msra.mxu0 1.0
        %609 = vmatprep.subr.mxu0 0.0
        %610 = vmatpush1.msra.mxu0 1.0
        %611 = vmatprep.mubr.f32.mxu0 %v466
        %612 = vmatmul.mubr.f32.gmra.mrb[0].mxu0 %v464
        %v613 = vpop.f32.mrb[0].mxu0
        %v614 = vadd.f32 0.0, %v613
        %v615 = vpop.f32.mrb[0].mxu0
        %616 = vdwg.mxu0
        %s617 = vtos %v614
        %618 = vmatprep.subr.mxu0 0.0
        %619 = vmatpush1.msra.mxu0 1.0
        %620 = vmatprep.subr.mxu0 0.0
        %621 = vmatpush1.msra.mxu0 1.0
        %622 = vmatprep.subr.mxu0 0.0
        %623 = vmatpush1.msra.mxu0 1.0
        %624 = vmatprep.subr.mxu0 0.0
        %625 = vmatpush1.msra.mxu0 1.0
        %626 = vmatprep.subr.mxu0 0.0
        %627 = vmatpush1.msra.mxu0 1.0
        %628 = vmatprep.subr.mxu0 0.0
        %629 = vmatpush1.msra.mxu0 1.0
        %630 = vmatprep.subr.mxu0 0.0
        %631 = vmatpush1.msra.mxu0 1.0
        %632 = vmatprep.subr.mxu0 0.0
        %633 = vmatpush1.msra.mxu0 1.0
        %634 = vmatprep.subr.mxu0 0.0
        %635 = vmatpush1.msra.mxu0 1.0
        %636 = vmatprep.subr.mxu0 0.0
        %637 = vmatpush1.msra.mxu0 1.0
        %638 = vmatprep.subr.mxu0 0.0
        %639 = vmatpush1.msra.mxu0 1.0
        %640 = vmatprep.subr.mxu0 0.0
        %641 = vmatpush1.msra.mxu0 1.0
        %642 = vmatprep.subr.mxu0 0.0
        %643 = vmatpush1.msra.mxu0 1.0
        %644 = vmatprep.subr.mxu0 0.0
        %645 = vmatpush1.msra.mxu0 1.0
        %646 = vmatprep.subr.mxu0 0.0
        %647 = vmatpush1.msra.mxu0 1.0
        %648 = vmatprep.subr.mxu0 0.0
        %649 = vmatpush1.msra.mxu0 1.0
        %650 = vmatprep.subr.mxu0 0.0
        %651 = vmatpush1.msra.mxu0 1.0
        %652 = vmatprep.subr.mxu0 0.0
        %653 = vmatpush1.msra.mxu0 1.0
        %654 = vmatprep.subr.mxu0 0.0
        %655 = vmatpush1.msra.mxu0 1.0
        %656 = vmatprep.subr.mxu0 0.0
        %657 = vmatpush1.msra.mxu0 1.0
        %658 = vmatprep.subr.mxu0 0.0
        %659 = vmatpush1.msra.mxu0 1.0
        %660 = vmatprep.subr.mxu0 0.0
        %661 = vmatpush1.msra.mxu0 1.0
        %662 = vmatprep.subr.mxu0 0.0
        %663 = vmatpush1.msra.mxu0 1.0
        %664 = vmatprep.subr.mxu0 0.0
        %665 = vmatpush1.msra.mxu0 1.0
        %666 = vmatprep.subr.mxu0 0.0
        %667 = vmatpush1.msra.mxu0 1.0
        %668 = vmatprep.subr.mxu0 0.0
        %669 = vmatpush1.msra.mxu0 1.0
        %670 = vmatprep.subr.mxu0 0.0
        %671 = vmatpush1.msra.mxu0 1.0
        %672 = vmatprep.subr.mxu0 0.0
        %673 = vmatpush1.msra.mxu0 1.0
        %674 = vmatprep.subr.mxu0 0.0
        %675 = vmatpush1.msra.mxu0 1.0
        %676 = vmatprep.subr.mxu0 0.0
        %677 = vmatpush1.msra.mxu0 1.0
        %678 = vmatprep.subr.mxu0 0.0
        %679 = vmatpush1.msra.mxu0 1.0
        %680 = vmatprep.subr.mxu0 0.0
        %681 = vmatpush1.msra.mxu0 1.0
        %682 = vmatprep.mubr.f32.mxu0 %v545
        %683 = vmatmul.mubr.f32.gmra.mrb[0].mxu0 %v543
        %v684 = vpop.f32.mrb[0].mxu0
        %v685 = vadd.f32 0.0, %v684
        %v686 = vpop.f32.mrb[0].mxu0
        %687 = vdwg.mxu0
        %s688 = vtos %v685
        %s689 = smul.f32 %s617, 0.00012207031
        %s690 = smul.f32 %s688, 0.00012207031
        %s691 = smul.f32 %s689, %s689
        %s692 = ssub.f32 %s690, %s691
        %s693 = smax.f32 %s692, 0.0
        %s694 = sadd.f32 %s693, 1e-16
        %v695 = vstv %s694
        %v696 = vrsqrt.pop %v695
        %s697 = vtos %v696
        %v698 = vstv %s697
        %v699 = vmul.f32 %v269, %v698
        %v700 = vmul.f32 %v270, %v698
        %v701 = vmul.f32 %v271, %v698
        %v702 = vmul.f32 %v272, %v698
        %v703 = vstv %s689
        %v704 = vmul.f32 %v703, %v699
        %v705 = vmul.f32 %v703, %v700
        %v706 = vmul.f32 %v703, %v701
        %v707 = vmul.f32 %v703, %v702
        %712 = vrot.lane.b32.xlu0 %v704, 1
        %v713 = vpop.permute.xlu0 %712
        %714 = vrot.lane.b32.xlu0 %v705, 1
        %v715 = vpop.permute.xlu0 %714
        %716 = vrot.lane.b32.xlu0 %v706, 1
        %v717 = vpop.permute.xlu0 %716
        %718 = vrot.lane.b32.xlu0 %v707, 1
        %v719 = vpop.permute.xlu0 %718
        %v724 = vsub.f32 %v269, %v713
        %v725 = vsub.f32 %v270, %v715
        %v726 = vsub.f32 %v271, %v717
        %v727 = vsub.f32 %v272, %v719
        %729 = vset.pattern.permute.xlu0 1
        %730 = vperm.xlu0 %729, %v699
        %v731 = vpop.permute.xlu0 %730
        %734 = vset.pattern.permute.xlu0 1
        %735 = vperm.xlu0 %734, %v700
        %v736 = vpop.permute.xlu0 %735
        %739 = vset.pattern.permute.xlu0 1
        %740 = vperm.xlu0 %739, %v701
        %v741 = vpop.permute.xlu0 %740
        %744 = vset.pattern.permute.xlu0 1
        %745 = vperm.xlu0 %744, %v702
        %v746 = vpop.permute.xlu0 %745
        %v748 = vmul.f32 %v385, %v731
        %v749 = vmul.f32 %v386, %v731
        %v750 = vmul.f32 %v387, %v736
        %v751 = vmul.f32 %v388, %v736
        %v752 = vmul.f32 %v389, %v741
        %v753 = vmul.f32 %v390, %v741
        %v754 = vmul.f32 %v391, %v746
        %v755 = vmul.f32 %v392, %v746
        %757 = vset.pattern.permute.xlu0 2
        %758 = vperm.xlu0 %757, %v724
        %v759 = vpop.permute.xlu0 %758
        %762 = vset.pattern.permute.xlu0 2
        %763 = vperm.xlu0 %762, %v725
        %v764 = vpop.permute.xlu0 %763
        %767 = vset.pattern.permute.xlu0 2
        %768 = vperm.xlu0 %767, %v726
        %v769 = vpop.permute.xlu0 %768
        %772 = vset.pattern.permute.xlu0 2
        %773 = vperm.xlu0 %772, %v727
        %v774 = vpop.permute.xlu0 %773
        %v776 = vadd.f32 %v748, %v759
        %v777 = vadd.f32 %v749, %v759
        %v778 = vadd.f32 %v750, %v764
        %v779 = vadd.f32 %v751, %v764
        %v780 = vadd.f32 %v752, %v769
        %v781 = vadd.f32 %v753, %v769
        %v782 = vadd.f32 %v754, %v774
        %v783 = vadd.f32 %v755, %v774
        %784 = vset.pattern.permute.xlu0 4
        %785 = vperm.xlu0 %784, %v269
        %v786 = vpop.permute.xlu0 %785
        %788 = vset.pattern.permute.xlu0 4
        %789 = vperm.xlu0 %788, %v270
        %v790 = vpop.permute.xlu0 %789
        %792 = vset.pattern.permute.xlu0 4
        %793 = vperm.xlu0 %792, %v271
        %v794 = vpop.permute.xlu0 %793
        %796 = vset.pattern.permute.xlu0 4
        %797 = vperm.xlu0 %796, %v272
        %v798 = vpop.permute.xlu0 %797
        %v800 = vmul.f32 %v786, %v776
        %v801 = vmul.f32 %v786, %v777
        %v802 = vmul.f32 %v790, %v778
        %v803 = vmul.f32 %v790, %v779
        %v804 = vmul.f32 %v794, %v780
        %v805 = vmul.f32 %v794, %v781
        %v806 = vmul.f32 %v798, %v782
        %v807 = vmul.f32 %v798, %v783
        %vm808 = vcmp.ge.s32.totalorder %v267, 1
        %vm809 = vcmp.ge.s32.totalorder %v268, 1
        %810 = vrot.lane.b32.xlu0 %v776, 1
        %v811 = vpop.permute.xlu0 %810
        %812 = vrot.lane.b32.xlu0 %v778, 1
        %v813 = vpop.permute.xlu0 %812
        %814 = vrot.lane.b32.xlu0 %v780, 1
        %v815 = vpop.permute.xlu0 %814
        %816 = vrot.lane.b32.xlu0 %v782, 1
        %v817 = vpop.permute.xlu0 %816
        %818 = vrot.lane.b32.xlu0 %v777, 1
        %v819 = vpop.permute.xlu0 %818
        %820 = vrot.lane.b32.xlu0 %v779, 1
        %v821 = vpop.permute.xlu0 %820
        %822 = vrot.lane.b32.xlu0 %v781, 1
        %v823 = vpop.permute.xlu0 %822
        %824 = vrot.lane.b32.xlu0 %v783, 1
        %v825 = vpop.permute.xlu0 %824
        %vm826 = vcmp.lt.s32.totalorder %v267, 1
        %v827 = vsel %vm826, %v811, %v819
        %v828 = vsel %vm826, %v813, %v821
        %v829 = vsel %vm826, %v815, %v823
        %v830 = vsel %vm826, %v817, %v825
        %v831 = vsel %vm826, %v819, %v811
        %v832 = vsel %vm826, %v821, %v813
        %v833 = vsel %vm826, %v823, %v815
        %v834 = vsel %vm826, %v825, %v817
        %v835 = vsel %vm808, 1, 0
        %v836 = vsel %vm809, 1, 0
        %vm837 = vcmp.eq.s32.totalorder %v835, 1
        %vm838 = vcmp.eq.s32.totalorder %v836, 1
        %v839 = vsel %vm837, %v831, 0.0
        %v840 = vsel %vm838, %v827, 0.0
        %v841 = vsel %vm837, %v832, 0.0
        %v842 = vsel %vm838, %v828, 0.0
        %v843 = vsel %vm837, %v833, 0.0
        %v844 = vsel %vm838, %v829, 0.0
        %v845 = vsel %vm837, %v834, 0.0
        %v846 = vsel %vm838, %v830, 0.0
        %847 = vset.pattern.permute.xlu0 3
        %848 = vperm.xlu0 %847, %v269
        %v849 = vpop.permute.xlu0 %848
        %851 = vset.pattern.permute.xlu0 3
        %852 = vperm.xlu0 %851, %v270
        %v853 = vpop.permute.xlu0 %852
        %855 = vset.pattern.permute.xlu0 3
        %856 = vperm.xlu0 %855, %v271
        %v857 = vpop.permute.xlu0 %856
        %859 = vset.pattern.permute.xlu0 3
        %860 = vperm.xlu0 %859, %v272
        %v861 = vpop.permute.xlu0 %860
        %v863 = vmul.f32 %v849, %v839
        %v864 = vmul.f32 %v849, %v840
        %v865 = vmul.f32 %v853, %v841
        %v866 = vmul.f32 %v853, %v842
        %v867 = vmul.f32 %v857, %v843
        %v868 = vmul.f32 %v857, %v844
        %v869 = vmul.f32 %v861, %v845
        %v870 = vmul.f32 %v861, %v846
        %v871 = vadd.f32 %v800, %v863
        %v872 = vadd.f32 %v801, %v864
        %v873 = vadd.f32 %v802, %v865
        %v874 = vadd.f32 %v803, %v866
        %v875 = vadd.f32 %v804, %v867
        %v876 = vadd.f32 %v805, %v868
        %v877 = vadd.f32 %v806, %v869
        %v878 = vadd.f32 %v807, %v870
        %vm879 = vcmp.lt.s32.totalorder %v267, 255
        %vm880 = vcmp.lt.s32.totalorder %v268, 255
        %881 = vrot.lane.b32.xlu0 %v776, 127
        %v882 = vpop.permute.xlu0 %881
        %883 = vrot.lane.b32.xlu0 %v778, 127
        %v884 = vpop.permute.xlu0 %883
        %885 = vrot.lane.b32.xlu0 %v780, 127
        %v886 = vpop.permute.xlu0 %885
        %887 = vrot.lane.b32.xlu0 %v782, 127
        %v888 = vpop.permute.xlu0 %887
        %889 = vrot.lane.b32.xlu0 %v777, 127
        %v890 = vpop.permute.xlu0 %889
        %891 = vrot.lane.b32.xlu0 %v779, 127
        %v892 = vpop.permute.xlu0 %891
        %893 = vrot.lane.b32.xlu0 %v781, 127
        %v894 = vpop.permute.xlu0 %893
        %895 = vrot.lane.b32.xlu0 %v783, 127
        %v896 = vpop.permute.xlu0 %895
        %vm897 = vcmp.lt.s32.totalorder %v267, 127
        %v898 = vsel %vm897, %v882, %v890
        %v899 = vsel %vm897, %v884, %v892
        %v900 = vsel %vm897, %v886, %v894
        %v901 = vsel %vm897, %v888, %v896
        %v902 = vsel %vm897, %v890, %v882
        %v903 = vsel %vm897, %v892, %v884
        %v904 = vsel %vm897, %v894, %v886
        %v905 = vsel %vm897, %v896, %v888
        %v906 = vsel %vm879, 1, 0
        %v907 = vsel %vm880, 1, 0
        %vm908 = vcmp.eq.s32.totalorder %v906, 1
        %vm909 = vcmp.eq.s32.totalorder %v907, 1
        %v910 = vsel %vm908, %v898, 0.0
        %v911 = vsel %vm909, %v902, 0.0
        %v912 = vsel %vm908, %v899, 0.0
        %v913 = vsel %vm909, %v903, 0.0
        %v914 = vsel %vm908, %v900, 0.0
        %v915 = vsel %vm909, %v904, 0.0
        %v916 = vsel %vm908, %v901, 0.0
        %v917 = vsel %vm909, %v905, 0.0
        %918 = vset.pattern.permute.xlu0 5
        %919 = vperm.xlu0 %918, %v269
        %v920 = vpop.permute.xlu0 %919
        %922 = vset.pattern.permute.xlu0 5
        %923 = vperm.xlu0 %922, %v270
        %v924 = vpop.permute.xlu0 %923
        %926 = vset.pattern.permute.xlu0 5
        %927 = vperm.xlu0 %926, %v271
        %v928 = vpop.permute.xlu0 %927
        %930 = vset.pattern.permute.xlu0 5
        %931 = vperm.xlu0 %930, %v272
        %v932 = vpop.permute.xlu0 %931
        %v934 = vmul.f32 %v920, %v910
        %v935 = vmul.f32 %v920, %v911
        %v936 = vmul.f32 %v924, %v912
        %v937 = vmul.f32 %v924, %v913
        %v938 = vmul.f32 %v928, %v914
        %v939 = vmul.f32 %v928, %v915
        %v940 = vmul.f32 %v932, %v916
        %v941 = vmul.f32 %v932, %v917
        %v942 = vadd.f32 %v871, %v934
        %v943 = vadd.f32 %v872, %v935
        %v944 = vadd.f32 %v873, %v936
        %v945 = vadd.f32 %v874, %v937
        %v946 = vadd.f32 %v875, %v938
        %v947 = vadd.f32 %v876, %v939
        %v948 = vadd.f32 %v877, %v940
        %v949 = vadd.f32 %v878, %v941
        %vm950 = vcmp.ge.f32.partialorder %v942, 0.0
        %vm951 = vcmp.ge.f32.partialorder %v943, 0.0
        %vm952 = vcmp.ge.f32.partialorder %v944, 0.0
        %vm953 = vcmp.ge.f32.partialorder %v945, 0.0
        %vm954 = vcmp.ge.f32.partialorder %v946, 0.0
        %vm955 = vcmp.ge.f32.partialorder %v947, 0.0
        %vm956 = vcmp.ge.f32.partialorder %v948, 0.0
        %vm957 = vcmp.ge.f32.partialorder %v949, 0.0
        %958 = vset.pattern.permute.xlu0 6
        %959 = vperm.xlu0 %958, %v269
        %v960 = vpop.permute.xlu0 %959
        %962 = vset.pattern.permute.xlu0 6
        %963 = vperm.xlu0 %962, %v270
        %v964 = vpop.permute.xlu0 %963
        %966 = vset.pattern.permute.xlu0 6
        %967 = vperm.xlu0 %966, %v271
        %v968 = vpop.permute.xlu0 %967
        %970 = vset.pattern.permute.xlu0 6
        %971 = vperm.xlu0 %970, %v272
        %v972 = vpop.permute.xlu0 %971
        %v974 = vmul.f32 %v960, %v942
        %v975 = vmul.f32 %v960, %v943
        %v976 = vmul.f32 %v964, %v944
        %v977 = vmul.f32 %v964, %v945
        %v978 = vmul.f32 %v968, %v946
        %v979 = vmul.f32 %v968, %v947
        %v980 = vmul.f32 %v972, %v948
        %v981 = vmul.f32 %v972, %v949
        %v982 = vsel %vm950, %v942, %v974
        %v983 = vsel %vm951, %v943, %v975
        %v984 = vsel %vm952, %v944, %v976
        %v985 = vsel %vm953, %v945, %v977
        %v986 = vsel %vm954, %v946, %v978
        %v987 = vsel %vm955, %v947, %v979
        %v988 = vsel %vm956, %v948, %v980
        %v989 = vsel %vm957, %v949, %v981
        %990 = vmatprep.subr.mxu0 %v983
        %991 = vmatpush1.msra.mxu0 %v982
        %992 = vmatprep.subr.mxu0 %v985
        %993 = vmatpush1.msra.mxu0 %v984
        %994 = vmatprep.subr.mxu0 %v987
        %995 = vmatpush1.msra.mxu0 %v986
        %996 = vmatprep.subr.mxu0 %v989
        %997 = vmatpush1.msra.mxu0 %v988
        %998 = vmatprep.subr.mxu0 0.0
        %999 = vmatpush1.msra.mxu0 0.0
        %1000 = vmatprep.subr.mxu0 0.0
        %1001 = vmatpush1.msra.mxu0 0.0
        %1002 = vmatprep.subr.mxu0 0.0
        %1003 = vmatpush1.msra.mxu0 0.0
        %1004 = vmatprep.subr.mxu0 0.0
        %1005 = vmatpush1.msra.mxu0 0.0
        %1006 = vmatprep.subr.mxu0 0.0
        %1007 = vmatpush1.msra.mxu0 0.0
        %1008 = vmatprep.subr.mxu0 0.0
        %1009 = vmatpush1.msra.mxu0 0.0
        %1010 = vmatprep.subr.mxu0 0.0
        %1011 = vmatpush1.msra.mxu0 0.0
        %1012 = vmatprep.subr.mxu0 0.0
        %1013 = vmatpush1.msra.mxu0 0.0
        %1014 = vmatprep.subr.mxu0 0.0
        %1015 = vmatpush1.msra.mxu0 0.0
        %1016 = vmatprep.subr.mxu0 0.0
        %1017 = vmatpush1.msra.mxu0 0.0
        %1018 = vmatprep.subr.mxu0 0.0
        %1019 = vmatpush1.msra.mxu0 0.0
        %1020 = vmatprep.subr.mxu0 0.0
        %1021 = vmatpush1.msra.mxu0 0.0
        %1022 = vmatprep.subr.mxu0 0.0
        %1023 = vmatpush1.msra.mxu0 0.0
        %1024 = vmatprep.subr.mxu0 0.0
        %1025 = vmatpush1.msra.mxu0 0.0
        %1026 = vmatprep.subr.mxu0 0.0
        %1027 = vmatpush1.msra.mxu0 0.0
        %1028 = vmatprep.subr.mxu0 0.0
        %1029 = vmatpush1.msra.mxu0 0.0
        %1030 = vmatprep.subr.mxu0 0.0
        %1031 = vmatpush1.msra.mxu0 0.0
        %1032 = vmatprep.subr.mxu0 0.0
        %1033 = vmatpush1.msra.mxu0 0.0
        %1034 = vmatprep.subr.mxu0 0.0
        %1035 = vmatpush1.msra.mxu0 0.0
        %1036 = vmatprep.subr.mxu0 0.0
        %1037 = vmatpush1.msra.mxu0 0.0
        %1038 = vmatprep.subr.mxu0 0.0
        %1039 = vmatpush1.msra.mxu0 0.0
        %1040 = vmatprep.subr.mxu0 0.0
        %1041 = vmatpush1.msra.mxu0 0.0
        %1042 = vmatprep.subr.mxu0 0.0
        %1043 = vmatpush1.msra.mxu0 0.0
        %1044 = vmatprep.subr.mxu0 0.0
        %1045 = vmatpush1.msra.mxu0 0.0
        %1046 = vmatprep.subr.mxu0 0.0
        %1047 = vmatpush1.msra.mxu0 0.0
        %1048 = vmatprep.subr.mxu0 0.0
        %1049 = vmatpush1.msra.mxu0 0.0
        %1050 = vmatprep.subr.mxu0 0.0
        %1051 = vmatpush1.msra.mxu0 0.0
        %1052 = vmatprep.subr.mxu0 0.0
        %1053 = vmatpush1.msra.mxu0 0.0
        %1054 = vmatprep.mubr.f32.mxu0 0.0
        %1055 = vmatmul.mubr.f32.gmra.mrb[0].mxu0 %v395
        %v1056 = vpop.f32.mrb[0].mxu0
        %v1057 = vadd.f32 0.0, %v1056
        %v1058 = vpop.f32.mrb[0].mxu0
        %v1059 = vadd.f32 0.0, %v1058
        %1060 = vdwg.mxu0
        %v1061 = vmul.f32 %v982, %v982
        %v1062 = vmul.f32 %v983, %v983
        %v1063 = vmul.f32 %v984, %v984
        %v1064 = vmul.f32 %v985, %v985
        %v1065 = vmul.f32 %v986, %v986
        %v1066 = vmul.f32 %v987, %v987
        %v1067 = vmul.f32 %v988, %v988
        %v1068 = vmul.f32 %v989, %v989
        %1069 = vmatprep.subr.mxu0 %v1062
        %1070 = vmatpush1.msra.mxu0 %v1061
        %1071 = vmatprep.subr.mxu0 %v1064
        %1072 = vmatpush1.msra.mxu0 %v1063
        %1073 = vmatprep.subr.mxu0 %v1066
        %1074 = vmatpush1.msra.mxu0 %v1065
        %1075 = vmatprep.subr.mxu0 %v1068
        %1076 = vmatpush1.msra.mxu0 %v1067
        %1077 = vmatprep.subr.mxu0 0.0
        %1078 = vmatpush1.msra.mxu0 0.0
        %1079 = vmatprep.subr.mxu0 0.0
        %1080 = vmatpush1.msra.mxu0 0.0
        %1081 = vmatprep.subr.mxu0 0.0
        %1082 = vmatpush1.msra.mxu0 0.0
        %1083 = vmatprep.subr.mxu0 0.0
        %1084 = vmatpush1.msra.mxu0 0.0
        %1085 = vmatprep.subr.mxu0 0.0
        %1086 = vmatpush1.msra.mxu0 0.0
        %1087 = vmatprep.subr.mxu0 0.0
        %1088 = vmatpush1.msra.mxu0 0.0
        %1089 = vmatprep.subr.mxu0 0.0
        %1090 = vmatpush1.msra.mxu0 0.0
        %1091 = vmatprep.subr.mxu0 0.0
        %1092 = vmatpush1.msra.mxu0 0.0
        %1093 = vmatprep.subr.mxu0 0.0
        %1094 = vmatpush1.msra.mxu0 0.0
        %1095 = vmatprep.subr.mxu0 0.0
        %1096 = vmatpush1.msra.mxu0 0.0
        %1097 = vmatprep.subr.mxu0 0.0
        %1098 = vmatpush1.msra.mxu0 0.0
        %1099 = vmatprep.subr.mxu0 0.0
        %1100 = vmatpush1.msra.mxu0 0.0
        %1101 = vmatprep.subr.mxu0 0.0
        %1102 = vmatpush1.msra.mxu0 0.0
        %1103 = vmatprep.subr.mxu0 0.0
        %1104 = vmatpush1.msra.mxu0 0.0
        %1105 = vmatprep.subr.mxu0 0.0
        %1106 = vmatpush1.msra.mxu0 0.0
        %1107 = vmatprep.subr.mxu0 0.0
        %1108 = vmatpush1.msra.mxu0 0.0
        %1109 = vmatprep.subr.mxu0 0.0
        %1110 = vmatpush1.msra.mxu0 0.0
        %1111 = vmatprep.subr.mxu0 0.0
        %1112 = vmatpush1.msra.mxu0 0.0
        %1113 = vmatprep.subr.mxu0 0.0
        %1114 = vmatpush1.msra.mxu0 0.0
        %1115 = vmatprep.subr.mxu0 0.0
        %1116 = vmatpush1.msra.mxu0 0.0
        %1117 = vmatprep.subr.mxu0 0.0
        %1118 = vmatpush1.msra.mxu0 0.0
        %1119 = vmatprep.subr.mxu0 0.0
        %1120 = vmatpush1.msra.mxu0 0.0
        %1121 = vmatprep.subr.mxu0 0.0
        %1122 = vmatpush1.msra.mxu0 0.0
        %1123 = vmatprep.subr.mxu0 0.0
        %1124 = vmatpush1.msra.mxu0 0.0
        %1125 = vmatprep.subr.mxu0 0.0
        %1126 = vmatpush1.msra.mxu0 0.0
        %1127 = vmatprep.subr.mxu0 0.0
        %1128 = vmatpush1.msra.mxu0 0.0
        %1129 = vmatprep.subr.mxu0 0.0
        %1130 = vmatpush1.msra.mxu0 0.0
        %1131 = vmatprep.subr.mxu0 0.0
        %1132 = vmatpush1.msra.mxu0 0.0
        %1133 = vmatprep.mubr.f32.mxu0 0.0
        %1134 = vmatmul.mubr.f32.gmra.mrb[0].mxu0 %v395
        %v1135 = vpop.f32.mrb[0].mxu0
        %v1136 = vadd.f32 0.0, %v1135
        %v1137 = vpop.f32.mrb[0].mxu0
        %v1138 = vadd.f32 0.0, %v1137
        %1139 = vdwg.mxu0
        %1140 = vmatprep.subr.mxu0 0.0
        %1141 = vmatpush1.msra.mxu0 1.0
        %1142 = vmatprep.subr.mxu0 0.0
        %1143 = vmatpush1.msra.mxu0 1.0
        %1144 = vmatprep.subr.mxu0 0.0
        %1145 = vmatpush1.msra.mxu0 1.0
        %1146 = vmatprep.subr.mxu0 0.0
        %1147 = vmatpush1.msra.mxu0 1.0
        %1148 = vmatprep.subr.mxu0 0.0
        %1149 = vmatpush1.msra.mxu0 1.0
        %1150 = vmatprep.subr.mxu0 0.0
        %1151 = vmatpush1.msra.mxu0 1.0
        %1152 = vmatprep.subr.mxu0 0.0
        %1153 = vmatpush1.msra.mxu0 1.0
        %1154 = vmatprep.subr.mxu0 0.0
        %1155 = vmatpush1.msra.mxu0 1.0
        %1156 = vmatprep.subr.mxu0 0.0
        %1157 = vmatpush1.msra.mxu0 1.0
        %1158 = vmatprep.subr.mxu0 0.0
        %1159 = vmatpush1.msra.mxu0 1.0
        %1160 = vmatprep.subr.mxu0 0.0
        %1161 = vmatpush1.msra.mxu0 1.0
        %1162 = vmatprep.subr.mxu0 0.0
        %1163 = vmatpush1.msra.mxu0 1.0
        %1164 = vmatprep.subr.mxu0 0.0
        %1165 = vmatpush1.msra.mxu0 1.0
        %1166 = vmatprep.subr.mxu0 0.0
        %1167 = vmatpush1.msra.mxu0 1.0
        %1168 = vmatprep.subr.mxu0 0.0
        %1169 = vmatpush1.msra.mxu0 1.0
        %1170 = vmatprep.subr.mxu0 0.0
        %1171 = vmatpush1.msra.mxu0 1.0
        %1172 = vmatprep.subr.mxu0 0.0
        %1173 = vmatpush1.msra.mxu0 1.0
        %1174 = vmatprep.subr.mxu0 0.0
        %1175 = vmatpush1.msra.mxu0 1.0
        %1176 = vmatprep.subr.mxu0 0.0
        %1177 = vmatpush1.msra.mxu0 1.0
        %1178 = vmatprep.subr.mxu0 0.0
        %1179 = vmatpush1.msra.mxu0 1.0
        %1180 = vmatprep.subr.mxu0 0.0
        %1181 = vmatpush1.msra.mxu0 1.0
        %1182 = vmatprep.subr.mxu0 0.0
        %1183 = vmatpush1.msra.mxu0 1.0
        %1184 = vmatprep.subr.mxu0 0.0
        %1185 = vmatpush1.msra.mxu0 1.0
        %1186 = vmatprep.subr.mxu0 0.0
        %1187 = vmatpush1.msra.mxu0 1.0
        %1188 = vmatprep.subr.mxu0 0.0
        %1189 = vmatpush1.msra.mxu0 1.0
        %1190 = vmatprep.subr.mxu0 0.0
        %1191 = vmatpush1.msra.mxu0 1.0
        %1192 = vmatprep.subr.mxu0 0.0
        %1193 = vmatpush1.msra.mxu0 1.0
        %1194 = vmatprep.subr.mxu0 0.0
        %1195 = vmatpush1.msra.mxu0 1.0
        %1196 = vmatprep.subr.mxu0 0.0
        %1197 = vmatpush1.msra.mxu0 1.0
        %1198 = vmatprep.subr.mxu0 0.0
        %1199 = vmatpush1.msra.mxu0 1.0
        %1200 = vmatprep.subr.mxu0 0.0
        %1201 = vmatpush1.msra.mxu0 1.0
        %1202 = vmatprep.subr.mxu0 0.0
        %1203 = vmatpush1.msra.mxu0 1.0
        %1204 = vmatprep.mubr.f32.mxu0 %v1059
        %1205 = vmatmul.mubr.f32.gmra.mrb[0].mxu0 %v1057
        %v1206 = vpop.f32.mrb[0].mxu0
        %v1207 = vadd.f32 0.0, %v1206
        %v1208 = vpop.f32.mrb[0].mxu0
        %1209 = vdwg.mxu0
        %s1210 = vtos %v1207
        %1211 = vmatprep.subr.mxu0 0.0
        %1212 = vmatpush1.msra.mxu0 1.0
        %1213 = vmatprep.subr.mxu0 0.0
        %1214 = vmatpush1.msra.mxu0 1.0
        %1215 = vmatprep.subr.mxu0 0.0
        %1216 = vmatpush1.msra.mxu0 1.0
        %1217 = vmatprep.subr.mxu0 0.0
        %1218 = vmatpush1.msra.mxu0 1.0
        %1219 = vmatprep.subr.mxu0 0.0
        %1220 = vmatpush1.msra.mxu0 1.0
        %1221 = vmatprep.subr.mxu0 0.0
        %1222 = vmatpush1.msra.mxu0 1.0
        %1223 = vmatprep.subr.mxu0 0.0
        %1224 = vmatpush1.msra.mxu0 1.0
        %1225 = vmatprep.subr.mxu0 0.0
        %1226 = vmatpush1.msra.mxu0 1.0
        %1227 = vmatprep.subr.mxu0 0.0
        %1228 = vmatpush1.msra.mxu0 1.0
        %1229 = vmatprep.subr.mxu0 0.0
        %1230 = vmatpush1.msra.mxu0 1.0
        %1231 = vmatprep.subr.mxu0 0.0
        %1232 = vmatpush1.msra.mxu0 1.0
        %1233 = vmatprep.subr.mxu0 0.0
        %1234 = vmatpush1.msra.mxu0 1.0
        %1235 = vmatprep.subr.mxu0 0.0
        %1236 = vmatpush1.msra.mxu0 1.0
        %1237 = vmatprep.subr.mxu0 0.0
        %1238 = vmatpush1.msra.mxu0 1.0
        %1239 = vmatprep.subr.mxu0 0.0
        %1240 = vmatpush1.msra.mxu0 1.0
        %1241 = vmatprep.subr.mxu0 0.0
        %1242 = vmatpush1.msra.mxu0 1.0
        %1243 = vmatprep.subr.mxu0 0.0
        %1244 = vmatpush1.msra.mxu0 1.0
        %1245 = vmatprep.subr.mxu0 0.0
        %1246 = vmatpush1.msra.mxu0 1.0
        %1247 = vmatprep.subr.mxu0 0.0
        %1248 = vmatpush1.msra.mxu0 1.0
        %1249 = vmatprep.subr.mxu0 0.0
        %1250 = vmatpush1.msra.mxu0 1.0
        %1251 = vmatprep.subr.mxu0 0.0
        %1252 = vmatpush1.msra.mxu0 1.0
        %1253 = vmatprep.subr.mxu0 0.0
        %1254 = vmatpush1.msra.mxu0 1.0
        %1255 = vmatprep.subr.mxu0 0.0
        %1256 = vmatpush1.msra.mxu0 1.0
        %1257 = vmatprep.subr.mxu0 0.0
        %1258 = vmatpush1.msra.mxu0 1.0
        %1259 = vmatprep.subr.mxu0 0.0
        %1260 = vmatpush1.msra.mxu0 1.0
        %1261 = vmatprep.subr.mxu0 0.0
        %1262 = vmatpush1.msra.mxu0 1.0
        %1263 = vmatprep.subr.mxu0 0.0
        %1264 = vmatpush1.msra.mxu0 1.0
        %1265 = vmatprep.subr.mxu0 0.0
        %1266 = vmatpush1.msra.mxu0 1.0
        %1267 = vmatprep.subr.mxu0 0.0
        %1268 = vmatpush1.msra.mxu0 1.0
        %1269 = vmatprep.subr.mxu0 0.0
        %1270 = vmatpush1.msra.mxu0 1.0
        %1271 = vmatprep.subr.mxu0 0.0
        %1272 = vmatpush1.msra.mxu0 1.0
        %1273 = vmatprep.subr.mxu0 0.0
        %1274 = vmatpush1.msra.mxu0 1.0
        %1275 = vmatprep.mubr.f32.mxu0 %v1138
        %1276 = vmatmul.mubr.f32.gmra.mrb[0].mxu0 %v1136
        %v1277 = vpop.f32.mrb[0].mxu0
        %v1278 = vadd.f32 0.0, %v1277
        %v1279 = vpop.f32.mrb[0].mxu0
        %1280 = vdwg.mxu0
        %s1281 = vtos %v1278
        %s1282 = smul.f32 %s1210, 0.00012207031
        %s1283 = smul.f32 %s1281, 0.00012207031
        %s1284 = smul.f32 %s1282, %s1282
        %s1285 = ssub.f32 %s1283, %s1284
        %s1286 = smax.f32 %s1285, 0.0
        %s1287 = sadd.f32 %s1286, 1e-16
        %v1288 = vstv %s1287
        %v1289 = vrsqrt.pop %v1288
        %s1290 = vtos %v1289
        %v1291 = vld [vmem:[%s3] sm:$0xf]
        %v1292 = vld [vmem:[%s3 + $0x4] sm:$0xf]
        %v1293 = vld [vmem:[%s3 + $0x8] sm:$0xf]
        %v1294 = vld [vmem:[%s3 + $0xc] sm:$0xf]
        %v1295 = vpack.c.bf16 %v984, %v982
        %v1296 = vpack.c.bf16 %v985, %v983
        %v1297 = vpack.c.bf16 %v988, %v986
        %v1298 = vpack.c.bf16 %v989, %v987
        %v1303 = vunpack.c.l.b16 %v1291
        %v1304 = vunpack.c.l.b16 %v1292
        %v1305 = vunpack.c.l.b16 %v1293
        %v1306 = vunpack.c.l.b16 %v1294
        %v1307 = vpack.c.b16 %v1304, %v1303
        %v1308 = vpack.c.b16 %v1306, %v1305
        %v1310 = vsel %vm393, %v1307, 0
        %v1313 = vsel %vm393, %v1308, 0
        %1315 = vmatprep.subr.bf16.mxu0 %v1296
        %1316 = vmatpush1.bf16.msra.mxu0 %v1295
        %1317 = vmatprep.subr.bf16.mxu0 %v1298
        %1318 = vmatpush1.bf16.msra.mxu0 %v1297
        %1319 = vmatprep.subr.bf16.mxu0 0
        %1320 = vmatpush1.bf16.msra.mxu0 0
        %1321 = vmatprep.subr.bf16.mxu0 0
        %1322 = vmatpush1.bf16.msra.mxu0 0
        %1323 = vmatprep.subr.bf16.mxu0 0
        %1324 = vmatpush1.bf16.msra.mxu0 0
        %1325 = vmatprep.subr.bf16.mxu0 0
        %1326 = vmatpush1.bf16.msra.mxu0 0
        %1327 = vmatprep.subr.bf16.mxu0 0
        %1328 = vmatpush1.bf16.msra.mxu0 0
        %1329 = vmatprep.subr.bf16.mxu0 0
        %1330 = vmatpush1.bf16.msra.mxu0 0
        %1331 = vmatprep.subr.bf16.mxu0 0
        %1332 = vmatpush1.bf16.msra.mxu0 0
        %1333 = vmatprep.subr.bf16.mxu0 0
        %1334 = vmatpush1.bf16.msra.mxu0 0
        %1335 = vmatprep.subr.bf16.mxu0 0
        %1336 = vmatpush1.bf16.msra.mxu0 0
        %1337 = vmatprep.subr.bf16.mxu0 0
        %1338 = vmatpush1.bf16.msra.mxu0 0
        %1339 = vmatprep.subr.bf16.mxu0 0
        %1340 = vmatpush1.bf16.msra.mxu0 0
        %1341 = vmatprep.subr.bf16.mxu0 0
        %1342 = vmatpush1.bf16.msra.mxu0 0
        %1343 = vmatprep.subr.bf16.mxu0 0
        %1344 = vmatpush1.bf16.msra.mxu0 0
        %1345 = vmatprep.subr.bf16.mxu0 0
        %1346 = vmatpush1.bf16.msra.mxu0 0
        %1347 = vmatprep.mubr.bf16.mxu0 0
        %1348 = vmatmul.mubr.bf16.gmra.mrb[0].mxu0 %v1310
        %v1349 = vpop.f32.mrb[0].mxu0
        %v1350 = vadd.f32 0.0, %v1349
        %v1351 = vpop.f32.mrb[0].mxu0
        %v1352 = vadd.f32 0.0, %v1351
        %v1353 = vpop.f32.mrb[0].mxu0
        %v1354 = vadd.f32 0.0, %v1353
        %v1355 = vpop.f32.mrb[0].mxu0
        %v1356 = vadd.f32 0.0, %v1355
        %1357 = vmatprep.mubr.bf16.mxu0 0
        %1358 = vmatmul.mubr.bf16.gmra.mrb[0].mxu0 %v1313
        %v1359 = vpop.f32.mrb[0].mxu0
        %v1360 = vadd.f32 0.0, %v1359
        %v1361 = vpop.f32.mrb[0].mxu0
        %v1362 = vadd.f32 0.0, %v1361
        %v1363 = vpop.f32.mrb[0].mxu0
        %v1364 = vadd.f32 0.0, %v1363
        %v1365 = vpop.f32.mrb[0].mxu0
        %v1366 = vadd.f32 0.0, %v1365
        %1367 = vdwg.mxu0
        %v1368 = vld [vmem:[%s4] sm:$0xff]
        %v1369 = vld [vmem:[%s4 + $0x8] sm:$0xff]
        %v1370 = vld [vmem:[%s4 + $0x10] sm:$0xff]
        %v1371 = vld [vmem:[%s4 + $0x18] sm:$0xff]
        %s1372 = smul.f32 %s1282, %s1290
        %v1373 = vstv %s1372
        %v1374 = vmul.f32 %v1373, %v1368
        %v1375 = vmul.f32 %v1373, %v1369
        %v1376 = vmul.f32 %v1373, %v1370
        %v1377 = vmul.f32 %v1373, %v1371
        %1382 = vrot.lane.b32.xlu0 %v1374, 1
        %v1383 = vpop.permute.xlu0 %1382
        %1384 = vrot.lane.b32.xlu0 %v1375, 1
        %v1385 = vpop.permute.xlu0 %1384
        %1386 = vrot.lane.b32.xlu0 %v1376, 1
        %v1387 = vpop.permute.xlu0 %1386
        %1388 = vrot.lane.b32.xlu0 %v1377, 1
        %v1389 = vpop.permute.xlu0 %1388
        %v1394 = vsub.f32 %v1368, %v1383
        %v1395 = vsub.f32 %v1369, %v1385
        %v1396 = vsub.f32 %v1370, %v1387
        %v1397 = vsub.f32 %v1371, %v1389
        %v1398 = vstv %s1290
        %v1399 = vmul.f32 %v1350, %v1398
        %v1400 = vmul.f32 %v1352, %v1398
        %v1401 = vmul.f32 %v1354, %v1398
        %v1402 = vmul.f32 %v1356, %v1398
        %v1403 = vmul.f32 %v1360, %v1398
        %v1404 = vmul.f32 %v1362, %v1398
        %v1405 = vmul.f32 %v1364, %v1398
        %v1406 = vmul.f32 %v1366, %v1398
        %1408 = vset.pattern.permute.xlu0 1
        %1409 = vperm.xlu0 %1408, %v1394
        %v1410 = vpop.permute.xlu0 %1409
        %1413 = vset.pattern.permute.xlu0 1
        %1414 = vperm.xlu0 %1413, %v1395
        %v1415 = vpop.permute.xlu0 %1414
        %1418 = vset.pattern.permute.xlu0 1
        %1419 = vperm.xlu0 %1418, %v1396
        %v1420 = vpop.permute.xlu0 %1419
        %1423 = vset.pattern.permute.xlu0 1
        %1424 = vperm.xlu0 %1423, %v1397
        %v1425 = vpop.permute.xlu0 %1424
        %v1427 = vadd.f32 %v1399, %v1410
        %v1428 = vadd.f32 %v1400, %v1410
        %v1429 = vadd.f32 %v1401, %v1415
        %v1430 = vadd.f32 %v1402, %v1415
        %v1431 = vadd.f32 %v1403, %v1420
        %v1432 = vadd.f32 %v1404, %v1420
        %v1433 = vadd.f32 %v1405, %v1425
        %v1434 = vadd.f32 %v1406, %v1425
        %v1435 = vadd.f32 %v1427, %v262
        %v1436 = vadd.f32 %v1428, %v263
        %v1437 = vadd.f32 %v1429, %v264
        %v1438 = vadd.f32 %v1430, %v265
        %v1439 = vadd.f32 %v1431, 0.0
        %v1440 = vadd.f32 %v1432, 0.0
        %v1441 = vadd.f32 %v1433, 0.0
        %v1442 = vadd.f32 %v1434, 0.0
        %s1443 = scalar_lea.vmem %s2, 32
        %v1444 = vld [vmem:[%s1443] sm:$0xff]
        %v1445 = vld [vmem:[%s1443 + $0x8] sm:$0xff]
        %v1446 = vld [vmem:[%s1443 + $0x10] sm:$0xff]
        %v1447 = vld [vmem:[%s1443 + $0x18] sm:$0xff]
        %s1448 = scalar_lea.vmem %s1, 16
        %v1449 = vld [vmem:[%s1448] sm:$0xf]
        %v1450 = vld [vmem:[%s1448 + $0x4] sm:$0xf]
        %v1451 = vld [vmem:[%s1448 + $0x8] sm:$0xf]
        %v1452 = vld [vmem:[%s1448 + $0xc] sm:$0xf]
        %v1453 = vpack.c.bf16 %v1437, %v1435
        %v1454 = vpack.c.bf16 %v1438, %v1436
        %v1459 = vunpack.c.l.b16 %v1449
        %v1460 = vunpack.c.l.b16 %v1450
        %v1461 = vunpack.c.l.b16 %v1451
        %v1462 = vunpack.c.l.b16 %v1452
        %v1463 = vpack.c.b16 %v1460, %v1459
        %v1464 = vpack.c.b16 %v1462, %v1461
        %v1466 = vsel %vm289, %v1463, 0
        %v1469 = vsel %vm289, %v1464, 0
        %1471 = vmatprep.subr.bf16.mxu0 %v1454
        %1472 = vmatpush1.bf16.msra.mxu0 %v1453
        %1473 = vmatprep.subr.bf16.mxu0 0
        %1474 = vmatpush1.bf16.msra.mxu0 0
        %1475 = vmatprep.subr.bf16.mxu0 0
        %1476 = vmatpush1.bf16.msra.mxu0 0
        %1477 = vmatprep.subr.bf16.mxu0 0
        %1478 = vmatpush1.bf16.msra.mxu0 0
        %1479 = vmatprep.subr.bf16.mxu0 0
        %1480 = vmatpush1.bf16.msra.mxu0 0
        %1481 = vmatprep.subr.bf16.mxu0 0
        %1482 = vmatpush1.bf16.msra.mxu0 0
        %1483 = vmatprep.subr.bf16.mxu0 0
        %1484 = vmatpush1.bf16.msra.mxu0 0
        %1485 = vmatprep.subr.bf16.mxu0 0
        %1486 = vmatpush1.bf16.msra.mxu0 0
        %1487 = vmatprep.subr.bf16.mxu0 0
        %1488 = vmatpush1.bf16.msra.mxu0 0
        %1489 = vmatprep.subr.bf16.mxu0 0
        %1490 = vmatpush1.bf16.msra.mxu0 0
        %1491 = vmatprep.subr.bf16.mxu0 0
        %1492 = vmatpush1.bf16.msra.mxu0 0
        %1493 = vmatprep.subr.bf16.mxu0 0
        %1494 = vmatpush1.bf16.msra.mxu0 0
        %1495 = vmatprep.subr.bf16.mxu0 0
        %1496 = vmatpush1.bf16.msra.mxu0 0
        %1497 = vmatprep.subr.bf16.mxu0 0
        %1498 = vmatpush1.bf16.msra.mxu0 0
        %1499 = vmatprep.subr.bf16.mxu0 0
        %1500 = vmatpush1.bf16.msra.mxu0 0
        %1501 = vmatprep.subr.bf16.mxu0 0
        %1502 = vmatpush1.bf16.msra.mxu0 0
        %1503 = vmatprep.mubr.bf16.mxu0 0
        %1504 = vmatmul.mubr.bf16.gmra.mrb[0].mxu0 %v1466
        %v1505 = vpop.f32.mrb[0].mxu0
        %v1506 = vadd.f32 0.0, %v1505
        %v1507 = vpop.f32.mrb[0].mxu0
        %v1508 = vadd.f32 0.0, %v1507
        %v1509 = vpop.f32.mrb[0].mxu0
        %v1510 = vadd.f32 0.0, %v1509
        %v1511 = vpop.f32.mrb[0].mxu0
        %v1512 = vadd.f32 0.0, %v1511
        %1513 = vmatprep.mubr.bf16.mxu0 0
        %1514 = vmatmul.mubr.bf16.gmra.mrb[0].mxu0 %v1469
        %v1515 = vpop.f32.mrb[0].mxu0
        %v1516 = vadd.f32 0.0, %v1515
        %v1517 = vpop.f32.mrb[0].mxu0
        %v1518 = vadd.f32 0.0, %v1517
        %v1519 = vpop.f32.mrb[0].mxu0
        %v1520 = vadd.f32 0.0, %v1519
        %v1521 = vpop.f32.mrb[0].mxu0
        %v1522 = vadd.f32 0.0, %v1521
        %1523 = vdwg.mxu0
        %vm1524 = vcmp.ge.f32.partialorder %v1506, 0.0
        %vm1525 = vcmp.ge.f32.partialorder %v1508, 0.0
        %vm1526 = vcmp.ge.f32.partialorder %v1510, 0.0
        %vm1527 = vcmp.ge.f32.partialorder %v1512, 0.0
        %vm1528 = vcmp.ge.f32.partialorder %v1516, 0.0
        %vm1529 = vcmp.ge.f32.partialorder %v1518, 0.0
        %vm1530 = vcmp.ge.f32.partialorder %v1520, 0.0
        %vm1531 = vcmp.ge.f32.partialorder %v1522, 0.0
        %1533 = vset.pattern.permute.xlu0 0
        %1534 = vperm.xlu0 %1533, %v1444
        %v1535 = vpop.permute.xlu0 %1534
        %1538 = vset.pattern.permute.xlu0 0
        %1539 = vperm.xlu0 %1538, %v1445
        %v1540 = vpop.permute.xlu0 %1539
        %1543 = vset.pattern.permute.xlu0 0
        %1544 = vperm.xlu0 %1543, %v1446
        %v1545 = vpop.permute.xlu0 %1544
        %1548 = vset.pattern.permute.xlu0 0
        %1549 = vperm.xlu0 %1548, %v1447
        %v1550 = vpop.permute.xlu0 %1549
        %v1552 = vmul.f32 %v1535, %v1506
        %v1553 = vmul.f32 %v1535, %v1508
        %v1554 = vmul.f32 %v1540, %v1510
        %v1555 = vmul.f32 %v1540, %v1512
        %v1556 = vmul.f32 %v1545, %v1516
        %v1557 = vmul.f32 %v1545, %v1518
        %v1558 = vmul.f32 %v1550, %v1520
        %v1559 = vmul.f32 %v1550, %v1522
        %v1560 = vsel %vm1524, %v1506, %v1552
        %v1561 = vsel %vm1525, %v1508, %v1553
        %v1562 = vsel %vm1526, %v1510, %v1554
        %v1563 = vsel %vm1527, %v1512, %v1555
        %v1564 = vsel %vm1528, %v1516, %v1556
        %v1565 = vsel %vm1529, %v1518, %v1557
        %v1566 = vsel %vm1530, %v1520, %v1558
        %v1567 = vsel %vm1531, %v1522, %v1559
        %1568 = vmatprep.subr.mxu0 %v1561
        %1569 = vmatpush1.msra.mxu0 %v1560
        %1570 = vmatprep.subr.mxu0 %v1563
        %1571 = vmatpush1.msra.mxu0 %v1562
        %1572 = vmatprep.subr.mxu0 %v1565
        %1573 = vmatpush1.msra.mxu0 %v1564
        %1574 = vmatprep.subr.mxu0 %v1567
        %1575 = vmatpush1.msra.mxu0 %v1566
        %1576 = vmatprep.subr.mxu0 0.0
        %1577 = vmatpush1.msra.mxu0 0.0
        %1578 = vmatprep.subr.mxu0 0.0
        %1579 = vmatpush1.msra.mxu0 0.0
        %1580 = vmatprep.subr.mxu0 0.0
        %1581 = vmatpush1.msra.mxu0 0.0
        %1582 = vmatprep.subr.mxu0 0.0
        %1583 = vmatpush1.msra.mxu0 0.0
        %1584 = vmatprep.subr.mxu0 0.0
        %1585 = vmatpush1.msra.mxu0 0.0
        %1586 = vmatprep.subr.mxu0 0.0
        %1587 = vmatpush1.msra.mxu0 0.0
        %1588 = vmatprep.subr.mxu0 0.0
        %1589 = vmatpush1.msra.mxu0 0.0
        %1590 = vmatprep.subr.mxu0 0.0
        %1591 = vmatpush1.msra.mxu0 0.0
        %1592 = vmatprep.subr.mxu0 0.0
        %1593 = vmatpush1.msra.mxu0 0.0
        %1594 = vmatprep.subr.mxu0 0.0
        %1595 = vmatpush1.msra.mxu0 0.0
        %1596 = vmatprep.subr.mxu0 0.0
        %1597 = vmatpush1.msra.mxu0 0.0
        %1598 = vmatprep.subr.mxu0 0.0
        %1599 = vmatpush1.msra.mxu0 0.0
        %1600 = vmatprep.subr.mxu0 0.0
        %1601 = vmatpush1.msra.mxu0 0.0
        %1602 = vmatprep.subr.mxu0 0.0
        %1603 = vmatpush1.msra.mxu0 0.0
        %1604 = vmatprep.subr.mxu0 0.0
        %1605 = vmatpush1.msra.mxu0 0.0
        %1606 = vmatprep.subr.mxu0 0.0
        %1607 = vmatpush1.msra.mxu0 0.0
        %1608 = vmatprep.subr.mxu0 0.0
        %1609 = vmatpush1.msra.mxu0 0.0
        %1610 = vmatprep.subr.mxu0 0.0
        %1611 = vmatpush1.msra.mxu0 0.0
        %1612 = vmatprep.subr.mxu0 0.0
        %1613 = vmatpush1.msra.mxu0 0.0
        %1614 = vmatprep.subr.mxu0 0.0
        %1615 = vmatpush1.msra.mxu0 0.0
        %1616 = vmatprep.subr.mxu0 0.0
        %1617 = vmatpush1.msra.mxu0 0.0
        %1618 = vmatprep.subr.mxu0 0.0
        %1619 = vmatpush1.msra.mxu0 0.0
        %1620 = vmatprep.subr.mxu0 0.0
        %1621 = vmatpush1.msra.mxu0 0.0
        %1622 = vmatprep.subr.mxu0 0.0
        %1623 = vmatpush1.msra.mxu0 0.0
        %1624 = vmatprep.subr.mxu0 0.0
        %1625 = vmatpush1.msra.mxu0 0.0
        %1626 = vmatprep.subr.mxu0 0.0
        %1627 = vmatpush1.msra.mxu0 0.0
        %1628 = vmatprep.subr.mxu0 0.0
        %1629 = vmatpush1.msra.mxu0 0.0
        %1630 = vmatprep.subr.mxu0 0.0
        %1631 = vmatpush1.msra.mxu0 0.0
        %1632 = vmatprep.mubr.f32.mxu0 0.0
        %1633 = vmatmul.mubr.f32.gmra.mrb[0].mxu0 %v395
        %v1634 = vpop.f32.mrb[0].mxu0
        %v1635 = vadd.f32 0.0, %v1634
        %v1636 = vpop.f32.mrb[0].mxu0
        %v1637 = vadd.f32 0.0, %v1636
        %1638 = vdwg.mxu0
        %v1639 = vmul.f32 %v1560, %v1560
        %v1640 = vmul.f32 %v1561, %v1561
        %v1641 = vmul.f32 %v1562, %v1562
        %v1642 = vmul.f32 %v1563, %v1563
        %v1643 = vmul.f32 %v1564, %v1564
        %v1644 = vmul.f32 %v1565, %v1565
        %v1645 = vmul.f32 %v1566, %v1566
        %v1646 = vmul.f32 %v1567, %v1567
        %1647 = vmatprep.subr.mxu0 %v1640
        %1648 = vmatpush1.msra.mxu0 %v1639
        %1649 = vmatprep.subr.mxu0 %v1642
        %1650 = vmatpush1.msra.mxu0 %v1641
        %1651 = vmatprep.subr.mxu0 %v1644
        %1652 = vmatpush1.msra.mxu0 %v1643
        %1653 = vmatprep.subr.mxu0 %v1646
        %1654 = vmatpush1.msra.mxu0 %v1645
        %1655 = vmatprep.subr.mxu0 0.0
        %1656 = vmatpush1.msra.mxu0 0.0
        %1657 = vmatprep.subr.mxu0 0.0
        %1658 = vmatpush1.msra.mxu0 0.0
        %1659 = vmatprep.subr.mxu0 0.0
        %1660 = vmatpush1.msra.mxu0 0.0
        %1661 = vmatprep.subr.mxu0 0.0
        %1662 = vmatpush1.msra.mxu0 0.0
        %1663 = vmatprep.subr.mxu0 0.0
        %1664 = vmatpush1.msra.mxu0 0.0
        %1665 = vmatprep.subr.mxu0 0.0
        %1666 = vmatpush1.msra.mxu0 0.0
        %1667 = vmatprep.subr.mxu0 0.0
        %1668 = vmatpush1.msra.mxu0 0.0
        %1669 = vmatprep.subr.mxu0 0.0
        %1670 = vmatpush1.msra.mxu0 0.0
        %1671 = vmatprep.subr.mxu0 0.0
        %1672 = vmatpush1.msra.mxu0 0.0
        %1673 = vmatprep.subr.mxu0 0.0
        %1674 = vmatpush1.msra.mxu0 0.0
        %1675 = vmatprep.subr.mxu0 0.0
        %1676 = vmatpush1.msra.mxu0 0.0
        %1677 = vmatprep.subr.mxu0 0.0
        %1678 = vmatpush1.msra.mxu0 0.0
        %1679 = vmatprep.subr.mxu0 0.0
        %1680 = vmatpush1.msra.mxu0 0.0
        %1681 = vmatprep.subr.mxu0 0.0
        %1682 = vmatpush1.msra.mxu0 0.0
        %1683 = vmatprep.subr.mxu0 0.0
        %1684 = vmatpush1.msra.mxu0 0.0
        %1685 = vmatprep.subr.mxu0 0.0
        %1686 = vmatpush1.msra.mxu0 0.0
        %1687 = vmatprep.subr.mxu0 0.0
        %1688 = vmatpush1.msra.mxu0 0.0
        %1689 = vmatprep.subr.mxu0 0.0
        %1690 = vmatpush1.msra.mxu0 0.0
        %1691 = vmatprep.subr.mxu0 0.0
        %1692 = vmatpush1.msra.mxu0 0.0
        %1693 = vmatprep.subr.mxu0 0.0
        %1694 = vmatpush1.msra.mxu0 0.0
        %1695 = vmatprep.subr.mxu0 0.0
        %1696 = vmatpush1.msra.mxu0 0.0
        %1697 = vmatprep.subr.mxu0 0.0
        %1698 = vmatpush1.msra.mxu0 0.0
        %1699 = vmatprep.subr.mxu0 0.0
        %1700 = vmatpush1.msra.mxu0 0.0
        %1701 = vmatprep.subr.mxu0 0.0
        %1702 = vmatpush1.msra.mxu0 0.0
        %1703 = vmatprep.subr.mxu0 0.0
        %1704 = vmatpush1.msra.mxu0 0.0
        %1705 = vmatprep.subr.mxu0 0.0
        %1706 = vmatpush1.msra.mxu0 0.0
        %1707 = vmatprep.subr.mxu0 0.0
        %1708 = vmatpush1.msra.mxu0 0.0
        %1709 = vmatprep.subr.mxu0 0.0
        %1710 = vmatpush1.msra.mxu0 0.0
        %1711 = vmatprep.mubr.f32.mxu0 0.0
        %1712 = vmatmul.mubr.f32.gmra.mrb[0].mxu0 %v395
        %v1713 = vpop.f32.mrb[0].mxu0
        %v1714 = vadd.f32 0.0, %v1713
        %v1715 = vpop.f32.mrb[0].mxu0
        %v1716 = vadd.f32 0.0, %v1715
        %1717 = vdwg.mxu0
        %1718 = vmatprep.subr.mxu0 0.0
        %1719 = vmatpush1.msra.mxu0 1.0
        %1720 = vmatprep.subr.mxu0 0.0
        %1721 = vmatpush1.msra.mxu0 1.0
        %1722 = vmatprep.subr.mxu0 0.0
        %1723 = vmatpush1.msra.mxu0 1.0
        %1724 = vmatprep.subr.mxu0 0.0
        %1725 = vmatpush1.msra.mxu0 1.0
        %1726 = vmatprep.subr.mxu0 0.0
        %1727 = vmatpush1.msra.mxu0 1.0
        %1728 = vmatprep.subr.mxu0 0.0
        %1729 = vmatpush1.msra.mxu0 1.0
        %1730 = vmatprep.subr.mxu0 0.0
        %1731 = vmatpush1.msra.mxu0 1.0
        %1732 = vmatprep.subr.mxu0 0.0
        %1733 = vmatpush1.msra.mxu0 1.0
        %1734 = vmatprep.subr.mxu0 0.0
        %1735 = vmatpush1.msra.mxu0 1.0
        %1736 = vmatprep.subr.mxu0 0.0
        %1737 = vmatpush1.msra.mxu0 1.0
        %1738 = vmatprep.subr.mxu0 0.0
        %1739 = vmatpush1.msra.mxu0 1.0
        %1740 = vmatprep.subr.mxu0 0.0
        %1741 = vmatpush1.msra.mxu0 1.0
        %1742 = vmatprep.subr.mxu0 0.0
        %1743 = vmatpush1.msra.mxu0 1.0
        %1744 = vmatprep.subr.mxu0 0.0
        %1745 = vmatpush1.msra.mxu0 1.0
        %1746 = vmatprep.subr.mxu0 0.0
        %1747 = vmatpush1.msra.mxu0 1.0
        %1748 = vmatprep.subr.mxu0 0.0
        %1749 = vmatpush1.msra.mxu0 1.0
        %1750 = vmatprep.subr.mxu0 0.0
        %1751 = vmatpush1.msra.mxu0 1.0
        %1752 = vmatprep.subr.mxu0 0.0
        %1753 = vmatpush1.msra.mxu0 1.0
        %1754 = vmatprep.subr.mxu0 0.0
        %1755 = vmatpush1.msra.mxu0 1.0
        %1756 = vmatprep.subr.mxu0 0.0
        %1757 = vmatpush1.msra.mxu0 1.0
        %1758 = vmatprep.subr.mxu0 0.0
        %1759 = vmatpush1.msra.mxu0 1.0
        %1760 = vmatprep.subr.mxu0 0.0
        %1761 = vmatpush1.msra.mxu0 1.0
        %1762 = vmatprep.subr.mxu0 0.0
        %1763 = vmatpush1.msra.mxu0 1.0
        %1764 = vmatprep.subr.mxu0 0.0
        %1765 = vmatpush1.msra.mxu0 1.0
        %1766 = vmatprep.subr.mxu0 0.0
        %1767 = vmatpush1.msra.mxu0 1.0
        %1768 = vmatprep.subr.mxu0 0.0
        %1769 = vmatpush1.msra.mxu0 1.0
        %1770 = vmatprep.subr.mxu0 0.0
        %1771 = vmatpush1.msra.mxu0 1.0
        %1772 = vmatprep.subr.mxu0 0.0
        %1773 = vmatpush1.msra.mxu0 1.0
        %1774 = vmatprep.subr.mxu0 0.0
        %1775 = vmatpush1.msra.mxu0 1.0
        %1776 = vmatprep.subr.mxu0 0.0
        %1777 = vmatpush1.msra.mxu0 1.0
        %1778 = vmatprep.subr.mxu0 0.0
        %1779 = vmatpush1.msra.mxu0 1.0
        %1780 = vmatprep.subr.mxu0 0.0
        %1781 = vmatpush1.msra.mxu0 1.0
        %1782 = vmatprep.mubr.f32.mxu0 %v1637
        %1783 = vmatmul.mubr.f32.gmra.mrb[0].mxu0 %v1635
        %v1784 = vpop.f32.mrb[0].mxu0
        %v1785 = vadd.f32 0.0, %v1784
        %v1786 = vpop.f32.mrb[0].mxu0
        %1787 = vdwg.mxu0
        %s1788 = vtos %v1785
        %1789 = vmatprep.subr.mxu0 0.0
        %1790 = vmatpush1.msra.mxu0 1.0
        %1791 = vmatprep.subr.mxu0 0.0
        %1792 = vmatpush1.msra.mxu0 1.0
        %1793 = vmatprep.subr.mxu0 0.0
        %1794 = vmatpush1.msra.mxu0 1.0
        %1795 = vmatprep.subr.mxu0 0.0
        %1796 = vmatpush1.msra.mxu0 1.0
        %1797 = vmatprep.subr.mxu0 0.0
        %1798 = vmatpush1.msra.mxu0 1.0
        %1799 = vmatprep.subr.mxu0 0.0
        %1800 = vmatpush1.msra.mxu0 1.0
        %1801 = vmatprep.subr.mxu0 0.0
        %1802 = vmatpush1.msra.mxu0 1.0
        %1803 = vmatprep.subr.mxu0 0.0
        %1804 = vmatpush1.msra.mxu0 1.0
        %1805 = vmatprep.subr.mxu0 0.0
        %1806 = vmatpush1.msra.mxu0 1.0
        %1807 = vmatprep.subr.mxu0 0.0
        %1808 = vmatpush1.msra.mxu0 1.0
        %1809 = vmatprep.subr.mxu0 0.0
        %1810 = vmatpush1.msra.mxu0 1.0
        %1811 = vmatprep.subr.mxu0 0.0
        %1812 = vmatpush1.msra.mxu0 1.0
        %1813 = vmatprep.subr.mxu0 0.0
        %1814 = vmatpush1.msra.mxu0 1.0
        %1815 = vmatprep.subr.mxu0 0.0
        %1816 = vmatpush1.msra.mxu0 1.0
        %1817 = vmatprep.subr.mxu0 0.0
        %1818 = vmatpush1.msra.mxu0 1.0
        %1819 = vmatprep.subr.mxu0 0.0
        %1820 = vmatpush1.msra.mxu0 1.0
        %1821 = vmatprep.subr.mxu0 0.0
        %1822 = vmatpush1.msra.mxu0 1.0
        %1823 = vmatprep.subr.mxu0 0.0
        %1824 = vmatpush1.msra.mxu0 1.0
        %1825 = vmatprep.subr.mxu0 0.0
        %1826 = vmatpush1.msra.mxu0 1.0
        %1827 = vmatprep.subr.mxu0 0.0
        %1828 = vmatpush1.msra.mxu0 1.0
        %1829 = vmatprep.subr.mxu0 0.0
        %1830 = vmatpush1.msra.mxu0 1.0
        %1831 = vmatprep.subr.mxu0 0.0
        %1832 = vmatpush1.msra.mxu0 1.0
        %1833 = vmatprep.subr.mxu0 0.0
        %1834 = vmatpush1.msra.mxu0 1.0
        %1835 = vmatprep.subr.mxu0 0.0
        %1836 = vmatpush1.msra.mxu0 1.0
        %1837 = vmatprep.subr.mxu0 0.0
        %1838 = vmatpush1.msra.mxu0 1.0
        %1839 = vmatprep.subr.mxu0 0.0
        %1840 = vmatpush1.msra.mxu0 1.0
        %1841 = vmatprep.subr.mxu0 0.0
        %1842 = vmatpush1.msra.mxu0 1.0
        %1843 = vmatprep.subr.mxu0 0.0
        %1844 = vmatpush1.msra.mxu0 1.0
        %1845 = vmatprep.subr.mxu0 0.0
        %1846 = vmatpush1.msra.mxu0 1.0
        %1847 = vmatprep.subr.mxu0 0.0
        %1848 = vmatpush1.msra.mxu0 1.0
        %1849 = vmatprep.subr.mxu0 0.0
        %1850 = vmatpush1.msra.mxu0 1.0
        %1851 = vmatprep.subr.mxu0 0.0
        %1852 = vmatpush1.msra.mxu0 1.0
        %1853 = vmatprep.mubr.f32.mxu0 %v1716
        %1854 = vmatmul.mubr.f32.gmra.mrb[0].mxu0 %v1714
        %v1855 = vpop.f32.mrb[0].mxu0
        %v1856 = vadd.f32 0.0, %v1855
        %v1857 = vpop.f32.mrb[0].mxu0
        %1858 = vdwg.mxu0
        %s1859 = vtos %v1856
        %s1860 = smul.f32 %s1788, 0.00012207031
        %s1861 = smul.f32 %s1859, 0.00012207031
        %s1862 = smul.f32 %s1860, %s1860
        %s1863 = ssub.f32 %s1861, %s1862
        %s1864 = smax.f32 %s1863, 0.0
        %s1865 = sadd.f32 %s1864, 1e-16
        %v1866 = vstv %s1865
        %v1867 = vrsqrt.pop %v1866
        %s1868 = vtos %v1867
        %v1869 = vstv %s1868
        %v1870 = vmul.f32 %v1444, %v1869
        %v1871 = vmul.f32 %v1445, %v1869
        %v1872 = vmul.f32 %v1446, %v1869
        %v1873 = vmul.f32 %v1447, %v1869
        %v1874 = vstv %s1860
        %v1875 = vmul.f32 %v1874, %v1870
        %v1876 = vmul.f32 %v1874, %v1871
        %v1877 = vmul.f32 %v1874, %v1872
        %v1878 = vmul.f32 %v1874, %v1873
        %1883 = vrot.lane.b32.xlu0 %v1875, 1
        %v1884 = vpop.permute.xlu0 %1883
        %1885 = vrot.lane.b32.xlu0 %v1876, 1
        %v1886 = vpop.permute.xlu0 %1885
        %1887 = vrot.lane.b32.xlu0 %v1877, 1
        %v1888 = vpop.permute.xlu0 %1887
        %1889 = vrot.lane.b32.xlu0 %v1878, 1
        %v1890 = vpop.permute.xlu0 %1889
        %v1895 = vsub.f32 %v1444, %v1884
        %v1896 = vsub.f32 %v1445, %v1886
        %v1897 = vsub.f32 %v1446, %v1888
        %v1898 = vsub.f32 %v1447, %v1890
        %1900 = vset.pattern.permute.xlu0 1
        %1901 = vperm.xlu0 %1900, %v1870
        %v1902 = vpop.permute.xlu0 %1901
        %1905 = vset.pattern.permute.xlu0 1
        %1906 = vperm.xlu0 %1905, %v1871
        %v1907 = vpop.permute.xlu0 %1906
        %1910 = vset.pattern.permute.xlu0 1
        %1911 = vperm.xlu0 %1910, %v1872
        %v1912 = vpop.permute.xlu0 %1911
        %1915 = vset.pattern.permute.xlu0 1
        %1916 = vperm.xlu0 %1915, %v1873
        %v1917 = vpop.permute.xlu0 %1916
        %v1919 = vmul.f32 %v1560, %v1902
        %v1920 = vmul.f32 %v1561, %v1902
        %v1921 = vmul.f32 %v1562, %v1907
        %v1922 = vmul.f32 %v1563, %v1907
        %v1923 = vmul.f32 %v1564, %v1912
        %v1924 = vmul.f32 %v1565, %v1912
        %v1925 = vmul.f32 %v1566, %v1917
        %v1926 = vmul.f32 %v1567, %v1917
        %1928 = vset.pattern.permute.xlu0 2
        %1929 = vperm.xlu0 %1928, %v1895
        %v1930 = vpop.permute.xlu0 %1929
        %1933 = vset.pattern.permute.xlu0 2
        %1934 = vperm.xlu0 %1933, %v1896
        %v1935 = vpop.permute.xlu0 %1934
        %1938 = vset.pattern.permute.xlu0 2
        %1939 = vperm.xlu0 %1938, %v1897
        %v1940 = vpop.permute.xlu0 %1939
        %1943 = vset.pattern.permute.xlu0 2
        %1944 = vperm.xlu0 %1943, %v1898
        %v1945 = vpop.permute.xlu0 %1944
        %v1947 = vadd.f32 %v1919, %v1930
        %v1948 = vadd.f32 %v1920, %v1930
        %v1949 = vadd.f32 %v1921, %v1935
        %v1950 = vadd.f32 %v1922, %v1935
        %v1951 = vadd.f32 %v1923, %v1940
        %v1952 = vadd.f32 %v1924, %v1940
        %v1953 = vadd.f32 %v1925, %v1945
        %v1954 = vadd.f32 %v1926, %v1945
        %1955 = vset.pattern.permute.xlu0 4
        %1956 = vperm.xlu0 %1955, %v1444
        %v1957 = vpop.permute.xlu0 %1956
        %1959 = vset.pattern.permute.xlu0 4
        %1960 = vperm.xlu0 %1959, %v1445
        %v1961 = vpop.permute.xlu0 %1960
        %1963 = vset.pattern.permute.xlu0 4
        %1964 = vperm.xlu0 %1963, %v1446
        %v1965 = vpop.permute.xlu0 %1964
        %1967 = vset.pattern.permute.xlu0 4
        %1968 = vperm.xlu0 %1967, %v1447
        %v1969 = vpop.permute.xlu0 %1968
        %v1971 = vmul.f32 %v1957, %v1947
        %v1972 = vmul.f32 %v1957, %v1948
        %v1973 = vmul.f32 %v1961, %v1949
        %v1974 = vmul.f32 %v1961, %v1950
        %v1975 = vmul.f32 %v1965, %v1951
        %v1976 = vmul.f32 %v1965, %v1952
        %v1977 = vmul.f32 %v1969, %v1953
        %v1978 = vmul.f32 %v1969, %v1954
        %vm1979 = vcmp.ge.s32.totalorder %v267, 2
        %vm1980 = vcmp.ge.s32.totalorder %v268, 2
        %1981 = vrot.lane.b32.xlu0 %v1947, 2
        %v1982 = vpop.permute.xlu0 %1981
        %1983 = vrot.lane.b32.xlu0 %v1949, 2
        %v1984 = vpop.permute.xlu0 %1983
        %1985 = vrot.lane.b32.xlu0 %v1951, 2
        %v1986 = vpop.permute.xlu0 %1985
        %1987 = vrot.lane.b32.xlu0 %v1953, 2
        %v1988 = vpop.permute.xlu0 %1987
        %1989 = vrot.lane.b32.xlu0 %v1948, 2
        %v1990 = vpop.permute.xlu0 %1989
        %1991 = vrot.lane.b32.xlu0 %v1950, 2
        %v1992 = vpop.permute.xlu0 %1991
        %1993 = vrot.lane.b32.xlu0 %v1952, 2
        %v1994 = vpop.permute.xlu0 %1993
        %1995 = vrot.lane.b32.xlu0 %v1954, 2
        %v1996 = vpop.permute.xlu0 %1995
        %vm1997 = vcmp.lt.s32.totalorder %v267, 2
        %v1998 = vsel %vm1997, %v1982, %v1990
        %v1999 = vsel %vm1997, %v1984, %v1992
        %v2000 = vsel %vm1997, %v1986, %v1994
        %v2001 = vsel %vm1997, %v1988, %v1996
        %v2002 = vsel %vm1997, %v1990, %v1982
        %v2003 = vsel %vm1997, %v1992, %v1984
        %v2004 = vsel %vm1997, %v1994, %v1986
        %v2005 = vsel %vm1997, %v1996, %v1988
        %v2006 = vsel %vm1979, 1, 0
        %v2007 = vsel %vm1980, 1, 0
        %vm2008 = vcmp.eq.s32.totalorder %v2006, 1
        %vm2009 = vcmp.eq.s32.totalorder %v2007, 1
        %v2010 = vsel %vm2008, %v2002, 0.0
        %v2011 = vsel %vm2009, %v1998, 0.0
        %v2012 = vsel %vm2008, %v2003, 0.0
        %v2013 = vsel %vm2009, %v1999, 0.0
        %v2014 = vsel %vm2008, %v2004, 0.0
        %v2015 = vsel %vm2009, %v2000, 0.0
        %v2016 = vsel %vm2008, %v2005, 0.0
        %v2017 = vsel %vm2009, %v2001, 0.0
        %2018 = vset.pattern.permute.xlu0 3
        %2019 = vperm.xlu0 %2018, %v1444
        %v2020 = vpop.permute.xlu0 %2019
        %2022 = vset.pattern.permute.xlu0 3
        %2023 = vperm.xlu0 %2022, %v1445
        %v2024 = vpop.permute.xlu0 %2023
        %2026 = vset.pattern.permute.xlu0 3
        %2027 = vperm.xlu0 %2026, %v1446
        %v2028 = vpop.permute.xlu0 %2027
        %2030 = vset.pattern.permute.xlu0 3
        %2031 = vperm.xlu0 %2030, %v1447
        %v2032 = vpop.permute.xlu0 %2031
        %v2034 = vmul.f32 %v2020, %v2010
        %v2035 = vmul.f32 %v2020, %v2011
        %v2036 = vmul.f32 %v2024, %v2012
        %v2037 = vmul.f32 %v2024, %v2013
        %v2038 = vmul.f32 %v2028, %v2014
        %v2039 = vmul.f32 %v2028, %v2015
        %v2040 = vmul.f32 %v2032, %v2016
        %v2041 = vmul.f32 %v2032, %v2017
        %v2042 = vadd.f32 %v1971, %v2034
        %v2043 = vadd.f32 %v1972, %v2035
        %v2044 = vadd.f32 %v1973, %v2036
        %v2045 = vadd.f32 %v1974, %v2037
        %v2046 = vadd.f32 %v1975, %v2038
        %v2047 = vadd.f32 %v1976, %v2039
        %v2048 = vadd.f32 %v1977, %v2040
        %v2049 = vadd.f32 %v1978, %v2041
        %vm2050 = vcmp.lt.s32.totalorder %v267, 254
        %vm2051 = vcmp.lt.s32.totalorder %v268, 254
        %2052 = vrot.lane.b32.xlu0 %v1947, 126
        %v2053 = vpop.permute.xlu0 %2052
        %2054 = vrot.lane.b32.xlu0 %v1949, 126
        %v2055 = vpop.permute.xlu0 %2054
        %2056 = vrot.lane.b32.xlu0 %v1951, 126
        %v2057 = vpop.permute.xlu0 %2056
        %2058 = vrot.lane.b32.xlu0 %v1953, 126
        %v2059 = vpop.permute.xlu0 %2058
        %2060 = vrot.lane.b32.xlu0 %v1948, 126
        %v2061 = vpop.permute.xlu0 %2060
        %2062 = vrot.lane.b32.xlu0 %v1950, 126
        %v2063 = vpop.permute.xlu0 %2062
        %2064 = vrot.lane.b32.xlu0 %v1952, 126
        %v2065 = vpop.permute.xlu0 %2064
        %2066 = vrot.lane.b32.xlu0 %v1954, 126
        %v2067 = vpop.permute.xlu0 %2066
        %vm2068 = vcmp.lt.s32.totalorder %v267, 126
        %v2069 = vsel %vm2068, %v2053, %v2061
        %v2070 = vsel %vm2068, %v2055, %v2063
        %v2071 = vsel %vm2068, %v2057, %v2065
        %v2072 = vsel %vm2068, %v2059, %v2067
        %v2073 = vsel %vm2068, %v2061, %v2053
        %v2074 = vsel %vm2068, %v2063, %v2055
        %v2075 = vsel %vm2068, %v2065, %v2057
        %v2076 = vsel %vm2068, %v2067, %v2059
        %v2077 = vsel %vm2050, 1, 0
        %v2078 = vsel %vm2051, 1, 0
        %vm2079 = vcmp.eq.s32.totalorder %v2077, 1
        %vm2080 = vcmp.eq.s32.totalorder %v2078, 1
        %v2081 = vsel %vm2079, %v2069, 0.0
        %v2082 = vsel %vm2080, %v2073, 0.0
        %v2083 = vsel %vm2079, %v2070, 0.0
        %v2084 = vsel %vm2080, %v2074, 0.0
        %v2085 = vsel %vm2079, %v2071, 0.0
        %v2086 = vsel %vm2080, %v2075, 0.0
        %v2087 = vsel %vm2079, %v2072, 0.0
        %v2088 = vsel %vm2080, %v2076, 0.0
        %2089 = vset.pattern.permute.xlu0 5
        %2090 = vperm.xlu0 %2089, %v1444
        %v2091 = vpop.permute.xlu0 %2090
        %2093 = vset.pattern.permute.xlu0 5
        %2094 = vperm.xlu0 %2093, %v1445
        %v2095 = vpop.permute.xlu0 %2094
        %2097 = vset.pattern.permute.xlu0 5
        %2098 = vperm.xlu0 %2097, %v1446
        %v2099 = vpop.permute.xlu0 %2098
        %2101 = vset.pattern.permute.xlu0 5
        %2102 = vperm.xlu0 %2101, %v1447
        %v2103 = vpop.permute.xlu0 %2102
        %v2105 = vmul.f32 %v2091, %v2081
        %v2106 = vmul.f32 %v2091, %v2082
        %v2107 = vmul.f32 %v2095, %v2083
        %v2108 = vmul.f32 %v2095, %v2084
        %v2109 = vmul.f32 %v2099, %v2085
        %v2110 = vmul.f32 %v2099, %v2086
        %v2111 = vmul.f32 %v2103, %v2087
        %v2112 = vmul.f32 %v2103, %v2088
        %v2113 = vadd.f32 %v2042, %v2105
        %v2114 = vadd.f32 %v2043, %v2106
        %v2115 = vadd.f32 %v2044, %v2107
        %v2116 = vadd.f32 %v2045, %v2108
        %v2117 = vadd.f32 %v2046, %v2109
        %v2118 = vadd.f32 %v2047, %v2110
        %v2119 = vadd.f32 %v2048, %v2111
        %v2120 = vadd.f32 %v2049, %v2112
        %vm2121 = vcmp.ge.f32.partialorder %v2113, 0.0
        %vm2122 = vcmp.ge.f32.partialorder %v2114, 0.0
        %vm2123 = vcmp.ge.f32.partialorder %v2115, 0.0
        %vm2124 = vcmp.ge.f32.partialorder %v2116, 0.0
        %vm2125 = vcmp.ge.f32.partialorder %v2117, 0.0
        %vm2126 = vcmp.ge.f32.partialorder %v2118, 0.0
        %vm2127 = vcmp.ge.f32.partialorder %v2119, 0.0
        %vm2128 = vcmp.ge.f32.partialorder %v2120, 0.0
        %2129 = vset.pattern.permute.xlu0 6
        %2130 = vperm.xlu0 %2129, %v1444
        %v2131 = vpop.permute.xlu0 %2130
        %2133 = vset.pattern.permute.xlu0 6
        %2134 = vperm.xlu0 %2133, %v1445
        %v2135 = vpop.permute.xlu0 %2134
        %2137 = vset.pattern.permute.xlu0 6
        %2138 = vperm.xlu0 %2137, %v1446
        %v2139 = vpop.permute.xlu0 %2138
        %2141 = vset.pattern.permute.xlu0 6
        %2142 = vperm.xlu0 %2141, %v1447
        %v2143 = vpop.permute.xlu0 %2142
        %v2145 = vmul.f32 %v2131, %v2113
        %v2146 = vmul.f32 %v2131, %v2114
        %v2147 = vmul.f32 %v2135, %v2115
        %v2148 = vmul.f32 %v2135, %v2116
        %v2149 = vmul.f32 %v2139, %v2117
        %v2150 = vmul.f32 %v2139, %v2118
        %v2151 = vmul.f32 %v2143, %v2119
        %v2152 = vmul.f32 %v2143, %v2120
        %v2153 = vsel %vm2121, %v2113, %v2145
        %v2154 = vsel %vm2122, %v2114, %v2146
        %v2155 = vsel %vm2123, %v2115, %v2147
        %v2156 = vsel %vm2124, %v2116, %v2148
        %v2157 = vsel %vm2125, %v2117, %v2149
        %v2158 = vsel %vm2126, %v2118, %v2150
        %v2159 = vsel %vm2127, %v2119, %v2151
        %v2160 = vsel %vm2128, %v2120, %v2152
        %2161 = vmatprep.subr.mxu0 %v2154
        %2162 = vmatpush1.msra.mxu0 %v2153
        %2163 = vmatprep.subr.mxu0 %v2156
        %2164 = vmatpush1.msra.mxu0 %v2155
        %2165 = vmatprep.subr.mxu0 %v2158
        %2166 = vmatpush1.msra.mxu0 %v2157
        %2167 = vmatprep.subr.mxu0 %v2160
        %2168 = vmatpush1.msra.mxu0 %v2159
        %2169 = vmatprep.subr.mxu0 0.0
        %2170 = vmatpush1.msra.mxu0 0.0
        %2171 = vmatprep.subr.mxu0 0.0
        %2172 = vmatpush1.msra.mxu0 0.0
        %2173 = vmatprep.subr.mxu0 0.0
        %2174 = vmatpush1.msra.mxu0 0.0
        %2175 = vmatprep.subr.mxu0 0.0
        %2176 = vmatpush1.msra.mxu0 0.0
        %2177 = vmatprep.subr.mxu0 0.0
        %2178 = vmatpush1.msra.mxu0 0.0
        %2179 = vmatprep.subr.mxu0 0.0
        %2180 = vmatpush1.msra.mxu0 0.0
        %2181 = vmatprep.subr.mxu0 0.0
        %2182 = vmatpush1.msra.mxu0 0.0
        %2183 = vmatprep.subr.mxu0 0.0
        %2184 = vmatpush1.msra.mxu0 0.0
        %2185 = vmatprep.subr.mxu0 0.0
        %2186 = vmatpush1.msra.mxu0 0.0
        %2187 = vmatprep.subr.mxu0 0.0
        %2188 = vmatpush1.msra.mxu0 0.0
        %2189 = vmatprep.subr.mxu0 0.0
        %2190 = vmatpush1.msra.mxu0 0.0
        %2191 = vmatprep.subr.mxu0 0.0
        %2192 = vmatpush1.msra.mxu0 0.0
        %2193 = vmatprep.subr.mxu0 0.0
        %2194 = vmatpush1.msra.mxu0 0.0
        %2195 = vmatprep.subr.mxu0 0.0
        %2196 = vmatpush1.msra.mxu0 0.0
        %2197 = vmatprep.subr.mxu0 0.0
        %2198 = vmatpush1.msra.mxu0 0.0
        %2199 = vmatprep.subr.mxu0 0.0
        %2200 = vmatpush1.msra.mxu0 0.0
        %2201 = vmatprep.subr.mxu0 0.0
        %2202 = vmatpush1.msra.mxu0 0.0
        %2203 = vmatprep.subr.mxu0 0.0
        %2204 = vmatpush1.msra.mxu0 0.0
        %2205 = vmatprep.subr.mxu0 0.0
        %2206 = vmatpush1.msra.mxu0 0.0
        %2207 = vmatprep.subr.mxu0 0.0
        %2208 = vmatpush1.msra.mxu0 0.0
        %2209 = vmatprep.subr.mxu0 0.0
        %2210 = vmatpush1.msra.mxu0 0.0
        %2211 = vmatprep.subr.mxu0 0.0
        %2212 = vmatpush1.msra.mxu0 0.0
        %2213 = vmatprep.subr.mxu0 0.0
        %2214 = vmatpush1.msra.mxu0 0.0
        %2215 = vmatprep.subr.mxu0 0.0
        %2216 = vmatpush1.msra.mxu0 0.0
        %2217 = vmatprep.subr.mxu0 0.0
        %2218 = vmatpush1.msra.mxu0 0.0
        %2219 = vmatprep.subr.mxu0 0.0
        %2220 = vmatpush1.msra.mxu0 0.0
        %2221 = vmatprep.subr.mxu0 0.0
        %2222 = vmatpush1.msra.mxu0 0.0
        %2223 = vmatprep.subr.mxu0 0.0
        %2224 = vmatpush1.msra.mxu0 0.0
        %2225 = vmatprep.mubr.f32.mxu0 0.0
        %2226 = vmatmul.mubr.f32.gmra.mrb[0].mxu0 %v395
        %v2227 = vpop.f32.mrb[0].mxu0
        %v2228 = vadd.f32 0.0, %v2227
        %v2229 = vpop.f32.mrb[0].mxu0
        %v2230 = vadd.f32 0.0, %v2229
        %2231 = vdwg.mxu0
        %v2232 = vmul.f32 %v2153, %v2153
        %v2233 = vmul.f32 %v2154, %v2154
        %v2234 = vmul.f32 %v2155, %v2155
        %v2235 = vmul.f32 %v2156, %v2156
        %v2236 = vmul.f32 %v2157, %v2157
        %v2237 = vmul.f32 %v2158, %v2158
        %v2238 = vmul.f32 %v2159, %v2159
        %v2239 = vmul.f32 %v2160, %v2160
        %2240 = vmatprep.subr.mxu0 %v2233
        %2241 = vmatpush1.msra.mxu0 %v2232
        %2242 = vmatprep.subr.mxu0 %v2235
        %2243 = vmatpush1.msra.mxu0 %v2234
        %2244 = vmatprep.subr.mxu0 %v2237
        %2245 = vmatpush1.msra.mxu0 %v2236
        %2246 = vmatprep.subr.mxu0 %v2239
        %2247 = vmatpush1.msra.mxu0 %v2238
        %2248 = vmatprep.subr.mxu0 0.0
        %2249 = vmatpush1.msra.mxu0 0.0
        %2250 = vmatprep.subr.mxu0 0.0
        %2251 = vmatpush1.msra.mxu0 0.0
        %2252 = vmatprep.subr.mxu0 0.0
        %2253 = vmatpush1.msra.mxu0 0.0
        %2254 = vmatprep.subr.mxu0 0.0
        %2255 = vmatpush1.msra.mxu0 0.0
        %2256 = vmatprep.subr.mxu0 0.0
        %2257 = vmatpush1.msra.mxu0 0.0
        %2258 = vmatprep.subr.mxu0 0.0
        %2259 = vmatpush1.msra.mxu0 0.0
        %2260 = vmatprep.subr.mxu0 0.0
        %2261 = vmatpush1.msra.mxu0 0.0
        %2262 = vmatprep.subr.mxu0 0.0
        %2263 = vmatpush1.msra.mxu0 0.0
        %2264 = vmatprep.subr.mxu0 0.0
        %2265 = vmatpush1.msra.mxu0 0.0
        %2266 = vmatprep.subr.mxu0 0.0
        %2267 = vmatpush1.msra.mxu0 0.0
        %2268 = vmatprep.subr.mxu0 0.0
        %2269 = vmatpush1.msra.mxu0 0.0
        %2270 = vmatprep.subr.mxu0 0.0
        %2271 = vmatpush1.msra.mxu0 0.0
        %2272 = vmatprep.subr.mxu0 0.0
        %2273 = vmatpush1.msra.mxu0 0.0
        %2274 = vmatprep.subr.mxu0 0.0
        %2275 = vmatpush1.msra.mxu0 0.0
        %2276 = vmatprep.subr.mxu0 0.0
        %2277 = vmatpush1.msra.mxu0 0.0
        %2278 = vmatprep.subr.mxu0 0.0
        %2279 = vmatpush1.msra.mxu0 0.0
        %2280 = vmatprep.subr.mxu0 0.0
        %2281 = vmatpush1.msra.mxu0 0.0
        %2282 = vmatprep.subr.mxu0 0.0
        %2283 = vmatpush1.msra.mxu0 0.0
        %2284 = vmatprep.subr.mxu0 0.0
        %2285 = vmatpush1.msra.mxu0 0.0
        %2286 = vmatprep.subr.mxu0 0.0
        %2287 = vmatpush1.msra.mxu0 0.0
        %2288 = vmatprep.subr.mxu0 0.0
        %2289 = vmatpush1.msra.mxu0 0.0
        %2290 = vmatprep.subr.mxu0 0.0
        %2291 = vmatpush1.msra.mxu0 0.0
        %2292 = vmatprep.subr.mxu0 0.0
        %2293 = vmatpush1.msra.mxu0 0.0
        %2294 = vmatprep.subr.mxu0 0.0
        %2295 = vmatpush1.msra.mxu0 0.0
        %2296 = vmatprep.subr.mxu0 0.0
        %2297 = vmatpush1.msra.mxu0 0.0
        %2298 = vmatprep.subr.mxu0 0.0
        %2299 = vmatpush1.msra.mxu0 0.0
        %2300 = vmatprep.subr.mxu0 0.0
        %2301 = vmatpush1.msra.mxu0 0.0
        %2302 = vmatprep.subr.mxu0 0.0
        %2303 = vmatpush1.msra.mxu0 0.0
        %2304 = vmatprep.mubr.f32.mxu0 0.0
        %2305 = vmatmul.mubr.f32.gmra.mrb[0].mxu0 %v395
        %v2306 = vpop.f32.mrb[0].mxu0
        %v2307 = vadd.f32 0.0, %v2306
        %v2308 = vpop.f32.mrb[0].mxu0
        %v2309 = vadd.f32 0.0, %v2308
        %2310 = vdwg.mxu0
        %2311 = vmatprep.subr.mxu0 0.0
        %2312 = vmatpush1.msra.mxu0 1.0
        %2313 = vmatprep.subr.mxu0 0.0
        %2314 = vmatpush1.msra.mxu0 1.0
        %2315 = vmatprep.subr.mxu0 0.0
        %2316 = vmatpush1.msra.mxu0 1.0
        %2317 = vmatprep.subr.mxu0 0.0
        %2318 = vmatpush1.msra.mxu0 1.0
        %2319 = vmatprep.subr.mxu0 0.0
        %2320 = vmatpush1.msra.mxu0 1.0
        %2321 = vmatprep.subr.mxu0 0.0
        %2322 = vmatpush1.msra.mxu0 1.0
        %2323 = vmatprep.subr.mxu0 0.0
        %2324 = vmatpush1.msra.mxu0 1.0
        %2325 = vmatprep.subr.mxu0 0.0
        %2326 = vmatpush1.msra.mxu0 1.0
        %2327 = vmatprep.subr.mxu0 0.0
        %2328 = vmatpush1.msra.mxu0 1.0
        %2329 = vmatprep.subr.mxu0 0.0
        %2330 = vmatpush1.msra.mxu0 1.0
        %2331 = vmatprep.subr.mxu0 0.0
        %2332 = vmatpush1.msra.mxu0 1.0
        %2333 = vmatprep.subr.mxu0 0.0
        %2334 = vmatpush1.msra.mxu0 1.0
        %2335 = vmatprep.subr.mxu0 0.0
        %2336 = vmatpush1.msra.mxu0 1.0
        %2337 = vmatprep.subr.mxu0 0.0
        %2338 = vmatpush1.msra.mxu0 1.0
        %2339 = vmatprep.subr.mxu0 0.0
        %2340 = vmatpush1.msra.mxu0 1.0
        %2341 = vmatprep.subr.mxu0 0.0
        %2342 = vmatpush1.msra.mxu0 1.0
        %2343 = vmatprep.subr.mxu0 0.0
        %2344 = vmatpush1.msra.mxu0 1.0
        %2345 = vmatprep.subr.mxu0 0.0
        %2346 = vmatpush1.msra.mxu0 1.0
        %2347 = vmatprep.subr.mxu0 0.0
        %2348 = vmatpush1.msra.mxu0 1.0
        %2349 = vmatprep.subr.mxu0 0.0
        %2350 = vmatpush1.msra.mxu0 1.0
        %2351 = vmatprep.subr.mxu0 0.0
        %2352 = vmatpush1.msra.mxu0 1.0
        %2353 = vmatprep.subr.mxu0 0.0
        %2354 = vmatpush1.msra.mxu0 1.0
        %2355 = vmatprep.subr.mxu0 0.0
        %2356 = vmatpush1.msra.mxu0 1.0
        %2357 = vmatprep.subr.mxu0 0.0
        %2358 = vmatpush1.msra.mxu0 1.0
        %2359 = vmatprep.subr.mxu0 0.0
        %2360 = vmatpush1.msra.mxu0 1.0
        %2361 = vmatprep.subr.mxu0 0.0
        %2362 = vmatpush1.msra.mxu0 1.0
        %2363 = vmatprep.subr.mxu0 0.0
        %2364 = vmatpush1.msra.mxu0 1.0
        %2365 = vmatprep.subr.mxu0 0.0
        %2366 = vmatpush1.msra.mxu0 1.0
        %2367 = vmatprep.subr.mxu0 0.0
        %2368 = vmatpush1.msra.mxu0 1.0
        %2369 = vmatprep.subr.mxu0 0.0
        %2370 = vmatpush1.msra.mxu0 1.0
        %2371 = vmatprep.subr.mxu0 0.0
        %2372 = vmatpush1.msra.mxu0 1.0
        %2373 = vmatprep.subr.mxu0 0.0
        %2374 = vmatpush1.msra.mxu0 1.0
        %2375 = vmatprep.mubr.f32.mxu0 %v2230
        %2376 = vmatmul.mubr.f32.gmra.mrb[0].mxu0 %v2228
        %v2377 = vpop.f32.mrb[0].mxu0
        %v2378 = vadd.f32 0.0, %v2377
        %v2379 = vpop.f32.mrb[0].mxu0
        %2380 = vdwg.mxu0
        %s2381 = vtos %v2378
        %2382 = vmatprep.subr.mxu0 0.0
        %2383 = vmatpush1.msra.mxu0 1.0
        %2384 = vmatprep.subr.mxu0 0.0
        %2385 = vmatpush1.msra.mxu0 1.0
        %2386 = vmatprep.subr.mxu0 0.0
        %2387 = vmatpush1.msra.mxu0 1.0
        %2388 = vmatprep.subr.mxu0 0.0
        %2389 = vmatpush1.msra.mxu0 1.0
        %2390 = vmatprep.subr.mxu0 0.0
        %2391 = vmatpush1.msra.mxu0 1.0
        %2392 = vmatprep.subr.mxu0 0.0
        %2393 = vmatpush1.msra.mxu0 1.0
        %2394 = vmatprep.subr.mxu0 0.0
        %2395 = vmatpush1.msra.mxu0 1.0
        %2396 = vmatprep.subr.mxu0 0.0
        %2397 = vmatpush1.msra.mxu0 1.0
        %2398 = vmatprep.subr.mxu0 0.0
        %2399 = vmatpush1.msra.mxu0 1.0
        %2400 = vmatprep.subr.mxu0 0.0
        %2401 = vmatpush1.msra.mxu0 1.0
        %2402 = vmatprep.subr.mxu0 0.0
        %2403 = vmatpush1.msra.mxu0 1.0
        %2404 = vmatprep.subr.mxu0 0.0
        %2405 = vmatpush1.msra.mxu0 1.0
        %2406 = vmatprep.subr.mxu0 0.0
        %2407 = vmatpush1.msra.mxu0 1.0
        %2408 = vmatprep.subr.mxu0 0.0
        %2409 = vmatpush1.msra.mxu0 1.0
        %2410 = vmatprep.subr.mxu0 0.0
        %2411 = vmatpush1.msra.mxu0 1.0
        %2412 = vmatprep.subr.mxu0 0.0
        %2413 = vmatpush1.msra.mxu0 1.0
        %2414 = vmatprep.subr.mxu0 0.0
        %2415 = vmatpush1.msra.mxu0 1.0
        %2416 = vmatprep.subr.mxu0 0.0
        %2417 = vmatpush1.msra.mxu0 1.0
        %2418 = vmatprep.subr.mxu0 0.0
        %2419 = vmatpush1.msra.mxu0 1.0
        %2420 = vmatprep.subr.mxu0 0.0
        %2421 = vmatpush1.msra.mxu0 1.0
        %2422 = vmatprep.subr.mxu0 0.0
        %2423 = vmatpush1.msra.mxu0 1.0
        %2424 = vmatprep.subr.mxu0 0.0
        %2425 = vmatpush1.msra.mxu0 1.0
        %2426 = vmatprep.subr.mxu0 0.0
        %2427 = vmatpush1.msra.mxu0 1.0
        %2428 = vmatprep.subr.mxu0 0.0
        %2429 = vmatpush1.msra.mxu0 1.0
        %2430 = vmatprep.subr.mxu0 0.0
        %2431 = vmatpush1.msra.mxu0 1.0
        %2432 = vmatprep.subr.mxu0 0.0
        %2433 = vmatpush1.msra.mxu0 1.0
        %2434 = vmatprep.subr.mxu0 0.0
        %2435 = vmatpush1.msra.mxu0 1.0
        %2436 = vmatprep.subr.mxu0 0.0
        %2437 = vmatpush1.msra.mxu0 1.0
        %2438 = vmatprep.subr.mxu0 0.0
        %2439 = vmatpush1.msra.mxu0 1.0
        %2440 = vmatprep.subr.mxu0 0.0
        %2441 = vmatpush1.msra.mxu0 1.0
        %2442 = vmatprep.subr.mxu0 0.0
        %2443 = vmatpush1.msra.mxu0 1.0
        %2444 = vmatprep.subr.mxu0 0.0
        %2445 = vmatpush1.msra.mxu0 1.0
        %2446 = vmatprep.mubr.f32.mxu0 %v2309
        %2447 = vmatmul.mubr.f32.gmra.mrb[0].mxu0 %v2307
        %v2448 = vpop.f32.mrb[0].mxu0
        %v2449 = vadd.f32 0.0, %v2448
        %v2450 = vpop.f32.mrb[0].mxu0
        %2451 = vdwg.mxu0
        %s2452 = vtos %v2449
        %s2453 = smul.f32 %s2381, 0.00012207031
        %s2454 = smul.f32 %s2452, 0.00012207031
        %s2455 = smul.f32 %s2453, %s2453
        %s2456 = ssub.f32 %s2454, %s2455
        %s2457 = smax.f32 %s2456, 0.0
        %s2458 = sadd.f32 %s2457, 1e-16
        %v2459 = vstv %s2458
        %v2460 = vrsqrt.pop %v2459
        %s2461 = vtos %v2460
        %s2462 = scalar_lea.vmem %s3, 16
        %v2463 = vld [vmem:[%s2462] sm:$0xf]
        %v2464 = vld [vmem:[%s2462 + $0x4] sm:$0xf]
        %v2465 = vld [vmem:[%s2462 + $0x8] sm:$0xf]
        %v2466 = vld [vmem:[%s2462 + $0xc] sm:$0xf]
        %v2467 = vpack.c.bf16 %v2155, %v2153
        %v2468 = vpack.c.bf16 %v2156, %v2154
        %v2469 = vpack.c.bf16 %v2159, %v2157
        %v2470 = vpack.c.bf16 %v2160, %v2158
        %v2475 = vunpack.c.l.b16 %v2463
        %v2476 = vunpack.c.l.b16 %v2464
        %v2477 = vunpack.c.l.b16 %v2465
        %v2478 = vunpack.c.l.b16 %v2466
        %v2479 = vpack.c.b16 %v2476, %v2475
        %v2480 = vpack.c.b16 %v2478, %v2477
        %v2482 = vsel %vm393, %v2479, 0
        %v2485 = vsel %vm393, %v2480, 0
        %2487 = vmatprep.subr.bf16.mxu0 %v2468
        %2488 = vmatpush1.bf16.msra.mxu0 %v2467
        %2489 = vmatprep.subr.bf16.mxu0 %v2470
        %2490 = vmatpush1.bf16.msra.mxu0 %v2469
        %2491 = vmatprep.subr.bf16.mxu0 0
        %2492 = vmatpush1.bf16.msra.mxu0 0
        %2493 = vmatprep.subr.bf16.mxu0 0
        %2494 = vmatpush1.bf16.msra.mxu0 0
        %2495 = vmatprep.subr.bf16.mxu0 0
        %2496 = vmatpush1.bf16.msra.mxu0 0
        %2497 = vmatprep.subr.bf16.mxu0 0
        %2498 = vmatpush1.bf16.msra.mxu0 0
        %2499 = vmatprep.subr.bf16.mxu0 0
        %2500 = vmatpush1.bf16.msra.mxu0 0
        %2501 = vmatprep.subr.bf16.mxu0 0
        %2502 = vmatpush1.bf16.msra.mxu0 0
        %2503 = vmatprep.subr.bf16.mxu0 0
        %2504 = vmatpush1.bf16.msra.mxu0 0
        %2505 = vmatprep.subr.bf16.mxu0 0
        %2506 = vmatpush1.bf16.msra.mxu0 0
        %2507 = vmatprep.subr.bf16.mxu0 0
        %2508 = vmatpush1.bf16.msra.mxu0 0
        %2509 = vmatprep.subr.bf16.mxu0 0
        %2510 = vmatpush1.bf16.msra.mxu0 0
        %2511 = vmatprep.subr.bf16.mxu0 0
        %2512 = vmatpush1.bf16.msra.mxu0 0
        %2513 = vmatprep.subr.bf16.mxu0 0
        %2514 = vmatpush1.bf16.msra.mxu0 0
        %2515 = vmatprep.subr.bf16.mxu0 0
        %2516 = vmatpush1.bf16.msra.mxu0 0
        %2517 = vmatprep.subr.bf16.mxu0 0
        %2518 = vmatpush1.bf16.msra.mxu0 0
        %2519 = vmatprep.mubr.bf16.mxu0 0
        %2520 = vmatmul.mubr.bf16.gmra.mrb[0].mxu0 %v2482
        %v2521 = vpop.f32.mrb[0].mxu0
        %v2522 = vadd.f32 0.0, %v2521
        %v2523 = vpop.f32.mrb[0].mxu0
        %v2524 = vadd.f32 0.0, %v2523
        %v2525 = vpop.f32.mrb[0].mxu0
        %v2526 = vadd.f32 0.0, %v2525
        %v2527 = vpop.f32.mrb[0].mxu0
        %v2528 = vadd.f32 0.0, %v2527
        %2529 = vmatprep.mubr.bf16.mxu0 0
        %2530 = vmatmul.mubr.bf16.gmra.mrb[0].mxu0 %v2485
        %v2531 = vpop.f32.mrb[0].mxu0
        %v2532 = vadd.f32 0.0, %v2531
        %v2533 = vpop.f32.mrb[0].mxu0
        %v2534 = vadd.f32 0.0, %v2533
        %v2535 = vpop.f32.mrb[0].mxu0
        %v2536 = vadd.f32 0.0, %v2535
        %v2537 = vpop.f32.mrb[0].mxu0
        %v2538 = vadd.f32 0.0, %v2537
        %2539 = vdwg.mxu0
        %s2540 = scalar_lea.vmem %s4, 32
        %v2541 = vld [vmem:[%s2540] sm:$0xff]
        %v2542 = vld [vmem:[%s2540 + $0x8] sm:$0xff]
        %v2543 = vld [vmem:[%s2540 + $0x10] sm:$0xff]
        %v2544 = vld [vmem:[%s2540 + $0x18] sm:$0xff]
        %s2545 = smul.f32 %s2453, %s2461
        %v2546 = vstv %s2545
        %v2547 = vmul.f32 %v2546, %v2541
        %v2548 = vmul.f32 %v2546, %v2542
        %v2549 = vmul.f32 %v2546, %v2543
        %v2550 = vmul.f32 %v2546, %v2544
        %2555 = vrot.lane.b32.xlu0 %v2547, 1
        %v2556 = vpop.permute.xlu0 %2555
        %2557 = vrot.lane.b32.xlu0 %v2548, 1
        %v2558 = vpop.permute.xlu0 %2557
        %2559 = vrot.lane.b32.xlu0 %v2549, 1
        %v2560 = vpop.permute.xlu0 %2559
        %2561 = vrot.lane.b32.xlu0 %v2550, 1
        %v2562 = vpop.permute.xlu0 %2561
        %v2567 = vsub.f32 %v2541, %v2556
        %v2568 = vsub.f32 %v2542, %v2558
        %v2569 = vsub.f32 %v2543, %v2560
        %v2570 = vsub.f32 %v2544, %v2562
        %v2571 = vstv %s2461
        %v2572 = vmul.f32 %v2522, %v2571
        %v2573 = vmul.f32 %v2524, %v2571
        %v2574 = vmul.f32 %v2526, %v2571
        %v2575 = vmul.f32 %v2528, %v2571
        %v2576 = vmul.f32 %v2532, %v2571
        %v2577 = vmul.f32 %v2534, %v2571
        %v2578 = vmul.f32 %v2536, %v2571
        %v2579 = vmul.f32 %v2538, %v2571
        %2581 = vset.pattern.permute.xlu0 1
        %2582 = vperm.xlu0 %2581, %v2567
        %v2583 = vpop.permute.xlu0 %2582
        %2586 = vset.pattern.permute.xlu0 1
        %2587 = vperm.xlu0 %2586, %v2568
        %v2588 = vpop.permute.xlu0 %2587
        %2591 = vset.pattern.permute.xlu0 1
        %2592 = vperm.xlu0 %2591, %v2569
        %v2593 = vpop.permute.xlu0 %2592
        %2596 = vset.pattern.permute.xlu0 1
        %2597 = vperm.xlu0 %2596, %v2570
        %v2598 = vpop.permute.xlu0 %2597
        %v2600 = vadd.f32 %v2572, %v2583
        %v2601 = vadd.f32 %v2573, %v2583
        %v2602 = vadd.f32 %v2574, %v2588
        %v2603 = vadd.f32 %v2575, %v2588
        %v2604 = vadd.f32 %v2576, %v2593
        %v2605 = vadd.f32 %v2577, %v2593
        %v2606 = vadd.f32 %v2578, %v2598
        %v2607 = vadd.f32 %v2579, %v2598
        %v2608 = vadd.f32 %v2600, %v1435
        %v2609 = vadd.f32 %v2601, %v1436
        %v2610 = vadd.f32 %v2602, %v1437
        %v2611 = vadd.f32 %v2603, %v1438
        %v2612 = vadd.f32 %v1439, %v2604
        %v2613 = vadd.f32 %v1440, %v2605
        %v2614 = vadd.f32 %v1441, %v2606
        %v2615 = vadd.f32 %v1442, %v2607
        %s2616 = scalar_lea.vmem %s2, 64
        %v2617 = vld [vmem:[%s2616] sm:$0xff]
        %v2618 = vld [vmem:[%s2616 + $0x8] sm:$0xff]
        %v2619 = vld [vmem:[%s2616 + $0x10] sm:$0xff]
        %v2620 = vld [vmem:[%s2616 + $0x18] sm:$0xff]
        %s2621 = scalar_lea.vmem %s1, 32
        %v2622 = vld [vmem:[%s2621] sm:$0xf]
        %v2623 = vld [vmem:[%s2621 + $0x4] sm:$0xf]
        %v2624 = vld [vmem:[%s2621 + $0x8] sm:$0xf]
        %v2625 = vld [vmem:[%s2621 + $0xc] sm:$0xf]
        %v2626 = vpack.c.bf16 %v2610, %v2608
        %v2627 = vpack.c.bf16 %v2611, %v2609
        %v2632 = vunpack.c.l.b16 %v2622
        %v2633 = vunpack.c.l.b16 %v2623
        %v2634 = vunpack.c.l.b16 %v2624
        %v2635 = vunpack.c.l.b16 %v2625
        %v2636 = vpack.c.b16 %v2633, %v2632
        %v2637 = vpack.c.b16 %v2635, %v2634
        %v2639 = vsel %vm289, %v2636, 0
        %v2642 = vsel %vm289, %v2637, 0
        %2644 = vmatprep.subr.bf16.mxu0 %v2627
        %2645 = vmatpush1.bf16.msra.mxu0 %v2626
        %2646 = vmatprep.subr.bf16.mxu0 0
        %2647 = vmatpush1.bf16.msra.mxu0 0
        %2648 = vmatprep.subr.bf16.mxu0 0
        %2649 = vmatpush1.bf16.msra.mxu0 0
        %2650 = vmatprep.subr.bf16.mxu0 0
        %2651 = vmatpush1.bf16.msra.mxu0 0
        %2652 = vmatprep.subr.bf16.mxu0 0
        %2653 = vmatpush1.bf16.msra.mxu0 0
        %2654 = vmatprep.subr.bf16.mxu0 0
        %2655 = vmatpush1.bf16.msra.mxu0 0
        %2656 = vmatprep.subr.bf16.mxu0 0
        %2657 = vmatpush1.bf16.msra.mxu0 0
        %2658 = vmatprep.subr.bf16.mxu0 0
        %2659 = vmatpush1.bf16.msra.mxu0 0
        %2660 = vmatprep.subr.bf16.mxu0 0
        %2661 = vmatpush1.bf16.msra.mxu0 0
        %2662 = vmatprep.subr.bf16.mxu0 0
        %2663 = vmatpush1.bf16.msra.mxu0 0
        %2664 = vmatprep.subr.bf16.mxu0 0
        %2665 = vmatpush1.bf16.msra.mxu0 0
        %2666 = vmatprep.subr.bf16.mxu0 0
        %2667 = vmatpush1.bf16.msra.mxu0 0
        %2668 = vmatprep.subr.bf16.mxu0 0
        %2669 = vmatpush1.bf16.msra.mxu0 0
        %2670 = vmatprep.subr.bf16.mxu0 0
        %2671 = vmatpush1.bf16.msra.mxu0 0
        %2672 = vmatprep.subr.bf16.mxu0 0
        %2673 = vmatpush1.bf16.msra.mxu0 0
        %2674 = vmatprep.subr.bf16.mxu0 0
        %2675 = vmatpush1.bf16.msra.mxu0 0
        %2676 = vmatprep.mubr.bf16.mxu0 0
        %2677 = vmatmul.mubr.bf16.gmra.mrb[0].mxu0 %v2639
        %v2678 = vpop.f32.mrb[0].mxu0
        %v2679 = vadd.f32 0.0, %v2678
        %v2680 = vpop.f32.mrb[0].mxu0
        %v2681 = vadd.f32 0.0, %v2680
        %v2682 = vpop.f32.mrb[0].mxu0
        %v2683 = vadd.f32 0.0, %v2682
        %v2684 = vpop.f32.mrb[0].mxu0
        %v2685 = vadd.f32 0.0, %v2684
        %2686 = vmatprep.mubr.bf16.mxu0 0
        %2687 = vmatmul.mubr.bf16.gmra.mrb[0].mxu0 %v2642
        %v2688 = vpop.f32.mrb[0].mxu0
        %v2689 = vadd.f32 0.0, %v2688
        %v2690 = vpop.f32.mrb[0].mxu0
        %v2691 = vadd.f32 0.0, %v2690
        %v2692 = vpop.f32.mrb[0].mxu0
        %v2693 = vadd.f32 0.0, %v2692
        %v2694 = vpop.f32.mrb[0].mxu0
        %v2695 = vadd.f32 0.0, %v2694
        %2696 = vdwg.mxu0
        %vm2697 = vcmp.ge.f32.partialorder %v2679, 0.0
        %vm2698 = vcmp.ge.f32.partialorder %v2681, 0.0
        %vm2699 = vcmp.ge.f32.partialorder %v2683, 0.0
        %vm2700 = vcmp.ge.f32.partialorder %v2685, 0.0
        %vm2701 = vcmp.ge.f32.partialorder %v2689, 0.0
        %vm2702 = vcmp.ge.f32.partialorder %v2691, 0.0
        %vm2703 = vcmp.ge.f32.partialorder %v2693, 0.0
        %vm2704 = vcmp.ge.f32.partialorder %v2695, 0.0
        %2706 = vset.pattern.permute.xlu0 0
        %2707 = vperm.xlu0 %2706, %v2617
        %v2708 = vpop.permute.xlu0 %2707
        %2711 = vset.pattern.permute.xlu0 0
        %2712 = vperm.xlu0 %2711, %v2618
        %v2713 = vpop.permute.xlu0 %2712
        %2716 = vset.pattern.permute.xlu0 0
        %2717 = vperm.xlu0 %2716, %v2619
        %v2718 = vpop.permute.xlu0 %2717
        %2721 = vset.pattern.permute.xlu0 0
        %2722 = vperm.xlu0 %2721, %v2620
        %v2723 = vpop.permute.xlu0 %2722
        %v2725 = vmul.f32 %v2708, %v2679
        %v2726 = vmul.f32 %v2708, %v2681
        %v2727 = vmul.f32 %v2713, %v2683
        %v2728 = vmul.f32 %v2713, %v2685
        %v2729 = vmul.f32 %v2718, %v2689
        %v2730 = vmul.f32 %v2718, %v2691
        %v2731 = vmul.f32 %v2723, %v2693
        %v2732 = vmul.f32 %v2723, %v2695
        %v2733 = vsel %vm2697, %v2679, %v2725
        %v2734 = vsel %vm2698, %v2681, %v2726
        %v2735 = vsel %vm2699, %v2683, %v2727
        %v2736 = vsel %vm2700, %v2685, %v2728
        %v2737 = vsel %vm2701, %v2689, %v2729
        %v2738 = vsel %vm2702, %v2691, %v2730
        %v2739 = vsel %vm2703, %v2693, %v2731
        %v2740 = vsel %vm2704, %v2695, %v2732
        %2741 = vmatprep.subr.mxu0 %v2734
        %2742 = vmatpush1.msra.mxu0 %v2733
        %2743 = vmatprep.subr.mxu0 %v2736
        %2744 = vmatpush1.msra.mxu0 %v2735
        %2745 = vmatprep.subr.mxu0 %v2738
        %2746 = vmatpush1.msra.mxu0 %v2737
        %2747 = vmatprep.subr.mxu0 %v2740
        %2748 = vmatpush1.msra.mxu0 %v2739
        %2749 = vmatprep.subr.mxu0 0.0
        %2750 = vmatpush1.msra.mxu0 0.0
        %2751 = vmatprep.subr.mxu0 0.0
        %2752 = vmatpush1.msra.mxu0 0.0
        %2753 = vmatprep.subr.mxu0 0.0
        %2754 = vmatpush1.msra.mxu0 0.0
        %2755 = vmatprep.subr.mxu0 0.0
        %2756 = vmatpush1.msra.mxu0 0.0
        %2757 = vmatprep.subr.mxu0 0.0
        %2758 = vmatpush1.msra.mxu0 0.0
        %2759 = vmatprep.subr.mxu0 0.0
        %2760 = vmatpush1.msra.mxu0 0.0
        %2761 = vmatprep.subr.mxu0 0.0
        %2762 = vmatpush1.msra.mxu0 0.0
        %2763 = vmatprep.subr.mxu0 0.0
        %2764 = vmatpush1.msra.mxu0 0.0
        %2765 = vmatprep.subr.mxu0 0.0
        %2766 = vmatpush1.msra.mxu0 0.0
        %2767 = vmatprep.subr.mxu0 0.0
        %2768 = vmatpush1.msra.mxu0 0.0
        %2769 = vmatprep.subr.mxu0 0.0
        %2770 = vmatpush1.msra.mxu0 0.0
        %2771 = vmatprep.subr.mxu0 0.0
        %2772 = vmatpush1.msra.mxu0 0.0
        %2773 = vmatprep.subr.mxu0 0.0
        %2774 = vmatpush1.msra.mxu0 0.0
        %2775 = vmatprep.subr.mxu0 0.0
        %2776 = vmatpush1.msra.mxu0 0.0
        %2777 = vmatprep.subr.mxu0 0.0
        %2778 = vmatpush1.msra.mxu0 0.0
        %2779 = vmatprep.subr.mxu0 0.0
        %2780 = vmatpush1.msra.mxu0 0.0
        %2781 = vmatprep.subr.mxu0 0.0
        %2782 = vmatpush1.msra.mxu0 0.0
        %2783 = vmatprep.subr.mxu0 0.0
        %2784 = vmatpush1.msra.mxu0 0.0
        %2785 = vmatprep.subr.mxu0 0.0
        %2786 = vmatpush1.msra.mxu0 0.0
        %2787 = vmatprep.subr.mxu0 0.0
        %2788 = vmatpush1.msra.mxu0 0.0
        %2789 = vmatprep.subr.mxu0 0.0
        %2790 = vmatpush1.msra.mxu0 0.0
        %2791 = vmatprep.subr.mxu0 0.0
        %2792 = vmatpush1.msra.mxu0 0.0
        %2793 = vmatprep.subr.mxu0 0.0
        %2794 = vmatpush1.msra.mxu0 0.0
        %2795 = vmatprep.subr.mxu0 0.0
        %2796 = vmatpush1.msra.mxu0 0.0
        %2797 = vmatprep.subr.mxu0 0.0
        %2798 = vmatpush1.msra.mxu0 0.0
        %2799 = vmatprep.subr.mxu0 0.0
        %2800 = vmatpush1.msra.mxu0 0.0
        %2801 = vmatprep.subr.mxu0 0.0
        %2802 = vmatpush1.msra.mxu0 0.0
        %2803 = vmatprep.subr.mxu0 0.0
        %2804 = vmatpush1.msra.mxu0 0.0
        %2805 = vmatprep.mubr.f32.mxu0 0.0
        %2806 = vmatmul.mubr.f32.gmra.mrb[0].mxu0 %v395
        %v2807 = vpop.f32.mrb[0].mxu0
        %v2808 = vadd.f32 0.0, %v2807
        %v2809 = vpop.f32.mrb[0].mxu0
        %v2810 = vadd.f32 0.0, %v2809
        %2811 = vdwg.mxu0
        %v2812 = vmul.f32 %v2733, %v2733
        %v2813 = vmul.f32 %v2734, %v2734
        %v2814 = vmul.f32 %v2735, %v2735
        %v2815 = vmul.f32 %v2736, %v2736
        %v2816 = vmul.f32 %v2737, %v2737
        %v2817 = vmul.f32 %v2738, %v2738
        %v2818 = vmul.f32 %v2739, %v2739
        %v2819 = vmul.f32 %v2740, %v2740
        %2820 = vmatprep.subr.mxu0 %v2813
        %2821 = vmatpush1.msra.mxu0 %v2812
        %2822 = vmatprep.subr.mxu0 %v2815
        %2823 = vmatpush1.msra.mxu0 %v2814
        %2824 = vmatprep.subr.mxu0 %v2817
        %2825 = vmatpush1.msra.mxu0 %v2816
        %2826 = vmatprep.subr.mxu0 %v2819
        %2827 = vmatpush1.msra.mxu0 %v2818
        %2828 = vmatprep.subr.mxu0 0.0
        %2829 = vmatpush1.msra.mxu0 0.0
        %2830 = vmatprep.subr.mxu0 0.0
        %2831 = vmatpush1.msra.mxu0 0.0
        %2832 = vmatprep.subr.mxu0 0.0
        %2833 = vmatpush1.msra.mxu0 0.0
        %2834 = vmatprep.subr.mxu0 0.0
        %2835 = vmatpush1.msra.mxu0 0.0
        %2836 = vmatprep.subr.mxu0 0.0
        %2837 = vmatpush1.msra.mxu0 0.0
        %2838 = vmatprep.subr.mxu0 0.0
        %2839 = vmatpush1.msra.mxu0 0.0
        %2840 = vmatprep.subr.mxu0 0.0
        %2841 = vmatpush1.msra.mxu0 0.0
        %2842 = vmatprep.subr.mxu0 0.0
        %2843 = vmatpush1.msra.mxu0 0.0
        %2844 = vmatprep.subr.mxu0 0.0
        %2845 = vmatpush1.msra.mxu0 0.0
        %2846 = vmatprep.subr.mxu0 0.0
        %2847 = vmatpush1.msra.mxu0 0.0
        %2848 = vmatprep.subr.mxu0 0.0
        %2849 = vmatpush1.msra.mxu0 0.0
        %2850 = vmatprep.subr.mxu0 0.0
        %2851 = vmatpush1.msra.mxu0 0.0
        %2852 = vmatprep.subr.mxu0 0.0
        %2853 = vmatpush1.msra.mxu0 0.0
        %2854 = vmatprep.subr.mxu0 0.0
        %2855 = vmatpush1.msra.mxu0 0.0
        %2856 = vmatprep.subr.mxu0 0.0
        %2857 = vmatpush1.msra.mxu0 0.0
        %2858 = vmatprep.subr.mxu0 0.0
        %2859 = vmatpush1.msra.mxu0 0.0
        %2860 = vmatprep.subr.mxu0 0.0
        %2861 = vmatpush1.msra.mxu0 0.0
        %2862 = vmatprep.subr.mxu0 0.0
        %2863 = vmatpush1.msra.mxu0 0.0
        %2864 = vmatprep.subr.mxu0 0.0
        %2865 = vmatpush1.msra.mxu0 0.0
        %2866 = vmatprep.subr.mxu0 0.0
        %2867 = vmatpush1.msra.mxu0 0.0
        %2868 = vmatprep.subr.mxu0 0.0
        %2869 = vmatpush1.msra.mxu0 0.0
        %2870 = vmatprep.subr.mxu0 0.0
        %2871 = vmatpush1.msra.mxu0 0.0
        %2872 = vmatprep.subr.mxu0 0.0
        %2873 = vmatpush1.msra.mxu0 0.0
        %2874 = vmatprep.subr.mxu0 0.0
        %2875 = vmatpush1.msra.mxu0 0.0
        %2876 = vmatprep.subr.mxu0 0.0
        %2877 = vmatpush1.msra.mxu0 0.0
        %2878 = vmatprep.subr.mxu0 0.0
        %2879 = vmatpush1.msra.mxu0 0.0
        %2880 = vmatprep.subr.mxu0 0.0
        %2881 = vmatpush1.msra.mxu0 0.0
        %2882 = vmatprep.subr.mxu0 0.0
        %2883 = vmatpush1.msra.mxu0 0.0
        %2884 = vmatprep.mubr.f32.mxu0 0.0
        %2885 = vmatmul.mubr.f32.gmra.mrb[0].mxu0 %v395
        %v2886 = vpop.f32.mrb[0].mxu0
        %v2887 = vadd.f32 0.0, %v2886
        %v2888 = vpop.f32.mrb[0].mxu0
        %v2889 = vadd.f32 0.0, %v2888
        %2890 = vdwg.mxu0
        %2891 = vmatprep.subr.mxu0 0.0
        %2892 = vmatpush1.msra.mxu0 1.0
        %2893 = vmatprep.subr.mxu0 0.0
        %2894 = vmatpush1.msra.mxu0 1.0
        %2895 = vmatprep.subr.mxu0 0.0
        %2896 = vmatpush1.msra.mxu0 1.0
        %2897 = vmatprep.subr.mxu0 0.0
        %2898 = vmatpush1.msra.mxu0 1.0
        %2899 = vmatprep.subr.mxu0 0.0
        %2900 = vmatpush1.msra.mxu0 1.0
        %2901 = vmatprep.subr.mxu0 0.0
        %2902 = vmatpush1.msra.mxu0 1.0
        %2903 = vmatprep.subr.mxu0 0.0
        %2904 = vmatpush1.msra.mxu0 1.0
        %2905 = vmatprep.subr.mxu0 0.0
        %2906 = vmatpush1.msra.mxu0 1.0
        %2907 = vmatprep.subr.mxu0 0.0
        %2908 = vmatpush1.msra.mxu0 1.0
        %2909 = vmatprep.subr.mxu0 0.0
        %2910 = vmatpush1.msra.mxu0 1.0
        %2911 = vmatprep.subr.mxu0 0.0
        %2912 = vmatpush1.msra.mxu0 1.0
        %2913 = vmatprep.subr.mxu0 0.0
        %2914 = vmatpush1.msra.mxu0 1.0
        %2915 = vmatprep.subr.mxu0 0.0
        %2916 = vmatpush1.msra.mxu0 1.0
        %2917 = vmatprep.subr.mxu0 0.0
        %2918 = vmatpush1.msra.mxu0 1.0
        %2919 = vmatprep.subr.mxu0 0.0
        %2920 = vmatpush1.msra.mxu0 1.0
        %2921 = vmatprep.subr.mxu0 0.0
        %2922 = vmatpush1.msra.mxu0 1.0
        %2923 = vmatprep.subr.mxu0 0.0
        %2924 = vmatpush1.msra.mxu0 1.0
        %2925 = vmatprep.subr.mxu0 0.0
        %2926 = vmatpush1.msra.mxu0 1.0
        %2927 = vmatprep.subr.mxu0 0.0
        %2928 = vmatpush1.msra.mxu0 1.0
        %2929 = vmatprep.subr.mxu0 0.0
        %2930 = vmatpush1.msra.mxu0 1.0
        %2931 = vmatprep.subr.mxu0 0.0
        %2932 = vmatpush1.msra.mxu0 1.0
        %2933 = vmatprep.subr.mxu0 0.0
        %2934 = vmatpush1.msra.mxu0 1.0
        %2935 = vmatprep.subr.mxu0 0.0
        %2936 = vmatpush1.msra.mxu0 1.0
        %2937 = vmatprep.subr.mxu0 0.0
        %2938 = vmatpush1.msra.mxu0 1.0
        %2939 = vmatprep.subr.mxu0 0.0
        %2940 = vmatpush1.msra.mxu0 1.0
        %2941 = vmatprep.subr.mxu0 0.0
        %2942 = vmatpush1.msra.mxu0 1.0
        %2943 = vmatprep.subr.mxu0 0.0
        %2944 = vmatpush1.msra.mxu0 1.0
        %2945 = vmatprep.subr.mxu0 0.0
        %2946 = vmatpush1.msra.mxu0 1.0
        %2947 = vmatprep.subr.mxu0 0.0
        %2948 = vmatpush1.msra.mxu0 1.0
        %2949 = vmatprep.subr.mxu0 0.0
        %2950 = vmatpush1.msra.mxu0 1.0
        %2951 = vmatprep.subr.mxu0 0.0
        %2952 = vmatpush1.msra.mxu0 1.0
        %2953 = vmatprep.subr.mxu0 0.0
        %2954 = vmatpush1.msra.mxu0 1.0
        %2955 = vmatprep.mubr.f32.mxu0 %v2810
        %2956 = vmatmul.mubr.f32.gmra.mrb[0].mxu0 %v2808
        %v2957 = vpop.f32.mrb[0].mxu0
        %v2958 = vadd.f32 0.0, %v2957
        %v2959 = vpop.f32.mrb[0].mxu0
        %2960 = vdwg.mxu0
        %s2961 = vtos %v2958
        %2962 = vmatprep.subr.mxu0 0.0
        %2963 = vmatpush1.msra.mxu0 1.0
        %2964 = vmatprep.subr.mxu0 0.0
        %2965 = vmatpush1.msra.mxu0 1.0
        %2966 = vmatprep.subr.mxu0 0.0
        %2967 = vmatpush1.msra.mxu0 1.0
        %2968 = vmatprep.subr.mxu0 0.0
        %2969 = vmatpush1.msra.mxu0 1.0
        %2970 = vmatprep.subr.mxu0 0.0
        %2971 = vmatpush1.msra.mxu0 1.0
        %2972 = vmatprep.subr.mxu0 0.0
        %2973 = vmatpush1.msra.mxu0 1.0
        %2974 = vmatprep.subr.mxu0 0.0
        %2975 = vmatpush1.msra.mxu0 1.0
        %2976 = vmatprep.subr.mxu0 0.0
        %2977 = vmatpush1.msra.mxu0 1.0
        %2978 = vmatprep.subr.mxu0 0.0
        %2979 = vmatpush1.msra.mxu0 1.0
        %2980 = vmatprep.subr.mxu0 0.0
        %2981 = vmatpush1.msra.mxu0 1.0
        %2982 = vmatprep.subr.mxu0 0.0
        %2983 = vmatpush1.msra.mxu0 1.0
        %2984 = vmatprep.subr.mxu0 0.0
        %2985 = vmatpush1.msra.mxu0 1.0
        %2986 = vmatprep.subr.mxu0 0.0
        %2987 = vmatpush1.msra.mxu0 1.0
        %2988 = vmatprep.subr.mxu0 0.0
        %2989 = vmatpush1.msra.mxu0 1.0
        %2990 = vmatprep.subr.mxu0 0.0
        %2991 = vmatpush1.msra.mxu0 1.0
        %2992 = vmatprep.subr.mxu0 0.0
        %2993 = vmatpush1.msra.mxu0 1.0
        %2994 = vmatprep.subr.mxu0 0.0
        %2995 = vmatpush1.msra.mxu0 1.0
        %2996 = vmatprep.subr.mxu0 0.0
        %2997 = vmatpush1.msra.mxu0 1.0
        %2998 = vmatprep.subr.mxu0 0.0
        %2999 = vmatpush1.msra.mxu0 1.0
        %3000 = vmatprep.subr.mxu0 0.0
        %3001 = vmatpush1.msra.mxu0 1.0
        %3002 = vmatprep.subr.mxu0 0.0
        %3003 = vmatpush1.msra.mxu0 1.0
        %3004 = vmatprep.subr.mxu0 0.0
        %3005 = vmatpush1.msra.mxu0 1.0
        %3006 = vmatprep.subr.mxu0 0.0
        %3007 = vmatpush1.msra.mxu0 1.0
        %3008 = vmatprep.subr.mxu0 0.0
        %3009 = vmatpush1.msra.mxu0 1.0
        %3010 = vmatprep.subr.mxu0 0.0
        %3011 = vmatpush1.msra.mxu0 1.0
        %3012 = vmatprep.subr.mxu0 0.0
        %3013 = vmatpush1.msra.mxu0 1.0
        %3014 = vmatprep.subr.mxu0 0.0
        %3015 = vmatpush1.msra.mxu0 1.0
        %3016 = vmatprep.subr.mxu0 0.0
        %3017 = vmatpush1.msra.mxu0 1.0
        %3018 = vmatprep.subr.mxu0 0.0
        %3019 = vmatpush1.msra.mxu0 1.0
        %3020 = vmatprep.subr.mxu0 0.0
        %3021 = vmatpush1.msra.mxu0 1.0
        %3022 = vmatprep.subr.mxu0 0.0
        %3023 = vmatpush1.msra.mxu0 1.0
        %3024 = vmatprep.subr.mxu0 0.0
        %3025 = vmatpush1.msra.mxu0 1.0
        %3026 = vmatprep.mubr.f32.mxu0 %v2889
        %3027 = vmatmul.mubr.f32.gmra.mrb[0].mxu0 %v2887
        %v3028 = vpop.f32.mrb[0].mxu0
        %v3029 = vadd.f32 0.0, %v3028
        %v3030 = vpop.f32.mrb[0].mxu0
        %3031 = vdwg.mxu0
        %s3032 = vtos %v3029
        %s3033 = smul.f32 %s2961, 0.00012207031
        %s3034 = smul.f32 %s3032, 0.00012207031
        %s3035 = smul.f32 %s3033, %s3033
        %s3036 = ssub.f32 %s3034, %s3035
        %s3037 = smax.f32 %s3036, 0.0
        %s3038 = sadd.f32 %s3037, 1e-16
        %v3039 = vstv %s3038
        %v3040 = vrsqrt.pop %v3039
        %s3041 = vtos %v3040
        %v3042 = vstv %s3041
        %v3043 = vmul.f32 %v2617, %v3042
        %v3044 = vmul.f32 %v2618, %v3042
        %v3045 = vmul.f32 %v2619, %v3042
        %v3046 = vmul.f32 %v2620, %v3042
        %v3047 = vstv %s3033
        %v3048 = vmul.f32 %v3047, %v3043
        %v3049 = vmul.f32 %v3047, %v3044
        %v3050 = vmul.f32 %v3047, %v3045
        %v3051 = vmul.f32 %v3047, %v3046
        %3056 = vrot.lane.b32.xlu0 %v3048, 1
        %v3057 = vpop.permute.xlu0 %3056
        %3058 = vrot.lane.b32.xlu0 %v3049, 1
        %v3059 = vpop.permute.xlu0 %3058
        %3060 = vrot.lane.b32.xlu0 %v3050, 1
        %v3061 = vpop.permute.xlu0 %3060
        %3062 = vrot.lane.b32.xlu0 %v3051, 1
        %v3063 = vpop.permute.xlu0 %3062
        %v3068 = vsub.f32 %v2617, %v3057
        %v3069 = vsub.f32 %v2618, %v3059
        %v3070 = vsub.f32 %v2619, %v3061
        %v3071 = vsub.f32 %v2620, %v3063
        %3073 = vset.pattern.permute.xlu0 1
        %3074 = vperm.xlu0 %3073, %v3043
        %v3075 = vpop.permute.xlu0 %3074
        %3078 = vset.pattern.permute.xlu0 1
        %3079 = vperm.xlu0 %3078, %v3044
        %v3080 = vpop.permute.xlu0 %3079
        %3083 = vset.pattern.permute.xlu0 1
        %3084 = vperm.xlu0 %3083, %v3045
        %v3085 = vpop.permute.xlu0 %3084
        %3088 = vset.pattern.permute.xlu0 1
        %3089 = vperm.xlu0 %3088, %v3046
        %v3090 = vpop.permute.xlu0 %3089
        %v3092 = vmul.f32 %v2733, %v3075
        %v3093 = vmul.f32 %v2734, %v3075
        %v3094 = vmul.f32 %v2735, %v3080
        %v3095 = vmul.f32 %v2736, %v3080
        %v3096 = vmul.f32 %v2737, %v3085
        %v3097 = vmul.f32 %v2738, %v3085
        %v3098 = vmul.f32 %v2739, %v3090
        %v3099 = vmul.f32 %v2740, %v3090
        %3101 = vset.pattern.permute.xlu0 2
        %3102 = vperm.xlu0 %3101, %v3068
        %v3103 = vpop.permute.xlu0 %3102
        %3106 = vset.pattern.permute.xlu0 2
        %3107 = vperm.xlu0 %3106, %v3069
        %v3108 = vpop.permute.xlu0 %3107
        %3111 = vset.pattern.permute.xlu0 2
        %3112 = vperm.xlu0 %3111, %v3070
        %v3113 = vpop.permute.xlu0 %3112
        %3116 = vset.pattern.permute.xlu0 2
        %3117 = vperm.xlu0 %3116, %v3071
        %v3118 = vpop.permute.xlu0 %3117
        %v3120 = vadd.f32 %v3092, %v3103
        %v3121 = vadd.f32 %v3093, %v3103
        %v3122 = vadd.f32 %v3094, %v3108
        %v3123 = vadd.f32 %v3095, %v3108
        %v3124 = vadd.f32 %v3096, %v3113
        %v3125 = vadd.f32 %v3097, %v3113
        %v3126 = vadd.f32 %v3098, %v3118
        %v3127 = vadd.f32 %v3099, %v3118
        %3128 = vset.pattern.permute.xlu0 4
        %3129 = vperm.xlu0 %3128, %v2617
        %v3130 = vpop.permute.xlu0 %3129
        %3132 = vset.pattern.permute.xlu0 4
        %3133 = vperm.xlu0 %3132, %v2618
        %v3134 = vpop.permute.xlu0 %3133
        %3136 = vset.pattern.permute.xlu0 4
        %3137 = vperm.xlu0 %3136, %v2619
        %v3138 = vpop.permute.xlu0 %3137
        %3140 = vset.pattern.permute.xlu0 4
        %3141 = vperm.xlu0 %3140, %v2620
        %v3142 = vpop.permute.xlu0 %3141
        %v3144 = vmul.f32 %v3130, %v3120
        %v3145 = vmul.f32 %v3130, %v3121
        %v3146 = vmul.f32 %v3134, %v3122
        %v3147 = vmul.f32 %v3134, %v3123
        %v3148 = vmul.f32 %v3138, %v3124
        %v3149 = vmul.f32 %v3138, %v3125
        %v3150 = vmul.f32 %v3142, %v3126
        %v3151 = vmul.f32 %v3142, %v3127
        %vm3152 = vcmp.ge.s32.totalorder %v267, 4
        %vm3153 = vcmp.ge.s32.totalorder %v268, 4
        %3154 = vrot.lane.b32.xlu0 %v3120, 4
        %v3155 = vpop.permute.xlu0 %3154
        %3156 = vrot.lane.b32.xlu0 %v3122, 4
        %v3157 = vpop.permute.xlu0 %3156
        %3158 = vrot.lane.b32.xlu0 %v3124, 4
        %v3159 = vpop.permute.xlu0 %3158
        %3160 = vrot.lane.b32.xlu0 %v3126, 4
        %v3161 = vpop.permute.xlu0 %3160
        %3162 = vrot.lane.b32.xlu0 %v3121, 4
        %v3163 = vpop.permute.xlu0 %3162
        %3164 = vrot.lane.b32.xlu0 %v3123, 4
        %v3165 = vpop.permute.xlu0 %3164
        %3166 = vrot.lane.b32.xlu0 %v3125, 4
        %v3167 = vpop.permute.xlu0 %3166
        %3168 = vrot.lane.b32.xlu0 %v3127, 4
        %v3169 = vpop.permute.xlu0 %3168
        %vm3170 = vcmp.lt.s32.totalorder %v267, 4
        %v3171 = vsel %vm3170, %v3155, %v3163
        %v3172 = vsel %vm3170, %v3157, %v3165
        %v3173 = vsel %vm3170, %v3159, %v3167
        %v3174 = vsel %vm3170, %v3161, %v3169
        %v3175 = vsel %vm3170, %v3163, %v3155
        %v3176 = vsel %vm3170, %v3165, %v3157
        %v3177 = vsel %vm3170, %v3167, %v3159
        %v3178 = vsel %vm3170, %v3169, %v3161
        %v3179 = vsel %vm3152, 1, 0
        %v3180 = vsel %vm3153, 1, 0
        %vm3181 = vcmp.eq.s32.totalorder %v3179, 1
        %vm3182 = vcmp.eq.s32.totalorder %v3180, 1
        %v3183 = vsel %vm3181, %v3175, 0.0
        %v3184 = vsel %vm3182, %v3171, 0.0
        %v3185 = vsel %vm3181, %v3176, 0.0
        %v3186 = vsel %vm3182, %v3172, 0.0
        %v3187 = vsel %vm3181, %v3177, 0.0
        %v3188 = vsel %vm3182, %v3173, 0.0
        %v3189 = vsel %vm3181, %v3178, 0.0
        %v3190 = vsel %vm3182, %v3174, 0.0
        %3191 = vset.pattern.permute.xlu0 3
        %3192 = vperm.xlu0 %3191, %v2617
        %v3193 = vpop.permute.xlu0 %3192
        %3195 = vset.pattern.permute.xlu0 3
        %3196 = vperm.xlu0 %3195, %v2618
        %v3197 = vpop.permute.xlu0 %3196
        %3199 = vset.pattern.permute.xlu0 3
        %3200 = vperm.xlu0 %3199, %v2619
        %v3201 = vpop.permute.xlu0 %3200
        %3203 = vset.pattern.permute.xlu0 3
        %3204 = vperm.xlu0 %3203, %v2620
        %v3205 = vpop.permute.xlu0 %3204
        %v3207 = vmul.f32 %v3193, %v3183
        %v3208 = vmul.f32 %v3193, %v3184
        %v3209 = vmul.f32 %v3197, %v3185
        %v3210 = vmul.f32 %v3197, %v3186
        %v3211 = vmul.f32 %v3201, %v3187
        %v3212 = vmul.f32 %v3201, %v3188
        %v3213 = vmul.f32 %v3205, %v3189
        %v3214 = vmul.f32 %v3205, %v3190
        %v3215 = vadd.f32 %v3144, %v3207
        %v3216 = vadd.f32 %v3145, %v3208
        %v3217 = vadd.f32 %v3146, %v3209
        %v3218 = vadd.f32 %v3147, %v3210
        %v3219 = vadd.f32 %v3148, %v3211
        %v3220 = vadd.f32 %v3149, %v3212
        %v3221 = vadd.f32 %v3150, %v3213
        %v3222 = vadd.f32 %v3151, %v3214
        %vm3223 = vcmp.lt.s32.totalorder %v267, 252
        %vm3224 = vcmp.lt.s32.totalorder %v268, 252
        %3225 = vrot.lane.b32.xlu0 %v3120, 124
        %v3226 = vpop.permute.xlu0 %3225
        %3227 = vrot.lane.b32.xlu0 %v3122, 124
        %v3228 = vpop.permute.xlu0 %3227
        %3229 = vrot.lane.b32.xlu0 %v3124, 124
        %v3230 = vpop.permute.xlu0 %3229
        %3231 = vrot.lane.b32.xlu0 %v3126, 124
        %v3232 = vpop.permute.xlu0 %3231
        %3233 = vrot.lane.b32.xlu0 %v3121, 124
        %v3234 = vpop.permute.xlu0 %3233
        %3235 = vrot.lane.b32.xlu0 %v3123, 124
        %v3236 = vpop.permute.xlu0 %3235
        %3237 = vrot.lane.b32.xlu0 %v3125, 124
        %v3238 = vpop.permute.xlu0 %3237
        %3239 = vrot.lane.b32.xlu0 %v3127, 124
        %v3240 = vpop.permute.xlu0 %3239
        %vm3241 = vcmp.lt.s32.totalorder %v267, 124
        %v3242 = vsel %vm3241, %v3226, %v3234
        %v3243 = vsel %vm3241, %v3228, %v3236
        %v3244 = vsel %vm3241, %v3230, %v3238
        %v3245 = vsel %vm3241, %v3232, %v3240
        %v3246 = vsel %vm3241, %v3234, %v3226
        %v3247 = vsel %vm3241, %v3236, %v3228
        %v3248 = vsel %vm3241, %v3238, %v3230
        %v3249 = vsel %vm3241, %v3240, %v3232
        %v3250 = vsel %vm3223, 1, 0
        %v3251 = vsel %vm3224, 1, 0
        %vm3252 = vcmp.eq.s32.totalorder %v3250, 1
        %vm3253 = vcmp.eq.s32.totalorder %v3251, 1
        %v3254 = vsel %vm3252, %v3242, 0.0
        %v3255 = vsel %vm3253, %v3246, 0.0
        %v3256 = vsel %vm3252, %v3243, 0.0
        %v3257 = vsel %vm3253, %v3247, 0.0
        %v3258 = vsel %vm3252, %v3244, 0.0
        %v3259 = vsel %vm3253, %v3248, 0.0
        %v3260 = vsel %vm3252, %v3245, 0.0
        %v3261 = vsel %vm3253, %v3249, 0.0
        %3262 = vset.pattern.permute.xlu0 5
        %3263 = vperm.xlu0 %3262, %v2617
        %v3264 = vpop.permute.xlu0 %3263
        %3266 = vset.pattern.permute.xlu0 5
        %3267 = vperm.xlu0 %3266, %v2618
        %v3268 = vpop.permute.xlu0 %3267
        %3270 = vset.pattern.permute.xlu0 5
        %3271 = vperm.xlu0 %3270, %v2619
        %v3272 = vpop.permute.xlu0 %3271
        %3274 = vset.pattern.permute.xlu0 5
        %3275 = vperm.xlu0 %3274, %v2620
        %v3276 = vpop.permute.xlu0 %3275
        %v3278 = vmul.f32 %v3264, %v3254
        %v3279 = vmul.f32 %v3264, %v3255
        %v3280 = vmul.f32 %v3268, %v3256
        %v3281 = vmul.f32 %v3268, %v3257
        %v3282 = vmul.f32 %v3272, %v3258
        %v3283 = vmul.f32 %v3272, %v3259
        %v3284 = vmul.f32 %v3276, %v3260
        %v3285 = vmul.f32 %v3276, %v3261
        %v3286 = vadd.f32 %v3215, %v3278
        %v3287 = vadd.f32 %v3216, %v3279
        %v3288 = vadd.f32 %v3217, %v3280
        %v3289 = vadd.f32 %v3218, %v3281
        %v3290 = vadd.f32 %v3219, %v3282
        %v3291 = vadd.f32 %v3220, %v3283
        %v3292 = vadd.f32 %v3221, %v3284
        %v3293 = vadd.f32 %v3222, %v3285
        %vm3294 = vcmp.ge.f32.partialorder %v3286, 0.0
        %vm3295 = vcmp.ge.f32.partialorder %v3287, 0.0
        %vm3296 = vcmp.ge.f32.partialorder %v3288, 0.0
        %vm3297 = vcmp.ge.f32.partialorder %v3289, 0.0
        %vm3298 = vcmp.ge.f32.partialorder %v3290, 0.0
        %vm3299 = vcmp.ge.f32.partialorder %v3291, 0.0
        %vm3300 = vcmp.ge.f32.partialorder %v3292, 0.0
        %vm3301 = vcmp.ge.f32.partialorder %v3293, 0.0
        %3302 = vset.pattern.permute.xlu0 6
        %3303 = vperm.xlu0 %3302, %v2617
        %v3304 = vpop.permute.xlu0 %3303
        %3306 = vset.pattern.permute.xlu0 6
        %3307 = vperm.xlu0 %3306, %v2618
        %v3308 = vpop.permute.xlu0 %3307
        %3310 = vset.pattern.permute.xlu0 6
        %3311 = vperm.xlu0 %3310, %v2619
        %v3312 = vpop.permute.xlu0 %3311
        %3314 = vset.pattern.permute.xlu0 6
        %3315 = vperm.xlu0 %3314, %v2620
        %v3316 = vpop.permute.xlu0 %3315
        %v3318 = vmul.f32 %v3304, %v3286
        %v3319 = vmul.f32 %v3304, %v3287
        %v3320 = vmul.f32 %v3308, %v3288
        %v3321 = vmul.f32 %v3308, %v3289
        %v3322 = vmul.f32 %v3312, %v3290
        %v3323 = vmul.f32 %v3312, %v3291
        %v3324 = vmul.f32 %v3316, %v3292
        %v3325 = vmul.f32 %v3316, %v3293
        %v3326 = vsel %vm3294, %v3286, %v3318
        %v3327 = vsel %vm3295, %v3287, %v3319
        %v3328 = vsel %vm3296, %v3288, %v3320
        %v3329 = vsel %vm3297, %v3289, %v3321
        %v3330 = vsel %vm3298, %v3290, %v3322
        %v3331 = vsel %vm3299, %v3291, %v3323
        %v3332 = vsel %vm3300, %v3292, %v3324
        %v3333 = vsel %vm3301, %v3293, %v3325
        %3334 = vmatprep.subr.mxu0 %v3327
        %3335 = vmatpush1.msra.mxu0 %v3326
        %3336 = vmatprep.subr.mxu0 %v3329
        %3337 = vmatpush1.msra.mxu0 %v3328
        %3338 = vmatprep.subr.mxu0 %v3331
        %3339 = vmatpush1.msra.mxu0 %v3330
        %3340 = vmatprep.subr.mxu0 %v3333
        %3341 = vmatpush1.msra.mxu0 %v3332
        %3342 = vmatprep.subr.mxu0 0.0
        %3343 = vmatpush1.msra.mxu0 0.0
        %3344 = vmatprep.subr.mxu0 0.0
        %3345 = vmatpush1.msra.mxu0 0.0
        %3346 = vmatprep.subr.mxu0 0.0
        %3347 = vmatpush1.msra.mxu0 0.0
        %3348 = vmatprep.subr.mxu0 0.0
        %3349 = vmatpush1.msra.mxu0 0.0
        %3350 = vmatprep.subr.mxu0 0.0
        %3351 = vmatpush1.msra.mxu0 0.0
        %3352 = vmatprep.subr.mxu0 0.0
        %3353 = vmatpush1.msra.mxu0 0.0
        %3354 = vmatprep.subr.mxu0 0.0
        %3355 = vmatpush1.msra.mxu0 0.0
        %3356 = vmatprep.subr.mxu0 0.0
        %3357 = vmatpush1.msra.mxu0 0.0
        %3358 = vmatprep.subr.mxu0 0.0
        %3359 = vmatpush1.msra.mxu0 0.0
        %3360 = vmatprep.subr.mxu0 0.0
        %3361 = vmatpush1.msra.mxu0 0.0
        %3362 = vmatprep.subr.mxu0 0.0
        %3363 = vmatpush1.msra.mxu0 0.0
        %3364 = vmatprep.subr.mxu0 0.0
        %3365 = vmatpush1.msra.mxu0 0.0
        %3366 = vmatprep.subr.mxu0 0.0
        %3367 = vmatpush1.msra.mxu0 0.0
        %3368 = vmatprep.subr.mxu0 0.0
        %3369 = vmatpush1.msra.mxu0 0.0
        %3370 = vmatprep.subr.mxu0 0.0
        %3371 = vmatpush1.msra.mxu0 0.0
        %3372 = vmatprep.subr.mxu0 0.0
        %3373 = vmatpush1.msra.mxu0 0.0
        %3374 = vmatprep.subr.mxu0 0.0
        %3375 = vmatpush1.msra.mxu0 0.0
        %3376 = vmatprep.subr.mxu0 0.0
        %3377 = vmatpush1.msra.mxu0 0.0
        %3378 = vmatprep.subr.mxu0 0.0
        %3379 = vmatpush1.msra.mxu0 0.0
        %3380 = vmatprep.subr.mxu0 0.0
        %3381 = vmatpush1.msra.mxu0 0.0
        %3382 = vmatprep.subr.mxu0 0.0
        %3383 = vmatpush1.msra.mxu0 0.0
        %3384 = vmatprep.subr.mxu0 0.0
        %3385 = vmatpush1.msra.mxu0 0.0
        %3386 = vmatprep.subr.mxu0 0.0
        %3387 = vmatpush1.msra.mxu0 0.0
        %3388 = vmatprep.subr.mxu0 0.0
        %3389 = vmatpush1.msra.mxu0 0.0
        %3390 = vmatprep.subr.mxu0 0.0
        %3391 = vmatpush1.msra.mxu0 0.0
        %3392 = vmatprep.subr.mxu0 0.0
        %3393 = vmatpush1.msra.mxu0 0.0
        %3394 = vmatprep.subr.mxu0 0.0
        %3395 = vmatpush1.msra.mxu0 0.0
        %3396 = vmatprep.subr.mxu0 0.0
        %3397 = vmatpush1.msra.mxu0 0.0
        %3398 = vmatprep.mubr.f32.mxu0 0.0
        %3399 = vmatmul.mubr.f32.gmra.mrb[0].mxu0 %v395
        %v3400 = vpop.f32.mrb[0].mxu0
        %v3401 = vadd.f32 0.0, %v3400
        %v3402 = vpop.f32.mrb[0].mxu0
        %v3403 = vadd.f32 0.0, %v3402
        %3404 = vdwg.mxu0
        %v3405 = vmul.f32 %v3326, %v3326
        %v3406 = vmul.f32 %v3327, %v3327
        %v3407 = vmul.f32 %v3328, %v3328
        %v3408 = vmul.f32 %v3329, %v3329
        %v3409 = vmul.f32 %v3330, %v3330
        %v3410 = vmul.f32 %v3331, %v3331
        %v3411 = vmul.f32 %v3332, %v3332
        %v3412 = vmul.f32 %v3333, %v3333
        %3413 = vmatprep.subr.mxu0 %v3406
        %3414 = vmatpush1.msra.mxu0 %v3405
        %3415 = vmatprep.subr.mxu0 %v3408
        %3416 = vmatpush1.msra.mxu0 %v3407
        %3417 = vmatprep.subr.mxu0 %v3410
        %3418 = vmatpush1.msra.mxu0 %v3409
        %3419 = vmatprep.subr.mxu0 %v3412
        %3420 = vmatpush1.msra.mxu0 %v3411
        %3421 = vmatprep.subr.mxu0 0.0
        %3422 = vmatpush1.msra.mxu0 0.0
        %3423 = vmatprep.subr.mxu0 0.0
        %3424 = vmatpush1.msra.mxu0 0.0
        %3425 = vmatprep.subr.mxu0 0.0
        %3426 = vmatpush1.msra.mxu0 0.0
        %3427 = vmatprep.subr.mxu0 0.0
        %3428 = vmatpush1.msra.mxu0 0.0
        %3429 = vmatprep.subr.mxu0 0.0
        %3430 = vmatpush1.msra.mxu0 0.0
        %3431 = vmatprep.subr.mxu0 0.0
        %3432 = vmatpush1.msra.mxu0 0.0
        %3433 = vmatprep.subr.mxu0 0.0
        %3434 = vmatpush1.msra.mxu0 0.0
        %3435 = vmatprep.subr.mxu0 0.0
        %3436 = vmatpush1.msra.mxu0 0.0
        %3437 = vmatprep.subr.mxu0 0.0
        %3438 = vmatpush1.msra.mxu0 0.0
        %3439 = vmatprep.subr.mxu0 0.0
        %3440 = vmatpush1.msra.mxu0 0.0
        %3441 = vmatprep.subr.mxu0 0.0
        %3442 = vmatpush1.msra.mxu0 0.0
        %3443 = vmatprep.subr.mxu0 0.0
        %3444 = vmatpush1.msra.mxu0 0.0
        %3445 = vmatprep.subr.mxu0 0.0
        %3446 = vmatpush1.msra.mxu0 0.0
        %3447 = vmatprep.subr.mxu0 0.0
        %3448 = vmatpush1.msra.mxu0 0.0
        %3449 = vmatprep.subr.mxu0 0.0
        %3450 = vmatpush1.msra.mxu0 0.0
        %3451 = vmatprep.subr.mxu0 0.0
        %3452 = vmatpush1.msra.mxu0 0.0
        %3453 = vmatprep.subr.mxu0 0.0
        %3454 = vmatpush1.msra.mxu0 0.0
        %3455 = vmatprep.subr.mxu0 0.0
        %3456 = vmatpush1.msra.mxu0 0.0
        %3457 = vmatprep.subr.mxu0 0.0
        %3458 = vmatpush1.msra.mxu0 0.0
        %3459 = vmatprep.subr.mxu0 0.0
        %3460 = vmatpush1.msra.mxu0 0.0
        %3461 = vmatprep.subr.mxu0 0.0
        %3462 = vmatpush1.msra.mxu0 0.0
        %3463 = vmatprep.subr.mxu0 0.0
        %3464 = vmatpush1.msra.mxu0 0.0
        %3465 = vmatprep.subr.mxu0 0.0
        %3466 = vmatpush1.msra.mxu0 0.0
        %3467 = vmatprep.subr.mxu0 0.0
        %3468 = vmatpush1.msra.mxu0 0.0
        %3469 = vmatprep.subr.mxu0 0.0
        %3470 = vmatpush1.msra.mxu0 0.0
        %3471 = vmatprep.subr.mxu0 0.0
        %3472 = vmatpush1.msra.mxu0 0.0
        %3473 = vmatprep.subr.mxu0 0.0
        %3474 = vmatpush1.msra.mxu0 0.0
        %3475 = vmatprep.subr.mxu0 0.0
        %3476 = vmatpush1.msra.mxu0 0.0
        %3477 = vmatprep.mubr.f32.mxu0 0.0
        %3478 = vmatmul.mubr.f32.gmra.mrb[0].mxu0 %v395
        %v3479 = vpop.f32.mrb[0].mxu0
        %v3480 = vadd.f32 0.0, %v3479
        %v3481 = vpop.f32.mrb[0].mxu0
        %v3482 = vadd.f32 0.0, %v3481
        %3483 = vdwg.mxu0
        %3484 = vmatprep.subr.mxu0 0.0
        %3485 = vmatpush1.msra.mxu0 1.0
        %3486 = vmatprep.subr.mxu0 0.0
        %3487 = vmatpush1.msra.mxu0 1.0
        %3488 = vmatprep.subr.mxu0 0.0
        %3489 = vmatpush1.msra.mxu0 1.0
        %3490 = vmatprep.subr.mxu0 0.0
        %3491 = vmatpush1.msra.mxu0 1.0
        %3492 = vmatprep.subr.mxu0 0.0
        %3493 = vmatpush1.msra.mxu0 1.0
        %3494 = vmatprep.subr.mxu0 0.0
        %3495 = vmatpush1.msra.mxu0 1.0
        %3496 = vmatprep.subr.mxu0 0.0
        %3497 = vmatpush1.msra.mxu0 1.0
        %3498 = vmatprep.subr.mxu0 0.0
        %3499 = vmatpush1.msra.mxu0 1.0
        %3500 = vmatprep.subr.mxu0 0.0
        %3501 = vmatpush1.msra.mxu0 1.0
        %3502 = vmatprep.subr.mxu0 0.0
        %3503 = vmatpush1.msra.mxu0 1.0
        %3504 = vmatprep.subr.mxu0 0.0
        %3505 = vmatpush1.msra.mxu0 1.0
        %3506 = vmatprep.subr.mxu0 0.0
        %3507 = vmatpush1.msra.mxu0 1.0
        %3508 = vmatprep.subr.mxu0 0.0
        %3509 = vmatpush1.msra.mxu0 1.0
        %3510 = vmatprep.subr.mxu0 0.0
        %3511 = vmatpush1.msra.mxu0 1.0
        %3512 = vmatprep.subr.mxu0 0.0
        %3513 = vmatpush1.msra.mxu0 1.0
        %3514 = vmatprep.subr.mxu0 0.0
        %3515 = vmatpush1.msra.mxu0 1.0
        %3516 = vmatprep.subr.mxu0 0.0
        %3517 = vmatpush1.msra.mxu0 1.0
        %3518 = vmatprep.subr.mxu0 0.0
        %3519 = vmatpush1.msra.mxu0 1.0
        %3520 = vmatprep.subr.mxu0 0.0
        %3521 = vmatpush1.msra.mxu0 1.0
        %3522 = vmatprep.subr.mxu0 0.0
        %3523 = vmatpush1.msra.mxu0 1.0
        %3524 = vmatprep.subr.mxu0 0.0
        %3525 = vmatpush1.msra.mxu0 1.0
        %3526 = vmatprep.subr.mxu0 0.0
        %3527 = vmatpush1.msra.mxu0 1.0
        %3528 = vmatprep.subr.mxu0 0.0
        %3529 = vmatpush1.msra.mxu0 1.0
        %3530 = vmatprep.subr.mxu0 0.0
        %3531 = vmatpush1.msra.mxu0 1.0
        %3532 = vmatprep.subr.mxu0 0.0
        %3533 = vmatpush1.msra.mxu0 1.0
        %3534 = vmatprep.subr.mxu0 0.0
        %3535 = vmatpush1.msra.mxu0 1.0
        %3536 = vmatprep.subr.mxu0 0.0
        %3537 = vmatpush1.msra.mxu0 1.0
        %3538 = vmatprep.subr.mxu0 0.0
        %3539 = vmatpush1.msra.mxu0 1.0
        %3540 = vmatprep.subr.mxu0 0.0
        %3541 = vmatpush1.msra.mxu0 1.0
        %3542 = vmatprep.subr.mxu0 0.0
        %3543 = vmatpush1.msra.mxu0 1.0
        %3544 = vmatprep.subr.mxu0 0.0
        %3545 = vmatpush1.msra.mxu0 1.0
        %3546 = vmatprep.subr.mxu0 0.0
        %3547 = vmatpush1.msra.mxu0 1.0
        %3548 = vmatprep.mubr.f32.mxu0 %v3403
        %3549 = vmatmul.mubr.f32.gmra.mrb[0].mxu0 %v3401
        %v3550 = vpop.f32.mrb[0].mxu0
        %v3551 = vadd.f32 0.0, %v3550
        %v3552 = vpop.f32.mrb[0].mxu0
        %3553 = vdwg.mxu0
        %s3554 = vtos %v3551
        %3555 = vmatprep.subr.mxu0 0.0
        %3556 = vmatpush1.msra.mxu0 1.0
        %3557 = vmatprep.subr.mxu0 0.0
        %3558 = vmatpush1.msra.mxu0 1.0
        %3559 = vmatprep.subr.mxu0 0.0
        %3560 = vmatpush1.msra.mxu0 1.0
        %3561 = vmatprep.subr.mxu0 0.0
        %3562 = vmatpush1.msra.mxu0 1.0
        %3563 = vmatprep.subr.mxu0 0.0
        %3564 = vmatpush1.msra.mxu0 1.0
        %3565 = vmatprep.subr.mxu0 0.0
        %3566 = vmatpush1.msra.mxu0 1.0
        %3567 = vmatprep.subr.mxu0 0.0
        %3568 = vmatpush1.msra.mxu0 1.0
        %3569 = vmatprep.subr.mxu0 0.0
        %3570 = vmatpush1.msra.mxu0 1.0
        %3571 = vmatprep.subr.mxu0 0.0
        %3572 = vmatpush1.msra.mxu0 1.0
        %3573 = vmatprep.subr.mxu0 0.0
        %3574 = vmatpush1.msra.mxu0 1.0
        %3575 = vmatprep.subr.mxu0 0.0
        %3576 = vmatpush1.msra.mxu0 1.0
        %3577 = vmatprep.subr.mxu0 0.0
        %3578 = vmatpush1.msra.mxu0 1.0
        %3579 = vmatprep.subr.mxu0 0.0
        %3580 = vmatpush1.msra.mxu0 1.0
        %3581 = vmatprep.subr.mxu0 0.0
        %3582 = vmatpush1.msra.mxu0 1.0
        %3583 = vmatprep.subr.mxu0 0.0
        %3584 = vmatpush1.msra.mxu0 1.0
        %3585 = vmatprep.subr.mxu0 0.0
        %3586 = vmatpush1.msra.mxu0 1.0
        %3587 = vmatprep.subr.mxu0 0.0
        %3588 = vmatpush1.msra.mxu0 1.0
        %3589 = vmatprep.subr.mxu0 0.0
        %3590 = vmatpush1.msra.mxu0 1.0
        %3591 = vmatprep.subr.mxu0 0.0
        %3592 = vmatpush1.msra.mxu0 1.0
        %3593 = vmatprep.subr.mxu0 0.0
        %3594 = vmatpush1.msra.mxu0 1.0
        %3595 = vmatprep.subr.mxu0 0.0
        %3596 = vmatpush1.msra.mxu0 1.0
        %3597 = vmatprep.subr.mxu0 0.0
        %3598 = vmatpush1.msra.mxu0 1.0
        %3599 = vmatprep.subr.mxu0 0.0
        %3600 = vmatpush1.msra.mxu0 1.0
        %3601 = vmatprep.subr.mxu0 0.0
        %3602 = vmatpush1.msra.mxu0 1.0
        %3603 = vmatprep.subr.mxu0 0.0
        %3604 = vmatpush1.msra.mxu0 1.0
        %3605 = vmatprep.subr.mxu0 0.0
        %3606 = vmatpush1.msra.mxu0 1.0
        %3607 = vmatprep.subr.mxu0 0.0
        %3608 = vmatpush1.msra.mxu0 1.0
        %3609 = vmatprep.subr.mxu0 0.0
        %3610 = vmatpush1.msra.mxu0 1.0
        %3611 = vmatprep.subr.mxu0 0.0
        %3612 = vmatpush1.msra.mxu0 1.0
        %3613 = vmatprep.subr.mxu0 0.0
        %3614 = vmatpush1.msra.mxu0 1.0
        %3615 = vmatprep.subr.mxu0 0.0
        %3616 = vmatpush1.msra.mxu0 1.0
        %3617 = vmatprep.subr.mxu0 0.0
        %3618 = vmatpush1.msra.mxu0 1.0
        %3619 = vmatprep.mubr.f32.mxu0 %v3482
        %3620 = vmatmul.mubr.f32.gmra.mrb[0].mxu0 %v3480
        %v3621 = vpop.f32.mrb[0].mxu0
        %v3622 = vadd.f32 0.0, %v3621
        %v3623 = vpop.f32.mrb[0].mxu0
        %3624 = vdwg.mxu0
        %s3625 = vtos %v3622
        %s3626 = smul.f32 %s3554, 0.00012207031
        %s3627 = smul.f32 %s3625, 0.00012207031
        %s3628 = smul.f32 %s3626, %s3626
        %s3629 = ssub.f32 %s3627, %s3628
        %s3630 = smax.f32 %s3629, 0.0
        %s3631 = sadd.f32 %s3630, 1e-16
        %v3632 = vstv %s3631
        %v3633 = vrsqrt.pop %v3632
        %s3634 = vtos %v3633
        %s3635 = scalar_lea.vmem %s3, 32
        %v3636 = vld [vmem:[%s3635] sm:$0xf]
        %v3637 = vld [vmem:[%s3635 + $0x4] sm:$0xf]
        %v3638 = vld [vmem:[%s3635 + $0x8] sm:$0xf]
        %v3639 = vld [vmem:[%s3635 + $0xc] sm:$0xf]
        %v3640 = vpack.c.bf16 %v3328, %v3326
        %v3641 = vpack.c.bf16 %v3329, %v3327
        %v3642 = vpack.c.bf16 %v3332, %v3330
        %v3643 = vpack.c.bf16 %v3333, %v3331
        %v3648 = vunpack.c.l.b16 %v3636
        %v3649 = vunpack.c.l.b16 %v3637
        %v3650 = vunpack.c.l.b16 %v3638
        %v3651 = vunpack.c.l.b16 %v3639
        %v3652 = vpack.c.b16 %v3649, %v3648
        %v3653 = vpack.c.b16 %v3651, %v3650
        %v3655 = vsel %vm393, %v3652, 0
        %v3658 = vsel %vm393, %v3653, 0
        %3660 = vmatprep.subr.bf16.mxu0 %v3641
        %3661 = vmatpush1.bf16.msra.mxu0 %v3640
        %3662 = vmatprep.subr.bf16.mxu0 %v3643
        %3663 = vmatpush1.bf16.msra.mxu0 %v3642
        %3664 = vmatprep.subr.bf16.mxu0 0
        %3665 = vmatpush1.bf16.msra.mxu0 0
        %3666 = vmatprep.subr.bf16.mxu0 0
        %3667 = vmatpush1.bf16.msra.mxu0 0
        %3668 = vmatprep.subr.bf16.mxu0 0
        %3669 = vmatpush1.bf16.msra.mxu0 0
        %3670 = vmatprep.subr.bf16.mxu0 0
        %3671 = vmatpush1.bf16.msra.mxu0 0
        %3672 = vmatprep.subr.bf16.mxu0 0
        %3673 = vmatpush1.bf16.msra.mxu0 0
        %3674 = vmatprep.subr.bf16.mxu0 0
        %3675 = vmatpush1.bf16.msra.mxu0 0
        %3676 = vmatprep.subr.bf16.mxu0 0
        %3677 = vmatpush1.bf16.msra.mxu0 0
        %3678 = vmatprep.subr.bf16.mxu0 0
        %3679 = vmatpush1.bf16.msra.mxu0 0
        %3680 = vmatprep.subr.bf16.mxu0 0
        %3681 = vmatpush1.bf16.msra.mxu0 0
        %3682 = vmatprep.subr.bf16.mxu0 0
        %3683 = vmatpush1.bf16.msra.mxu0 0
        %3684 = vmatprep.subr.bf16.mxu0 0
        %3685 = vmatpush1.bf16.msra.mxu0 0
        %3686 = vmatprep.subr.bf16.mxu0 0
        %3687 = vmatpush1.bf16.msra.mxu0 0
        %3688 = vmatprep.subr.bf16.mxu0 0
        %3689 = vmatpush1.bf16.msra.mxu0 0
        %3690 = vmatprep.subr.bf16.mxu0 0
        %3691 = vmatpush1.bf16.msra.mxu0 0
        %3692 = vmatprep.mubr.bf16.mxu0 0
        %3693 = vmatmul.mubr.bf16.gmra.mrb[0].mxu0 %v3655
        %v3694 = vpop.f32.mrb[0].mxu0
        %v3695 = vadd.f32 0.0, %v3694
        %v3696 = vpop.f32.mrb[0].mxu0
        %v3697 = vadd.f32 0.0, %v3696
        %v3698 = vpop.f32.mrb[0].mxu0
        %v3699 = vadd.f32 0.0, %v3698
        %v3700 = vpop.f32.mrb[0].mxu0
        %v3701 = vadd.f32 0.0, %v3700
        %3702 = vmatprep.mubr.bf16.mxu0 0
        %3703 = vmatmul.mubr.bf16.gmra.mrb[0].mxu0 %v3658
        %v3704 = vpop.f32.mrb[0].mxu0
        %v3705 = vadd.f32 0.0, %v3704
        %v3706 = vpop.f32.mrb[0].mxu0
        %v3707 = vadd.f32 0.0, %v3706
        %v3708 = vpop.f32.mrb[0].mxu0
        %v3709 = vadd.f32 0.0, %v3708
        %v3710 = vpop.f32.mrb[0].mxu0
        %v3711 = vadd.f32 0.0, %v3710
        %3712 = vdwg.mxu0
        %s3713 = scalar_lea.vmem %s4, 64
        %v3714 = vld [vmem:[%s3713] sm:$0xff]
        %v3715 = vld [vmem:[%s3713 + $0x8] sm:$0xff]
        %v3716 = vld [vmem:[%s3713 + $0x10] sm:$0xff]
        %v3717 = vld [vmem:[%s3713 + $0x18] sm:$0xff]
        %s3718 = smul.f32 %s3626, %s3634
        %v3719 = vstv %s3718
        %v3720 = vmul.f32 %v3719, %v3714
        %v3721 = vmul.f32 %v3719, %v3715
        %v3722 = vmul.f32 %v3719, %v3716
        %v3723 = vmul.f32 %v3719, %v3717
        %3728 = vrot.lane.b32.xlu0 %v3720, 1
        %v3729 = vpop.permute.xlu0 %3728
        %3730 = vrot.lane.b32.xlu0 %v3721, 1
        %v3731 = vpop.permute.xlu0 %3730
        %3732 = vrot.lane.b32.xlu0 %v3722, 1
        %v3733 = vpop.permute.xlu0 %3732
        %3734 = vrot.lane.b32.xlu0 %v3723, 1
        %v3735 = vpop.permute.xlu0 %3734
        %v3740 = vsub.f32 %v3714, %v3729
        %v3741 = vsub.f32 %v3715, %v3731
        %v3742 = vsub.f32 %v3716, %v3733
        %v3743 = vsub.f32 %v3717, %v3735
        %v3744 = vstv %s3634
        %v3745 = vmul.f32 %v3695, %v3744
        %v3746 = vmul.f32 %v3697, %v3744
        %v3747 = vmul.f32 %v3699, %v3744
        %v3748 = vmul.f32 %v3701, %v3744
        %v3749 = vmul.f32 %v3705, %v3744
        %v3750 = vmul.f32 %v3707, %v3744
        %v3751 = vmul.f32 %v3709, %v3744
        %v3752 = vmul.f32 %v3711, %v3744
        %3754 = vset.pattern.permute.xlu0 1
        %3755 = vperm.xlu0 %3754, %v3740
        %v3756 = vpop.permute.xlu0 %3755
        %3759 = vset.pattern.permute.xlu0 1
        %3760 = vperm.xlu0 %3759, %v3741
        %v3761 = vpop.permute.xlu0 %3760
        %3764 = vset.pattern.permute.xlu0 1
        %3765 = vperm.xlu0 %3764, %v3742
        %v3766 = vpop.permute.xlu0 %3765
        %3769 = vset.pattern.permute.xlu0 1
        %3770 = vperm.xlu0 %3769, %v3743
        %v3771 = vpop.permute.xlu0 %3770
        %v3773 = vadd.f32 %v3745, %v3756
        %v3774 = vadd.f32 %v3746, %v3756
        %v3775 = vadd.f32 %v3747, %v3761
        %v3776 = vadd.f32 %v3748, %v3761
        %v3777 = vadd.f32 %v3749, %v3766
        %v3778 = vadd.f32 %v3750, %v3766
        %v3779 = vadd.f32 %v3751, %v3771
        %v3780 = vadd.f32 %v3752, %v3771
        %v3781 = vadd.f32 %v3773, %v2608
        %v3782 = vadd.f32 %v3774, %v2609
        %v3783 = vadd.f32 %v3775, %v2610
        %v3784 = vadd.f32 %v3776, %v2611
        %v3785 = vadd.f32 %v2612, %v3777
        %v3786 = vadd.f32 %v2613, %v3778
        %v3787 = vadd.f32 %v2614, %v3779
        %v3788 = vadd.f32 %v2615, %v3780
        %s3789 = scalar_lea.vmem %s2, 96
        %v3790 = vld [vmem:[%s3789] sm:$0xff]
        %v3791 = vld [vmem:[%s3789 + $0x8] sm:$0xff]
        %v3792 = vld [vmem:[%s3789 + $0x10] sm:$0xff]
        %v3793 = vld [vmem:[%s3789 + $0x18] sm:$0xff]
        %s3794 = scalar_lea.vmem %s1, 48
        %v3795 = vld [vmem:[%s3794] sm:$0xf]
        %v3796 = vld [vmem:[%s3794 + $0x4] sm:$0xf]
        %v3797 = vld [vmem:[%s3794 + $0x8] sm:$0xf]
        %v3798 = vld [vmem:[%s3794 + $0xc] sm:$0xf]
        %v3799 = vpack.c.bf16 %v3783, %v3781
        %v3800 = vpack.c.bf16 %v3784, %v3782
        %v3805 = vunpack.c.l.b16 %v3795
        %v3806 = vunpack.c.l.b16 %v3796
        %v3807 = vunpack.c.l.b16 %v3797
        %v3808 = vunpack.c.l.b16 %v3798
        %v3809 = vpack.c.b16 %v3806, %v3805
        %v3810 = vpack.c.b16 %v3808, %v3807
        %v3812 = vsel %vm289, %v3809, 0
        %v3815 = vsel %vm289, %v3810, 0
        %3817 = vmatprep.subr.bf16.mxu0 %v3800
        %3818 = vmatpush1.bf16.msra.mxu0 %v3799
        %3819 = vmatprep.subr.bf16.mxu0 0
        %3820 = vmatpush1.bf16.msra.mxu0 0
        %3821 = vmatprep.subr.bf16.mxu0 0
        %3822 = vmatpush1.bf16.msra.mxu0 0
        %3823 = vmatprep.subr.bf16.mxu0 0
        %3824 = vmatpush1.bf16.msra.mxu0 0
        %3825 = vmatprep.subr.bf16.mxu0 0
        %3826 = vmatpush1.bf16.msra.mxu0 0
        %3827 = vmatprep.subr.bf16.mxu0 0
        %3828 = vmatpush1.bf16.msra.mxu0 0
        %3829 = vmatprep.subr.bf16.mxu0 0
        %3830 = vmatpush1.bf16.msra.mxu0 0
        %3831 = vmatprep.subr.bf16.mxu0 0
        %3832 = vmatpush1.bf16.msra.mxu0 0
        %3833 = vmatprep.subr.bf16.mxu0 0
        %3834 = vmatpush1.bf16.msra.mxu0 0
        %3835 = vmatprep.subr.bf16.mxu0 0
        %3836 = vmatpush1.bf16.msra.mxu0 0
        %3837 = vmatprep.subr.bf16.mxu0 0
        %3838 = vmatpush1.bf16.msra.mxu0 0
        %3839 = vmatprep.subr.bf16.mxu0 0
        %3840 = vmatpush1.bf16.msra.mxu0 0
        %3841 = vmatprep.subr.bf16.mxu0 0
        %3842 = vmatpush1.bf16.msra.mxu0 0
        %3843 = vmatprep.subr.bf16.mxu0 0
        %3844 = vmatpush1.bf16.msra.mxu0 0
        %3845 = vmatprep.subr.bf16.mxu0 0
        %3846 = vmatpush1.bf16.msra.mxu0 0
        %3847 = vmatprep.subr.bf16.mxu0 0
        %3848 = vmatpush1.bf16.msra.mxu0 0
        %3849 = vmatprep.mubr.bf16.mxu0 0
        %3850 = vmatmul.mubr.bf16.gmra.mrb[0].mxu0 %v3812
        %v3851 = vpop.f32.mrb[0].mxu0
        %v3852 = vadd.f32 0.0, %v3851
        %v3853 = vpop.f32.mrb[0].mxu0
        %v3854 = vadd.f32 0.0, %v3853
        %v3855 = vpop.f32.mrb[0].mxu0
        %v3856 = vadd.f32 0.0, %v3855
        %v3857 = vpop.f32.mrb[0].mxu0
        %v3858 = vadd.f32 0.0, %v3857
        %3859 = vmatprep.mubr.bf16.mxu0 0
        %3860 = vmatmul.mubr.bf16.gmra.mrb[0].mxu0 %v3815
        %v3861 = vpop.f32.mrb[0].mxu0
        %v3862 = vadd.f32 0.0, %v3861
        %v3863 = vpop.f32.mrb[0].mxu0
        %v3864 = vadd.f32 0.0, %v3863
        %v3865 = vpop.f32.mrb[0].mxu0
        %v3866 = vadd.f32 0.0, %v3865
        %v3867 = vpop.f32.mrb[0].mxu0
        %v3868 = vadd.f32 0.0, %v3867
        %3869 = vdwg.mxu0
        %vm3870 = vcmp.ge.f32.partialorder %v3852, 0.0
        %vm3871 = vcmp.ge.f32.partialorder %v3854, 0.0
        %vm3872 = vcmp.ge.f32.partialorder %v3856, 0.0
        %vm3873 = vcmp.ge.f32.partialorder %v3858, 0.0
        %vm3874 = vcmp.ge.f32.partialorder %v3862, 0.0
        %vm3875 = vcmp.ge.f32.partialorder %v3864, 0.0
        %vm3876 = vcmp.ge.f32.partialorder %v3866, 0.0
        %vm3877 = vcmp.ge.f32.partialorder %v3868, 0.0
        %3879 = vset.pattern.permute.xlu0 0
        %3880 = vperm.xlu0 %3879, %v3790
        %v3881 = vpop.permute.xlu0 %3880
        %3884 = vset.pattern.permute.xlu0 0
        %3885 = vperm.xlu0 %3884, %v3791
        %v3886 = vpop.permute.xlu0 %3885
        %3889 = vset.pattern.permute.xlu0 0
        %3890 = vperm.xlu0 %3889, %v3792
        %v3891 = vpop.permute.xlu0 %3890
        %3894 = vset.pattern.permute.xlu0 0
        %3895 = vperm.xlu0 %3894, %v3793
        %v3896 = vpop.permute.xlu0 %3895
        %v3898 = vmul.f32 %v3881, %v3852
        %v3899 = vmul.f32 %v3881, %v3854
        %v3900 = vmul.f32 %v3886, %v3856
        %v3901 = vmul.f32 %v3886, %v3858
        %v3902 = vmul.f32 %v3891, %v3862
        %v3903 = vmul.f32 %v3891, %v3864
        %v3904 = vmul.f32 %v3896, %v3866
        %v3905 = vmul.f32 %v3896, %v3868
        %v3906 = vsel %vm3870, %v3852, %v3898
        %v3907 = vsel %vm3871, %v3854, %v3899
        %v3908 = vsel %vm3872, %v3856, %v3900
        %v3909 = vsel %vm3873, %v3858, %v3901
        %v3910 = vsel %vm3874, %v3862, %v3902
        %v3911 = vsel %vm3875, %v3864, %v3903
        %v3912 = vsel %vm3876, %v3866, %v3904
        %v3913 = vsel %vm3877, %v3868, %v3905
        %3914 = vmatprep.subr.mxu0 %v3907
        %3915 = vmatpush1.msra.mxu0 %v3906
        %3916 = vmatprep.subr.mxu0 %v3909
        %3917 = vmatpush1.msra.mxu0 %v3908
        %3918 = vmatprep.subr.mxu0 %v3911
        %3919 = vmatpush1.msra.mxu0 %v3910
        %3920 = vmatprep.subr.mxu0 %v3913
        %3921 = vmatpush1.msra.mxu0 %v3912
        %3922 = vmatprep.subr.mxu0 0.0
        %3923 = vmatpush1.msra.mxu0 0.0
        %3924 = vmatprep.subr.mxu0 0.0
        %3925 = vmatpush1.msra.mxu0 0.0
        %3926 = vmatprep.subr.mxu0 0.0
        %3927 = vmatpush1.msra.mxu0 0.0
        %3928 = vmatprep.subr.mxu0 0.0
        %3929 = vmatpush1.msra.mxu0 0.0
        %3930 = vmatprep.subr.mxu0 0.0
        %3931 = vmatpush1.msra.mxu0 0.0
        %3932 = vmatprep.subr.mxu0 0.0
        %3933 = vmatpush1.msra.mxu0 0.0
        %3934 = vmatprep.subr.mxu0 0.0
        %3935 = vmatpush1.msra.mxu0 0.0
        %3936 = vmatprep.subr.mxu0 0.0
        %3937 = vmatpush1.msra.mxu0 0.0
        %3938 = vmatprep.subr.mxu0 0.0
        %3939 = vmatpush1.msra.mxu0 0.0
        %3940 = vmatprep.subr.mxu0 0.0
        %3941 = vmatpush1.msra.mxu0 0.0
        %3942 = vmatprep.subr.mxu0 0.0
        %3943 = vmatpush1.msra.mxu0 0.0
        %3944 = vmatprep.subr.mxu0 0.0
        %3945 = vmatpush1.msra.mxu0 0.0
        %3946 = vmatprep.subr.mxu0 0.0
        %3947 = vmatpush1.msra.mxu0 0.0
        %3948 = vmatprep.subr.mxu0 0.0
        %3949 = vmatpush1.msra.mxu0 0.0
        %3950 = vmatprep.subr.mxu0 0.0
        %3951 = vmatpush1.msra.mxu0 0.0
        %3952 = vmatprep.subr.mxu0 0.0
        %3953 = vmatpush1.msra.mxu0 0.0
        %3954 = vmatprep.subr.mxu0 0.0
        %3955 = vmatpush1.msra.mxu0 0.0
        %3956 = vmatprep.subr.mxu0 0.0
        %3957 = vmatpush1.msra.mxu0 0.0
        %3958 = vmatprep.subr.mxu0 0.0
        %3959 = vmatpush1.msra.mxu0 0.0
        %3960 = vmatprep.subr.mxu0 0.0
        %3961 = vmatpush1.msra.mxu0 0.0
        %3962 = vmatprep.subr.mxu0 0.0
        %3963 = vmatpush1.msra.mxu0 0.0
        %3964 = vmatprep.subr.mxu0 0.0
        %3965 = vmatpush1.msra.mxu0 0.0
        %3966 = vmatprep.subr.mxu0 0.0
        %3967 = vmatpush1.msra.mxu0 0.0
        %3968 = vmatprep.subr.mxu0 0.0
        %3969 = vmatpush1.msra.mxu0 0.0
        %3970 = vmatprep.subr.mxu0 0.0
        %3971 = vmatpush1.msra.mxu0 0.0
        %3972 = vmatprep.subr.mxu0 0.0
        %3973 = vmatpush1.msra.mxu0 0.0
        %3974 = vmatprep.subr.mxu0 0.0
        %3975 = vmatpush1.msra.mxu0 0.0
        %3976 = vmatprep.subr.mxu0 0.0
        %3977 = vmatpush1.msra.mxu0 0.0
        %3978 = vmatprep.mubr.f32.mxu0 0.0
        %3979 = vmatmul.mubr.f32.gmra.mrb[0].mxu0 %v395
        %v3980 = vpop.f32.mrb[0].mxu0
        %v3981 = vadd.f32 0.0, %v3980
        %v3982 = vpop.f32.mrb[0].mxu0
        %v3983 = vadd.f32 0.0, %v3982
        %3984 = vdwg.mxu0
        %v3985 = vmul.f32 %v3906, %v3906
        %v3986 = vmul.f32 %v3907, %v3907
        %v3987 = vmul.f32 %v3908, %v3908
        %v3988 = vmul.f32 %v3909, %v3909
        %v3989 = vmul.f32 %v3910, %v3910
        %v3990 = vmul.f32 %v3911, %v3911
        %v3991 = vmul.f32 %v3912, %v3912
        %v3992 = vmul.f32 %v3913, %v3913
        %3993 = vmatprep.subr.mxu0 %v3986
        %3994 = vmatpush1.msra.mxu0 %v3985
        %3995 = vmatprep.subr.mxu0 %v3988
        %3996 = vmatpush1.msra.mxu0 %v3987
        %3997 = vmatprep.subr.mxu0 %v3990
        %3998 = vmatpush1.msra.mxu0 %v3989
        %3999 = vmatprep.subr.mxu0 %v3992
        %4000 = vmatpush1.msra.mxu0 %v3991
        %4001 = vmatprep.subr.mxu0 0.0
        %4002 = vmatpush1.msra.mxu0 0.0
        %4003 = vmatprep.subr.mxu0 0.0
        %4004 = vmatpush1.msra.mxu0 0.0
        %4005 = vmatprep.subr.mxu0 0.0
        %4006 = vmatpush1.msra.mxu0 0.0
        %4007 = vmatprep.subr.mxu0 0.0
        %4008 = vmatpush1.msra.mxu0 0.0
        %4009 = vmatprep.subr.mxu0 0.0
        %4010 = vmatpush1.msra.mxu0 0.0
        %4011 = vmatprep.subr.mxu0 0.0
        %4012 = vmatpush1.msra.mxu0 0.0
        %4013 = vmatprep.subr.mxu0 0.0
        %4014 = vmatpush1.msra.mxu0 0.0
        %4015 = vmatprep.subr.mxu0 0.0
        %4016 = vmatpush1.msra.mxu0 0.0
        %4017 = vmatprep.subr.mxu0 0.0
        %4018 = vmatpush1.msra.mxu0 0.0
        %4019 = vmatprep.subr.mxu0 0.0
        %4020 = vmatpush1.msra.mxu0 0.0
        %4021 = vmatprep.subr.mxu0 0.0
        %4022 = vmatpush1.msra.mxu0 0.0
        %4023 = vmatprep.subr.mxu0 0.0
        %4024 = vmatpush1.msra.mxu0 0.0
        %4025 = vmatprep.subr.mxu0 0.0
        %4026 = vmatpush1.msra.mxu0 0.0
        %4027 = vmatprep.subr.mxu0 0.0
        %4028 = vmatpush1.msra.mxu0 0.0
        %4029 = vmatprep.subr.mxu0 0.0
        %4030 = vmatpush1.msra.mxu0 0.0
        %4031 = vmatprep.subr.mxu0 0.0
        %4032 = vmatpush1.msra.mxu0 0.0
        %4033 = vmatprep.subr.mxu0 0.0
        %4034 = vmatpush1.msra.mxu0 0.0
        %4035 = vmatprep.subr.mxu0 0.0
        %4036 = vmatpush1.msra.mxu0 0.0
        %4037 = vmatprep.subr.mxu0 0.0
        %4038 = vmatpush1.msra.mxu0 0.0
        %4039 = vmatprep.subr.mxu0 0.0
        %4040 = vmatpush1.msra.mxu0 0.0
        %4041 = vmatprep.subr.mxu0 0.0
        %4042 = vmatpush1.msra.mxu0 0.0
        %4043 = vmatprep.subr.mxu0 0.0
        %4044 = vmatpush1.msra.mxu0 0.0
        %4045 = vmatprep.subr.mxu0 0.0
        %4046 = vmatpush1.msra.mxu0 0.0
        %4047 = vmatprep.subr.mxu0 0.0
        %4048 = vmatpush1.msra.mxu0 0.0
        %4049 = vmatprep.subr.mxu0 0.0
        %4050 = vmatpush1.msra.mxu0 0.0
        %4051 = vmatprep.subr.mxu0 0.0
        %4052 = vmatpush1.msra.mxu0 0.0
        %4053 = vmatprep.subr.mxu0 0.0
        %4054 = vmatpush1.msra.mxu0 0.0
        %4055 = vmatprep.subr.mxu0 0.0
        %4056 = vmatpush1.msra.mxu0 0.0
        %4057 = vmatprep.mubr.f32.mxu0 0.0
        %4058 = vmatmul.mubr.f32.gmra.mrb[0].mxu0 %v395
        %v4059 = vpop.f32.mrb[0].mxu0
        %v4060 = vadd.f32 0.0, %v4059
        %v4061 = vpop.f32.mrb[0].mxu0
        %v4062 = vadd.f32 0.0, %v4061
        %4063 = vdwg.mxu0
        %4064 = vmatprep.subr.mxu0 0.0
        %4065 = vmatpush1.msra.mxu0 1.0
        %4066 = vmatprep.subr.mxu0 0.0
        %4067 = vmatpush1.msra.mxu0 1.0
        %4068 = vmatprep.subr.mxu0 0.0
        %4069 = vmatpush1.msra.mxu0 1.0
        %4070 = vmatprep.subr.mxu0 0.0
        %4071 = vmatpush1.msra.mxu0 1.0
        %4072 = vmatprep.subr.mxu0 0.0
        %4073 = vmatpush1.msra.mxu0 1.0
        %4074 = vmatprep.subr.mxu0 0.0
        %4075 = vmatpush1.msra.mxu0 1.0
        %4076 = vmatprep.subr.mxu0 0.0
        %4077 = vmatpush1.msra.mxu0 1.0
        %4078 = vmatprep.subr.mxu0 0.0
        %4079 = vmatpush1.msra.mxu0 1.0
        %4080 = vmatprep.subr.mxu0 0.0
        %4081 = vmatpush1.msra.mxu0 1.0
        %4082 = vmatprep.subr.mxu0 0.0
        %4083 = vmatpush1.msra.mxu0 1.0
        %4084 = vmatprep.subr.mxu0 0.0
        %4085 = vmatpush1.msra.mxu0 1.0
        %4086 = vmatprep.subr.mxu0 0.0
        %4087 = vmatpush1.msra.mxu0 1.0
        %4088 = vmatprep.subr.mxu0 0.0
        %4089 = vmatpush1.msra.mxu0 1.0
        %4090 = vmatprep.subr.mxu0 0.0
        %4091 = vmatpush1.msra.mxu0 1.0
        %4092 = vmatprep.subr.mxu0 0.0
        %4093 = vmatpush1.msra.mxu0 1.0
        %4094 = vmatprep.subr.mxu0 0.0
        %4095 = vmatpush1.msra.mxu0 1.0
        %4096 = vmatprep.subr.mxu0 0.0
        %4097 = vmatpush1.msra.mxu0 1.0
        %4098 = vmatprep.subr.mxu0 0.0
        %4099 = vmatpush1.msra.mxu0 1.0
        %4100 = vmatprep.subr.mxu0 0.0
        %4101 = vmatpush1.msra.mxu0 1.0
        %4102 = vmatprep.subr.mxu0 0.0
        %4103 = vmatpush1.msra.mxu0 1.0
        %4104 = vmatprep.subr.mxu0 0.0
        %4105 = vmatpush1.msra.mxu0 1.0
        %4106 = vmatprep.subr.mxu0 0.0
        %4107 = vmatpush1.msra.mxu0 1.0
        %4108 = vmatprep.subr.mxu0 0.0
        %4109 = vmatpush1.msra.mxu0 1.0
        %4110 = vmatprep.subr.mxu0 0.0
        %4111 = vmatpush1.msra.mxu0 1.0
        %4112 = vmatprep.subr.mxu0 0.0
        %4113 = vmatpush1.msra.mxu0 1.0
        %4114 = vmatprep.subr.mxu0 0.0
        %4115 = vmatpush1.msra.mxu0 1.0
        %4116 = vmatprep.subr.mxu0 0.0
        %4117 = vmatpush1.msra.mxu0 1.0
        %4118 = vmatprep.subr.mxu0 0.0
        %4119 = vmatpush1.msra.mxu0 1.0
        %4120 = vmatprep.subr.mxu0 0.0
        %4121 = vmatpush1.msra.mxu0 1.0
        %4122 = vmatprep.subr.mxu0 0.0
        %4123 = vmatpush1.msra.mxu0 1.0
        %4124 = vmatprep.subr.mxu0 0.0
        %4125 = vmatpush1.msra.mxu0 1.0
        %4126 = vmatprep.subr.mxu0 0.0
        %4127 = vmatpush1.msra.mxu0 1.0
        %4128 = vmatprep.mubr.f32.mxu0 %v3983
        %4129 = vmatmul.mubr.f32.gmra.mrb[0].mxu0 %v3981
        %v4130 = vpop.f32.mrb[0].mxu0
        %v4131 = vadd.f32 0.0, %v4130
        %v4132 = vpop.f32.mrb[0].mxu0
        %4133 = vdwg.mxu0
        %s4134 = vtos %v4131
        %4135 = vmatprep.subr.mxu0 0.0
        %4136 = vmatpush1.msra.mxu0 1.0
        %4137 = vmatprep.subr.mxu0 0.0
        %4138 = vmatpush1.msra.mxu0 1.0
        %4139 = vmatprep.subr.mxu0 0.0
        %4140 = vmatpush1.msra.mxu0 1.0
        %4141 = vmatprep.subr.mxu0 0.0
        %4142 = vmatpush1.msra.mxu0 1.0
        %4143 = vmatprep.subr.mxu0 0.0
        %4144 = vmatpush1.msra.mxu0 1.0
        %4145 = vmatprep.subr.mxu0 0.0
        %4146 = vmatpush1.msra.mxu0 1.0
        %4147 = vmatprep.subr.mxu0 0.0
        %4148 = vmatpush1.msra.mxu0 1.0
        %4149 = vmatprep.subr.mxu0 0.0
        %4150 = vmatpush1.msra.mxu0 1.0
        %4151 = vmatprep.subr.mxu0 0.0
        %4152 = vmatpush1.msra.mxu0 1.0
        %4153 = vmatprep.subr.mxu0 0.0
        %4154 = vmatpush1.msra.mxu0 1.0
        %4155 = vmatprep.subr.mxu0 0.0
        %4156 = vmatpush1.msra.mxu0 1.0
        %4157 = vmatprep.subr.mxu0 0.0
        %4158 = vmatpush1.msra.mxu0 1.0
        %4159 = vmatprep.subr.mxu0 0.0
        %4160 = vmatpush1.msra.mxu0 1.0
        %4161 = vmatprep.subr.mxu0 0.0
        %4162 = vmatpush1.msra.mxu0 1.0
        %4163 = vmatprep.subr.mxu0 0.0
        %4164 = vmatpush1.msra.mxu0 1.0
        %4165 = vmatprep.subr.mxu0 0.0
        %4166 = vmatpush1.msra.mxu0 1.0
        %4167 = vmatprep.subr.mxu0 0.0
        %4168 = vmatpush1.msra.mxu0 1.0
        %4169 = vmatprep.subr.mxu0 0.0
        %4170 = vmatpush1.msra.mxu0 1.0
        %4171 = vmatprep.subr.mxu0 0.0
        %4172 = vmatpush1.msra.mxu0 1.0
        %4173 = vmatprep.subr.mxu0 0.0
        %4174 = vmatpush1.msra.mxu0 1.0
        %4175 = vmatprep.subr.mxu0 0.0
        %4176 = vmatpush1.msra.mxu0 1.0
        %4177 = vmatprep.subr.mxu0 0.0
        %4178 = vmatpush1.msra.mxu0 1.0
        %4179 = vmatprep.subr.mxu0 0.0
        %4180 = vmatpush1.msra.mxu0 1.0
        %4181 = vmatprep.subr.mxu0 0.0
        %4182 = vmatpush1.msra.mxu0 1.0
        %4183 = vmatprep.subr.mxu0 0.0
        %4184 = vmatpush1.msra.mxu0 1.0
        %4185 = vmatprep.subr.mxu0 0.0
        %4186 = vmatpush1.msra.mxu0 1.0
        %4187 = vmatprep.subr.mxu0 0.0
        %4188 = vmatpush1.msra.mxu0 1.0
        %4189 = vmatprep.subr.mxu0 0.0
        %4190 = vmatpush1.msra.mxu0 1.0
        %4191 = vmatprep.subr.mxu0 0.0
        %4192 = vmatpush1.msra.mxu0 1.0
        %4193 = vmatprep.subr.mxu0 0.0
        %4194 = vmatpush1.msra.mxu0 1.0
        %4195 = vmatprep.subr.mxu0 0.0
        %4196 = vmatpush1.msra.mxu0 1.0
        %4197 = vmatprep.subr.mxu0 0.0
        %4198 = vmatpush1.msra.mxu0 1.0
        %4199 = vmatprep.mubr.f32.mxu0 %v4062
        %4200 = vmatmul.mubr.f32.gmra.mrb[0].mxu0 %v4060
        %v4201 = vpop.f32.mrb[0].mxu0
        %v4202 = vadd.f32 0.0, %v4201
        %v4203 = vpop.f32.mrb[0].mxu0
        %4204 = vdwg.mxu0
        %s4205 = vtos %v4202
        %s4206 = smul.f32 %s4134, 0.00012207031
        %s4207 = smul.f32 %s4205, 0.00012207031
        %s4208 = smul.f32 %s4206, %s4206
        %s4209 = ssub.f32 %s4207, %s4208
        %s4210 = smax.f32 %s4209, 0.0
        %s4211 = sadd.f32 %s4210, 1e-16
        %v4212 = vstv %s4211
        %v4213 = vrsqrt.pop %v4212
        %s4214 = vtos %v4213
        %v4215 = vstv %s4214
        %v4216 = vmul.f32 %v3790, %v4215
        %v4217 = vmul.f32 %v3791, %v4215
        %v4218 = vmul.f32 %v3792, %v4215
        %v4219 = vmul.f32 %v3793, %v4215
        %v4220 = vstv %s4206
        %v4221 = vmul.f32 %v4220, %v4216
        %v4222 = vmul.f32 %v4220, %v4217
        %v4223 = vmul.f32 %v4220, %v4218
        %v4224 = vmul.f32 %v4220, %v4219
        %4229 = vrot.lane.b32.xlu0 %v4221, 1
        %v4230 = vpop.permute.xlu0 %4229
        %4231 = vrot.lane.b32.xlu0 %v4222, 1
        %v4232 = vpop.permute.xlu0 %4231
        %4233 = vrot.lane.b32.xlu0 %v4223, 1
        %v4234 = vpop.permute.xlu0 %4233
        %4235 = vrot.lane.b32.xlu0 %v4224, 1
        %v4236 = vpop.permute.xlu0 %4235
        %v4241 = vsub.f32 %v3790, %v4230
        %v4242 = vsub.f32 %v3791, %v4232
        %v4243 = vsub.f32 %v3792, %v4234
        %v4244 = vsub.f32 %v3793, %v4236
        %4246 = vset.pattern.permute.xlu0 1
        %4247 = vperm.xlu0 %4246, %v4216
        %v4248 = vpop.permute.xlu0 %4247
        %4251 = vset.pattern.permute.xlu0 1
        %4252 = vperm.xlu0 %4251, %v4217
        %v4253 = vpop.permute.xlu0 %4252
        %4256 = vset.pattern.permute.xlu0 1
        %4257 = vperm.xlu0 %4256, %v4218
        %v4258 = vpop.permute.xlu0 %4257
        %4261 = vset.pattern.permute.xlu0 1
        %4262 = vperm.xlu0 %4261, %v4219
        %v4263 = vpop.permute.xlu0 %4262
        %v4265 = vmul.f32 %v3906, %v4248
        %v4266 = vmul.f32 %v3907, %v4248
        %v4267 = vmul.f32 %v3908, %v4253
        %v4268 = vmul.f32 %v3909, %v4253
        %v4269 = vmul.f32 %v3910, %v4258
        %v4270 = vmul.f32 %v3911, %v4258
        %v4271 = vmul.f32 %v3912, %v4263
        %v4272 = vmul.f32 %v3913, %v4263
        %4274 = vset.pattern.permute.xlu0 2
        %4275 = vperm.xlu0 %4274, %v4241
        %v4276 = vpop.permute.xlu0 %4275
        %4279 = vset.pattern.permute.xlu0 2
        %4280 = vperm.xlu0 %4279, %v4242
        %v4281 = vpop.permute.xlu0 %4280
        %4284 = vset.pattern.permute.xlu0 2
        %4285 = vperm.xlu0 %4284, %v4243
        %v4286 = vpop.permute.xlu0 %4285
        %4289 = vset.pattern.permute.xlu0 2
        %4290 = vperm.xlu0 %4289, %v4244
        %v4291 = vpop.permute.xlu0 %4290
        %v4293 = vadd.f32 %v4265, %v4276
        %v4294 = vadd.f32 %v4266, %v4276
        %v4295 = vadd.f32 %v4267, %v4281
        %v4296 = vadd.f32 %v4268, %v4281
        %v4297 = vadd.f32 %v4269, %v4286
        %v4298 = vadd.f32 %v4270, %v4286
        %v4299 = vadd.f32 %v4271, %v4291
        %v4300 = vadd.f32 %v4272, %v4291
        %4301 = vset.pattern.permute.xlu0 4
        %4302 = vperm.xlu0 %4301, %v3790
        %v4303 = vpop.permute.xlu0 %4302
        %4305 = vset.pattern.permute.xlu0 4
        %4306 = vperm.xlu0 %4305, %v3791
        %v4307 = vpop.permute.xlu0 %4306
        %4309 = vset.pattern.permute.xlu0 4
        %4310 = vperm.xlu0 %4309, %v3792
        %v4311 = vpop.permute.xlu0 %4310
        %4313 = vset.pattern.permute.xlu0 4
        %4314 = vperm.xlu0 %4313, %v3793
        %v4315 = vpop.permute.xlu0 %4314
        %v4317 = vmul.f32 %v4303, %v4293
        %v4318 = vmul.f32 %v4303, %v4294
        %v4319 = vmul.f32 %v4307, %v4295
        %v4320 = vmul.f32 %v4307, %v4296
        %v4321 = vmul.f32 %v4311, %v4297
        %v4322 = vmul.f32 %v4311, %v4298
        %v4323 = vmul.f32 %v4315, %v4299
        %v4324 = vmul.f32 %v4315, %v4300
        %vm4325 = vcmp.ge.s32.totalorder %v267, 8
        %vm4326 = vcmp.ge.s32.totalorder %v268, 8
        %4327 = vrot.lane.b32.xlu0 %v4293, 8
        %v4328 = vpop.permute.xlu0 %4327
        %4329 = vrot.lane.b32.xlu0 %v4295, 8
        %v4330 = vpop.permute.xlu0 %4329
        %4331 = vrot.lane.b32.xlu0 %v4297, 8
        %v4332 = vpop.permute.xlu0 %4331
        %4333 = vrot.lane.b32.xlu0 %v4299, 8
        %v4334 = vpop.permute.xlu0 %4333
        %4335 = vrot.lane.b32.xlu0 %v4294, 8
        %v4336 = vpop.permute.xlu0 %4335
        %4337 = vrot.lane.b32.xlu0 %v4296, 8
        %v4338 = vpop.permute.xlu0 %4337
        %4339 = vrot.lane.b32.xlu0 %v4298, 8
        %v4340 = vpop.permute.xlu0 %4339
        %4341 = vrot.lane.b32.xlu0 %v4300, 8
        %v4342 = vpop.permute.xlu0 %4341
        %vm4343 = vcmp.lt.s32.totalorder %v267, 8
        %v4344 = vsel %vm4343, %v4328, %v4336
        %v4345 = vsel %vm4343, %v4330, %v4338
        %v4346 = vsel %vm4343, %v4332, %v4340
        %v4347 = vsel %vm4343, %v4334, %v4342
        %v4348 = vsel %vm4343, %v4336, %v4328
        %v4349 = vsel %vm4343, %v4338, %v4330
        %v4350 = vsel %vm4343, %v4340, %v4332
        %v4351 = vsel %vm4343, %v4342, %v4334
        %v4352 = vsel %vm4325, 1, 0
        %v4353 = vsel %vm4326, 1, 0
        %vm4354 = vcmp.eq.s32.totalorder %v4352, 1
        %vm4355 = vcmp.eq.s32.totalorder %v4353, 1
        %v4356 = vsel %vm4354, %v4348, 0.0
        %v4357 = vsel %vm4355, %v4344, 0.0
        %v4358 = vsel %vm4354, %v4349, 0.0
        %v4359 = vsel %vm4355, %v4345, 0.0
        %v4360 = vsel %vm4354, %v4350, 0.0
        %v4361 = vsel %vm4355, %v4346, 0.0
        %v4362 = vsel %vm4354, %v4351, 0.0
        %v4363 = vsel %vm4355, %v4347, 0.0
        %4364 = vset.pattern.permute.xlu0 3
        %4365 = vperm.xlu0 %4364, %v3790
        %v4366 = vpop.permute.xlu0 %4365
        %4368 = vset.pattern.permute.xlu0 3
        %4369 = vperm.xlu0 %4368, %v3791
        %v4370 = vpop.permute.xlu0 %4369
        %4372 = vset.pattern.permute.xlu0 3
        %4373 = vperm.xlu0 %4372, %v3792
        %v4374 = vpop.permute.xlu0 %4373
        %4376 = vset.pattern.permute.xlu0 3
        %4377 = vperm.xlu0 %4376, %v3793
        %v4378 = vpop.permute.xlu0 %4377
        %v4380 = vmul.f32 %v4366, %v4356
        %v4381 = vmul.f32 %v4366, %v4357
        %v4382 = vmul.f32 %v4370, %v4358
        %v4383 = vmul.f32 %v4370, %v4359
        %v4384 = vmul.f32 %v4374, %v4360
        %v4385 = vmul.f32 %v4374, %v4361
        %v4386 = vmul.f32 %v4378, %v4362
        %v4387 = vmul.f32 %v4378, %v4363
        %v4388 = vadd.f32 %v4317, %v4380
        %v4389 = vadd.f32 %v4318, %v4381
        %v4390 = vadd.f32 %v4319, %v4382
        %v4391 = vadd.f32 %v4320, %v4383
        %v4392 = vadd.f32 %v4321, %v4384
        %v4393 = vadd.f32 %v4322, %v4385
        %v4394 = vadd.f32 %v4323, %v4386
        %v4395 = vadd.f32 %v4324, %v4387
        %vm4396 = vcmp.lt.s32.totalorder %v267, 248
        %vm4397 = vcmp.lt.s32.totalorder %v268, 248
        %4398 = vrot.lane.b32.xlu0 %v4293, 120
        %v4399 = vpop.permute.xlu0 %4398
        %4400 = vrot.lane.b32.xlu0 %v4295, 120
        %v4401 = vpop.permute.xlu0 %4400
        %4402 = vrot.lane.b32.xlu0 %v4297, 120
        %v4403 = vpop.permute.xlu0 %4402
        %4404 = vrot.lane.b32.xlu0 %v4299, 120
        %v4405 = vpop.permute.xlu0 %4404
        %4406 = vrot.lane.b32.xlu0 %v4294, 120
        %v4407 = vpop.permute.xlu0 %4406
        %4408 = vrot.lane.b32.xlu0 %v4296, 120
        %v4409 = vpop.permute.xlu0 %4408
        %4410 = vrot.lane.b32.xlu0 %v4298, 120
        %v4411 = vpop.permute.xlu0 %4410
        %4412 = vrot.lane.b32.xlu0 %v4300, 120
        %v4413 = vpop.permute.xlu0 %4412
        %vm4414 = vcmp.lt.s32.totalorder %v267, 120
        %v4415 = vsel %vm4414, %v4399, %v4407
        %v4416 = vsel %vm4414, %v4401, %v4409
        %v4417 = vsel %vm4414, %v4403, %v4411
        %v4418 = vsel %vm4414, %v4405, %v4413
        %v4419 = vsel %vm4414, %v4407, %v4399
        %v4420 = vsel %vm4414, %v4409, %v4401
        %v4421 = vsel %vm4414, %v4411, %v4403
        %v4422 = vsel %vm4414, %v4413, %v4405
        %v4423 = vsel %vm4396, 1, 0
        %v4424 = vsel %vm4397, 1, 0
        %vm4425 = vcmp.eq.s32.totalorder %v4423, 1
        %vm4426 = vcmp.eq.s32.totalorder %v4424, 1
        %v4427 = vsel %vm4425, %v4415, 0.0
        %v4428 = vsel %vm4426, %v4419, 0.0
        %v4429 = vsel %vm4425, %v4416, 0.0
        %v4430 = vsel %vm4426, %v4420, 0.0
        %v4431 = vsel %vm4425, %v4417, 0.0
        %v4432 = vsel %vm4426, %v4421, 0.0
        %v4433 = vsel %vm4425, %v4418, 0.0
        %v4434 = vsel %vm4426, %v4422, 0.0
        %4435 = vset.pattern.permute.xlu0 5
        %4436 = vperm.xlu0 %4435, %v3790
        %v4437 = vpop.permute.xlu0 %4436
        %4439 = vset.pattern.permute.xlu0 5
        %4440 = vperm.xlu0 %4439, %v3791
        %v4441 = vpop.permute.xlu0 %4440
        %4443 = vset.pattern.permute.xlu0 5
        %4444 = vperm.xlu0 %4443, %v3792
        %v4445 = vpop.permute.xlu0 %4444
        %4447 = vset.pattern.permute.xlu0 5
        %4448 = vperm.xlu0 %4447, %v3793
        %v4449 = vpop.permute.xlu0 %4448
        %v4451 = vmul.f32 %v4437, %v4427
        %v4452 = vmul.f32 %v4437, %v4428
        %v4453 = vmul.f32 %v4441, %v4429
        %v4454 = vmul.f32 %v4441, %v4430
        %v4455 = vmul.f32 %v4445, %v4431
        %v4456 = vmul.f32 %v4445, %v4432
        %v4457 = vmul.f32 %v4449, %v4433
        %v4458 = vmul.f32 %v4449, %v4434
        %v4459 = vadd.f32 %v4388, %v4451
        %v4460 = vadd.f32 %v4389, %v4452
        %v4461 = vadd.f32 %v4390, %v4453
        %v4462 = vadd.f32 %v4391, %v4454
        %v4463 = vadd.f32 %v4392, %v4455
        %v4464 = vadd.f32 %v4393, %v4456
        %v4465 = vadd.f32 %v4394, %v4457
        %v4466 = vadd.f32 %v4395, %v4458
        %vm4467 = vcmp.ge.f32.partialorder %v4459, 0.0
        %vm4468 = vcmp.ge.f32.partialorder %v4460, 0.0
        %vm4469 = vcmp.ge.f32.partialorder %v4461, 0.0
        %vm4470 = vcmp.ge.f32.partialorder %v4462, 0.0
        %vm4471 = vcmp.ge.f32.partialorder %v4463, 0.0
        %vm4472 = vcmp.ge.f32.partialorder %v4464, 0.0
        %vm4473 = vcmp.ge.f32.partialorder %v4465, 0.0
        %vm4474 = vcmp.ge.f32.partialorder %v4466, 0.0
        %4475 = vset.pattern.permute.xlu0 6
        %4476 = vperm.xlu0 %4475, %v3790
        %v4477 = vpop.permute.xlu0 %4476
        %4479 = vset.pattern.permute.xlu0 6
        %4480 = vperm.xlu0 %4479, %v3791
        %v4481 = vpop.permute.xlu0 %4480
        %4483 = vset.pattern.permute.xlu0 6
        %4484 = vperm.xlu0 %4483, %v3792
        %v4485 = vpop.permute.xlu0 %4484
        %4487 = vset.pattern.permute.xlu0 6
        %4488 = vperm.xlu0 %4487, %v3793
        %v4489 = vpop.permute.xlu0 %4488
        %v4491 = vmul.f32 %v4477, %v4459
        %v4492 = vmul.f32 %v4477, %v4460
        %v4493 = vmul.f32 %v4481, %v4461
        %v4494 = vmul.f32 %v4481, %v4462
        %v4495 = vmul.f32 %v4485, %v4463
        %v4496 = vmul.f32 %v4485, %v4464
        %v4497 = vmul.f32 %v4489, %v4465
        %v4498 = vmul.f32 %v4489, %v4466
        %v4499 = vsel %vm4467, %v4459, %v4491
        %v4500 = vsel %vm4468, %v4460, %v4492
        %v4501 = vsel %vm4469, %v4461, %v4493
        %v4502 = vsel %vm4470, %v4462, %v4494
        %v4503 = vsel %vm4471, %v4463, %v4495
        %v4504 = vsel %vm4472, %v4464, %v4496
        %v4505 = vsel %vm4473, %v4465, %v4497
        %v4506 = vsel %vm4474, %v4466, %v4498
        %4507 = vmatprep.subr.mxu0 %v4500
        %4508 = vmatpush1.msra.mxu0 %v4499
        %4509 = vmatprep.subr.mxu0 %v4502
        %4510 = vmatpush1.msra.mxu0 %v4501
        %4511 = vmatprep.subr.mxu0 %v4504
        %4512 = vmatpush1.msra.mxu0 %v4503
        %4513 = vmatprep.subr.mxu0 %v4506
        %4514 = vmatpush1.msra.mxu0 %v4505
        %4515 = vmatprep.subr.mxu0 0.0
        %4516 = vmatpush1.msra.mxu0 0.0
        %4517 = vmatprep.subr.mxu0 0.0
        %4518 = vmatpush1.msra.mxu0 0.0
        %4519 = vmatprep.subr.mxu0 0.0
        %4520 = vmatpush1.msra.mxu0 0.0
        %4521 = vmatprep.subr.mxu0 0.0
        %4522 = vmatpush1.msra.mxu0 0.0
        %4523 = vmatprep.subr.mxu0 0.0
        %4524 = vmatpush1.msra.mxu0 0.0
        %4525 = vmatprep.subr.mxu0 0.0
        %4526 = vmatpush1.msra.mxu0 0.0
        %4527 = vmatprep.subr.mxu0 0.0
        %4528 = vmatpush1.msra.mxu0 0.0
        %4529 = vmatprep.subr.mxu0 0.0
        %4530 = vmatpush1.msra.mxu0 0.0
        %4531 = vmatprep.subr.mxu0 0.0
        %4532 = vmatpush1.msra.mxu0 0.0
        %4533 = vmatprep.subr.mxu0 0.0
        %4534 = vmatpush1.msra.mxu0 0.0
        %4535 = vmatprep.subr.mxu0 0.0
        %4536 = vmatpush1.msra.mxu0 0.0
        %4537 = vmatprep.subr.mxu0 0.0
        %4538 = vmatpush1.msra.mxu0 0.0
        %4539 = vmatprep.subr.mxu0 0.0
        %4540 = vmatpush1.msra.mxu0 0.0
        %4541 = vmatprep.subr.mxu0 0.0
        %4542 = vmatpush1.msra.mxu0 0.0
        %4543 = vmatprep.subr.mxu0 0.0
        %4544 = vmatpush1.msra.mxu0 0.0
        %4545 = vmatprep.subr.mxu0 0.0
        %4546 = vmatpush1.msra.mxu0 0.0
        %4547 = vmatprep.subr.mxu0 0.0
        %4548 = vmatpush1.msra.mxu0 0.0
        %4549 = vmatprep.subr.mxu0 0.0
        %4550 = vmatpush1.msra.mxu0 0.0
        %4551 = vmatprep.subr.mxu0 0.0
        %4552 = vmatpush1.msra.mxu0 0.0
        %4553 = vmatprep.subr.mxu0 0.0
        %4554 = vmatpush1.msra.mxu0 0.0
        %4555 = vmatprep.subr.mxu0 0.0
        %4556 = vmatpush1.msra.mxu0 0.0
        %4557 = vmatprep.subr.mxu0 0.0
        %4558 = vmatpush1.msra.mxu0 0.0
        %4559 = vmatprep.subr.mxu0 0.0
        %4560 = vmatpush1.msra.mxu0 0.0
        %4561 = vmatprep.subr.mxu0 0.0
        %4562 = vmatpush1.msra.mxu0 0.0
        %4563 = vmatprep.subr.mxu0 0.0
        %4564 = vmatpush1.msra.mxu0 0.0
        %4565 = vmatprep.subr.mxu0 0.0
        %4566 = vmatpush1.msra.mxu0 0.0
        %4567 = vmatprep.subr.mxu0 0.0
        %4568 = vmatpush1.msra.mxu0 0.0
        %4569 = vmatprep.subr.mxu0 0.0
        %4570 = vmatpush1.msra.mxu0 0.0
        %4571 = vmatprep.mubr.f32.mxu0 0.0
        %4572 = vmatmul.mubr.f32.gmra.mrb[0].mxu0 %v395
        %v4573 = vpop.f32.mrb[0].mxu0
        %v4574 = vadd.f32 0.0, %v4573
        %v4575 = vpop.f32.mrb[0].mxu0
        %v4576 = vadd.f32 0.0, %v4575
        %4577 = vdwg.mxu0
        %v4578 = vmul.f32 %v4499, %v4499
        %v4579 = vmul.f32 %v4500, %v4500
        %v4580 = vmul.f32 %v4501, %v4501
        %v4581 = vmul.f32 %v4502, %v4502
        %v4582 = vmul.f32 %v4503, %v4503
        %v4583 = vmul.f32 %v4504, %v4504
        %v4584 = vmul.f32 %v4505, %v4505
        %v4585 = vmul.f32 %v4506, %v4506
        %4586 = vmatprep.subr.mxu0 %v4579
        %4587 = vmatpush1.msra.mxu0 %v4578
        %4588 = vmatprep.subr.mxu0 %v4581
        %4589 = vmatpush1.msra.mxu0 %v4580
        %4590 = vmatprep.subr.mxu0 %v4583
        %4591 = vmatpush1.msra.mxu0 %v4582
        %4592 = vmatprep.subr.mxu0 %v4585
        %4593 = vmatpush1.msra.mxu0 %v4584
        %4594 = vmatprep.subr.mxu0 0.0
        %4595 = vmatpush1.msra.mxu0 0.0
        %4596 = vmatprep.subr.mxu0 0.0
        %4597 = vmatpush1.msra.mxu0 0.0
        %4598 = vmatprep.subr.mxu0 0.0
        %4599 = vmatpush1.msra.mxu0 0.0
        %4600 = vmatprep.subr.mxu0 0.0
        %4601 = vmatpush1.msra.mxu0 0.0
        %4602 = vmatprep.subr.mxu0 0.0
        %4603 = vmatpush1.msra.mxu0 0.0
        %4604 = vmatprep.subr.mxu0 0.0
        %4605 = vmatpush1.msra.mxu0 0.0
        %4606 = vmatprep.subr.mxu0 0.0
        %4607 = vmatpush1.msra.mxu0 0.0
        %4608 = vmatprep.subr.mxu0 0.0
        %4609 = vmatpush1.msra.mxu0 0.0
        %4610 = vmatprep.subr.mxu0 0.0
        %4611 = vmatpush1.msra.mxu0 0.0
        %4612 = vmatprep.subr.mxu0 0.0
        %4613 = vmatpush1.msra.mxu0 0.0
        %4614 = vmatprep.subr.mxu0 0.0
        %4615 = vmatpush1.msra.mxu0 0.0
        %4616 = vmatprep.subr.mxu0 0.0
        %4617 = vmatpush1.msra.mxu0 0.0
        %4618 = vmatprep.subr.mxu0 0.0
        %4619 = vmatpush1.msra.mxu0 0.0
        %4620 = vmatprep.subr.mxu0 0.0
        %4621 = vmatpush1.msra.mxu0 0.0
        %4622 = vmatprep.subr.mxu0 0.0
        %4623 = vmatpush1.msra.mxu0 0.0
        %4624 = vmatprep.subr.mxu0 0.0
        %4625 = vmatpush1.msra.mxu0 0.0
        %4626 = vmatprep.subr.mxu0 0.0
        %4627 = vmatpush1.msra.mxu0 0.0
        %4628 = vmatprep.subr.mxu0 0.0
        %4629 = vmatpush1.msra.mxu0 0.0
        %4630 = vmatprep.subr.mxu0 0.0
        %4631 = vmatpush1.msra.mxu0 0.0
        %4632 = vmatprep.subr.mxu0 0.0
        %4633 = vmatpush1.msra.mxu0 0.0
        %4634 = vmatprep.subr.mxu0 0.0
        %4635 = vmatpush1.msra.mxu0 0.0
        %4636 = vmatprep.subr.mxu0 0.0
        %4637 = vmatpush1.msra.mxu0 0.0
        %4638 = vmatprep.subr.mxu0 0.0
        %4639 = vmatpush1.msra.mxu0 0.0
        %4640 = vmatprep.subr.mxu0 0.0
        %4641 = vmatpush1.msra.mxu0 0.0
        %4642 = vmatprep.subr.mxu0 0.0
        %4643 = vmatpush1.msra.mxu0 0.0
        %4644 = vmatprep.subr.mxu0 0.0
        %4645 = vmatpush1.msra.mxu0 0.0
        %4646 = vmatprep.subr.mxu0 0.0
        %4647 = vmatpush1.msra.mxu0 0.0
        %4648 = vmatprep.subr.mxu0 0.0
        %4649 = vmatpush1.msra.mxu0 0.0
        %4650 = vmatprep.mubr.f32.mxu0 0.0
        %4651 = vmatmul.mubr.f32.gmra.mrb[0].mxu0 %v395
        %v4652 = vpop.f32.mrb[0].mxu0
        %v4653 = vadd.f32 0.0, %v4652
        %v4654 = vpop.f32.mrb[0].mxu0
        %v4655 = vadd.f32 0.0, %v4654
        %4656 = vdwg.mxu0
        %4657 = vmatprep.subr.mxu0 0.0
        %4658 = vmatpush1.msra.mxu0 1.0
        %4659 = vmatprep.subr.mxu0 0.0
        %4660 = vmatpush1.msra.mxu0 1.0
        %4661 = vmatprep.subr.mxu0 0.0
        %4662 = vmatpush1.msra.mxu0 1.0
        %4663 = vmatprep.subr.mxu0 0.0
        %4664 = vmatpush1.msra.mxu0 1.0
        %4665 = vmatprep.subr.mxu0 0.0
        %4666 = vmatpush1.msra.mxu0 1.0
        %4667 = vmatprep.subr.mxu0 0.0
        %4668 = vmatpush1.msra.mxu0 1.0
        %4669 = vmatprep.subr.mxu0 0.0
        %4670 = vmatpush1.msra.mxu0 1.0
        %4671 = vmatprep.subr.mxu0 0.0
        %4672 = vmatpush1.msra.mxu0 1.0
        %4673 = vmatprep.subr.mxu0 0.0
        %4674 = vmatpush1.msra.mxu0 1.0
        %4675 = vmatprep.subr.mxu0 0.0
        %4676 = vmatpush1.msra.mxu0 1.0
        %4677 = vmatprep.subr.mxu0 0.0
        %4678 = vmatpush1.msra.mxu0 1.0
        %4679 = vmatprep.subr.mxu0 0.0
        %4680 = vmatpush1.msra.mxu0 1.0
        %4681 = vmatprep.subr.mxu0 0.0
        %4682 = vmatpush1.msra.mxu0 1.0
        %4683 = vmatprep.subr.mxu0 0.0
        %4684 = vmatpush1.msra.mxu0 1.0
        %4685 = vmatprep.subr.mxu0 0.0
        %4686 = vmatpush1.msra.mxu0 1.0
        %4687 = vmatprep.subr.mxu0 0.0
        %4688 = vmatpush1.msra.mxu0 1.0
        %4689 = vmatprep.subr.mxu0 0.0
        %4690 = vmatpush1.msra.mxu0 1.0
        %4691 = vmatprep.subr.mxu0 0.0
        %4692 = vmatpush1.msra.mxu0 1.0
        %4693 = vmatprep.subr.mxu0 0.0
        %4694 = vmatpush1.msra.mxu0 1.0
        %4695 = vmatprep.subr.mxu0 0.0
        %4696 = vmatpush1.msra.mxu0 1.0
        %4697 = vmatprep.subr.mxu0 0.0
        %4698 = vmatpush1.msra.mxu0 1.0
        %4699 = vmatprep.subr.mxu0 0.0
        %4700 = vmatpush1.msra.mxu0 1.0
        %4701 = vmatprep.subr.mxu0 0.0
        %4702 = vmatpush1.msra.mxu0 1.0
        %4703 = vmatprep.subr.mxu0 0.0
        %4704 = vmatpush1.msra.mxu0 1.0
        %4705 = vmatprep.subr.mxu0 0.0
        %4706 = vmatpush1.msra.mxu0 1.0
        %4707 = vmatprep.subr.mxu0 0.0
        %4708 = vmatpush1.msra.mxu0 1.0
        %4709 = vmatprep.subr.mxu0 0.0
        %4710 = vmatpush1.msra.mxu0 1.0
        %4711 = vmatprep.subr.mxu0 0.0
        %4712 = vmatpush1.msra.mxu0 1.0
        %4713 = vmatprep.subr.mxu0 0.0
        %4714 = vmatpush1.msra.mxu0 1.0
        %4715 = vmatprep.subr.mxu0 0.0
        %4716 = vmatpush1.msra.mxu0 1.0
        %4717 = vmatprep.subr.mxu0 0.0
        %4718 = vmatpush1.msra.mxu0 1.0
        %4719 = vmatprep.subr.mxu0 0.0
        %4720 = vmatpush1.msra.mxu0 1.0
        %4721 = vmatprep.mubr.f32.mxu0 %v4576
        %4722 = vmatmul.mubr.f32.gmra.mrb[0].mxu0 %v4574
        %v4723 = vpop.f32.mrb[0].mxu0
        %v4724 = vadd.f32 0.0, %v4723
        %v4725 = vpop.f32.mrb[0].mxu0
        %4726 = vdwg.mxu0
        %s4727 = vtos %v4724
        %4728 = vmatprep.subr.mxu0 0.0
        %4729 = vmatpush1.msra.mxu0 1.0
        %4730 = vmatprep.subr.mxu0 0.0
        %4731 = vmatpush1.msra.mxu0 1.0
        %4732 = vmatprep.subr.mxu0 0.0
        %4733 = vmatpush1.msra.mxu0 1.0
        %4734 = vmatprep.subr.mxu0 0.0
        %4735 = vmatpush1.msra.mxu0 1.0
        %4736 = vmatprep.subr.mxu0 0.0
        %4737 = vmatpush1.msra.mxu0 1.0
        %4738 = vmatprep.subr.mxu0 0.0
        %4739 = vmatpush1.msra.mxu0 1.0
        %4740 = vmatprep.subr.mxu0 0.0
        %4741 = vmatpush1.msra.mxu0 1.0
        %4742 = vmatprep.subr.mxu0 0.0
        %4743 = vmatpush1.msra.mxu0 1.0
        %4744 = vmatprep.subr.mxu0 0.0
        %4745 = vmatpush1.msra.mxu0 1.0
        %4746 = vmatprep.subr.mxu0 0.0
        %4747 = vmatpush1.msra.mxu0 1.0
        %4748 = vmatprep.subr.mxu0 0.0
        %4749 = vmatpush1.msra.mxu0 1.0
        %4750 = vmatprep.subr.mxu0 0.0
        %4751 = vmatpush1.msra.mxu0 1.0
        %4752 = vmatprep.subr.mxu0 0.0
        %4753 = vmatpush1.msra.mxu0 1.0
        %4754 = vmatprep.subr.mxu0 0.0
        %4755 = vmatpush1.msra.mxu0 1.0
        %4756 = vmatprep.subr.mxu0 0.0
        %4757 = vmatpush1.msra.mxu0 1.0
        %4758 = vmatprep.subr.mxu0 0.0
        %4759 = vmatpush1.msra.mxu0 1.0
        %4760 = vmatprep.subr.mxu0 0.0
        %4761 = vmatpush1.msra.mxu0 1.0
        %4762 = vmatprep.subr.mxu0 0.0
        %4763 = vmatpush1.msra.mxu0 1.0
        %4764 = vmatprep.subr.mxu0 0.0
        %4765 = vmatpush1.msra.mxu0 1.0
        %4766 = vmatprep.subr.mxu0 0.0
        %4767 = vmatpush1.msra.mxu0 1.0
        %4768 = vmatprep.subr.mxu0 0.0
        %4769 = vmatpush1.msra.mxu0 1.0
        %4770 = vmatprep.subr.mxu0 0.0
        %4771 = vmatpush1.msra.mxu0 1.0
        %4772 = vmatprep.subr.mxu0 0.0
        %4773 = vmatpush1.msra.mxu0 1.0
        %4774 = vmatprep.subr.mxu0 0.0
        %4775 = vmatpush1.msra.mxu0 1.0
        %4776 = vmatprep.subr.mxu0 0.0
        %4777 = vmatpush1.msra.mxu0 1.0
        %4778 = vmatprep.subr.mxu0 0.0
        %4779 = vmatpush1.msra.mxu0 1.0
        %4780 = vmatprep.subr.mxu0 0.0
        %4781 = vmatpush1.msra.mxu0 1.0
        %4782 = vmatprep.subr.mxu0 0.0
        %4783 = vmatpush1.msra.mxu0 1.0
        %4784 = vmatprep.subr.mxu0 0.0
        %4785 = vmatpush1.msra.mxu0 1.0
        %4786 = vmatprep.subr.mxu0 0.0
        %4787 = vmatpush1.msra.mxu0 1.0
        %4788 = vmatprep.subr.mxu0 0.0
        %4789 = vmatpush1.msra.mxu0 1.0
        %4790 = vmatprep.subr.mxu0 0.0
        %4791 = vmatpush1.msra.mxu0 1.0
        %4792 = vmatprep.mubr.f32.mxu0 %v4655
        %4793 = vmatmul.mubr.f32.gmra.mrb[0].mxu0 %v4653
        %v4794 = vpop.f32.mrb[0].mxu0
        %v4795 = vadd.f32 0.0, %v4794
        %v4796 = vpop.f32.mrb[0].mxu0
        %4797 = vdwg.mxu0
        %s4798 = vtos %v4795
        %s4799 = smul.f32 %s4727, 0.00012207031
        %s4800 = smul.f32 %s4798, 0.00012207031
        %s4801 = smul.f32 %s4799, %s4799
        %s4802 = ssub.f32 %s4800, %s4801
        %s4803 = smax.f32 %s4802, 0.0
        %s4804 = sadd.f32 %s4803, 1e-16
        %v4805 = vstv %s4804
        %v4806 = vrsqrt.pop %v4805
        %s4807 = vtos %v4806
        %s4808 = scalar_lea.vmem %s3, 48
        %v4809 = vld [vmem:[%s4808] sm:$0xf]
        %v4810 = vld [vmem:[%s4808 + $0x4] sm:$0xf]
        %v4811 = vld [vmem:[%s4808 + $0x8] sm:$0xf]
        %v4812 = vld [vmem:[%s4808 + $0xc] sm:$0xf]
        %v4813 = vpack.c.bf16 %v4501, %v4499
        %v4814 = vpack.c.bf16 %v4502, %v4500
        %v4815 = vpack.c.bf16 %v4505, %v4503
        %v4816 = vpack.c.bf16 %v4506, %v4504
        %v4821 = vunpack.c.l.b16 %v4809
        %v4822 = vunpack.c.l.b16 %v4810
        %v4823 = vunpack.c.l.b16 %v4811
        %v4824 = vunpack.c.l.b16 %v4812
        %v4825 = vpack.c.b16 %v4822, %v4821
        %v4826 = vpack.c.b16 %v4824, %v4823
        %v4828 = vsel %vm393, %v4825, 0
        %v4831 = vsel %vm393, %v4826, 0
        %4833 = vmatprep.subr.bf16.mxu0 %v4814
        %4834 = vmatpush1.bf16.msra.mxu0 %v4813
        %4835 = vmatprep.subr.bf16.mxu0 %v4816
        %4836 = vmatpush1.bf16.msra.mxu0 %v4815
        %4837 = vmatprep.subr.bf16.mxu0 0
        %4838 = vmatpush1.bf16.msra.mxu0 0
        %4839 = vmatprep.subr.bf16.mxu0 0
        %4840 = vmatpush1.bf16.msra.mxu0 0
        %4841 = vmatprep.subr.bf16.mxu0 0
        %4842 = vmatpush1.bf16.msra.mxu0 0
        %4843 = vmatprep.subr.bf16.mxu0 0
        %4844 = vmatpush1.bf16.msra.mxu0 0
        %4845 = vmatprep.subr.bf16.mxu0 0
        %4846 = vmatpush1.bf16.msra.mxu0 0
        %4847 = vmatprep.subr.bf16.mxu0 0
        %4848 = vmatpush1.bf16.msra.mxu0 0
        %4849 = vmatprep.subr.bf16.mxu0 0
        %4850 = vmatpush1.bf16.msra.mxu0 0
        %4851 = vmatprep.subr.bf16.mxu0 0
        %4852 = vmatpush1.bf16.msra.mxu0 0
        %4853 = vmatprep.subr.bf16.mxu0 0
        %4854 = vmatpush1.bf16.msra.mxu0 0
        %4855 = vmatprep.subr.bf16.mxu0 0
        %4856 = vmatpush1.bf16.msra.mxu0 0
        %4857 = vmatprep.subr.bf16.mxu0 0
        %4858 = vmatpush1.bf16.msra.mxu0 0
        %4859 = vmatprep.subr.bf16.mxu0 0
        %4860 = vmatpush1.bf16.msra.mxu0 0
        %4861 = vmatprep.subr.bf16.mxu0 0
        %4862 = vmatpush1.bf16.msra.mxu0 0
        %4863 = vmatprep.subr.bf16.mxu0 0
        %4864 = vmatpush1.bf16.msra.mxu0 0
        %4865 = vmatprep.mubr.bf16.mxu0 0
        %4866 = vmatmul.mubr.bf16.gmra.mrb[0].mxu0 %v4828
        %v4867 = vpop.f32.mrb[0].mxu0
        %v4868 = vadd.f32 0.0, %v4867
        %v4869 = vpop.f32.mrb[0].mxu0
        %v4870 = vadd.f32 0.0, %v4869
        %v4871 = vpop.f32.mrb[0].mxu0
        %v4872 = vadd.f32 0.0, %v4871
        %v4873 = vpop.f32.mrb[0].mxu0
        %v4874 = vadd.f32 0.0, %v4873
        %4875 = vmatprep.mubr.bf16.mxu0 0
        %4876 = vmatmul.mubr.bf16.gmra.mrb[0].mxu0 %v4831
        %v4877 = vpop.f32.mrb[0].mxu0
        %v4878 = vadd.f32 0.0, %v4877
        %v4879 = vpop.f32.mrb[0].mxu0
        %v4880 = vadd.f32 0.0, %v4879
        %v4881 = vpop.f32.mrb[0].mxu0
        %v4882 = vadd.f32 0.0, %v4881
        %v4883 = vpop.f32.mrb[0].mxu0
        %v4884 = vadd.f32 0.0, %v4883
        %4885 = vdwg.mxu0
        %s4886 = scalar_lea.vmem %s4, 96
        %v4887 = vld [vmem:[%s4886] sm:$0xff]
        %v4888 = vld [vmem:[%s4886 + $0x8] sm:$0xff]
        %v4889 = vld [vmem:[%s4886 + $0x10] sm:$0xff]
        %v4890 = vld [vmem:[%s4886 + $0x18] sm:$0xff]
        %s4891 = smul.f32 %s4799, %s4807
        %v4892 = vstv %s4891
        %v4893 = vmul.f32 %v4892, %v4887
        %v4894 = vmul.f32 %v4892, %v4888
        %v4895 = vmul.f32 %v4892, %v4889
        %v4896 = vmul.f32 %v4892, %v4890
        %4901 = vrot.lane.b32.xlu0 %v4893, 1
        %v4902 = vpop.permute.xlu0 %4901
        %4903 = vrot.lane.b32.xlu0 %v4894, 1
        %v4904 = vpop.permute.xlu0 %4903
        %4905 = vrot.lane.b32.xlu0 %v4895, 1
        %v4906 = vpop.permute.xlu0 %4905
        %4907 = vrot.lane.b32.xlu0 %v4896, 1
        %v4908 = vpop.permute.xlu0 %4907
        %v4913 = vsub.f32 %v4887, %v4902
        %v4914 = vsub.f32 %v4888, %v4904
        %v4915 = vsub.f32 %v4889, %v4906
        %v4916 = vsub.f32 %v4890, %v4908
        %v4917 = vstv %s4807
        %v4918 = vmul.f32 %v4868, %v4917
        %v4919 = vmul.f32 %v4870, %v4917
        %v4920 = vmul.f32 %v4872, %v4917
        %v4921 = vmul.f32 %v4874, %v4917
        %v4922 = vmul.f32 %v4878, %v4917
        %v4923 = vmul.f32 %v4880, %v4917
        %v4924 = vmul.f32 %v4882, %v4917
        %v4925 = vmul.f32 %v4884, %v4917
        %4927 = vset.pattern.permute.xlu0 1
        %4928 = vperm.xlu0 %4927, %v4913
        %v4929 = vpop.permute.xlu0 %4928
        %4932 = vset.pattern.permute.xlu0 1
        %4933 = vperm.xlu0 %4932, %v4914
        %v4934 = vpop.permute.xlu0 %4933
        %4937 = vset.pattern.permute.xlu0 1
        %4938 = vperm.xlu0 %4937, %v4915
        %v4939 = vpop.permute.xlu0 %4938
        %4942 = vset.pattern.permute.xlu0 1
        %4943 = vperm.xlu0 %4942, %v4916
        %v4944 = vpop.permute.xlu0 %4943
        %v4946 = vadd.f32 %v4918, %v4929
        %v4947 = vadd.f32 %v4919, %v4929
        %v4948 = vadd.f32 %v4920, %v4934
        %v4949 = vadd.f32 %v4921, %v4934
        %v4950 = vadd.f32 %v4922, %v4939
        %v4951 = vadd.f32 %v4923, %v4939
        %v4952 = vadd.f32 %v4924, %v4944
        %v4953 = vadd.f32 %v4925, %v4944
        %v4954 = vadd.f32 %v4946, %v3781
        %v4955 = vadd.f32 %v4947, %v3782
        %v4956 = vadd.f32 %v4948, %v3783
        %v4957 = vadd.f32 %v4949, %v3784
        %v4958 = vadd.f32 %v3785, %v4950
        %v4959 = vadd.f32 %v3786, %v4951
        %v4960 = vadd.f32 %v3787, %v4952
        %v4961 = vadd.f32 %v3788, %v4953
        %s4962 = scalar_lea.vmem %s2, 128
        %v4963 = vld [vmem:[%s4962] sm:$0xff]
        %v4964 = vld [vmem:[%s4962 + $0x8] sm:$0xff]
        %v4965 = vld [vmem:[%s4962 + $0x10] sm:$0xff]
        %v4966 = vld [vmem:[%s4962 + $0x18] sm:$0xff]
        %s4967 = scalar_lea.vmem %s1, 64
        %v4968 = vld [vmem:[%s4967] sm:$0xf]
        %v4969 = vld [vmem:[%s4967 + $0x4] sm:$0xf]
        %v4970 = vld [vmem:[%s4967 + $0x8] sm:$0xf]
        %v4971 = vld [vmem:[%s4967 + $0xc] sm:$0xf]
        %v4972 = vpack.c.bf16 %v4956, %v4954
        %v4973 = vpack.c.bf16 %v4957, %v4955
        %v4978 = vunpack.c.l.b16 %v4968
        %v4979 = vunpack.c.l.b16 %v4969
        %v4980 = vunpack.c.l.b16 %v4970
        %v4981 = vunpack.c.l.b16 %v4971
        %v4982 = vpack.c.b16 %v4979, %v4978
        %v4983 = vpack.c.b16 %v4981, %v4980
        %v4985 = vsel %vm289, %v4982, 0
        %v4988 = vsel %vm289, %v4983, 0
        %4990 = vmatprep.subr.bf16.mxu0 %v4973
        %4991 = vmatpush1.bf16.msra.mxu0 %v4972
        %4992 = vmatprep.subr.bf16.mxu0 0
        %4993 = vmatpush1.bf16.msra.mxu0 0
        %4994 = vmatprep.subr.bf16.mxu0 0
        %4995 = vmatpush1.bf16.msra.mxu0 0
        %4996 = vmatprep.subr.bf16.mxu0 0
        %4997 = vmatpush1.bf16.msra.mxu0 0
        %4998 = vmatprep.subr.bf16.mxu0 0
        %4999 = vmatpush1.bf16.msra.mxu0 0
        %5000 = vmatprep.subr.bf16.mxu0 0
        %5001 = vmatpush1.bf16.msra.mxu0 0
        %5002 = vmatprep.subr.bf16.mxu0 0
        %5003 = vmatpush1.bf16.msra.mxu0 0
        %5004 = vmatprep.subr.bf16.mxu0 0
        %5005 = vmatpush1.bf16.msra.mxu0 0
        %5006 = vmatprep.subr.bf16.mxu0 0
        %5007 = vmatpush1.bf16.msra.mxu0 0
        %5008 = vmatprep.subr.bf16.mxu0 0
        %5009 = vmatpush1.bf16.msra.mxu0 0
        %5010 = vmatprep.subr.bf16.mxu0 0
        %5011 = vmatpush1.bf16.msra.mxu0 0
        %5012 = vmatprep.subr.bf16.mxu0 0
        %5013 = vmatpush1.bf16.msra.mxu0 0
        %5014 = vmatprep.subr.bf16.mxu0 0
        %5015 = vmatpush1.bf16.msra.mxu0 0
        %5016 = vmatprep.subr.bf16.mxu0 0
        %5017 = vmatpush1.bf16.msra.mxu0 0
        %5018 = vmatprep.subr.bf16.mxu0 0
        %5019 = vmatpush1.bf16.msra.mxu0 0
        %5020 = vmatprep.subr.bf16.mxu0 0
        %5021 = vmatpush1.bf16.msra.mxu0 0
        %5022 = vmatprep.mubr.bf16.mxu0 0
        %5023 = vmatmul.mubr.bf16.gmra.mrb[0].mxu0 %v4985
        %v5024 = vpop.f32.mrb[0].mxu0
        %v5025 = vadd.f32 0.0, %v5024
        %v5026 = vpop.f32.mrb[0].mxu0
        %v5027 = vadd.f32 0.0, %v5026
        %v5028 = vpop.f32.mrb[0].mxu0
        %v5029 = vadd.f32 0.0, %v5028
        %v5030 = vpop.f32.mrb[0].mxu0
        %v5031 = vadd.f32 0.0, %v5030
        %5032 = vmatprep.mubr.bf16.mxu0 0
        %5033 = vmatmul.mubr.bf16.gmra.mrb[0].mxu0 %v4988
        %v5034 = vpop.f32.mrb[0].mxu0
        %v5035 = vadd.f32 0.0, %v5034
        %v5036 = vpop.f32.mrb[0].mxu0
        %v5037 = vadd.f32 0.0, %v5036
        %v5038 = vpop.f32.mrb[0].mxu0
        %v5039 = vadd.f32 0.0, %v5038
        %v5040 = vpop.f32.mrb[0].mxu0
        %v5041 = vadd.f32 0.0, %v5040
        %5042 = vdwg.mxu0
        %vm5043 = vcmp.ge.f32.partialorder %v5025, 0.0
        %vm5044 = vcmp.ge.f32.partialorder %v5027, 0.0
        %vm5045 = vcmp.ge.f32.partialorder %v5029, 0.0
        %vm5046 = vcmp.ge.f32.partialorder %v5031, 0.0
        %vm5047 = vcmp.ge.f32.partialorder %v5035, 0.0
        %vm5048 = vcmp.ge.f32.partialorder %v5037, 0.0
        %vm5049 = vcmp.ge.f32.partialorder %v5039, 0.0
        %vm5050 = vcmp.ge.f32.partialorder %v5041, 0.0
        %5052 = vset.pattern.permute.xlu0 0
        %5053 = vperm.xlu0 %5052, %v4963
        %v5054 = vpop.permute.xlu0 %5053
        %5057 = vset.pattern.permute.xlu0 0
        %5058 = vperm.xlu0 %5057, %v4964
        %v5059 = vpop.permute.xlu0 %5058
        %5062 = vset.pattern.permute.xlu0 0
        %5063 = vperm.xlu0 %5062, %v4965
        %v5064 = vpop.permute.xlu0 %5063
        %5067 = vset.pattern.permute.xlu0 0
        %5068 = vperm.xlu0 %5067, %v4966
        %v5069 = vpop.permute.xlu0 %5068
        %v5071 = vmul.f32 %v5054, %v5025
        %v5072 = vmul.f32 %v5054, %v5027
        %v5073 = vmul.f32 %v5059, %v5029
        %v5074 = vmul.f32 %v5059, %v5031
        %v5075 = vmul.f32 %v5064, %v5035
        %v5076 = vmul.f32 %v5064, %v5037
        %v5077 = vmul.f32 %v5069, %v5039
        %v5078 = vmul.f32 %v5069, %v5041
        %v5079 = vsel %vm5043, %v5025, %v5071
        %v5080 = vsel %vm5044, %v5027, %v5072
        %v5081 = vsel %vm5045, %v5029, %v5073
        %v5082 = vsel %vm5046, %v5031, %v5074
        %v5083 = vsel %vm5047, %v5035, %v5075
        %v5084 = vsel %vm5048, %v5037, %v5076
        %v5085 = vsel %vm5049, %v5039, %v5077
        %v5086 = vsel %vm5050, %v5041, %v5078
        %5087 = vmatprep.subr.mxu0 %v5080
        %5088 = vmatpush1.msra.mxu0 %v5079
        %5089 = vmatprep.subr.mxu0 %v5082
        %5090 = vmatpush1.msra.mxu0 %v5081
        %5091 = vmatprep.subr.mxu0 %v5084
        %5092 = vmatpush1.msra.mxu0 %v5083
        %5093 = vmatprep.subr.mxu0 %v5086
        %5094 = vmatpush1.msra.mxu0 %v5085
        %5095 = vmatprep.subr.mxu0 0.0
        %5096 = vmatpush1.msra.mxu0 0.0
        %5097 = vmatprep.subr.mxu0 0.0
        %5098 = vmatpush1.msra.mxu0 0.0
        %5099 = vmatprep.subr.mxu0 0.0
        %5100 = vmatpush1.msra.mxu0 0.0
        %5101 = vmatprep.subr.mxu0 0.0
        %5102 = vmatpush1.msra.mxu0 0.0
        %5103 = vmatprep.subr.mxu0 0.0
        %5104 = vmatpush1.msra.mxu0 0.0
        %5105 = vmatprep.subr.mxu0 0.0
        %5106 = vmatpush1.msra.mxu0 0.0
        %5107 = vmatprep.subr.mxu0 0.0
        %5108 = vmatpush1.msra.mxu0 0.0
        %5109 = vmatprep.subr.mxu0 0.0
        %5110 = vmatpush1.msra.mxu0 0.0
        %5111 = vmatprep.subr.mxu0 0.0
        %5112 = vmatpush1.msra.mxu0 0.0
        %5113 = vmatprep.subr.mxu0 0.0
        %5114 = vmatpush1.msra.mxu0 0.0
        %5115 = vmatprep.subr.mxu0 0.0
        %5116 = vmatpush1.msra.mxu0 0.0
        %5117 = vmatprep.subr.mxu0 0.0
        %5118 = vmatpush1.msra.mxu0 0.0
        %5119 = vmatprep.subr.mxu0 0.0
        %5120 = vmatpush1.msra.mxu0 0.0
        %5121 = vmatprep.subr.mxu0 0.0
        %5122 = vmatpush1.msra.mxu0 0.0
        %5123 = vmatprep.subr.mxu0 0.0
        %5124 = vmatpush1.msra.mxu0 0.0
        %5125 = vmatprep.subr.mxu0 0.0
        %5126 = vmatpush1.msra.mxu0 0.0
        %5127 = vmatprep.subr.mxu0 0.0
        %5128 = vmatpush1.msra.mxu0 0.0
        %5129 = vmatprep.subr.mxu0 0.0
        %5130 = vmatpush1.msra.mxu0 0.0
        %5131 = vmatprep.subr.mxu0 0.0
        %5132 = vmatpush1.msra.mxu0 0.0
        %5133 = vmatprep.subr.mxu0 0.0
        %5134 = vmatpush1.msra.mxu0 0.0
        %5135 = vmatprep.subr.mxu0 0.0
        %5136 = vmatpush1.msra.mxu0 0.0
        %5137 = vmatprep.subr.mxu0 0.0
        %5138 = vmatpush1.msra.mxu0 0.0
        %5139 = vmatprep.subr.mxu0 0.0
        %5140 = vmatpush1.msra.mxu0 0.0
        %5141 = vmatprep.subr.mxu0 0.0
        %5142 = vmatpush1.msra.mxu0 0.0
        %5143 = vmatprep.subr.mxu0 0.0
        %5144 = vmatpush1.msra.mxu0 0.0
        %5145 = vmatprep.subr.mxu0 0.0
        %5146 = vmatpush1.msra.mxu0 0.0
        %5147 = vmatprep.subr.mxu0 0.0
        %5148 = vmatpush1.msra.mxu0 0.0
        %5149 = vmatprep.subr.mxu0 0.0
        %5150 = vmatpush1.msra.mxu0 0.0
        %5151 = vmatprep.mubr.f32.mxu0 0.0
        %5152 = vmatmul.mubr.f32.gmra.mrb[0].mxu0 %v395
        %v5153 = vpop.f32.mrb[0].mxu0
        %v5154 = vadd.f32 0.0, %v5153
        %v5155 = vpop.f32.mrb[0].mxu0
        %v5156 = vadd.f32 0.0, %v5155
        %5157 = vdwg.mxu0
        %v5158 = vmul.f32 %v5079, %v5079
        %v5159 = vmul.f32 %v5080, %v5080
        %v5160 = vmul.f32 %v5081, %v5081
        %v5161 = vmul.f32 %v5082, %v5082
        %v5162 = vmul.f32 %v5083, %v5083
        %v5163 = vmul.f32 %v5084, %v5084
        %v5164 = vmul.f32 %v5085, %v5085
        %v5165 = vmul.f32 %v5086, %v5086
        %5166 = vmatprep.subr.mxu0 %v5159
        %5167 = vmatpush1.msra.mxu0 %v5158
        %5168 = vmatprep.subr.mxu0 %v5161
        %5169 = vmatpush1.msra.mxu0 %v5160
        %5170 = vmatprep.subr.mxu0 %v5163
        %5171 = vmatpush1.msra.mxu0 %v5162
        %5172 = vmatprep.subr.mxu0 %v5165
        %5173 = vmatpush1.msra.mxu0 %v5164
        %5174 = vmatprep.subr.mxu0 0.0
        %5175 = vmatpush1.msra.mxu0 0.0
        %5176 = vmatprep.subr.mxu0 0.0
        %5177 = vmatpush1.msra.mxu0 0.0
        %5178 = vmatprep.subr.mxu0 0.0
        %5179 = vmatpush1.msra.mxu0 0.0
        %5180 = vmatprep.subr.mxu0 0.0
        %5181 = vmatpush1.msra.mxu0 0.0
        %5182 = vmatprep.subr.mxu0 0.0
        %5183 = vmatpush1.msra.mxu0 0.0
        %5184 = vmatprep.subr.mxu0 0.0
        %5185 = vmatpush1.msra.mxu0 0.0
        %5186 = vmatprep.subr.mxu0 0.0
        %5187 = vmatpush1.msra.mxu0 0.0
        %5188 = vmatprep.subr.mxu0 0.0
        %5189 = vmatpush1.msra.mxu0 0.0
        %5190 = vmatprep.subr.mxu0 0.0
        %5191 = vmatpush1.msra.mxu0 0.0
        %5192 = vmatprep.subr.mxu0 0.0
        %5193 = vmatpush1.msra.mxu0 0.0
        %5194 = vmatprep.subr.mxu0 0.0
        %5195 = vmatpush1.msra.mxu0 0.0
        %5196 = vmatprep.subr.mxu0 0.0
        %5197 = vmatpush1.msra.mxu0 0.0
        %5198 = vmatprep.subr.mxu0 0.0
        %5199 = vmatpush1.msra.mxu0 0.0
        %5200 = vmatprep.subr.mxu0 0.0
        %5201 = vmatpush1.msra.mxu0 0.0
        %5202 = vmatprep.subr.mxu0 0.0
        %5203 = vmatpush1.msra.mxu0 0.0
        %5204 = vmatprep.subr.mxu0 0.0
        %5205 = vmatpush1.msra.mxu0 0.0
        %5206 = vmatprep.subr.mxu0 0.0
        %5207 = vmatpush1.msra.mxu0 0.0
        %5208 = vmatprep.subr.mxu0 0.0
        %5209 = vmatpush1.msra.mxu0 0.0
        %5210 = vmatprep.subr.mxu0 0.0
        %5211 = vmatpush1.msra.mxu0 0.0
        %5212 = vmatprep.subr.mxu0 0.0
        %5213 = vmatpush1.msra.mxu0 0.0
        %5214 = vmatprep.subr.mxu0 0.0
        %5215 = vmatpush1.msra.mxu0 0.0
        %5216 = vmatprep.subr.mxu0 0.0
        %5217 = vmatpush1.msra.mxu0 0.0
        %5218 = vmatprep.subr.mxu0 0.0
        %5219 = vmatpush1.msra.mxu0 0.0
        %5220 = vmatprep.subr.mxu0 0.0
        %5221 = vmatpush1.msra.mxu0 0.0
        %5222 = vmatprep.subr.mxu0 0.0
        %5223 = vmatpush1.msra.mxu0 0.0
        %5224 = vmatprep.subr.mxu0 0.0
        %5225 = vmatpush1.msra.mxu0 0.0
        %5226 = vmatprep.subr.mxu0 0.0
        %5227 = vmatpush1.msra.mxu0 0.0
        %5228 = vmatprep.subr.mxu0 0.0
        %5229 = vmatpush1.msra.mxu0 0.0
        %5230 = vmatprep.mubr.f32.mxu0 0.0
        %5231 = vmatmul.mubr.f32.gmra.mrb[0].mxu0 %v395
        %v5232 = vpop.f32.mrb[0].mxu0
        %v5233 = vadd.f32 0.0, %v5232
        %v5234 = vpop.f32.mrb[0].mxu0
        %v5235 = vadd.f32 0.0, %v5234
        %5236 = vdwg.mxu0
        %5237 = vmatprep.subr.mxu0 0.0
        %5238 = vmatpush1.msra.mxu0 1.0
        %5239 = vmatprep.subr.mxu0 0.0
        %5240 = vmatpush1.msra.mxu0 1.0
        %5241 = vmatprep.subr.mxu0 0.0
        %5242 = vmatpush1.msra.mxu0 1.0
        %5243 = vmatprep.subr.mxu0 0.0
        %5244 = vmatpush1.msra.mxu0 1.0
        %5245 = vmatprep.subr.mxu0 0.0
        %5246 = vmatpush1.msra.mxu0 1.0
        %5247 = vmatprep.subr.mxu0 0.0
        %5248 = vmatpush1.msra.mxu0 1.0
        %5249 = vmatprep.subr.mxu0 0.0
        %5250 = vmatpush1.msra.mxu0 1.0
        %5251 = vmatprep.subr.mxu0 0.0
        %5252 = vmatpush1.msra.mxu0 1.0
        %5253 = vmatprep.subr.mxu0 0.0
        %5254 = vmatpush1.msra.mxu0 1.0
        %5255 = vmatprep.subr.mxu0 0.0
        %5256 = vmatpush1.msra.mxu0 1.0
        %5257 = vmatprep.subr.mxu0 0.0
        %5258 = vmatpush1.msra.mxu0 1.0
        %5259 = vmatprep.subr.mxu0 0.0
        %5260 = vmatpush1.msra.mxu0 1.0
        %5261 = vmatprep.subr.mxu0 0.0
        %5262 = vmatpush1.msra.mxu0 1.0
        %5263 = vmatprep.subr.mxu0 0.0
        %5264 = vmatpush1.msra.mxu0 1.0
        %5265 = vmatprep.subr.mxu0 0.0
        %5266 = vmatpush1.msra.mxu0 1.0
        %5267 = vmatprep.subr.mxu0 0.0
        %5268 = vmatpush1.msra.mxu0 1.0
        %5269 = vmatprep.subr.mxu0 0.0
        %5270 = vmatpush1.msra.mxu0 1.0
        %5271 = vmatprep.subr.mxu0 0.0
        %5272 = vmatpush1.msra.mxu0 1.0
        %5273 = vmatprep.subr.mxu0 0.0
        %5274 = vmatpush1.msra.mxu0 1.0
        %5275 = vmatprep.subr.mxu0 0.0
        %5276 = vmatpush1.msra.mxu0 1.0
        %5277 = vmatprep.subr.mxu0 0.0
        %5278 = vmatpush1.msra.mxu0 1.0
        %5279 = vmatprep.subr.mxu0 0.0
        %5280 = vmatpush1.msra.mxu0 1.0
        %5281 = vmatprep.subr.mxu0 0.0
        %5282 = vmatpush1.msra.mxu0 1.0
        %5283 = vmatprep.subr.mxu0 0.0
        %5284 = vmatpush1.msra.mxu0 1.0
        %5285 = vmatprep.subr.mxu0 0.0
        %5286 = vmatpush1.msra.mxu0 1.0
        %5287 = vmatprep.subr.mxu0 0.0
        %5288 = vmatpush1.msra.mxu0 1.0
        %5289 = vmatprep.subr.mxu0 0.0
        %5290 = vmatpush1.msra.mxu0 1.0
        %5291 = vmatprep.subr.mxu0 0.0
        %5292 = vmatpush1.msra.mxu0 1.0
        %5293 = vmatprep.subr.mxu0 0.0
        %5294 = vmatpush1.msra.mxu0 1.0
        %5295 = vmatprep.subr.mxu0 0.0
        %5296 = vmatpush1.msra.mxu0 1.0
        %5297 = vmatprep.subr.mxu0 0.0
        %5298 = vmatpush1.msra.mxu0 1.0
        %5299 = vmatprep.subr.mxu0 0.0
        %5300 = vmatpush1.msra.mxu0 1.0
        %5301 = vmatprep.mubr.f32.mxu0 %v5156
        %5302 = vmatmul.mubr.f32.gmra.mrb[0].mxu0 %v5154
        %v5303 = vpop.f32.mrb[0].mxu0
        %v5304 = vadd.f32 0.0, %v5303
        %v5305 = vpop.f32.mrb[0].mxu0
        %5306 = vdwg.mxu0
        %s5307 = vtos %v5304
        %5308 = vmatprep.subr.mxu0 0.0
        %5309 = vmatpush1.msra.mxu0 1.0
        %5310 = vmatprep.subr.mxu0 0.0
        %5311 = vmatpush1.msra.mxu0 1.0
        %5312 = vmatprep.subr.mxu0 0.0
        %5313 = vmatpush1.msra.mxu0 1.0
        %5314 = vmatprep.subr.mxu0 0.0
        %5315 = vmatpush1.msra.mxu0 1.0
        %5316 = vmatprep.subr.mxu0 0.0
        %5317 = vmatpush1.msra.mxu0 1.0
        %5318 = vmatprep.subr.mxu0 0.0
        %5319 = vmatpush1.msra.mxu0 1.0
        %5320 = vmatprep.subr.mxu0 0.0
        %5321 = vmatpush1.msra.mxu0 1.0
        %5322 = vmatprep.subr.mxu0 0.0
        %5323 = vmatpush1.msra.mxu0 1.0
        %5324 = vmatprep.subr.mxu0 0.0
        %5325 = vmatpush1.msra.mxu0 1.0
        %5326 = vmatprep.subr.mxu0 0.0
        %5327 = vmatpush1.msra.mxu0 1.0
        %5328 = vmatprep.subr.mxu0 0.0
        %5329 = vmatpush1.msra.mxu0 1.0
        %5330 = vmatprep.subr.mxu0 0.0
        %5331 = vmatpush1.msra.mxu0 1.0
        %5332 = vmatprep.subr.mxu0 0.0
        %5333 = vmatpush1.msra.mxu0 1.0
        %5334 = vmatprep.subr.mxu0 0.0
        %5335 = vmatpush1.msra.mxu0 1.0
        %5336 = vmatprep.subr.mxu0 0.0
        %5337 = vmatpush1.msra.mxu0 1.0
        %5338 = vmatprep.subr.mxu0 0.0
        %5339 = vmatpush1.msra.mxu0 1.0
        %5340 = vmatprep.subr.mxu0 0.0
        %5341 = vmatpush1.msra.mxu0 1.0
        %5342 = vmatprep.subr.mxu0 0.0
        %5343 = vmatpush1.msra.mxu0 1.0
        %5344 = vmatprep.subr.mxu0 0.0
        %5345 = vmatpush1.msra.mxu0 1.0
        %5346 = vmatprep.subr.mxu0 0.0
        %5347 = vmatpush1.msra.mxu0 1.0
        %5348 = vmatprep.subr.mxu0 0.0
        %5349 = vmatpush1.msra.mxu0 1.0
        %5350 = vmatprep.subr.mxu0 0.0
        %5351 = vmatpush1.msra.mxu0 1.0
        %5352 = vmatprep.subr.mxu0 0.0
        %5353 = vmatpush1.msra.mxu0 1.0
        %5354 = vmatprep.subr.mxu0 0.0
        %5355 = vmatpush1.msra.mxu0 1.0
        %5356 = vmatprep.subr.mxu0 0.0
        %5357 = vmatpush1.msra.mxu0 1.0
        %5358 = vmatprep.subr.mxu0 0.0
        %5359 = vmatpush1.msra.mxu0 1.0
        %5360 = vmatprep.subr.mxu0 0.0
        %5361 = vmatpush1.msra.mxu0 1.0
        %5362 = vmatprep.subr.mxu0 0.0
        %5363 = vmatpush1.msra.mxu0 1.0
        %5364 = vmatprep.subr.mxu0 0.0
        %5365 = vmatpush1.msra.mxu0 1.0
        %5366 = vmatprep.subr.mxu0 0.0
        %5367 = vmatpush1.msra.mxu0 1.0
        %5368 = vmatprep.subr.mxu0 0.0
        %5369 = vmatpush1.msra.mxu0 1.0
        %5370 = vmatprep.subr.mxu0 0.0
        %5371 = vmatpush1.msra.mxu0 1.0
        %5372 = vmatprep.mubr.f32.mxu0 %v5235
        %5373 = vmatmul.mubr.f32.gmra.mrb[0].mxu0 %v5233
        %v5374 = vpop.f32.mrb[0].mxu0
        %v5375 = vadd.f32 0.0, %v5374
        %v5376 = vpop.f32.mrb[0].mxu0
        %5377 = vdwg.mxu0
        %s5378 = vtos %v5375
        %s5379 = smul.f32 %s5307, 0.00012207031
        %s5380 = smul.f32 %s5378, 0.00012207031
        %s5381 = smul.f32 %s5379, %s5379
        %s5382 = ssub.f32 %s5380, %s5381
        %s5383 = smax.f32 %s5382, 0.0
        %s5384 = sadd.f32 %s5383, 1e-16
        %v5385 = vstv %s5384
        %v5386 = vrsqrt.pop %v5385
        %s5387 = vtos %v5386
        %v5388 = vstv %s5387
        %v5389 = vmul.f32 %v4963, %v5388
        %v5390 = vmul.f32 %v4964, %v5388
        %v5391 = vmul.f32 %v4965, %v5388
        %v5392 = vmul.f32 %v4966, %v5388
        %v5393 = vstv %s5379
        %v5394 = vmul.f32 %v5393, %v5389
        %v5395 = vmul.f32 %v5393, %v5390
        %v5396 = vmul.f32 %v5393, %v5391
        %v5397 = vmul.f32 %v5393, %v5392
        %5402 = vrot.lane.b32.xlu0 %v5394, 1
        %v5403 = vpop.permute.xlu0 %5402
        %5404 = vrot.lane.b32.xlu0 %v5395, 1
        %v5405 = vpop.permute.xlu0 %5404
        %5406 = vrot.lane.b32.xlu0 %v5396, 1
        %v5407 = vpop.permute.xlu0 %5406
        %5408 = vrot.lane.b32.xlu0 %v5397, 1
        %v5409 = vpop.permute.xlu0 %5408
        %v5414 = vsub.f32 %v4963, %v5403
        %v5415 = vsub.f32 %v4964, %v5405
        %v5416 = vsub.f32 %v4965, %v5407
        %v5417 = vsub.f32 %v4966, %v5409
        %5419 = vset.pattern.permute.xlu0 1
        %5420 = vperm.xlu0 %5419, %v5389
        %v5421 = vpop.permute.xlu0 %5420
        %5424 = vset.pattern.permute.xlu0 1
        %5425 = vperm.xlu0 %5424, %v5390
        %v5426 = vpop.permute.xlu0 %5425
        %5429 = vset.pattern.permute.xlu0 1
        %5430 = vperm.xlu0 %5429, %v5391
        %v5431 = vpop.permute.xlu0 %5430
        %5434 = vset.pattern.permute.xlu0 1
        %5435 = vperm.xlu0 %5434, %v5392
        %v5436 = vpop.permute.xlu0 %5435
        %v5438 = vmul.f32 %v5079, %v5421
        %v5439 = vmul.f32 %v5080, %v5421
        %v5440 = vmul.f32 %v5081, %v5426
        %v5441 = vmul.f32 %v5082, %v5426
        %v5442 = vmul.f32 %v5083, %v5431
        %v5443 = vmul.f32 %v5084, %v5431
        %v5444 = vmul.f32 %v5085, %v5436
        %v5445 = vmul.f32 %v5086, %v5436
        %5447 = vset.pattern.permute.xlu0 2
        %5448 = vperm.xlu0 %5447, %v5414
        %v5449 = vpop.permute.xlu0 %5448
        %5452 = vset.pattern.permute.xlu0 2
        %5453 = vperm.xlu0 %5452, %v5415
        %v5454 = vpop.permute.xlu0 %5453
        %5457 = vset.pattern.permute.xlu0 2
        %5458 = vperm.xlu0 %5457, %v5416
        %v5459 = vpop.permute.xlu0 %5458
        %5462 = vset.pattern.permute.xlu0 2
        %5463 = vperm.xlu0 %5462, %v5417
        %v5464 = vpop.permute.xlu0 %5463
        %v5466 = vadd.f32 %v5438, %v5449
        %v5467 = vadd.f32 %v5439, %v5449
        %v5468 = vadd.f32 %v5440, %v5454
        %v5469 = vadd.f32 %v5441, %v5454
        %v5470 = vadd.f32 %v5442, %v5459
        %v5471 = vadd.f32 %v5443, %v5459
        %v5472 = vadd.f32 %v5444, %v5464
        %v5473 = vadd.f32 %v5445, %v5464
        %5474 = vset.pattern.permute.xlu0 4
        %5475 = vperm.xlu0 %5474, %v4963
        %v5476 = vpop.permute.xlu0 %5475
        %5478 = vset.pattern.permute.xlu0 4
        %5479 = vperm.xlu0 %5478, %v4964
        %v5480 = vpop.permute.xlu0 %5479
        %5482 = vset.pattern.permute.xlu0 4
        %5483 = vperm.xlu0 %5482, %v4965
        %v5484 = vpop.permute.xlu0 %5483
        %5486 = vset.pattern.permute.xlu0 4
        %5487 = vperm.xlu0 %5486, %v4966
        %v5488 = vpop.permute.xlu0 %5487
        %v5490 = vmul.f32 %v5476, %v5466
        %v5491 = vmul.f32 %v5476, %v5467
        %v5492 = vmul.f32 %v5480, %v5468
        %v5493 = vmul.f32 %v5480, %v5469
        %v5494 = vmul.f32 %v5484, %v5470
        %v5495 = vmul.f32 %v5484, %v5471
        %v5496 = vmul.f32 %v5488, %v5472
        %v5497 = vmul.f32 %v5488, %v5473
        %vm5498 = vcmp.ge.s32.totalorder %v267, 16
        %vm5499 = vcmp.ge.s32.totalorder %v268, 16
        %5500 = vrot.lane.b32.xlu0 %v5466, 16
        %v5501 = vpop.permute.xlu0 %5500
        %5502 = vrot.lane.b32.xlu0 %v5468, 16
        %v5503 = vpop.permute.xlu0 %5502
        %5504 = vrot.lane.b32.xlu0 %v5470, 16
        %v5505 = vpop.permute.xlu0 %5504
        %5506 = vrot.lane.b32.xlu0 %v5472, 16
        %v5507 = vpop.permute.xlu0 %5506
        %5508 = vrot.lane.b32.xlu0 %v5467, 16
        %v5509 = vpop.permute.xlu0 %5508
        %5510 = vrot.lane.b32.xlu0 %v5469, 16
        %v5511 = vpop.permute.xlu0 %5510
        %5512 = vrot.lane.b32.xlu0 %v5471, 16
        %v5513 = vpop.permute.xlu0 %5512
        %5514 = vrot.lane.b32.xlu0 %v5473, 16
        %v5515 = vpop.permute.xlu0 %5514
        %vm5516 = vcmp.lt.s32.totalorder %v267, 16
        %v5517 = vsel %vm5516, %v5501, %v5509
        %v5518 = vsel %vm5516, %v5503, %v5511
        %v5519 = vsel %vm5516, %v5505, %v5513
        %v5520 = vsel %vm5516, %v5507, %v5515
        %v5521 = vsel %vm5516, %v5509, %v5501
        %v5522 = vsel %vm5516, %v5511, %v5503
        %v5523 = vsel %vm5516, %v5513, %v5505
        %v5524 = vsel %vm5516, %v5515, %v5507
        %v5525 = vsel %vm5498, 1, 0
        %v5526 = vsel %vm5499, 1, 0
        %vm5527 = vcmp.eq.s32.totalorder %v5525, 1
        %vm5528 = vcmp.eq.s32.totalorder %v5526, 1
        %v5529 = vsel %vm5527, %v5521, 0.0
        %v5530 = vsel %vm5528, %v5517, 0.0
        %v5531 = vsel %vm5527, %v5522, 0.0
        %v5532 = vsel %vm5528, %v5518, 0.0
        %v5533 = vsel %vm5527, %v5523, 0.0
        %v5534 = vsel %vm5528, %v5519, 0.0
        %v5535 = vsel %vm5527, %v5524, 0.0
        %v5536 = vsel %vm5528, %v5520, 0.0
        %5537 = vset.pattern.permute.xlu0 3
        %5538 = vperm.xlu0 %5537, %v4963
        %v5539 = vpop.permute.xlu0 %5538
        %5541 = vset.pattern.permute.xlu0 3
        %5542 = vperm.xlu0 %5541, %v4964
        %v5543 = vpop.permute.xlu0 %5542
        %5545 = vset.pattern.permute.xlu0 3
        %5546 = vperm.xlu0 %5545, %v4965
        %v5547 = vpop.permute.xlu0 %5546
        %5549 = vset.pattern.permute.xlu0 3
        %5550 = vperm.xlu0 %5549, %v4966
        %v5551 = vpop.permute.xlu0 %5550
        %v5553 = vmul.f32 %v5539, %v5529
        %v5554 = vmul.f32 %v5539, %v5530
        %v5555 = vmul.f32 %v5543, %v5531
        %v5556 = vmul.f32 %v5543, %v5532
        %v5557 = vmul.f32 %v5547, %v5533
        %v5558 = vmul.f32 %v5547, %v5534
        %v5559 = vmul.f32 %v5551, %v5535
        %v5560 = vmul.f32 %v5551, %v5536
        %v5561 = vadd.f32 %v5490, %v5553
        %v5562 = vadd.f32 %v5491, %v5554
        %v5563 = vadd.f32 %v5492, %v5555
        %v5564 = vadd.f32 %v5493, %v5556
        %v5565 = vadd.f32 %v5494, %v5557
        %v5566 = vadd.f32 %v5495, %v5558
        %v5567 = vadd.f32 %v5496, %v5559
        %v5568 = vadd.f32 %v5497, %v5560
        %vm5569 = vcmp.lt.s32.totalorder %v267, 240
        %vm5570 = vcmp.lt.s32.totalorder %v268, 240
        %5571 = vrot.lane.b32.xlu0 %v5466, 112
        %v5572 = vpop.permute.xlu0 %5571
        %5573 = vrot.lane.b32.xlu0 %v5468, 112
        %v5574 = vpop.permute.xlu0 %5573
        %5575 = vrot.lane.b32.xlu0 %v5470, 112
        %v5576 = vpop.permute.xlu0 %5575
        %5577 = vrot.lane.b32.xlu0 %v5472, 112
        %v5578 = vpop.permute.xlu0 %5577
        %5579 = vrot.lane.b32.xlu0 %v5467, 112
        %v5580 = vpop.permute.xlu0 %5579
        %5581 = vrot.lane.b32.xlu0 %v5469, 112
        %v5582 = vpop.permute.xlu0 %5581
        %5583 = vrot.lane.b32.xlu0 %v5471, 112
        %v5584 = vpop.permute.xlu0 %5583
        %5585 = vrot.lane.b32.xlu0 %v5473, 112
        %v5586 = vpop.permute.xlu0 %5585
        %vm5587 = vcmp.lt.s32.totalorder %v267, 112
        %v5588 = vsel %vm5587, %v5572, %v5580
        %v5589 = vsel %vm5587, %v5574, %v5582
        %v5590 = vsel %vm5587, %v5576, %v5584
        %v5591 = vsel %vm5587, %v5578, %v5586
        %v5592 = vsel %vm5587, %v5580, %v5572
        %v5593 = vsel %vm5587, %v5582, %v5574
        %v5594 = vsel %vm5587, %v5584, %v5576
        %v5595 = vsel %vm5587, %v5586, %v5578
        %v5596 = vsel %vm5569, 1, 0
        %v5597 = vsel %vm5570, 1, 0
        %vm5598 = vcmp.eq.s32.totalorder %v5596, 1
        %vm5599 = vcmp.eq.s32.totalorder %v5597, 1
        %v5600 = vsel %vm5598, %v5588, 0.0
        %v5601 = vsel %vm5599, %v5592, 0.0
        %v5602 = vsel %vm5598, %v5589, 0.0
        %v5603 = vsel %vm5599, %v5593, 0.0
        %v5604 = vsel %vm5598, %v5590, 0.0
        %v5605 = vsel %vm5599, %v5594, 0.0
        %v5606 = vsel %vm5598, %v5591, 0.0
        %v5607 = vsel %vm5599, %v5595, 0.0
        %5608 = vset.pattern.permute.xlu0 5
        %5609 = vperm.xlu0 %5608, %v4963
        %v5610 = vpop.permute.xlu0 %5609
        %5612 = vset.pattern.permute.xlu0 5
        %5613 = vperm.xlu0 %5612, %v4964
        %v5614 = vpop.permute.xlu0 %5613
        %5616 = vset.pattern.permute.xlu0 5
        %5617 = vperm.xlu0 %5616, %v4965
        %v5618 = vpop.permute.xlu0 %5617
        %5620 = vset.pattern.permute.xlu0 5
        %5621 = vperm.xlu0 %5620, %v4966
        %v5622 = vpop.permute.xlu0 %5621
        %v5624 = vmul.f32 %v5610, %v5600
        %v5625 = vmul.f32 %v5610, %v5601
        %v5626 = vmul.f32 %v5614, %v5602
        %v5627 = vmul.f32 %v5614, %v5603
        %v5628 = vmul.f32 %v5618, %v5604
        %v5629 = vmul.f32 %v5618, %v5605
        %v5630 = vmul.f32 %v5622, %v5606
        %v5631 = vmul.f32 %v5622, %v5607
        %v5632 = vadd.f32 %v5561, %v5624
        %v5633 = vadd.f32 %v5562, %v5625
        %v5634 = vadd.f32 %v5563, %v5626
        %v5635 = vadd.f32 %v5564, %v5627
        %v5636 = vadd.f32 %v5565, %v5628
        %v5637 = vadd.f32 %v5566, %v5629
        %v5638 = vadd.f32 %v5567, %v5630
        %v5639 = vadd.f32 %v5568, %v5631
        %vm5640 = vcmp.ge.f32.partialorder %v5632, 0.0
        %vm5641 = vcmp.ge.f32.partialorder %v5633, 0.0
        %vm5642 = vcmp.ge.f32.partialorder %v5634, 0.0
        %vm5643 = vcmp.ge.f32.partialorder %v5635, 0.0
        %vm5644 = vcmp.ge.f32.partialorder %v5636, 0.0
        %vm5645 = vcmp.ge.f32.partialorder %v5637, 0.0
        %vm5646 = vcmp.ge.f32.partialorder %v5638, 0.0
        %vm5647 = vcmp.ge.f32.partialorder %v5639, 0.0
        %5648 = vset.pattern.permute.xlu0 6
        %5649 = vperm.xlu0 %5648, %v4963
        %v5650 = vpop.permute.xlu0 %5649
        %5652 = vset.pattern.permute.xlu0 6
        %5653 = vperm.xlu0 %5652, %v4964
        %v5654 = vpop.permute.xlu0 %5653
        %5656 = vset.pattern.permute.xlu0 6
        %5657 = vperm.xlu0 %5656, %v4965
        %v5658 = vpop.permute.xlu0 %5657
        %5660 = vset.pattern.permute.xlu0 6
        %5661 = vperm.xlu0 %5660, %v4966
        %v5662 = vpop.permute.xlu0 %5661
        %v5664 = vmul.f32 %v5650, %v5632
        %v5665 = vmul.f32 %v5650, %v5633
        %v5666 = vmul.f32 %v5654, %v5634
        %v5667 = vmul.f32 %v5654, %v5635
        %v5668 = vmul.f32 %v5658, %v5636
        %v5669 = vmul.f32 %v5658, %v5637
        %v5670 = vmul.f32 %v5662, %v5638
        %v5671 = vmul.f32 %v5662, %v5639
        %v5672 = vsel %vm5640, %v5632, %v5664
        %v5673 = vsel %vm5641, %v5633, %v5665
        %v5674 = vsel %vm5642, %v5634, %v5666
        %v5675 = vsel %vm5643, %v5635, %v5667
        %v5676 = vsel %vm5644, %v5636, %v5668
        %v5677 = vsel %vm5645, %v5637, %v5669
        %v5678 = vsel %vm5646, %v5638, %v5670
        %v5679 = vsel %vm5647, %v5639, %v5671
        %5680 = vmatprep.subr.mxu0 %v5673
        %5681 = vmatpush1.msra.mxu0 %v5672
        %5682 = vmatprep.subr.mxu0 %v5675
        %5683 = vmatpush1.msra.mxu0 %v5674
        %5684 = vmatprep.subr.mxu0 %v5677
        %5685 = vmatpush1.msra.mxu0 %v5676
        %5686 = vmatprep.subr.mxu0 %v5679
        %5687 = vmatpush1.msra.mxu0 %v5678
        %5688 = vmatprep.subr.mxu0 0.0
        %5689 = vmatpush1.msra.mxu0 0.0
        %5690 = vmatprep.subr.mxu0 0.0
        %5691 = vmatpush1.msra.mxu0 0.0
        %5692 = vmatprep.subr.mxu0 0.0
        %5693 = vmatpush1.msra.mxu0 0.0
        %5694 = vmatprep.subr.mxu0 0.0
        %5695 = vmatpush1.msra.mxu0 0.0
        %5696 = vmatprep.subr.mxu0 0.0
        %5697 = vmatpush1.msra.mxu0 0.0
        %5698 = vmatprep.subr.mxu0 0.0
        %5699 = vmatpush1.msra.mxu0 0.0
        %5700 = vmatprep.subr.mxu0 0.0
        %5701 = vmatpush1.msra.mxu0 0.0
        %5702 = vmatprep.subr.mxu0 0.0
        %5703 = vmatpush1.msra.mxu0 0.0
        %5704 = vmatprep.subr.mxu0 0.0
        %5705 = vmatpush1.msra.mxu0 0.0
        %5706 = vmatprep.subr.mxu0 0.0
        %5707 = vmatpush1.msra.mxu0 0.0
        %5708 = vmatprep.subr.mxu0 0.0
        %5709 = vmatpush1.msra.mxu0 0.0
        %5710 = vmatprep.subr.mxu0 0.0
        %5711 = vmatpush1.msra.mxu0 0.0
        %5712 = vmatprep.subr.mxu0 0.0
        %5713 = vmatpush1.msra.mxu0 0.0
        %5714 = vmatprep.subr.mxu0 0.0
        %5715 = vmatpush1.msra.mxu0 0.0
        %5716 = vmatprep.subr.mxu0 0.0
        %5717 = vmatpush1.msra.mxu0 0.0
        %5718 = vmatprep.subr.mxu0 0.0
        %5719 = vmatpush1.msra.mxu0 0.0
        %5720 = vmatprep.subr.mxu0 0.0
        %5721 = vmatpush1.msra.mxu0 0.0
        %5722 = vmatprep.subr.mxu0 0.0
        %5723 = vmatpush1.msra.mxu0 0.0
        %5724 = vmatprep.subr.mxu0 0.0
        %5725 = vmatpush1.msra.mxu0 0.0
        %5726 = vmatprep.subr.mxu0 0.0
        %5727 = vmatpush1.msra.mxu0 0.0
        %5728 = vmatprep.subr.mxu0 0.0
        %5729 = vmatpush1.msra.mxu0 0.0
        %5730 = vmatprep.subr.mxu0 0.0
        %5731 = vmatpush1.msra.mxu0 0.0
        %5732 = vmatprep.subr.mxu0 0.0
        %5733 = vmatpush1.msra.mxu0 0.0
        %5734 = vmatprep.subr.mxu0 0.0
        %5735 = vmatpush1.msra.mxu0 0.0
        %5736 = vmatprep.subr.mxu0 0.0
        %5737 = vmatpush1.msra.mxu0 0.0
        %5738 = vmatprep.subr.mxu0 0.0
        %5739 = vmatpush1.msra.mxu0 0.0
        %5740 = vmatprep.subr.mxu0 0.0
        %5741 = vmatpush1.msra.mxu0 0.0
        %5742 = vmatprep.subr.mxu0 0.0
        %5743 = vmatpush1.msra.mxu0 0.0
        %5744 = vmatprep.mubr.f32.mxu0 0.0
        %5745 = vmatmul.mubr.f32.gmra.mrb[0].mxu0 %v395
        %v5746 = vpop.f32.mrb[0].mxu0
        %v5747 = vadd.f32 0.0, %v5746
        %v5748 = vpop.f32.mrb[0].mxu0
        %v5749 = vadd.f32 0.0, %v5748
        %5750 = vdwg.mxu0
        %v5751 = vmul.f32 %v5672, %v5672
        %v5752 = vmul.f32 %v5673, %v5673
        %v5753 = vmul.f32 %v5674, %v5674
        %v5754 = vmul.f32 %v5675, %v5675
        %v5755 = vmul.f32 %v5676, %v5676
        %v5756 = vmul.f32 %v5677, %v5677
        %v5757 = vmul.f32 %v5678, %v5678
        %v5758 = vmul.f32 %v5679, %v5679
        %5759 = vmatprep.subr.mxu0 %v5752
        %5760 = vmatpush1.msra.mxu0 %v5751
        %5761 = vmatprep.subr.mxu0 %v5754
        %5762 = vmatpush1.msra.mxu0 %v5753
        %5763 = vmatprep.subr.mxu0 %v5756
        %5764 = vmatpush1.msra.mxu0 %v5755
        %5765 = vmatprep.subr.mxu0 %v5758
        %5766 = vmatpush1.msra.mxu0 %v5757
        %5767 = vmatprep.subr.mxu0 0.0
        %5768 = vmatpush1.msra.mxu0 0.0
        %5769 = vmatprep.subr.mxu0 0.0
        %5770 = vmatpush1.msra.mxu0 0.0
        %5771 = vmatprep.subr.mxu0 0.0
        %5772 = vmatpush1.msra.mxu0 0.0
        %5773 = vmatprep.subr.mxu0 0.0
        %5774 = vmatpush1.msra.mxu0 0.0
        %5775 = vmatprep.subr.mxu0 0.0
        %5776 = vmatpush1.msra.mxu0 0.0
        %5777 = vmatprep.subr.mxu0 0.0
        %5778 = vmatpush1.msra.mxu0 0.0
        %5779 = vmatprep.subr.mxu0 0.0
        %5780 = vmatpush1.msra.mxu0 0.0
        %5781 = vmatprep.subr.mxu0 0.0
        %5782 = vmatpush1.msra.mxu0 0.0
        %5783 = vmatprep.subr.mxu0 0.0
        %5784 = vmatpush1.msra.mxu0 0.0
        %5785 = vmatprep.subr.mxu0 0.0
        %5786 = vmatpush1.msra.mxu0 0.0
        %5787 = vmatprep.subr.mxu0 0.0
        %5788 = vmatpush1.msra.mxu0 0.0
        %5789 = vmatprep.subr.mxu0 0.0
        %5790 = vmatpush1.msra.mxu0 0.0
        %5791 = vmatprep.subr.mxu0 0.0
        %5792 = vmatpush1.msra.mxu0 0.0
        %5793 = vmatprep.subr.mxu0 0.0
        %5794 = vmatpush1.msra.mxu0 0.0
        %5795 = vmatprep.subr.mxu0 0.0
        %5796 = vmatpush1.msra.mxu0 0.0
        %5797 = vmatprep.subr.mxu0 0.0
        %5798 = vmatpush1.msra.mxu0 0.0
        %5799 = vmatprep.subr.mxu0 0.0
        %5800 = vmatpush1.msra.mxu0 0.0
        %5801 = vmatprep.subr.mxu0 0.0
        %5802 = vmatpush1.msra.mxu0 0.0
        %5803 = vmatprep.subr.mxu0 0.0
        %5804 = vmatpush1.msra.mxu0 0.0
        %5805 = vmatprep.subr.mxu0 0.0
        %5806 = vmatpush1.msra.mxu0 0.0
        %5807 = vmatprep.subr.mxu0 0.0
        %5808 = vmatpush1.msra.mxu0 0.0
        %5809 = vmatprep.subr.mxu0 0.0
        %5810 = vmatpush1.msra.mxu0 0.0
        %5811 = vmatprep.subr.mxu0 0.0
        %5812 = vmatpush1.msra.mxu0 0.0
        %5813 = vmatprep.subr.mxu0 0.0
        %5814 = vmatpush1.msra.mxu0 0.0
        %5815 = vmatprep.subr.mxu0 0.0
        %5816 = vmatpush1.msra.mxu0 0.0
        %5817 = vmatprep.subr.mxu0 0.0
        %5818 = vmatpush1.msra.mxu0 0.0
        %5819 = vmatprep.subr.mxu0 0.0
        %5820 = vmatpush1.msra.mxu0 0.0
        %5821 = vmatprep.subr.mxu0 0.0
        %5822 = vmatpush1.msra.mxu0 0.0
        %5823 = vmatprep.mubr.f32.mxu0 0.0
        %5824 = vmatmul.mubr.f32.gmra.mrb[0].mxu0 %v395
        %v5825 = vpop.f32.mrb[0].mxu0
        %v5826 = vadd.f32 0.0, %v5825
        %v5827 = vpop.f32.mrb[0].mxu0
        %v5828 = vadd.f32 0.0, %v5827
        %5829 = vdwg.mxu0
        %5830 = vmatprep.subr.mxu0 0.0
        %5831 = vmatpush1.msra.mxu0 1.0
        %5832 = vmatprep.subr.mxu0 0.0
        %5833 = vmatpush1.msra.mxu0 1.0
        %5834 = vmatprep.subr.mxu0 0.0
        %5835 = vmatpush1.msra.mxu0 1.0
        %5836 = vmatprep.subr.mxu0 0.0
        %5837 = vmatpush1.msra.mxu0 1.0
        %5838 = vmatprep.subr.mxu0 0.0
        %5839 = vmatpush1.msra.mxu0 1.0
        %5840 = vmatprep.subr.mxu0 0.0
        %5841 = vmatpush1.msra.mxu0 1.0
        %5842 = vmatprep.subr.mxu0 0.0
        %5843 = vmatpush1.msra.mxu0 1.0
        %5844 = vmatprep.subr.mxu0 0.0
        %5845 = vmatpush1.msra.mxu0 1.0
        %5846 = vmatprep.subr.mxu0 0.0
        %5847 = vmatpush1.msra.mxu0 1.0
        %5848 = vmatprep.subr.mxu0 0.0
        %5849 = vmatpush1.msra.mxu0 1.0
        %5850 = vmatprep.subr.mxu0 0.0
        %5851 = vmatpush1.msra.mxu0 1.0
        %5852 = vmatprep.subr.mxu0 0.0
        %5853 = vmatpush1.msra.mxu0 1.0
        %5854 = vmatprep.subr.mxu0 0.0
        %5855 = vmatpush1.msra.mxu0 1.0
        %5856 = vmatprep.subr.mxu0 0.0
        %5857 = vmatpush1.msra.mxu0 1.0
        %5858 = vmatprep.subr.mxu0 0.0
        %5859 = vmatpush1.msra.mxu0 1.0
        %5860 = vmatprep.subr.mxu0 0.0
        %5861 = vmatpush1.msra.mxu0 1.0
        %5862 = vmatprep.subr.mxu0 0.0
        %5863 = vmatpush1.msra.mxu0 1.0
        %5864 = vmatprep.subr.mxu0 0.0
        %5865 = vmatpush1.msra.mxu0 1.0
        %5866 = vmatprep.subr.mxu0 0.0
        %5867 = vmatpush1.msra.mxu0 1.0
        %5868 = vmatprep.subr.mxu0 0.0
        %5869 = vmatpush1.msra.mxu0 1.0
        %5870 = vmatprep.subr.mxu0 0.0
        %5871 = vmatpush1.msra.mxu0 1.0
        %5872 = vmatprep.subr.mxu0 0.0
        %5873 = vmatpush1.msra.mxu0 1.0
        %5874 = vmatprep.subr.mxu0 0.0
        %5875 = vmatpush1.msra.mxu0 1.0
        %5876 = vmatprep.subr.mxu0 0.0
        %5877 = vmatpush1.msra.mxu0 1.0
        %5878 = vmatprep.subr.mxu0 0.0
        %5879 = vmatpush1.msra.mxu0 1.0
        %5880 = vmatprep.subr.mxu0 0.0
        %5881 = vmatpush1.msra.mxu0 1.0
        %5882 = vmatprep.subr.mxu0 0.0
        %5883 = vmatpush1.msra.mxu0 1.0
        %5884 = vmatprep.subr.mxu0 0.0
        %5885 = vmatpush1.msra.mxu0 1.0
        %5886 = vmatprep.subr.mxu0 0.0
        %5887 = vmatpush1.msra.mxu0 1.0
        %5888 = vmatprep.subr.mxu0 0.0
        %5889 = vmatpush1.msra.mxu0 1.0
        %5890 = vmatprep.subr.mxu0 0.0
        %5891 = vmatpush1.msra.mxu0 1.0
        %5892 = vmatprep.subr.mxu0 0.0
        %5893 = vmatpush1.msra.mxu0 1.0
        %5894 = vmatprep.mubr.f32.mxu0 %v5749
        %5895 = vmatmul.mubr.f32.gmra.mrb[0].mxu0 %v5747
        %v5896 = vpop.f32.mrb[0].mxu0
        %v5897 = vadd.f32 0.0, %v5896
        %v5898 = vpop.f32.mrb[0].mxu0
        %5899 = vdwg.mxu0
        %s5900 = vtos %v5897
        %5901 = vmatprep.subr.mxu0 0.0
        %5902 = vmatpush1.msra.mxu0 1.0
        %5903 = vmatprep.subr.mxu0 0.0
        %5904 = vmatpush1.msra.mxu0 1.0
        %5905 = vmatprep.subr.mxu0 0.0
        %5906 = vmatpush1.msra.mxu0 1.0
        %5907 = vmatprep.subr.mxu0 0.0
        %5908 = vmatpush1.msra.mxu0 1.0
        %5909 = vmatprep.subr.mxu0 0.0
        %5910 = vmatpush1.msra.mxu0 1.0
        %5911 = vmatprep.subr.mxu0 0.0
        %5912 = vmatpush1.msra.mxu0 1.0
        %5913 = vmatprep.subr.mxu0 0.0
        %5914 = vmatpush1.msra.mxu0 1.0
        %5915 = vmatprep.subr.mxu0 0.0
        %5916 = vmatpush1.msra.mxu0 1.0
        %5917 = vmatprep.subr.mxu0 0.0
        %5918 = vmatpush1.msra.mxu0 1.0
        %5919 = vmatprep.subr.mxu0 0.0
        %5920 = vmatpush1.msra.mxu0 1.0
        %5921 = vmatprep.subr.mxu0 0.0
        %5922 = vmatpush1.msra.mxu0 1.0
        %5923 = vmatprep.subr.mxu0 0.0
        %5924 = vmatpush1.msra.mxu0 1.0
        %5925 = vmatprep.subr.mxu0 0.0
        %5926 = vmatpush1.msra.mxu0 1.0
        %5927 = vmatprep.subr.mxu0 0.0
        %5928 = vmatpush1.msra.mxu0 1.0
        %5929 = vmatprep.subr.mxu0 0.0
        %5930 = vmatpush1.msra.mxu0 1.0
        %5931 = vmatprep.subr.mxu0 0.0
        %5932 = vmatpush1.msra.mxu0 1.0
        %5933 = vmatprep.subr.mxu0 0.0
        %5934 = vmatpush1.msra.mxu0 1.0
        %5935 = vmatprep.subr.mxu0 0.0
        %5936 = vmatpush1.msra.mxu0 1.0
        %5937 = vmatprep.subr.mxu0 0.0
        %5938 = vmatpush1.msra.mxu0 1.0
        %5939 = vmatprep.subr.mxu0 0.0
        %5940 = vmatpush1.msra.mxu0 1.0
        %5941 = vmatprep.subr.mxu0 0.0
        %5942 = vmatpush1.msra.mxu0 1.0
        %5943 = vmatprep.subr.mxu0 0.0
        %5944 = vmatpush1.msra.mxu0 1.0
        %5945 = vmatprep.subr.mxu0 0.0
        %5946 = vmatpush1.msra.mxu0 1.0
        %5947 = vmatprep.subr.mxu0 0.0
        %5948 = vmatpush1.msra.mxu0 1.0
        %5949 = vmatprep.subr.mxu0 0.0
        %5950 = vmatpush1.msra.mxu0 1.0
        %5951 = vmatprep.subr.mxu0 0.0
        %5952 = vmatpush1.msra.mxu0 1.0
        %5953 = vmatprep.subr.mxu0 0.0
        %5954 = vmatpush1.msra.mxu0 1.0
        %5955 = vmatprep.subr.mxu0 0.0
        %5956 = vmatpush1.msra.mxu0 1.0
        %5957 = vmatprep.subr.mxu0 0.0
        %5958 = vmatpush1.msra.mxu0 1.0
        %5959 = vmatprep.subr.mxu0 0.0
        %5960 = vmatpush1.msra.mxu0 1.0
        %5961 = vmatprep.subr.mxu0 0.0
        %5962 = vmatpush1.msra.mxu0 1.0
        %5963 = vmatprep.subr.mxu0 0.0
        %5964 = vmatpush1.msra.mxu0 1.0
        %5965 = vmatprep.mubr.f32.mxu0 %v5828
        %5966 = vmatmul.mubr.f32.gmra.mrb[0].mxu0 %v5826
        %v5967 = vpop.f32.mrb[0].mxu0
        %v5968 = vadd.f32 0.0, %v5967
        %v5969 = vpop.f32.mrb[0].mxu0
        %5970 = vdwg.mxu0
        %s5971 = vtos %v5968
        %s5972 = smul.f32 %s5900, 0.00012207031
        %s5973 = smul.f32 %s5971, 0.00012207031
        %s5974 = smul.f32 %s5972, %s5972
        %s5975 = ssub.f32 %s5973, %s5974
        %s5976 = smax.f32 %s5975, 0.0
        %s5977 = sadd.f32 %s5976, 1e-16
        %v5978 = vstv %s5977
        %v5979 = vrsqrt.pop %v5978
        %s5980 = vtos %v5979
        %s5981 = scalar_lea.vmem %s3, 64
        %v5982 = vld [vmem:[%s5981] sm:$0xf]
        %v5983 = vld [vmem:[%s5981 + $0x4] sm:$0xf]
        %v5984 = vld [vmem:[%s5981 + $0x8] sm:$0xf]
        %v5985 = vld [vmem:[%s5981 + $0xc] sm:$0xf]
        %v5986 = vpack.c.bf16 %v5674, %v5672
        %v5987 = vpack.c.bf16 %v5675, %v5673
        %v5988 = vpack.c.bf16 %v5678, %v5676
        %v5989 = vpack.c.bf16 %v5679, %v5677
        %v5994 = vunpack.c.l.b16 %v5982
        %v5995 = vunpack.c.l.b16 %v5983
        %v5996 = vunpack.c.l.b16 %v5984
        %v5997 = vunpack.c.l.b16 %v5985
        %v5998 = vpack.c.b16 %v5995, %v5994
        %v5999 = vpack.c.b16 %v5997, %v5996
        %v6001 = vsel %vm393, %v5998, 0
        %v6004 = vsel %vm393, %v5999, 0
        %6006 = vmatprep.subr.bf16.mxu0 %v5987
        %6007 = vmatpush1.bf16.msra.mxu0 %v5986
        %6008 = vmatprep.subr.bf16.mxu0 %v5989
        %6009 = vmatpush1.bf16.msra.mxu0 %v5988
        %6010 = vmatprep.subr.bf16.mxu0 0
        %6011 = vmatpush1.bf16.msra.mxu0 0
        %6012 = vmatprep.subr.bf16.mxu0 0
        %6013 = vmatpush1.bf16.msra.mxu0 0
        %6014 = vmatprep.subr.bf16.mxu0 0
        %6015 = vmatpush1.bf16.msra.mxu0 0
        %6016 = vmatprep.subr.bf16.mxu0 0
        %6017 = vmatpush1.bf16.msra.mxu0 0
        %6018 = vmatprep.subr.bf16.mxu0 0
        %6019 = vmatpush1.bf16.msra.mxu0 0
        %6020 = vmatprep.subr.bf16.mxu0 0
        %6021 = vmatpush1.bf16.msra.mxu0 0
        %6022 = vmatprep.subr.bf16.mxu0 0
        %6023 = vmatpush1.bf16.msra.mxu0 0
        %6024 = vmatprep.subr.bf16.mxu0 0
        %6025 = vmatpush1.bf16.msra.mxu0 0
        %6026 = vmatprep.subr.bf16.mxu0 0
        %6027 = vmatpush1.bf16.msra.mxu0 0
        %6028 = vmatprep.subr.bf16.mxu0 0
        %6029 = vmatpush1.bf16.msra.mxu0 0
        %6030 = vmatprep.subr.bf16.mxu0 0
        %6031 = vmatpush1.bf16.msra.mxu0 0
        %6032 = vmatprep.subr.bf16.mxu0 0
        %6033 = vmatpush1.bf16.msra.mxu0 0
        %6034 = vmatprep.subr.bf16.mxu0 0
        %6035 = vmatpush1.bf16.msra.mxu0 0
        %6036 = vmatprep.subr.bf16.mxu0 0
        %6037 = vmatpush1.bf16.msra.mxu0 0
        %6038 = vmatprep.mubr.bf16.mxu0 0
        %6039 = vmatmul.mubr.bf16.gmra.mrb[0].mxu0 %v6001
        %v6040 = vpop.f32.mrb[0].mxu0
        %v6041 = vadd.f32 0.0, %v6040
        %v6042 = vpop.f32.mrb[0].mxu0
        %v6043 = vadd.f32 0.0, %v6042
        %v6044 = vpop.f32.mrb[0].mxu0
        %v6045 = vadd.f32 0.0, %v6044
        %v6046 = vpop.f32.mrb[0].mxu0
        %v6047 = vadd.f32 0.0, %v6046
        %6048 = vmatprep.mubr.bf16.mxu0 0
        %6049 = vmatmul.mubr.bf16.gmra.mrb[0].mxu0 %v6004
        %v6050 = vpop.f32.mrb[0].mxu0
        %v6051 = vadd.f32 0.0, %v6050
        %v6052 = vpop.f32.mrb[0].mxu0
        %v6053 = vadd.f32 0.0, %v6052
        %v6054 = vpop.f32.mrb[0].mxu0
        %v6055 = vadd.f32 0.0, %v6054
        %v6056 = vpop.f32.mrb[0].mxu0
        %v6057 = vadd.f32 0.0, %v6056
        %6058 = vdwg.mxu0
        %s6059 = scalar_lea.vmem %s4, 128
        %v6060 = vld [vmem:[%s6059] sm:$0xff]
        %v6061 = vld [vmem:[%s6059 + $0x8] sm:$0xff]
        %v6062 = vld [vmem:[%s6059 + $0x10] sm:$0xff]
        %v6063 = vld [vmem:[%s6059 + $0x18] sm:$0xff]
        %s6064 = smul.f32 %s5972, %s5980
        %v6065 = vstv %s6064
        %v6066 = vmul.f32 %v6065, %v6060
        %v6067 = vmul.f32 %v6065, %v6061
        %v6068 = vmul.f32 %v6065, %v6062
        %v6069 = vmul.f32 %v6065, %v6063
        %6074 = vrot.lane.b32.xlu0 %v6066, 1
        %v6075 = vpop.permute.xlu0 %6074
        %6076 = vrot.lane.b32.xlu0 %v6067, 1
        %v6077 = vpop.permute.xlu0 %6076
        %6078 = vrot.lane.b32.xlu0 %v6068, 1
        %v6079 = vpop.permute.xlu0 %6078
        %6080 = vrot.lane.b32.xlu0 %v6069, 1
        %v6081 = vpop.permute.xlu0 %6080
        %v6086 = vsub.f32 %v6060, %v6075
        %v6087 = vsub.f32 %v6061, %v6077
        %v6088 = vsub.f32 %v6062, %v6079
        %v6089 = vsub.f32 %v6063, %v6081
        %v6090 = vstv %s5980
        %v6091 = vmul.f32 %v6041, %v6090
        %v6092 = vmul.f32 %v6043, %v6090
        %v6093 = vmul.f32 %v6045, %v6090
        %v6094 = vmul.f32 %v6047, %v6090
        %v6095 = vmul.f32 %v6051, %v6090
        %v6096 = vmul.f32 %v6053, %v6090
        %v6097 = vmul.f32 %v6055, %v6090
        %v6098 = vmul.f32 %v6057, %v6090
        %6100 = vset.pattern.permute.xlu0 1
        %6101 = vperm.xlu0 %6100, %v6086
        %v6102 = vpop.permute.xlu0 %6101
        %6105 = vset.pattern.permute.xlu0 1
        %6106 = vperm.xlu0 %6105, %v6087
        %v6107 = vpop.permute.xlu0 %6106
        %6110 = vset.pattern.permute.xlu0 1
        %6111 = vperm.xlu0 %6110, %v6088
        %v6112 = vpop.permute.xlu0 %6111
        %6115 = vset.pattern.permute.xlu0 1
        %6116 = vperm.xlu0 %6115, %v6089
        %v6117 = vpop.permute.xlu0 %6116
        %v6119 = vadd.f32 %v6091, %v6102
        %v6120 = vadd.f32 %v6092, %v6102
        %v6121 = vadd.f32 %v6093, %v6107
        %v6122 = vadd.f32 %v6094, %v6107
        %v6123 = vadd.f32 %v6095, %v6112
        %v6124 = vadd.f32 %v6096, %v6112
        %v6125 = vadd.f32 %v6097, %v6117
        %v6126 = vadd.f32 %v6098, %v6117
        %v6127 = vadd.f32 %v6119, %v4954
        %v6128 = vadd.f32 %v6120, %v4955
        %v6129 = vadd.f32 %v6121, %v4956
        %v6130 = vadd.f32 %v6122, %v4957
        %v6131 = vadd.f32 %v4958, %v6123
        %v6132 = vadd.f32 %v4959, %v6124
        %v6133 = vadd.f32 %v4960, %v6125
        %v6134 = vadd.f32 %v4961, %v6126
        %s6135 = scalar_lea.vmem %s2, 160
        %v6136 = vld [vmem:[%s6135] sm:$0xff]
        %v6137 = vld [vmem:[%s6135 + $0x8] sm:$0xff]
        %v6138 = vld [vmem:[%s6135 + $0x10] sm:$0xff]
        %v6139 = vld [vmem:[%s6135 + $0x18] sm:$0xff]
        %s6140 = scalar_lea.vmem %s1, 80
        %v6141 = vld [vmem:[%s6140] sm:$0xf]
        %v6142 = vld [vmem:[%s6140 + $0x4] sm:$0xf]
        %v6143 = vld [vmem:[%s6140 + $0x8] sm:$0xf]
        %v6144 = vld [vmem:[%s6140 + $0xc] sm:$0xf]
        %v6145 = vpack.c.bf16 %v6129, %v6127
        %v6146 = vpack.c.bf16 %v6130, %v6128
        %v6151 = vunpack.c.l.b16 %v6141
        %v6152 = vunpack.c.l.b16 %v6142
        %v6153 = vunpack.c.l.b16 %v6143
        %v6154 = vunpack.c.l.b16 %v6144
        %v6155 = vpack.c.b16 %v6152, %v6151
        %v6156 = vpack.c.b16 %v6154, %v6153
        %v6158 = vsel %vm289, %v6155, 0
        %v6161 = vsel %vm289, %v6156, 0
        %6163 = vmatprep.subr.bf16.mxu0 %v6146
        %6164 = vmatpush1.bf16.msra.mxu0 %v6145
        %6165 = vmatprep.subr.bf16.mxu0 0
        %6166 = vmatpush1.bf16.msra.mxu0 0
        %6167 = vmatprep.subr.bf16.mxu0 0
        %6168 = vmatpush1.bf16.msra.mxu0 0
        %6169 = vmatprep.subr.bf16.mxu0 0
        %6170 = vmatpush1.bf16.msra.mxu0 0
        %6171 = vmatprep.subr.bf16.mxu0 0
        %6172 = vmatpush1.bf16.msra.mxu0 0
        %6173 = vmatprep.subr.bf16.mxu0 0
        %6174 = vmatpush1.bf16.msra.mxu0 0
        %6175 = vmatprep.subr.bf16.mxu0 0
        %6176 = vmatpush1.bf16.msra.mxu0 0
        %6177 = vmatprep.subr.bf16.mxu0 0
        %6178 = vmatpush1.bf16.msra.mxu0 0
        %6179 = vmatprep.subr.bf16.mxu0 0
        %6180 = vmatpush1.bf16.msra.mxu0 0
        %6181 = vmatprep.subr.bf16.mxu0 0
        %6182 = vmatpush1.bf16.msra.mxu0 0
        %6183 = vmatprep.subr.bf16.mxu0 0
        %6184 = vmatpush1.bf16.msra.mxu0 0
        %6185 = vmatprep.subr.bf16.mxu0 0
        %6186 = vmatpush1.bf16.msra.mxu0 0
        %6187 = vmatprep.subr.bf16.mxu0 0
        %6188 = vmatpush1.bf16.msra.mxu0 0
        %6189 = vmatprep.subr.bf16.mxu0 0
        %6190 = vmatpush1.bf16.msra.mxu0 0
        %6191 = vmatprep.subr.bf16.mxu0 0
        %6192 = vmatpush1.bf16.msra.mxu0 0
        %6193 = vmatprep.subr.bf16.mxu0 0
        %6194 = vmatpush1.bf16.msra.mxu0 0
        %6195 = vmatprep.mubr.bf16.mxu0 0
        %6196 = vmatmul.mubr.bf16.gmra.mrb[0].mxu0 %v6158
        %v6197 = vpop.f32.mrb[0].mxu0
        %v6198 = vadd.f32 0.0, %v6197
        %v6199 = vpop.f32.mrb[0].mxu0
        %v6200 = vadd.f32 0.0, %v6199
        %v6201 = vpop.f32.mrb[0].mxu0
        %v6202 = vadd.f32 0.0, %v6201
        %v6203 = vpop.f32.mrb[0].mxu0
        %v6204 = vadd.f32 0.0, %v6203
        %6205 = vmatprep.mubr.bf16.mxu0 0
        %6206 = vmatmul.mubr.bf16.gmra.mrb[0].mxu0 %v6161
        %v6207 = vpop.f32.mrb[0].mxu0
        %v6208 = vadd.f32 0.0, %v6207
        %v6209 = vpop.f32.mrb[0].mxu0
        %v6210 = vadd.f32 0.0, %v6209
        %v6211 = vpop.f32.mrb[0].mxu0
        %v6212 = vadd.f32 0.0, %v6211
        %v6213 = vpop.f32.mrb[0].mxu0
        %v6214 = vadd.f32 0.0, %v6213
        %6215 = vdwg.mxu0
        %vm6216 = vcmp.ge.f32.partialorder %v6198, 0.0
        %vm6217 = vcmp.ge.f32.partialorder %v6200, 0.0
        %vm6218 = vcmp.ge.f32.partialorder %v6202, 0.0
        %vm6219 = vcmp.ge.f32.partialorder %v6204, 0.0
        %vm6220 = vcmp.ge.f32.partialorder %v6208, 0.0
        %vm6221 = vcmp.ge.f32.partialorder %v6210, 0.0
        %vm6222 = vcmp.ge.f32.partialorder %v6212, 0.0
        %vm6223 = vcmp.ge.f32.partialorder %v6214, 0.0
        %6225 = vset.pattern.permute.xlu0 0
        %6226 = vperm.xlu0 %6225, %v6136
        %v6227 = vpop.permute.xlu0 %6226
        %6230 = vset.pattern.permute.xlu0 0
        %6231 = vperm.xlu0 %6230, %v6137
        %v6232 = vpop.permute.xlu0 %6231
        %6235 = vset.pattern.permute.xlu0 0
        %6236 = vperm.xlu0 %6235, %v6138
        %v6237 = vpop.permute.xlu0 %6236
        %6240 = vset.pattern.permute.xlu0 0
        %6241 = vperm.xlu0 %6240, %v6139
        %v6242 = vpop.permute.xlu0 %6241
        %v6244 = vmul.f32 %v6227, %v6198
        %v6245 = vmul.f32 %v6227, %v6200
        %v6246 = vmul.f32 %v6232, %v6202
        %v6247 = vmul.f32 %v6232, %v6204
        %v6248 = vmul.f32 %v6237, %v6208
        %v6249 = vmul.f32 %v6237, %v6210
        %v6250 = vmul.f32 %v6242, %v6212
        %v6251 = vmul.f32 %v6242, %v6214
        %v6252 = vsel %vm6216, %v6198, %v6244
        %v6253 = vsel %vm6217, %v6200, %v6245
        %v6254 = vsel %vm6218, %v6202, %v6246
        %v6255 = vsel %vm6219, %v6204, %v6247
        %v6256 = vsel %vm6220, %v6208, %v6248
        %v6257 = vsel %vm6221, %v6210, %v6249
        %v6258 = vsel %vm6222, %v6212, %v6250
        %v6259 = vsel %vm6223, %v6214, %v6251
        %6260 = vmatprep.subr.mxu0 %v6253
        %6261 = vmatpush1.msra.mxu0 %v6252
        %6262 = vmatprep.subr.mxu0 %v6255
        %6263 = vmatpush1.msra.mxu0 %v6254
        %6264 = vmatprep.subr.mxu0 %v6257
        %6265 = vmatpush1.msra.mxu0 %v6256
        %6266 = vmatprep.subr.mxu0 %v6259
        %6267 = vmatpush1.msra.mxu0 %v6258
        %6268 = vmatprep.subr.mxu0 0.0
        %6269 = vmatpush1.msra.mxu0 0.0
        %6270 = vmatprep.subr.mxu0 0.0
        %6271 = vmatpush1.msra.mxu0 0.0
        %6272 = vmatprep.subr.mxu0 0.0
        %6273 = vmatpush1.msra.mxu0 0.0
        %6274 = vmatprep.subr.mxu0 0.0
        %6275 = vmatpush1.msra.mxu0 0.0
        %6276 = vmatprep.subr.mxu0 0.0
        %6277 = vmatpush1.msra.mxu0 0.0
        %6278 = vmatprep.subr.mxu0 0.0
        %6279 = vmatpush1.msra.mxu0 0.0
        %6280 = vmatprep.subr.mxu0 0.0
        %6281 = vmatpush1.msra.mxu0 0.0
        %6282 = vmatprep.subr.mxu0 0.0
        %6283 = vmatpush1.msra.mxu0 0.0
        %6284 = vmatprep.subr.mxu0 0.0
        %6285 = vmatpush1.msra.mxu0 0.0
        %6286 = vmatprep.subr.mxu0 0.0
        %6287 = vmatpush1.msra.mxu0 0.0
        %6288 = vmatprep.subr.mxu0 0.0
        %6289 = vmatpush1.msra.mxu0 0.0
        %6290 = vmatprep.subr.mxu0 0.0
        %6291 = vmatpush1.msra.mxu0 0.0
        %6292 = vmatprep.subr.mxu0 0.0
        %6293 = vmatpush1.msra.mxu0 0.0
        %6294 = vmatprep.subr.mxu0 0.0
        %6295 = vmatpush1.msra.mxu0 0.0
        %6296 = vmatprep.subr.mxu0 0.0
        %6297 = vmatpush1.msra.mxu0 0.0
        %6298 = vmatprep.subr.mxu0 0.0
        %6299 = vmatpush1.msra.mxu0 0.0
        %6300 = vmatprep.subr.mxu0 0.0
        %6301 = vmatpush1.msra.mxu0 0.0
        %6302 = vmatprep.subr.mxu0 0.0
        %6303 = vmatpush1.msra.mxu0 0.0
        %6304 = vmatprep.subr.mxu0 0.0
        %6305 = vmatpush1.msra.mxu0 0.0
        %6306 = vmatprep.subr.mxu0 0.0
        %6307 = vmatpush1.msra.mxu0 0.0
        %6308 = vmatprep.subr.mxu0 0.0
        %6309 = vmatpush1.msra.mxu0 0.0
        %6310 = vmatprep.subr.mxu0 0.0
        %6311 = vmatpush1.msra.mxu0 0.0
        %6312 = vmatprep.subr.mxu0 0.0
        %6313 = vmatpush1.msra.mxu0 0.0
        %6314 = vmatprep.subr.mxu0 0.0
        %6315 = vmatpush1.msra.mxu0 0.0
        %6316 = vmatprep.subr.mxu0 0.0
        %6317 = vmatpush1.msra.mxu0 0.0
        %6318 = vmatprep.subr.mxu0 0.0
        %6319 = vmatpush1.msra.mxu0 0.0
        %6320 = vmatprep.subr.mxu0 0.0
        %6321 = vmatpush1.msra.mxu0 0.0
        %6322 = vmatprep.subr.mxu0 0.0
        %6323 = vmatpush1.msra.mxu0 0.0
        %6324 = vmatprep.mubr.f32.mxu0 0.0
        %6325 = vmatmul.mubr.f32.gmra.mrb[0].mxu0 %v395
        %v6326 = vpop.f32.mrb[0].mxu0
        %v6327 = vadd.f32 0.0, %v6326
        %v6328 = vpop.f32.mrb[0].mxu0
        %v6329 = vadd.f32 0.0, %v6328
        %6330 = vdwg.mxu0
        %v6331 = vmul.f32 %v6252, %v6252
        %v6332 = vmul.f32 %v6253, %v6253
        %v6333 = vmul.f32 %v6254, %v6254
        %v6334 = vmul.f32 %v6255, %v6255
        %v6335 = vmul.f32 %v6256, %v6256
        %v6336 = vmul.f32 %v6257, %v6257
        %v6337 = vmul.f32 %v6258, %v6258
        %v6338 = vmul.f32 %v6259, %v6259
        %6339 = vmatprep.subr.mxu0 %v6332
        %6340 = vmatpush1.msra.mxu0 %v6331
        %6341 = vmatprep.subr.mxu0 %v6334
        %6342 = vmatpush1.msra.mxu0 %v6333
        %6343 = vmatprep.subr.mxu0 %v6336
        %6344 = vmatpush1.msra.mxu0 %v6335
        %6345 = vmatprep.subr.mxu0 %v6338
        %6346 = vmatpush1.msra.mxu0 %v6337
        %6347 = vmatprep.subr.mxu0 0.0
        %6348 = vmatpush1.msra.mxu0 0.0
        %6349 = vmatprep.subr.mxu0 0.0
        %6350 = vmatpush1.msra.mxu0 0.0
        %6351 = vmatprep.subr.mxu0 0.0
        %6352 = vmatpush1.msra.mxu0 0.0
        %6353 = vmatprep.subr.mxu0 0.0
        %6354 = vmatpush1.msra.mxu0 0.0
        %6355 = vmatprep.subr.mxu0 0.0
        %6356 = vmatpush1.msra.mxu0 0.0
        %6357 = vmatprep.subr.mxu0 0.0
        %6358 = vmatpush1.msra.mxu0 0.0
        %6359 = vmatprep.subr.mxu0 0.0
        %6360 = vmatpush1.msra.mxu0 0.0
        %6361 = vmatprep.subr.mxu0 0.0
        %6362 = vmatpush1.msra.mxu0 0.0
        %6363 = vmatprep.subr.mxu0 0.0
        %6364 = vmatpush1.msra.mxu0 0.0
        %6365 = vmatprep.subr.mxu0 0.0
        %6366 = vmatpush1.msra.mxu0 0.0
        %6367 = vmatprep.subr.mxu0 0.0
        %6368 = vmatpush1.msra.mxu0 0.0
        %6369 = vmatprep.subr.mxu0 0.0
        %6370 = vmatpush1.msra.mxu0 0.0
        %6371 = vmatprep.subr.mxu0 0.0
        %6372 = vmatpush1.msra.mxu0 0.0
        %6373 = vmatprep.subr.mxu0 0.0
        %6374 = vmatpush1.msra.mxu0 0.0
        %6375 = vmatprep.subr.mxu0 0.0
        %6376 = vmatpush1.msra.mxu0 0.0
        %6377 = vmatprep.subr.mxu0 0.0
        %6378 = vmatpush1.msra.mxu0 0.0
        %6379 = vmatprep.subr.mxu0 0.0
        %6380 = vmatpush1.msra.mxu0 0.0
        %6381 = vmatprep.subr.mxu0 0.0
        %6382 = vmatpush1.msra.mxu0 0.0
        %6383 = vmatprep.subr.mxu0 0.0
        %6384 = vmatpush1.msra.mxu0 0.0
        %6385 = vmatprep.subr.mxu0 0.0
        %6386 = vmatpush1.msra.mxu0 0.0
        %6387 = vmatprep.subr.mxu0 0.0
        %6388 = vmatpush1.msra.mxu0 0.0
        %6389 = vmatprep.subr.mxu0 0.0
        %6390 = vmatpush1.msra.mxu0 0.0
        %6391 = vmatprep.subr.mxu0 0.0
        %6392 = vmatpush1.msra.mxu0 0.0
        %6393 = vmatprep.subr.mxu0 0.0
        %6394 = vmatpush1.msra.mxu0 0.0
        %6395 = vmatprep.subr.mxu0 0.0
        %6396 = vmatpush1.msra.mxu0 0.0
        %6397 = vmatprep.subr.mxu0 0.0
        %6398 = vmatpush1.msra.mxu0 0.0
        %6399 = vmatprep.subr.mxu0 0.0
        %6400 = vmatpush1.msra.mxu0 0.0
        %6401 = vmatprep.subr.mxu0 0.0
        %6402 = vmatpush1.msra.mxu0 0.0
        %6403 = vmatprep.mubr.f32.mxu0 0.0
        %6404 = vmatmul.mubr.f32.gmra.mrb[0].mxu0 %v395
        %v6405 = vpop.f32.mrb[0].mxu0
        %v6406 = vadd.f32 0.0, %v6405
        %v6407 = vpop.f32.mrb[0].mxu0
        %v6408 = vadd.f32 0.0, %v6407
        %6409 = vdwg.mxu0
        %6410 = vmatprep.subr.mxu0 0.0
        %6411 = vmatpush1.msra.mxu0 1.0
        %6412 = vmatprep.subr.mxu0 0.0
        %6413 = vmatpush1.msra.mxu0 1.0
        %6414 = vmatprep.subr.mxu0 0.0
        %6415 = vmatpush1.msra.mxu0 1.0
        %6416 = vmatprep.subr.mxu0 0.0
        %6417 = vmatpush1.msra.mxu0 1.0
        %6418 = vmatprep.subr.mxu0 0.0
        %6419 = vmatpush1.msra.mxu0 1.0
        %6420 = vmatprep.subr.mxu0 0.0
        %6421 = vmatpush1.msra.mxu0 1.0
        %6422 = vmatprep.subr.mxu0 0.0
        %6423 = vmatpush1.msra.mxu0 1.0
        %6424 = vmatprep.subr.mxu0 0.0
        %6425 = vmatpush1.msra.mxu0 1.0
        %6426 = vmatprep.subr.mxu0 0.0
        %6427 = vmatpush1.msra.mxu0 1.0
        %6428 = vmatprep.subr.mxu0 0.0
        %6429 = vmatpush1.msra.mxu0 1.0
        %6430 = vmatprep.subr.mxu0 0.0
        %6431 = vmatpush1.msra.mxu0 1.0
        %6432 = vmatprep.subr.mxu0 0.0
        %6433 = vmatpush1.msra.mxu0 1.0
        %6434 = vmatprep.subr.mxu0 0.0
        %6435 = vmatpush1.msra.mxu0 1.0
        %6436 = vmatprep.subr.mxu0 0.0
        %6437 = vmatpush1.msra.mxu0 1.0
        %6438 = vmatprep.subr.mxu0 0.0
        %6439 = vmatpush1.msra.mxu0 1.0
        %6440 = vmatprep.subr.mxu0 0.0
        %6441 = vmatpush1.msra.mxu0 1.0
        %6442 = vmatprep.subr.mxu0 0.0
        %6443 = vmatpush1.msra.mxu0 1.0
        %6444 = vmatprep.subr.mxu0 0.0
        %6445 = vmatpush1.msra.mxu0 1.0
        %6446 = vmatprep.subr.mxu0 0.0
        %6447 = vmatpush1.msra.mxu0 1.0
        %6448 = vmatprep.subr.mxu0 0.0
        %6449 = vmatpush1.msra.mxu0 1.0
        %6450 = vmatprep.subr.mxu0 0.0
        %6451 = vmatpush1.msra.mxu0 1.0
        %6452 = vmatprep.subr.mxu0 0.0
        %6453 = vmatpush1.msra.mxu0 1.0
        %6454 = vmatprep.subr.mxu0 0.0
        %6455 = vmatpush1.msra.mxu0 1.0
        %6456 = vmatprep.subr.mxu0 0.0
        %6457 = vmatpush1.msra.mxu0 1.0
        %6458 = vmatprep.subr.mxu0 0.0
        %6459 = vmatpush1.msra.mxu0 1.0
        %6460 = vmatprep.subr.mxu0 0.0
        %6461 = vmatpush1.msra.mxu0 1.0
        %6462 = vmatprep.subr.mxu0 0.0
        %6463 = vmatpush1.msra.mxu0 1.0
        %6464 = vmatprep.subr.mxu0 0.0
        %6465 = vmatpush1.msra.mxu0 1.0
        %6466 = vmatprep.subr.mxu0 0.0
        %6467 = vmatpush1.msra.mxu0 1.0
        %6468 = vmatprep.subr.mxu0 0.0
        %6469 = vmatpush1.msra.mxu0 1.0
        %6470 = vmatprep.subr.mxu0 0.0
        %6471 = vmatpush1.msra.mxu0 1.0
        %6472 = vmatprep.subr.mxu0 0.0
        %6473 = vmatpush1.msra.mxu0 1.0
        %6474 = vmatprep.mubr.f32.mxu0 %v6329
        %6475 = vmatmul.mubr.f32.gmra.mrb[0].mxu0 %v6327
        %v6476 = vpop.f32.mrb[0].mxu0
        %v6477 = vadd.f32 0.0, %v6476
        %v6478 = vpop.f32.mrb[0].mxu0
        %6479 = vdwg.mxu0
        %s6480 = vtos %v6477
        %6481 = vmatprep.subr.mxu0 0.0
        %6482 = vmatpush1.msra.mxu0 1.0
        %6483 = vmatprep.subr.mxu0 0.0
        %6484 = vmatpush1.msra.mxu0 1.0
        %6485 = vmatprep.subr.mxu0 0.0
        %6486 = vmatpush1.msra.mxu0 1.0
        %6487 = vmatprep.subr.mxu0 0.0
        %6488 = vmatpush1.msra.mxu0 1.0
        %6489 = vmatprep.subr.mxu0 0.0
        %6490 = vmatpush1.msra.mxu0 1.0
        %6491 = vmatprep.subr.mxu0 0.0
        %6492 = vmatpush1.msra.mxu0 1.0
        %6493 = vmatprep.subr.mxu0 0.0
        %6494 = vmatpush1.msra.mxu0 1.0
        %6495 = vmatprep.subr.mxu0 0.0
        %6496 = vmatpush1.msra.mxu0 1.0
        %6497 = vmatprep.subr.mxu0 0.0
        %6498 = vmatpush1.msra.mxu0 1.0
        %6499 = vmatprep.subr.mxu0 0.0
        %6500 = vmatpush1.msra.mxu0 1.0
        %6501 = vmatprep.subr.mxu0 0.0
        %6502 = vmatpush1.msra.mxu0 1.0
        %6503 = vmatprep.subr.mxu0 0.0
        %6504 = vmatpush1.msra.mxu0 1.0
        %6505 = vmatprep.subr.mxu0 0.0
        %6506 = vmatpush1.msra.mxu0 1.0
        %6507 = vmatprep.subr.mxu0 0.0
        %6508 = vmatpush1.msra.mxu0 1.0
        %6509 = vmatprep.subr.mxu0 0.0
        %6510 = vmatpush1.msra.mxu0 1.0
        %6511 = vmatprep.subr.mxu0 0.0
        %6512 = vmatpush1.msra.mxu0 1.0
        %6513 = vmatprep.subr.mxu0 0.0
        %6514 = vmatpush1.msra.mxu0 1.0
        %6515 = vmatprep.subr.mxu0 0.0
        %6516 = vmatpush1.msra.mxu0 1.0
        %6517 = vmatprep.subr.mxu0 0.0
        %6518 = vmatpush1.msra.mxu0 1.0
        %6519 = vmatprep.subr.mxu0 0.0
        %6520 = vmatpush1.msra.mxu0 1.0
        %6521 = vmatprep.subr.mxu0 0.0
        %6522 = vmatpush1.msra.mxu0 1.0
        %6523 = vmatprep.subr.mxu0 0.0
        %6524 = vmatpush1.msra.mxu0 1.0
        %6525 = vmatprep.subr.mxu0 0.0
        %6526 = vmatpush1.msra.mxu0 1.0
        %6527 = vmatprep.subr.mxu0 0.0
        %6528 = vmatpush1.msra.mxu0 1.0
        %6529 = vmatprep.subr.mxu0 0.0
        %6530 = vmatpush1.msra.mxu0 1.0
        %6531 = vmatprep.subr.mxu0 0.0
        %6532 = vmatpush1.msra.mxu0 1.0
        %6533 = vmatprep.subr.mxu0 0.0
        %6534 = vmatpush1.msra.mxu0 1.0
        %6535 = vmatprep.subr.mxu0 0.0
        %6536 = vmatpush1.msra.mxu0 1.0
        %6537 = vmatprep.subr.mxu0 0.0
        %6538 = vmatpush1.msra.mxu0 1.0
        %6539 = vmatprep.subr.mxu0 0.0
        %6540 = vmatpush1.msra.mxu0 1.0
        %6541 = vmatprep.subr.mxu0 0.0
        %6542 = vmatpush1.msra.mxu0 1.0
        %6543 = vmatprep.subr.mxu0 0.0
        %6544 = vmatpush1.msra.mxu0 1.0
        %6545 = vmatprep.mubr.f32.mxu0 %v6408
        %6546 = vmatmul.mubr.f32.gmra.mrb[0].mxu0 %v6406
        %v6547 = vpop.f32.mrb[0].mxu0
        %v6548 = vadd.f32 0.0, %v6547
        %v6549 = vpop.f32.mrb[0].mxu0
        %6550 = vdwg.mxu0
        %s6551 = vtos %v6548
        %s6552 = smul.f32 %s6480, 0.00012207031
        %s6553 = smul.f32 %s6551, 0.00012207031
        %s6554 = smul.f32 %s6552, %s6552
        %s6555 = ssub.f32 %s6553, %s6554
        %s6556 = smax.f32 %s6555, 0.0
        %s6557 = sadd.f32 %s6556, 1e-16
        %v6558 = vstv %s6557
        %v6559 = vrsqrt.pop %v6558
        %s6560 = vtos %v6559
        %v6561 = vstv %s6560
        %v6562 = vmul.f32 %v6136, %v6561
        %v6563 = vmul.f32 %v6137, %v6561
        %v6564 = vmul.f32 %v6138, %v6561
        %v6565 = vmul.f32 %v6139, %v6561
        %v6566 = vstv %s6552
        %v6567 = vmul.f32 %v6566, %v6562
        %v6568 = vmul.f32 %v6566, %v6563
        %v6569 = vmul.f32 %v6566, %v6564
        %v6570 = vmul.f32 %v6566, %v6565
        %6575 = vrot.lane.b32.xlu0 %v6567, 1
        %v6576 = vpop.permute.xlu0 %6575
        %6577 = vrot.lane.b32.xlu0 %v6568, 1
        %v6578 = vpop.permute.xlu0 %6577
        %6579 = vrot.lane.b32.xlu0 %v6569, 1
        %v6580 = vpop.permute.xlu0 %6579
        %6581 = vrot.lane.b32.xlu0 %v6570, 1
        %v6582 = vpop.permute.xlu0 %6581
        %v6587 = vsub.f32 %v6136, %v6576
        %v6588 = vsub.f32 %v6137, %v6578
        %v6589 = vsub.f32 %v6138, %v6580
        %v6590 = vsub.f32 %v6139, %v6582
        %6592 = vset.pattern.permute.xlu0 1
        %6593 = vperm.xlu0 %6592, %v6562
        %v6594 = vpop.permute.xlu0 %6593
        %6597 = vset.pattern.permute.xlu0 1
        %6598 = vperm.xlu0 %6597, %v6563
        %v6599 = vpop.permute.xlu0 %6598
        %6602 = vset.pattern.permute.xlu0 1
        %6603 = vperm.xlu0 %6602, %v6564
        %v6604 = vpop.permute.xlu0 %6603
        %6607 = vset.pattern.permute.xlu0 1
        %6608 = vperm.xlu0 %6607, %v6565
        %v6609 = vpop.permute.xlu0 %6608
        %v6611 = vmul.f32 %v6252, %v6594
        %v6612 = vmul.f32 %v6253, %v6594
        %v6613 = vmul.f32 %v6254, %v6599
        %v6614 = vmul.f32 %v6255, %v6599
        %v6615 = vmul.f32 %v6256, %v6604
        %v6616 = vmul.f32 %v6257, %v6604
        %v6617 = vmul.f32 %v6258, %v6609
        %v6618 = vmul.f32 %v6259, %v6609
        %6620 = vset.pattern.permute.xlu0 2
        %6621 = vperm.xlu0 %6620, %v6587
        %v6622 = vpop.permute.xlu0 %6621
        %6625 = vset.pattern.permute.xlu0 2
        %6626 = vperm.xlu0 %6625, %v6588
        %v6627 = vpop.permute.xlu0 %6626
        %6630 = vset.pattern.permute.xlu0 2
        %6631 = vperm.xlu0 %6630, %v6589
        %v6632 = vpop.permute.xlu0 %6631
        %6635 = vset.pattern.permute.xlu0 2
        %6636 = vperm.xlu0 %6635, %v6590
        %v6637 = vpop.permute.xlu0 %6636
        %v6639 = vadd.f32 %v6611, %v6622
        %v6640 = vadd.f32 %v6612, %v6622
        %v6641 = vadd.f32 %v6613, %v6627
        %v6642 = vadd.f32 %v6614, %v6627
        %v6643 = vadd.f32 %v6615, %v6632
        %v6644 = vadd.f32 %v6616, %v6632
        %v6645 = vadd.f32 %v6617, %v6637
        %v6646 = vadd.f32 %v6618, %v6637
        %6647 = vset.pattern.permute.xlu0 4
        %6648 = vperm.xlu0 %6647, %v6136
        %v6649 = vpop.permute.xlu0 %6648
        %6651 = vset.pattern.permute.xlu0 4
        %6652 = vperm.xlu0 %6651, %v6137
        %v6653 = vpop.permute.xlu0 %6652
        %6655 = vset.pattern.permute.xlu0 4
        %6656 = vperm.xlu0 %6655, %v6138
        %v6657 = vpop.permute.xlu0 %6656
        %6659 = vset.pattern.permute.xlu0 4
        %6660 = vperm.xlu0 %6659, %v6139
        %v6661 = vpop.permute.xlu0 %6660
        %v6663 = vmul.f32 %v6649, %v6639
        %v6664 = vmul.f32 %v6649, %v6640
        %v6665 = vmul.f32 %v6653, %v6641
        %v6666 = vmul.f32 %v6653, %v6642
        %v6667 = vmul.f32 %v6657, %v6643
        %v6668 = vmul.f32 %v6657, %v6644
        %v6669 = vmul.f32 %v6661, %v6645
        %v6670 = vmul.f32 %v6661, %v6646
        %vm6671 = vcmp.ge.s32.totalorder %v267, 32
        %vm6672 = vcmp.ge.s32.totalorder %v268, 32
        %6673 = vrot.lane.b32.xlu0 %v6639, 32
        %v6674 = vpop.permute.xlu0 %6673
        %6675 = vrot.lane.b32.xlu0 %v6641, 32
        %v6676 = vpop.permute.xlu0 %6675
        %6677 = vrot.lane.b32.xlu0 %v6643, 32
        %v6678 = vpop.permute.xlu0 %6677
        %6679 = vrot.lane.b32.xlu0 %v6645, 32
        %v6680 = vpop.permute.xlu0 %6679
        %6681 = vrot.lane.b32.xlu0 %v6640, 32
        %v6682 = vpop.permute.xlu0 %6681
        %6683 = vrot.lane.b32.xlu0 %v6642, 32
        %v6684 = vpop.permute.xlu0 %6683
        %6685 = vrot.lane.b32.xlu0 %v6644, 32
        %v6686 = vpop.permute.xlu0 %6685
        %6687 = vrot.lane.b32.xlu0 %v6646, 32
        %v6688 = vpop.permute.xlu0 %6687
        %vm6689 = vcmp.lt.s32.totalorder %v267, 32
        %v6690 = vsel %vm6689, %v6674, %v6682
        %v6691 = vsel %vm6689, %v6676, %v6684
        %v6692 = vsel %vm6689, %v6678, %v6686
        %v6693 = vsel %vm6689, %v6680, %v6688
        %v6694 = vsel %vm6689, %v6682, %v6674
        %v6695 = vsel %vm6689, %v6684, %v6676
        %v6696 = vsel %vm6689, %v6686, %v6678
        %v6697 = vsel %vm6689, %v6688, %v6680
        %v6698 = vsel %vm6671, 1, 0
        %v6699 = vsel %vm6672, 1, 0
        %vm6700 = vcmp.eq.s32.totalorder %v6698, 1
        %vm6701 = vcmp.eq.s32.totalorder %v6699, 1
        %v6702 = vsel %vm6700, %v6694, 0.0
        %v6703 = vsel %vm6701, %v6690, 0.0
        %v6704 = vsel %vm6700, %v6695, 0.0
        %v6705 = vsel %vm6701, %v6691, 0.0
        %v6706 = vsel %vm6700, %v6696, 0.0
        %v6707 = vsel %vm6701, %v6692, 0.0
        %v6708 = vsel %vm6700, %v6697, 0.0
        %v6709 = vsel %vm6701, %v6693, 0.0
        %6710 = vset.pattern.permute.xlu0 3
        %6711 = vperm.xlu0 %6710, %v6136
        %v6712 = vpop.permute.xlu0 %6711
        %6714 = vset.pattern.permute.xlu0 3
        %6715 = vperm.xlu0 %6714, %v6137
        %v6716 = vpop.permute.xlu0 %6715
        %6718 = vset.pattern.permute.xlu0 3
        %6719 = vperm.xlu0 %6718, %v6138
        %v6720 = vpop.permute.xlu0 %6719
        %6722 = vset.pattern.permute.xlu0 3
        %6723 = vperm.xlu0 %6722, %v6139
        %v6724 = vpop.permute.xlu0 %6723
        %v6726 = vmul.f32 %v6712, %v6702
        %v6727 = vmul.f32 %v6712, %v6703
        %v6728 = vmul.f32 %v6716, %v6704
        %v6729 = vmul.f32 %v6716, %v6705
        %v6730 = vmul.f32 %v6720, %v6706
        %v6731 = vmul.f32 %v6720, %v6707
        %v6732 = vmul.f32 %v6724, %v6708
        %v6733 = vmul.f32 %v6724, %v6709
        %v6734 = vadd.f32 %v6663, %v6726
        %v6735 = vadd.f32 %v6664, %v6727
        %v6736 = vadd.f32 %v6665, %v6728
        %v6737 = vadd.f32 %v6666, %v6729
        %v6738 = vadd.f32 %v6667, %v6730
        %v6739 = vadd.f32 %v6668, %v6731
        %v6740 = vadd.f32 %v6669, %v6732
        %v6741 = vadd.f32 %v6670, %v6733
        %vm6742 = vcmp.lt.s32.totalorder %v267, 224
        %vm6743 = vcmp.lt.s32.totalorder %v268, 224
        %6744 = vrot.lane.b32.xlu0 %v6639, 96
        %v6745 = vpop.permute.xlu0 %6744
        %6746 = vrot.lane.b32.xlu0 %v6641, 96
        %v6747 = vpop.permute.xlu0 %6746
        %6748 = vrot.lane.b32.xlu0 %v6643, 96
        %v6749 = vpop.permute.xlu0 %6748
        %6750 = vrot.lane.b32.xlu0 %v6645, 96
        %v6751 = vpop.permute.xlu0 %6750
        %6752 = vrot.lane.b32.xlu0 %v6640, 96
        %v6753 = vpop.permute.xlu0 %6752
        %6754 = vrot.lane.b32.xlu0 %v6642, 96
        %v6755 = vpop.permute.xlu0 %6754
        %6756 = vrot.lane.b32.xlu0 %v6644, 96
        %v6757 = vpop.permute.xlu0 %6756
        %6758 = vrot.lane.b32.xlu0 %v6646, 96
        %v6759 = vpop.permute.xlu0 %6758
        %vm6760 = vcmp.lt.s32.totalorder %v267, 96
        %v6761 = vsel %vm6760, %v6745, %v6753
        %v6762 = vsel %vm6760, %v6747, %v6755
        %v6763 = vsel %vm6760, %v6749, %v6757
        %v6764 = vsel %vm6760, %v6751, %v6759
        %v6765 = vsel %vm6760, %v6753, %v6745
        %v6766 = vsel %vm6760, %v6755, %v6747
        %v6767 = vsel %vm6760, %v6757, %v6749
        %v6768 = vsel %vm6760, %v6759, %v6751
        %v6769 = vsel %vm6742, 1, 0
        %v6770 = vsel %vm6743, 1, 0
        %vm6771 = vcmp.eq.s32.totalorder %v6769, 1
        %vm6772 = vcmp.eq.s32.totalorder %v6770, 1
        %v6773 = vsel %vm6771, %v6761, 0.0
        %v6774 = vsel %vm6772, %v6765, 0.0
        %v6775 = vsel %vm6771, %v6762, 0.0
        %v6776 = vsel %vm6772, %v6766, 0.0
        %v6777 = vsel %vm6771, %v6763, 0.0
        %v6778 = vsel %vm6772, %v6767, 0.0
        %v6779 = vsel %vm6771, %v6764, 0.0
        %v6780 = vsel %vm6772, %v6768, 0.0
        %6781 = vset.pattern.permute.xlu0 5
        %6782 = vperm.xlu0 %6781, %v6136
        %v6783 = vpop.permute.xlu0 %6782
        %6785 = vset.pattern.permute.xlu0 5
        %6786 = vperm.xlu0 %6785, %v6137
        %v6787 = vpop.permute.xlu0 %6786
        %6789 = vset.pattern.permute.xlu0 5
        %6790 = vperm.xlu0 %6789, %v6138
        %v6791 = vpop.permute.xlu0 %6790
        %6793 = vset.pattern.permute.xlu0 5
        %6794 = vperm.xlu0 %6793, %v6139
        %v6795 = vpop.permute.xlu0 %6794
        %v6797 = vmul.f32 %v6783, %v6773
        %v6798 = vmul.f32 %v6783, %v6774
        %v6799 = vmul.f32 %v6787, %v6775
        %v6800 = vmul.f32 %v6787, %v6776
        %v6801 = vmul.f32 %v6791, %v6777
        %v6802 = vmul.f32 %v6791, %v6778
        %v6803 = vmul.f32 %v6795, %v6779
        %v6804 = vmul.f32 %v6795, %v6780
        %v6805 = vadd.f32 %v6734, %v6797
        %v6806 = vadd.f32 %v6735, %v6798
        %v6807 = vadd.f32 %v6736, %v6799
        %v6808 = vadd.f32 %v6737, %v6800
        %v6809 = vadd.f32 %v6738, %v6801
        %v6810 = vadd.f32 %v6739, %v6802
        %v6811 = vadd.f32 %v6740, %v6803
        %v6812 = vadd.f32 %v6741, %v6804
        %vm6813 = vcmp.ge.f32.partialorder %v6805, 0.0
        %vm6814 = vcmp.ge.f32.partialorder %v6806, 0.0
        %vm6815 = vcmp.ge.f32.partialorder %v6807, 0.0
        %vm6816 = vcmp.ge.f32.partialorder %v6808, 0.0
        %vm6817 = vcmp.ge.f32.partialorder %v6809, 0.0
        %vm6818 = vcmp.ge.f32.partialorder %v6810, 0.0
        %vm6819 = vcmp.ge.f32.partialorder %v6811, 0.0
        %vm6820 = vcmp.ge.f32.partialorder %v6812, 0.0
        %6821 = vset.pattern.permute.xlu0 6
        %6822 = vperm.xlu0 %6821, %v6136
        %v6823 = vpop.permute.xlu0 %6822
        %6825 = vset.pattern.permute.xlu0 6
        %6826 = vperm.xlu0 %6825, %v6137
        %v6827 = vpop.permute.xlu0 %6826
        %6829 = vset.pattern.permute.xlu0 6
        %6830 = vperm.xlu0 %6829, %v6138
        %v6831 = vpop.permute.xlu0 %6830
        %6833 = vset.pattern.permute.xlu0 6
        %6834 = vperm.xlu0 %6833, %v6139
        %v6835 = vpop.permute.xlu0 %6834
        %v6837 = vmul.f32 %v6823, %v6805
        %v6838 = vmul.f32 %v6823, %v6806
        %v6839 = vmul.f32 %v6827, %v6807
        %v6840 = vmul.f32 %v6827, %v6808
        %v6841 = vmul.f32 %v6831, %v6809
        %v6842 = vmul.f32 %v6831, %v6810
        %v6843 = vmul.f32 %v6835, %v6811
        %v6844 = vmul.f32 %v6835, %v6812
        %v6845 = vsel %vm6813, %v6805, %v6837
        %v6846 = vsel %vm6814, %v6806, %v6838
        %v6847 = vsel %vm6815, %v6807, %v6839
        %v6848 = vsel %vm6816, %v6808, %v6840
        %v6849 = vsel %vm6817, %v6809, %v6841
        %v6850 = vsel %vm6818, %v6810, %v6842
        %v6851 = vsel %vm6819, %v6811, %v6843
        %v6852 = vsel %vm6820, %v6812, %v6844
        %6853 = vmatprep.subr.mxu0 %v6846
        %6854 = vmatpush1.msra.mxu0 %v6845
        %6855 = vmatprep.subr.mxu0 %v6848
        %6856 = vmatpush1.msra.mxu0 %v6847
        %6857 = vmatprep.subr.mxu0 %v6850
        %6858 = vmatpush1.msra.mxu0 %v6849
        %6859 = vmatprep.subr.mxu0 %v6852
        %6860 = vmatpush1.msra.mxu0 %v6851
        %6861 = vmatprep.subr.mxu0 0.0
        %6862 = vmatpush1.msra.mxu0 0.0
        %6863 = vmatprep.subr.mxu0 0.0
        %6864 = vmatpush1.msra.mxu0 0.0
        %6865 = vmatprep.subr.mxu0 0.0
        %6866 = vmatpush1.msra.mxu0 0.0
        %6867 = vmatprep.subr.mxu0 0.0
        %6868 = vmatpush1.msra.mxu0 0.0
        %6869 = vmatprep.subr.mxu0 0.0
        %6870 = vmatpush1.msra.mxu0 0.0
        %6871 = vmatprep.subr.mxu0 0.0
        %6872 = vmatpush1.msra.mxu0 0.0
        %6873 = vmatprep.subr.mxu0 0.0
        %6874 = vmatpush1.msra.mxu0 0.0
        %6875 = vmatprep.subr.mxu0 0.0
        %6876 = vmatpush1.msra.mxu0 0.0
        %6877 = vmatprep.subr.mxu0 0.0
        %6878 = vmatpush1.msra.mxu0 0.0
        %6879 = vmatprep.subr.mxu0 0.0
        %6880 = vmatpush1.msra.mxu0 0.0
        %6881 = vmatprep.subr.mxu0 0.0
        %6882 = vmatpush1.msra.mxu0 0.0
        %6883 = vmatprep.subr.mxu0 0.0
        %6884 = vmatpush1.msra.mxu0 0.0
        %6885 = vmatprep.subr.mxu0 0.0
        %6886 = vmatpush1.msra.mxu0 0.0
        %6887 = vmatprep.subr.mxu0 0.0
        %6888 = vmatpush1.msra.mxu0 0.0
        %6889 = vmatprep.subr.mxu0 0.0
        %6890 = vmatpush1.msra.mxu0 0.0
        %6891 = vmatprep.subr.mxu0 0.0
        %6892 = vmatpush1.msra.mxu0 0.0
        %6893 = vmatprep.subr.mxu0 0.0
        %6894 = vmatpush1.msra.mxu0 0.0
        %6895 = vmatprep.subr.mxu0 0.0
        %6896 = vmatpush1.msra.mxu0 0.0
        %6897 = vmatprep.subr.mxu0 0.0
        %6898 = vmatpush1.msra.mxu0 0.0
        %6899 = vmatprep.subr.mxu0 0.0
        %6900 = vmatpush1.msra.mxu0 0.0
        %6901 = vmatprep.subr.mxu0 0.0
        %6902 = vmatpush1.msra.mxu0 0.0
        %6903 = vmatprep.subr.mxu0 0.0
        %6904 = vmatpush1.msra.mxu0 0.0
        %6905 = vmatprep.subr.mxu0 0.0
        %6906 = vmatpush1.msra.mxu0 0.0
        %6907 = vmatprep.subr.mxu0 0.0
        %6908 = vmatpush1.msra.mxu0 0.0
        %6909 = vmatprep.subr.mxu0 0.0
        %6910 = vmatpush1.msra.mxu0 0.0
        %6911 = vmatprep.subr.mxu0 0.0
        %6912 = vmatpush1.msra.mxu0 0.0
        %6913 = vmatprep.subr.mxu0 0.0
        %6914 = vmatpush1.msra.mxu0 0.0
        %6915 = vmatprep.subr.mxu0 0.0
        %6916 = vmatpush1.msra.mxu0 0.0
        %6917 = vmatprep.mubr.f32.mxu0 0.0
        %6918 = vmatmul.mubr.f32.gmra.mrb[0].mxu0 %v395
        %v6919 = vpop.f32.mrb[0].mxu0
        %v6920 = vadd.f32 0.0, %v6919
        %v6921 = vpop.f32.mrb[0].mxu0
        %v6922 = vadd.f32 0.0, %v6921
        %6923 = vdwg.mxu0
        %v6924 = vmul.f32 %v6845, %v6845
        %v6925 = vmul.f32 %v6846, %v6846
        %v6926 = vmul.f32 %v6847, %v6847
        %v6927 = vmul.f32 %v6848, %v6848
        %v6928 = vmul.f32 %v6849, %v6849
        %v6929 = vmul.f32 %v6850, %v6850
        %v6930 = vmul.f32 %v6851, %v6851
        %v6931 = vmul.f32 %v6852, %v6852
        %6932 = vmatprep.subr.mxu0 %v6925
        %6933 = vmatpush1.msra.mxu0 %v6924
        %6934 = vmatprep.subr.mxu0 %v6927
        %6935 = vmatpush1.msra.mxu0 %v6926
        %6936 = vmatprep.subr.mxu0 %v6929
        %6937 = vmatpush1.msra.mxu0 %v6928
        %6938 = vmatprep.subr.mxu0 %v6931
        %6939 = vmatpush1.msra.mxu0 %v6930
        %6940 = vmatprep.subr.mxu0 0.0
        %6941 = vmatpush1.msra.mxu0 0.0
        %6942 = vmatprep.subr.mxu0 0.0
        %6943 = vmatpush1.msra.mxu0 0.0
        %6944 = vmatprep.subr.mxu0 0.0
        %6945 = vmatpush1.msra.mxu0 0.0
        %6946 = vmatprep.subr.mxu0 0.0
        %6947 = vmatpush1.msra.mxu0 0.0
        %6948 = vmatprep.subr.mxu0 0.0
        %6949 = vmatpush1.msra.mxu0 0.0
        %6950 = vmatprep.subr.mxu0 0.0
        %6951 = vmatpush1.msra.mxu0 0.0
        %6952 = vmatprep.subr.mxu0 0.0
        %6953 = vmatpush1.msra.mxu0 0.0
        %6954 = vmatprep.subr.mxu0 0.0
        %6955 = vmatpush1.msra.mxu0 0.0
        %6956 = vmatprep.subr.mxu0 0.0
        %6957 = vmatpush1.msra.mxu0 0.0
        %6958 = vmatprep.subr.mxu0 0.0
        %6959 = vmatpush1.msra.mxu0 0.0
        %6960 = vmatprep.subr.mxu0 0.0
        %6961 = vmatpush1.msra.mxu0 0.0
        %6962 = vmatprep.subr.mxu0 0.0
        %6963 = vmatpush1.msra.mxu0 0.0
        %6964 = vmatprep.subr.mxu0 0.0
        %6965 = vmatpush1.msra.mxu0 0.0
        %6966 = vmatprep.subr.mxu0 0.0
        %6967 = vmatpush1.msra.mxu0 0.0
        %6968 = vmatprep.subr.mxu0 0.0
        %6969 = vmatpush1.msra.mxu0 0.0
        %6970 = vmatprep.subr.mxu0 0.0
        %6971 = vmatpush1.msra.mxu0 0.0
        %6972 = vmatprep.subr.mxu0 0.0
        %6973 = vmatpush1.msra.mxu0 0.0
        %6974 = vmatprep.subr.mxu0 0.0
        %6975 = vmatpush1.msra.mxu0 0.0
        %6976 = vmatprep.subr.mxu0 0.0
        %6977 = vmatpush1.msra.mxu0 0.0
        %6978 = vmatprep.subr.mxu0 0.0
        %6979 = vmatpush1.msra.mxu0 0.0
        %6980 = vmatprep.subr.mxu0 0.0
        %6981 = vmatpush1.msra.mxu0 0.0
        %6982 = vmatprep.subr.mxu0 0.0
        %6983 = vmatpush1.msra.mxu0 0.0
        %6984 = vmatprep.subr.mxu0 0.0
        %6985 = vmatpush1.msra.mxu0 0.0
        %6986 = vmatprep.subr.mxu0 0.0
        %6987 = vmatpush1.msra.mxu0 0.0
        %6988 = vmatprep.subr.mxu0 0.0
        %6989 = vmatpush1.msra.mxu0 0.0
        %6990 = vmatprep.subr.mxu0 0.0
        %6991 = vmatpush1.msra.mxu0 0.0
        %6992 = vmatprep.subr.mxu0 0.0
        %6993 = vmatpush1.msra.mxu0 0.0
        %6994 = vmatprep.subr.mxu0 0.0
        %6995 = vmatpush1.msra.mxu0 0.0
        %6996 = vmatprep.mubr.f32.mxu0 0.0
        %6997 = vmatmul.mubr.f32.gmra.mrb[0].mxu0 %v395
        %v6998 = vpop.f32.mrb[0].mxu0
        %v6999 = vadd.f32 0.0, %v6998
        %v7000 = vpop.f32.mrb[0].mxu0
        %v7001 = vadd.f32 0.0, %v7000
        %7002 = vdwg.mxu0
        %7003 = vmatprep.subr.mxu0 0.0
        %7004 = vmatpush1.msra.mxu0 1.0
        %7005 = vmatprep.subr.mxu0 0.0
        %7006 = vmatpush1.msra.mxu0 1.0
        %7007 = vmatprep.subr.mxu0 0.0
        %7008 = vmatpush1.msra.mxu0 1.0
        %7009 = vmatprep.subr.mxu0 0.0
        %7010 = vmatpush1.msra.mxu0 1.0
        %7011 = vmatprep.subr.mxu0 0.0
        %7012 = vmatpush1.msra.mxu0 1.0
        %7013 = vmatprep.subr.mxu0 0.0
        %7014 = vmatpush1.msra.mxu0 1.0
        %7015 = vmatprep.subr.mxu0 0.0
        %7016 = vmatpush1.msra.mxu0 1.0
        %7017 = vmatprep.subr.mxu0 0.0
        %7018 = vmatpush1.msra.mxu0 1.0
        %7019 = vmatprep.subr.mxu0 0.0
        %7020 = vmatpush1.msra.mxu0 1.0
        %7021 = vmatprep.subr.mxu0 0.0
        %7022 = vmatpush1.msra.mxu0 1.0
        %7023 = vmatprep.subr.mxu0 0.0
        %7024 = vmatpush1.msra.mxu0 1.0
        %7025 = vmatprep.subr.mxu0 0.0
        %7026 = vmatpush1.msra.mxu0 1.0
        %7027 = vmatprep.subr.mxu0 0.0
        %7028 = vmatpush1.msra.mxu0 1.0
        %7029 = vmatprep.subr.mxu0 0.0
        %7030 = vmatpush1.msra.mxu0 1.0
        %7031 = vmatprep.subr.mxu0 0.0
        %7032 = vmatpush1.msra.mxu0 1.0
        %7033 = vmatprep.subr.mxu0 0.0
        %7034 = vmatpush1.msra.mxu0 1.0
        %7035 = vmatprep.subr.mxu0 0.0
        %7036 = vmatpush1.msra.mxu0 1.0
        %7037 = vmatprep.subr.mxu0 0.0
        %7038 = vmatpush1.msra.mxu0 1.0
        %7039 = vmatprep.subr.mxu0 0.0
        %7040 = vmatpush1.msra.mxu0 1.0
        %7041 = vmatprep.subr.mxu0 0.0
        %7042 = vmatpush1.msra.mxu0 1.0
        %7043 = vmatprep.subr.mxu0 0.0
        %7044 = vmatpush1.msra.mxu0 1.0
        %7045 = vmatprep.subr.mxu0 0.0
        %7046 = vmatpush1.msra.mxu0 1.0
        %7047 = vmatprep.subr.mxu0 0.0
        %7048 = vmatpush1.msra.mxu0 1.0
        %7049 = vmatprep.subr.mxu0 0.0
        %7050 = vmatpush1.msra.mxu0 1.0
        %7051 = vmatprep.subr.mxu0 0.0
        %7052 = vmatpush1.msra.mxu0 1.0
        %7053 = vmatprep.subr.mxu0 0.0
        %7054 = vmatpush1.msra.mxu0 1.0
        %7055 = vmatprep.subr.mxu0 0.0
        %7056 = vmatpush1.msra.mxu0 1.0
        %7057 = vmatprep.subr.mxu0 0.0
        %7058 = vmatpush1.msra.mxu0 1.0
        %7059 = vmatprep.subr.mxu0 0.0
        %7060 = vmatpush1.msra.mxu0 1.0
        %7061 = vmatprep.subr.mxu0 0.0
        %7062 = vmatpush1.msra.mxu0 1.0
        %7063 = vmatprep.subr.mxu0 0.0
        %7064 = vmatpush1.msra.mxu0 1.0
        %7065 = vmatprep.subr.mxu0 0.0
        %7066 = vmatpush1.msra.mxu0 1.0
        %7067 = vmatprep.mubr.f32.mxu0 %v6922
        %7068 = vmatmul.mubr.f32.gmra.mrb[0].mxu0 %v6920
        %v7069 = vpop.f32.mrb[0].mxu0
        %v7070 = vadd.f32 0.0, %v7069
        %v7071 = vpop.f32.mrb[0].mxu0
        %7072 = vdwg.mxu0
        %s7073 = vtos %v7070
        %7074 = vmatprep.subr.mxu0 0.0
        %7075 = vmatpush1.msra.mxu0 1.0
        %7076 = vmatprep.subr.mxu0 0.0
        %7077 = vmatpush1.msra.mxu0 1.0
        %7078 = vmatprep.subr.mxu0 0.0
        %7079 = vmatpush1.msra.mxu0 1.0
        %7080 = vmatprep.subr.mxu0 0.0
        %7081 = vmatpush1.msra.mxu0 1.0
        %7082 = vmatprep.subr.mxu0 0.0
        %7083 = vmatpush1.msra.mxu0 1.0
        %7084 = vmatprep.subr.mxu0 0.0
        %7085 = vmatpush1.msra.mxu0 1.0
        %7086 = vmatprep.subr.mxu0 0.0
        %7087 = vmatpush1.msra.mxu0 1.0
        %7088 = vmatprep.subr.mxu0 0.0
        %7089 = vmatpush1.msra.mxu0 1.0
        %7090 = vmatprep.subr.mxu0 0.0
        %7091 = vmatpush1.msra.mxu0 1.0
        %7092 = vmatprep.subr.mxu0 0.0
        %7093 = vmatpush1.msra.mxu0 1.0
        %7094 = vmatprep.subr.mxu0 0.0
        %7095 = vmatpush1.msra.mxu0 1.0
        %7096 = vmatprep.subr.mxu0 0.0
        %7097 = vmatpush1.msra.mxu0 1.0
        %7098 = vmatprep.subr.mxu0 0.0
        %7099 = vmatpush1.msra.mxu0 1.0
        %7100 = vmatprep.subr.mxu0 0.0
        %7101 = vmatpush1.msra.mxu0 1.0
        %7102 = vmatprep.subr.mxu0 0.0
        %7103 = vmatpush1.msra.mxu0 1.0
        %7104 = vmatprep.subr.mxu0 0.0
        %7105 = vmatpush1.msra.mxu0 1.0
        %7106 = vmatprep.subr.mxu0 0.0
        %7107 = vmatpush1.msra.mxu0 1.0
        %7108 = vmatprep.subr.mxu0 0.0
        %7109 = vmatpush1.msra.mxu0 1.0
        %7110 = vmatprep.subr.mxu0 0.0
        %7111 = vmatpush1.msra.mxu0 1.0
        %7112 = vmatprep.subr.mxu0 0.0
        %7113 = vmatpush1.msra.mxu0 1.0
        %7114 = vmatprep.subr.mxu0 0.0
        %7115 = vmatpush1.msra.mxu0 1.0
        %7116 = vmatprep.subr.mxu0 0.0
        %7117 = vmatpush1.msra.mxu0 1.0
        %7118 = vmatprep.subr.mxu0 0.0
        %7119 = vmatpush1.msra.mxu0 1.0
        %7120 = vmatprep.subr.mxu0 0.0
        %7121 = vmatpush1.msra.mxu0 1.0
        %7122 = vmatprep.subr.mxu0 0.0
        %7123 = vmatpush1.msra.mxu0 1.0
        %7124 = vmatprep.subr.mxu0 0.0
        %7125 = vmatpush1.msra.mxu0 1.0
        %7126 = vmatprep.subr.mxu0 0.0
        %7127 = vmatpush1.msra.mxu0 1.0
        %7128 = vmatprep.subr.mxu0 0.0
        %7129 = vmatpush1.msra.mxu0 1.0
        %7130 = vmatprep.subr.mxu0 0.0
        %7131 = vmatpush1.msra.mxu0 1.0
        %7132 = vmatprep.subr.mxu0 0.0
        %7133 = vmatpush1.msra.mxu0 1.0
        %7134 = vmatprep.subr.mxu0 0.0
        %7135 = vmatpush1.msra.mxu0 1.0
        %7136 = vmatprep.subr.mxu0 0.0
        %7137 = vmatpush1.msra.mxu0 1.0
        %7138 = vmatprep.mubr.f32.mxu0 %v7001
        %7139 = vmatmul.mubr.f32.gmra.mrb[0].mxu0 %v6999
        %v7140 = vpop.f32.mrb[0].mxu0
        %v7141 = vadd.f32 0.0, %v7140
        %v7142 = vpop.f32.mrb[0].mxu0
        %7143 = vdwg.mxu0
        %s7144 = vtos %v7141
        %s7145 = smul.f32 %s7073, 0.00012207031
        %s7146 = smul.f32 %s7144, 0.00012207031
        %s7147 = smul.f32 %s7145, %s7145
        %s7148 = ssub.f32 %s7146, %s7147
        %s7149 = smax.f32 %s7148, 0.0
        %s7150 = sadd.f32 %s7149, 1e-16
        %v7151 = vstv %s7150
        %v7152 = vrsqrt.pop %v7151
        %s7153 = vtos %v7152
        %s7154 = scalar_lea.vmem %s3, 80
        %v7155 = vld [vmem:[%s7154] sm:$0xf]
        %v7156 = vld [vmem:[%s7154 + $0x4] sm:$0xf]
        %v7157 = vld [vmem:[%s7154 + $0x8] sm:$0xf]
        %v7158 = vld [vmem:[%s7154 + $0xc] sm:$0xf]
        %v7159 = vpack.c.bf16 %v6847, %v6845
        %v7160 = vpack.c.bf16 %v6848, %v6846
        %v7161 = vpack.c.bf16 %v6851, %v6849
        %v7162 = vpack.c.bf16 %v6852, %v6850
        %v7167 = vunpack.c.l.b16 %v7155
        %v7168 = vunpack.c.l.b16 %v7156
        %v7169 = vunpack.c.l.b16 %v7157
        %v7170 = vunpack.c.l.b16 %v7158
        %v7171 = vpack.c.b16 %v7168, %v7167
        %v7172 = vpack.c.b16 %v7170, %v7169
        %v7174 = vsel %vm393, %v7171, 0
        %v7177 = vsel %vm393, %v7172, 0
        %7179 = vmatprep.subr.bf16.mxu0 %v7160
        %7180 = vmatpush1.bf16.msra.mxu0 %v7159
        %7181 = vmatprep.subr.bf16.mxu0 %v7162
        %7182 = vmatpush1.bf16.msra.mxu0 %v7161
        %7183 = vmatprep.subr.bf16.mxu0 0
        %7184 = vmatpush1.bf16.msra.mxu0 0
        %7185 = vmatprep.subr.bf16.mxu0 0
        %7186 = vmatpush1.bf16.msra.mxu0 0
        %7187 = vmatprep.subr.bf16.mxu0 0
        %7188 = vmatpush1.bf16.msra.mxu0 0
        %7189 = vmatprep.subr.bf16.mxu0 0
        %7190 = vmatpush1.bf16.msra.mxu0 0
        %7191 = vmatprep.subr.bf16.mxu0 0
        %7192 = vmatpush1.bf16.msra.mxu0 0
        %7193 = vmatprep.subr.bf16.mxu0 0
        %7194 = vmatpush1.bf16.msra.mxu0 0
        %7195 = vmatprep.subr.bf16.mxu0 0
        %7196 = vmatpush1.bf16.msra.mxu0 0
        %7197 = vmatprep.subr.bf16.mxu0 0
        %7198 = vmatpush1.bf16.msra.mxu0 0
        %7199 = vmatprep.subr.bf16.mxu0 0
        %7200 = vmatpush1.bf16.msra.mxu0 0
        %7201 = vmatprep.subr.bf16.mxu0 0
        %7202 = vmatpush1.bf16.msra.mxu0 0
        %7203 = vmatprep.subr.bf16.mxu0 0
        %7204 = vmatpush1.bf16.msra.mxu0 0
        %7205 = vmatprep.subr.bf16.mxu0 0
        %7206 = vmatpush1.bf16.msra.mxu0 0
        %7207 = vmatprep.subr.bf16.mxu0 0
        %7208 = vmatpush1.bf16.msra.mxu0 0
        %7209 = vmatprep.subr.bf16.mxu0 0
        %7210 = vmatpush1.bf16.msra.mxu0 0
        %7211 = vmatprep.mubr.bf16.mxu0 0
        %7212 = vmatmul.mubr.bf16.gmra.mrb[0].mxu0 %v7174
        %v7213 = vpop.f32.mrb[0].mxu0
        %v7214 = vadd.f32 0.0, %v7213
        %v7215 = vpop.f32.mrb[0].mxu0
        %v7216 = vadd.f32 0.0, %v7215
        %v7217 = vpop.f32.mrb[0].mxu0
        %v7218 = vadd.f32 0.0, %v7217
        %v7219 = vpop.f32.mrb[0].mxu0
        %v7220 = vadd.f32 0.0, %v7219
        %7221 = vmatprep.mubr.bf16.mxu0 0
        %7222 = vmatmul.mubr.bf16.gmra.mrb[0].mxu0 %v7177
        %v7223 = vpop.f32.mrb[0].mxu0
        %v7224 = vadd.f32 0.0, %v7223
        %v7225 = vpop.f32.mrb[0].mxu0
        %v7226 = vadd.f32 0.0, %v7225
        %v7227 = vpop.f32.mrb[0].mxu0
        %v7228 = vadd.f32 0.0, %v7227
        %v7229 = vpop.f32.mrb[0].mxu0
        %v7230 = vadd.f32 0.0, %v7229
        %7231 = vdwg.mxu0
        %s7232 = scalar_lea.vmem %s4, 160
        %v7233 = vld [vmem:[%s7232] sm:$0xff]
        %v7234 = vld [vmem:[%s7232 + $0x8] sm:$0xff]
        %v7235 = vld [vmem:[%s7232 + $0x10] sm:$0xff]
        %v7236 = vld [vmem:[%s7232 + $0x18] sm:$0xff]
        %s7237 = smul.f32 %s7145, %s7153
        %v7238 = vstv %s7237
        %v7239 = vmul.f32 %v7238, %v7233
        %v7240 = vmul.f32 %v7238, %v7234
        %v7241 = vmul.f32 %v7238, %v7235
        %v7242 = vmul.f32 %v7238, %v7236
        %7247 = vrot.lane.b32.xlu0 %v7239, 1
        %v7248 = vpop.permute.xlu0 %7247
        %7249 = vrot.lane.b32.xlu0 %v7240, 1
        %v7250 = vpop.permute.xlu0 %7249
        %7251 = vrot.lane.b32.xlu0 %v7241, 1
        %v7252 = vpop.permute.xlu0 %7251
        %7253 = vrot.lane.b32.xlu0 %v7242, 1
        %v7254 = vpop.permute.xlu0 %7253
        %v7259 = vsub.f32 %v7233, %v7248
        %v7260 = vsub.f32 %v7234, %v7250
        %v7261 = vsub.f32 %v7235, %v7252
        %v7262 = vsub.f32 %v7236, %v7254
        %v7263 = vstv %s7153
        %v7264 = vmul.f32 %v7214, %v7263
        %v7265 = vmul.f32 %v7216, %v7263
        %v7266 = vmul.f32 %v7218, %v7263
        %v7267 = vmul.f32 %v7220, %v7263
        %v7268 = vmul.f32 %v7224, %v7263
        %v7269 = vmul.f32 %v7226, %v7263
        %v7270 = vmul.f32 %v7228, %v7263
        %v7271 = vmul.f32 %v7230, %v7263
        %7273 = vset.pattern.permute.xlu0 1
        %7274 = vperm.xlu0 %7273, %v7259
        %v7275 = vpop.permute.xlu0 %7274
        %7278 = vset.pattern.permute.xlu0 1
        %7279 = vperm.xlu0 %7278, %v7260
        %v7280 = vpop.permute.xlu0 %7279
        %7283 = vset.pattern.permute.xlu0 1
        %7284 = vperm.xlu0 %7283, %v7261
        %v7285 = vpop.permute.xlu0 %7284
        %7288 = vset.pattern.permute.xlu0 1
        %7289 = vperm.xlu0 %7288, %v7262
        %v7290 = vpop.permute.xlu0 %7289
        %v7292 = vadd.f32 %v7264, %v7275
        %v7293 = vadd.f32 %v7265, %v7275
        %v7294 = vadd.f32 %v7266, %v7280
        %v7295 = vadd.f32 %v7267, %v7280
        %v7296 = vadd.f32 %v7268, %v7285
        %v7297 = vadd.f32 %v7269, %v7285
        %v7298 = vadd.f32 %v7270, %v7290
        %v7299 = vadd.f32 %v7271, %v7290
        %v7300 = vadd.f32 %v7292, %v6127
        %v7301 = vadd.f32 %v7293, %v6128
        %v7302 = vadd.f32 %v7294, %v6129
        %v7303 = vadd.f32 %v7295, %v6130
        %v7304 = vadd.f32 %v6131, %v7296
        %v7305 = vadd.f32 %v6132, %v7297
        %v7306 = vadd.f32 %v6133, %v7298
        %v7307 = vadd.f32 %v6134, %v7299
        %s7308 = scalar_lea.vmem %s2, 192
        %v7309 = vld [vmem:[%s7308] sm:$0xff]
        %v7310 = vld [vmem:[%s7308 + $0x8] sm:$0xff]
        %v7311 = vld [vmem:[%s7308 + $0x10] sm:$0xff]
        %v7312 = vld [vmem:[%s7308 + $0x18] sm:$0xff]
        %s7313 = scalar_lea.vmem %s1, 96
        %v7314 = vld [vmem:[%s7313] sm:$0xf]
        %v7315 = vld [vmem:[%s7313 + $0x4] sm:$0xf]
        %v7316 = vld [vmem:[%s7313 + $0x8] sm:$0xf]
        %v7317 = vld [vmem:[%s7313 + $0xc] sm:$0xf]
        %v7318 = vpack.c.bf16 %v7302, %v7300
        %v7319 = vpack.c.bf16 %v7303, %v7301
        %v7324 = vunpack.c.l.b16 %v7314
        %v7325 = vunpack.c.l.b16 %v7315
        %v7326 = vunpack.c.l.b16 %v7316
        %v7327 = vunpack.c.l.b16 %v7317
        %v7328 = vpack.c.b16 %v7325, %v7324
        %v7329 = vpack.c.b16 %v7327, %v7326
        %v7331 = vsel %vm289, %v7328, 0
        %v7334 = vsel %vm289, %v7329, 0
        %7336 = vmatprep.subr.bf16.mxu0 %v7319
        %7337 = vmatpush1.bf16.msra.mxu0 %v7318
        %7338 = vmatprep.subr.bf16.mxu0 0
        %7339 = vmatpush1.bf16.msra.mxu0 0
        %7340 = vmatprep.subr.bf16.mxu0 0
        %7341 = vmatpush1.bf16.msra.mxu0 0
        %7342 = vmatprep.subr.bf16.mxu0 0
        %7343 = vmatpush1.bf16.msra.mxu0 0
        %7344 = vmatprep.subr.bf16.mxu0 0
        %7345 = vmatpush1.bf16.msra.mxu0 0
        %7346 = vmatprep.subr.bf16.mxu0 0
        %7347 = vmatpush1.bf16.msra.mxu0 0
        %7348 = vmatprep.subr.bf16.mxu0 0
        %7349 = vmatpush1.bf16.msra.mxu0 0
        %7350 = vmatprep.subr.bf16.mxu0 0
        %7351 = vmatpush1.bf16.msra.mxu0 0
        %7352 = vmatprep.subr.bf16.mxu0 0
        %7353 = vmatpush1.bf16.msra.mxu0 0
        %7354 = vmatprep.subr.bf16.mxu0 0
        %7355 = vmatpush1.bf16.msra.mxu0 0
        %7356 = vmatprep.subr.bf16.mxu0 0
        %7357 = vmatpush1.bf16.msra.mxu0 0
        %7358 = vmatprep.subr.bf16.mxu0 0
        %7359 = vmatpush1.bf16.msra.mxu0 0
        %7360 = vmatprep.subr.bf16.mxu0 0
        %7361 = vmatpush1.bf16.msra.mxu0 0
        %7362 = vmatprep.subr.bf16.mxu0 0
        %7363 = vmatpush1.bf16.msra.mxu0 0
        %7364 = vmatprep.subr.bf16.mxu0 0
        %7365 = vmatpush1.bf16.msra.mxu0 0
        %7366 = vmatprep.subr.bf16.mxu0 0
        %7367 = vmatpush1.bf16.msra.mxu0 0
        %7368 = vmatprep.mubr.bf16.mxu0 0
        %7369 = vmatmul.mubr.bf16.gmra.mrb[0].mxu0 %v7331
        %v7370 = vpop.f32.mrb[0].mxu0
        %v7371 = vadd.f32 0.0, %v7370
        %v7372 = vpop.f32.mrb[0].mxu0
        %v7373 = vadd.f32 0.0, %v7372
        %v7374 = vpop.f32.mrb[0].mxu0
        %v7375 = vadd.f32 0.0, %v7374
        %v7376 = vpop.f32.mrb[0].mxu0
        %v7377 = vadd.f32 0.0, %v7376
        %7378 = vmatprep.mubr.bf16.mxu0 0
        %7379 = vmatmul.mubr.bf16.gmra.mrb[0].mxu0 %v7334
        %v7380 = vpop.f32.mrb[0].mxu0
        %v7381 = vadd.f32 0.0, %v7380
        %v7382 = vpop.f32.mrb[0].mxu0
        %v7383 = vadd.f32 0.0, %v7382
        %v7384 = vpop.f32.mrb[0].mxu0
        %v7385 = vadd.f32 0.0, %v7384
        %v7386 = vpop.f32.mrb[0].mxu0
        %v7387 = vadd.f32 0.0, %v7386
        %7388 = vdwg.mxu0
        %vm7389 = vcmp.ge.f32.partialorder %v7371, 0.0
        %vm7390 = vcmp.ge.f32.partialorder %v7373, 0.0
        %vm7391 = vcmp.ge.f32.partialorder %v7375, 0.0
        %vm7392 = vcmp.ge.f32.partialorder %v7377, 0.0
        %vm7393 = vcmp.ge.f32.partialorder %v7381, 0.0
        %vm7394 = vcmp.ge.f32.partialorder %v7383, 0.0
        %vm7395 = vcmp.ge.f32.partialorder %v7385, 0.0
        %vm7396 = vcmp.ge.f32.partialorder %v7387, 0.0
        %7398 = vset.pattern.permute.xlu0 0
        %7399 = vperm.xlu0 %7398, %v7309
        %v7400 = vpop.permute.xlu0 %7399
        %7403 = vset.pattern.permute.xlu0 0
        %7404 = vperm.xlu0 %7403, %v7310
        %v7405 = vpop.permute.xlu0 %7404
        %7408 = vset.pattern.permute.xlu0 0
        %7409 = vperm.xlu0 %7408, %v7311
        %v7410 = vpop.permute.xlu0 %7409
        %7413 = vset.pattern.permute.xlu0 0
        %7414 = vperm.xlu0 %7413, %v7312
        %v7415 = vpop.permute.xlu0 %7414
        %v7417 = vmul.f32 %v7400, %v7371
        %v7418 = vmul.f32 %v7400, %v7373
        %v7419 = vmul.f32 %v7405, %v7375
        %v7420 = vmul.f32 %v7405, %v7377
        %v7421 = vmul.f32 %v7410, %v7381
        %v7422 = vmul.f32 %v7410, %v7383
        %v7423 = vmul.f32 %v7415, %v7385
        %v7424 = vmul.f32 %v7415, %v7387
        %v7425 = vsel %vm7389, %v7371, %v7417
        %v7426 = vsel %vm7390, %v7373, %v7418
        %v7427 = vsel %vm7391, %v7375, %v7419
        %v7428 = vsel %vm7392, %v7377, %v7420
        %v7429 = vsel %vm7393, %v7381, %v7421
        %v7430 = vsel %vm7394, %v7383, %v7422
        %v7431 = vsel %vm7395, %v7385, %v7423
        %v7432 = vsel %vm7396, %v7387, %v7424
        %7433 = vmatprep.subr.mxu0 %v7426
        %7434 = vmatpush1.msra.mxu0 %v7425
        %7435 = vmatprep.subr.mxu0 %v7428
        %7436 = vmatpush1.msra.mxu0 %v7427
        %7437 = vmatprep.subr.mxu0 %v7430
        %7438 = vmatpush1.msra.mxu0 %v7429
        %7439 = vmatprep.subr.mxu0 %v7432
        %7440 = vmatpush1.msra.mxu0 %v7431
        %7441 = vmatprep.subr.mxu0 0.0
        %7442 = vmatpush1.msra.mxu0 0.0
        %7443 = vmatprep.subr.mxu0 0.0
        %7444 = vmatpush1.msra.mxu0 0.0
        %7445 = vmatprep.subr.mxu0 0.0
        %7446 = vmatpush1.msra.mxu0 0.0
        %7447 = vmatprep.subr.mxu0 0.0
        %7448 = vmatpush1.msra.mxu0 0.0
        %7449 = vmatprep.subr.mxu0 0.0
        %7450 = vmatpush1.msra.mxu0 0.0
        %7451 = vmatprep.subr.mxu0 0.0
        %7452 = vmatpush1.msra.mxu0 0.0
        %7453 = vmatprep.subr.mxu0 0.0
        %7454 = vmatpush1.msra.mxu0 0.0
        %7455 = vmatprep.subr.mxu0 0.0
        %7456 = vmatpush1.msra.mxu0 0.0
        %7457 = vmatprep.subr.mxu0 0.0
        %7458 = vmatpush1.msra.mxu0 0.0
        %7459 = vmatprep.subr.mxu0 0.0
        %7460 = vmatpush1.msra.mxu0 0.0
        %7461 = vmatprep.subr.mxu0 0.0
        %7462 = vmatpush1.msra.mxu0 0.0
        %7463 = vmatprep.subr.mxu0 0.0
        %7464 = vmatpush1.msra.mxu0 0.0
        %7465 = vmatprep.subr.mxu0 0.0
        %7466 = vmatpush1.msra.mxu0 0.0
        %7467 = vmatprep.subr.mxu0 0.0
        %7468 = vmatpush1.msra.mxu0 0.0
        %7469 = vmatprep.subr.mxu0 0.0
        %7470 = vmatpush1.msra.mxu0 0.0
        %7471 = vmatprep.subr.mxu0 0.0
        %7472 = vmatpush1.msra.mxu0 0.0
        %7473 = vmatprep.subr.mxu0 0.0
        %7474 = vmatpush1.msra.mxu0 0.0
        %7475 = vmatprep.subr.mxu0 0.0
        %7476 = vmatpush1.msra.mxu0 0.0
        %7477 = vmatprep.subr.mxu0 0.0
        %7478 = vmatpush1.msra.mxu0 0.0
        %7479 = vmatprep.subr.mxu0 0.0
        %7480 = vmatpush1.msra.mxu0 0.0
        %7481 = vmatprep.subr.mxu0 0.0
        %7482 = vmatpush1.msra.mxu0 0.0
        %7483 = vmatprep.subr.mxu0 0.0
        %7484 = vmatpush1.msra.mxu0 0.0
        %7485 = vmatprep.subr.mxu0 0.0
        %7486 = vmatpush1.msra.mxu0 0.0
        %7487 = vmatprep.subr.mxu0 0.0
        %7488 = vmatpush1.msra.mxu0 0.0
        %7489 = vmatprep.subr.mxu0 0.0
        %7490 = vmatpush1.msra.mxu0 0.0
        %7491 = vmatprep.subr.mxu0 0.0
        %7492 = vmatpush1.msra.mxu0 0.0
        %7493 = vmatprep.subr.mxu0 0.0
        %7494 = vmatpush1.msra.mxu0 0.0
        %7495 = vmatprep.subr.mxu0 0.0
        %7496 = vmatpush1.msra.mxu0 0.0
        %7497 = vmatprep.mubr.f32.mxu0 0.0
        %7498 = vmatmul.mubr.f32.gmra.mrb[0].mxu0 %v395
        %v7499 = vpop.f32.mrb[0].mxu0
        %v7500 = vadd.f32 0.0, %v7499
        %v7501 = vpop.f32.mrb[0].mxu0
        %v7502 = vadd.f32 0.0, %v7501
        %7503 = vdwg.mxu0
        %v7504 = vmul.f32 %v7425, %v7425
        %v7505 = vmul.f32 %v7426, %v7426
        %v7506 = vmul.f32 %v7427, %v7427
        %v7507 = vmul.f32 %v7428, %v7428
        %v7508 = vmul.f32 %v7429, %v7429
        %v7509 = vmul.f32 %v7430, %v7430
        %v7510 = vmul.f32 %v7431, %v7431
        %v7511 = vmul.f32 %v7432, %v7432
        %7512 = vmatprep.subr.mxu0 %v7505
        %7513 = vmatpush1.msra.mxu0 %v7504
        %7514 = vmatprep.subr.mxu0 %v7507
        %7515 = vmatpush1.msra.mxu0 %v7506
        %7516 = vmatprep.subr.mxu0 %v7509
        %7517 = vmatpush1.msra.mxu0 %v7508
        %7518 = vmatprep.subr.mxu0 %v7511
        %7519 = vmatpush1.msra.mxu0 %v7510
        %7520 = vmatprep.subr.mxu0 0.0
        %7521 = vmatpush1.msra.mxu0 0.0
        %7522 = vmatprep.subr.mxu0 0.0
        %7523 = vmatpush1.msra.mxu0 0.0
        %7524 = vmatprep.subr.mxu0 0.0
        %7525 = vmatpush1.msra.mxu0 0.0
        %7526 = vmatprep.subr.mxu0 0.0
        %7527 = vmatpush1.msra.mxu0 0.0
        %7528 = vmatprep.subr.mxu0 0.0
        %7529 = vmatpush1.msra.mxu0 0.0
        %7530 = vmatprep.subr.mxu0 0.0
        %7531 = vmatpush1.msra.mxu0 0.0
        %7532 = vmatprep.subr.mxu0 0.0
        %7533 = vmatpush1.msra.mxu0 0.0
        %7534 = vmatprep.subr.mxu0 0.0
        %7535 = vmatpush1.msra.mxu0 0.0
        %7536 = vmatprep.subr.mxu0 0.0
        %7537 = vmatpush1.msra.mxu0 0.0
        %7538 = vmatprep.subr.mxu0 0.0
        %7539 = vmatpush1.msra.mxu0 0.0
        %7540 = vmatprep.subr.mxu0 0.0
        %7541 = vmatpush1.msra.mxu0 0.0
        %7542 = vmatprep.subr.mxu0 0.0
        %7543 = vmatpush1.msra.mxu0 0.0
        %7544 = vmatprep.subr.mxu0 0.0
        %7545 = vmatpush1.msra.mxu0 0.0
        %7546 = vmatprep.subr.mxu0 0.0
        %7547 = vmatpush1.msra.mxu0 0.0
        %7548 = vmatprep.subr.mxu0 0.0
        %7549 = vmatpush1.msra.mxu0 0.0
        %7550 = vmatprep.subr.mxu0 0.0
        %7551 = vmatpush1.msra.mxu0 0.0
        %7552 = vmatprep.subr.mxu0 0.0
        %7553 = vmatpush1.msra.mxu0 0.0
        %7554 = vmatprep.subr.mxu0 0.0
        %7555 = vmatpush1.msra.mxu0 0.0
        %7556 = vmatprep.subr.mxu0 0.0
        %7557 = vmatpush1.msra.mxu0 0.0
        %7558 = vmatprep.subr.mxu0 0.0
        %7559 = vmatpush1.msra.mxu0 0.0
        %7560 = vmatprep.subr.mxu0 0.0
        %7561 = vmatpush1.msra.mxu0 0.0
        %7562 = vmatprep.subr.mxu0 0.0
        %7563 = vmatpush1.msra.mxu0 0.0
        %7564 = vmatprep.subr.mxu0 0.0
        %7565 = vmatpush1.msra.mxu0 0.0
        %7566 = vmatprep.subr.mxu0 0.0
        %7567 = vmatpush1.msra.mxu0 0.0
        %7568 = vmatprep.subr.mxu0 0.0
        %7569 = vmatpush1.msra.mxu0 0.0
        %7570 = vmatprep.subr.mxu0 0.0
        %7571 = vmatpush1.msra.mxu0 0.0
        %7572 = vmatprep.subr.mxu0 0.0
        %7573 = vmatpush1.msra.mxu0 0.0
        %7574 = vmatprep.subr.mxu0 0.0
        %7575 = vmatpush1.msra.mxu0 0.0
        %7576 = vmatprep.mubr.f32.mxu0 0.0
        %7577 = vmatmul.mubr.f32.gmra.mrb[0].mxu0 %v395
        %v7578 = vpop.f32.mrb[0].mxu0
        %v7579 = vadd.f32 0.0, %v7578
        %v7580 = vpop.f32.mrb[0].mxu0
        %v7581 = vadd.f32 0.0, %v7580
        %7582 = vdwg.mxu0
        %7583 = vmatprep.subr.mxu0 0.0
        %7584 = vmatpush1.msra.mxu0 1.0
        %7585 = vmatprep.subr.mxu0 0.0
        %7586 = vmatpush1.msra.mxu0 1.0
        %7587 = vmatprep.subr.mxu0 0.0
        %7588 = vmatpush1.msra.mxu0 1.0
        %7589 = vmatprep.subr.mxu0 0.0
        %7590 = vmatpush1.msra.mxu0 1.0
        %7591 = vmatprep.subr.mxu0 0.0
        %7592 = vmatpush1.msra.mxu0 1.0
        %7593 = vmatprep.subr.mxu0 0.0
        %7594 = vmatpush1.msra.mxu0 1.0
        %7595 = vmatprep.subr.mxu0 0.0
        %7596 = vmatpush1.msra.mxu0 1.0
        %7597 = vmatprep.subr.mxu0 0.0
        %7598 = vmatpush1.msra.mxu0 1.0
        %7599 = vmatprep.subr.mxu0 0.0
        %7600 = vmatpush1.msra.mxu0 1.0
        %7601 = vmatprep.subr.mxu0 0.0
        %7602 = vmatpush1.msra.mxu0 1.0
        %7603 = vmatprep.subr.mxu0 0.0
        %7604 = vmatpush1.msra.mxu0 1.0
        %7605 = vmatprep.subr.mxu0 0.0
        %7606 = vmatpush1.msra.mxu0 1.0
        %7607 = vmatprep.subr.mxu0 0.0
        %7608 = vmatpush1.msra.mxu0 1.0
        %7609 = vmatprep.subr.mxu0 0.0
        %7610 = vmatpush1.msra.mxu0 1.0
        %7611 = vmatprep.subr.mxu0 0.0
        %7612 = vmatpush1.msra.mxu0 1.0
        %7613 = vmatprep.subr.mxu0 0.0
        %7614 = vmatpush1.msra.mxu0 1.0
        %7615 = vmatprep.subr.mxu0 0.0
        %7616 = vmatpush1.msra.mxu0 1.0
        %7617 = vmatprep.subr.mxu0 0.0
        %7618 = vmatpush1.msra.mxu0 1.0
        %7619 = vmatprep.subr.mxu0 0.0
        %7620 = vmatpush1.msra.mxu0 1.0
        %7621 = vmatprep.subr.mxu0 0.0
        %7622 = vmatpush1.msra.mxu0 1.0
        %7623 = vmatprep.subr.mxu0 0.0
        %7624 = vmatpush1.msra.mxu0 1.0
        %7625 = vmatprep.subr.mxu0 0.0
        %7626 = vmatpush1.msra.mxu0 1.0
        %7627 = vmatprep.subr.mxu0 0.0
        %7628 = vmatpush1.msra.mxu0 1.0
        %7629 = vmatprep.subr.mxu0 0.0
        %7630 = vmatpush1.msra.mxu0 1.0
        %7631 = vmatprep.subr.mxu0 0.0
        %7632 = vmatpush1.msra.mxu0 1.0
        %7633 = vmatprep.subr.mxu0 0.0
        %7634 = vmatpush1.msra.mxu0 1.0
        %7635 = vmatprep.subr.mxu0 0.0
        %7636 = vmatpush1.msra.mxu0 1.0
        %7637 = vmatprep.subr.mxu0 0.0
        %7638 = vmatpush1.msra.mxu0 1.0
        %7639 = vmatprep.subr.mxu0 0.0
        %7640 = vmatpush1.msra.mxu0 1.0
        %7641 = vmatprep.subr.mxu0 0.0
        %7642 = vmatpush1.msra.mxu0 1.0
        %7643 = vmatprep.subr.mxu0 0.0
        %7644 = vmatpush1.msra.mxu0 1.0
        %7645 = vmatprep.subr.mxu0 0.0
        %7646 = vmatpush1.msra.mxu0 1.0
        %7647 = vmatprep.mubr.f32.mxu0 %v7502
        %7648 = vmatmul.mubr.f32.gmra.mrb[0].mxu0 %v7500
        %v7649 = vpop.f32.mrb[0].mxu0
        %v7650 = vadd.f32 0.0, %v7649
        %v7651 = vpop.f32.mrb[0].mxu0
        %7652 = vdwg.mxu0
        %s7653 = vtos %v7650
        %7654 = vmatprep.subr.mxu0 0.0
        %7655 = vmatpush1.msra.mxu0 1.0
        %7656 = vmatprep.subr.mxu0 0.0
        %7657 = vmatpush1.msra.mxu0 1.0
        %7658 = vmatprep.subr.mxu0 0.0
        %7659 = vmatpush1.msra.mxu0 1.0
        %7660 = vmatprep.subr.mxu0 0.0
        %7661 = vmatpush1.msra.mxu0 1.0
        %7662 = vmatprep.subr.mxu0 0.0
        %7663 = vmatpush1.msra.mxu0 1.0
        %7664 = vmatprep.subr.mxu0 0.0
        %7665 = vmatpush1.msra.mxu0 1.0
        %7666 = vmatprep.subr.mxu0 0.0
        %7667 = vmatpush1.msra.mxu0 1.0
        %7668 = vmatprep.subr.mxu0 0.0
        %7669 = vmatpush1.msra.mxu0 1.0
        %7670 = vmatprep.subr.mxu0 0.0
        %7671 = vmatpush1.msra.mxu0 1.0
        %7672 = vmatprep.subr.mxu0 0.0
        %7673 = vmatpush1.msra.mxu0 1.0
        %7674 = vmatprep.subr.mxu0 0.0
        %7675 = vmatpush1.msra.mxu0 1.0
        %7676 = vmatprep.subr.mxu0 0.0
        %7677 = vmatpush1.msra.mxu0 1.0
        %7678 = vmatprep.subr.mxu0 0.0
        %7679 = vmatpush1.msra.mxu0 1.0
        %7680 = vmatprep.subr.mxu0 0.0
        %7681 = vmatpush1.msra.mxu0 1.0
        %7682 = vmatprep.subr.mxu0 0.0
        %7683 = vmatpush1.msra.mxu0 1.0
        %7684 = vmatprep.subr.mxu0 0.0
        %7685 = vmatpush1.msra.mxu0 1.0
        %7686 = vmatprep.subr.mxu0 0.0
        %7687 = vmatpush1.msra.mxu0 1.0
        %7688 = vmatprep.subr.mxu0 0.0
        %7689 = vmatpush1.msra.mxu0 1.0
        %7690 = vmatprep.subr.mxu0 0.0
        %7691 = vmatpush1.msra.mxu0 1.0
        %7692 = vmatprep.subr.mxu0 0.0
        %7693 = vmatpush1.msra.mxu0 1.0
        %7694 = vmatprep.subr.mxu0 0.0
        %7695 = vmatpush1.msra.mxu0 1.0
        %7696 = vmatprep.subr.mxu0 0.0
        %7697 = vmatpush1.msra.mxu0 1.0
        %7698 = vmatprep.subr.mxu0 0.0
        %7699 = vmatpush1.msra.mxu0 1.0
        %7700 = vmatprep.subr.mxu0 0.0
        %7701 = vmatpush1.msra.mxu0 1.0
        %7702 = vmatprep.subr.mxu0 0.0
        %7703 = vmatpush1.msra.mxu0 1.0
        %7704 = vmatprep.subr.mxu0 0.0
        %7705 = vmatpush1.msra.mxu0 1.0
        %7706 = vmatprep.subr.mxu0 0.0
        %7707 = vmatpush1.msra.mxu0 1.0
        %7708 = vmatprep.subr.mxu0 0.0
        %7709 = vmatpush1.msra.mxu0 1.0
        %7710 = vmatprep.subr.mxu0 0.0
        %7711 = vmatpush1.msra.mxu0 1.0
        %7712 = vmatprep.subr.mxu0 0.0
        %7713 = vmatpush1.msra.mxu0 1.0
        %7714 = vmatprep.subr.mxu0 0.0
        %7715 = vmatpush1.msra.mxu0 1.0
        %7716 = vmatprep.subr.mxu0 0.0
        %7717 = vmatpush1.msra.mxu0 1.0
        %7718 = vmatprep.mubr.f32.mxu0 %v7581
        %7719 = vmatmul.mubr.f32.gmra.mrb[0].mxu0 %v7579
        %v7720 = vpop.f32.mrb[0].mxu0
        %v7721 = vadd.f32 0.0, %v7720
        %v7722 = vpop.f32.mrb[0].mxu0
        %7723 = vdwg.mxu0
        %s7724 = vtos %v7721
        %s7725 = smul.f32 %s7653, 0.00012207031
        %s7726 = smul.f32 %s7724, 0.00012207031
        %s7727 = smul.f32 %s7725, %s7725
        %s7728 = ssub.f32 %s7726, %s7727
        %s7729 = smax.f32 %s7728, 0.0
        %s7730 = sadd.f32 %s7729, 1e-16
        %v7731 = vstv %s7730
        %v7732 = vrsqrt.pop %v7731
        %s7733 = vtos %v7732
        %v7734 = vstv %s7733
        %v7735 = vmul.f32 %v7309, %v7734
        %v7736 = vmul.f32 %v7310, %v7734
        %v7737 = vmul.f32 %v7311, %v7734
        %v7738 = vmul.f32 %v7312, %v7734
        %v7739 = vstv %s7725
        %v7740 = vmul.f32 %v7739, %v7735
        %v7741 = vmul.f32 %v7739, %v7736
        %v7742 = vmul.f32 %v7739, %v7737
        %v7743 = vmul.f32 %v7739, %v7738
        %7748 = vrot.lane.b32.xlu0 %v7740, 1
        %v7749 = vpop.permute.xlu0 %7748
        %7750 = vrot.lane.b32.xlu0 %v7741, 1
        %v7751 = vpop.permute.xlu0 %7750
        %7752 = vrot.lane.b32.xlu0 %v7742, 1
        %v7753 = vpop.permute.xlu0 %7752
        %7754 = vrot.lane.b32.xlu0 %v7743, 1
        %v7755 = vpop.permute.xlu0 %7754
        %v7760 = vsub.f32 %v7309, %v7749
        %v7761 = vsub.f32 %v7310, %v7751
        %v7762 = vsub.f32 %v7311, %v7753
        %v7763 = vsub.f32 %v7312, %v7755
        %7765 = vset.pattern.permute.xlu0 1
        %7766 = vperm.xlu0 %7765, %v7735
        %v7767 = vpop.permute.xlu0 %7766
        %7770 = vset.pattern.permute.xlu0 1
        %7771 = vperm.xlu0 %7770, %v7736
        %v7772 = vpop.permute.xlu0 %7771
        %7775 = vset.pattern.permute.xlu0 1
        %7776 = vperm.xlu0 %7775, %v7737
        %v7777 = vpop.permute.xlu0 %7776
        %7780 = vset.pattern.permute.xlu0 1
        %7781 = vperm.xlu0 %7780, %v7738
        %v7782 = vpop.permute.xlu0 %7781
        %v7784 = vmul.f32 %v7425, %v7767
        %v7785 = vmul.f32 %v7426, %v7767
        %v7786 = vmul.f32 %v7427, %v7772
        %v7787 = vmul.f32 %v7428, %v7772
        %v7788 = vmul.f32 %v7429, %v7777
        %v7789 = vmul.f32 %v7430, %v7777
        %v7790 = vmul.f32 %v7431, %v7782
        %v7791 = vmul.f32 %v7432, %v7782
        %7793 = vset.pattern.permute.xlu0 2
        %7794 = vperm.xlu0 %7793, %v7760
        %v7795 = vpop.permute.xlu0 %7794
        %7798 = vset.pattern.permute.xlu0 2
        %7799 = vperm.xlu0 %7798, %v7761
        %v7800 = vpop.permute.xlu0 %7799
        %7803 = vset.pattern.permute.xlu0 2
        %7804 = vperm.xlu0 %7803, %v7762
        %v7805 = vpop.permute.xlu0 %7804
        %7808 = vset.pattern.permute.xlu0 2
        %7809 = vperm.xlu0 %7808, %v7763
        %v7810 = vpop.permute.xlu0 %7809
        %v7812 = vadd.f32 %v7784, %v7795
        %v7813 = vadd.f32 %v7785, %v7795
        %v7814 = vadd.f32 %v7786, %v7800
        %v7815 = vadd.f32 %v7787, %v7800
        %v7816 = vadd.f32 %v7788, %v7805
        %v7817 = vadd.f32 %v7789, %v7805
        %v7818 = vadd.f32 %v7790, %v7810
        %v7819 = vadd.f32 %v7791, %v7810
        %7820 = vset.pattern.permute.xlu0 4
        %7821 = vperm.xlu0 %7820, %v7309
        %v7822 = vpop.permute.xlu0 %7821
        %7824 = vset.pattern.permute.xlu0 4
        %7825 = vperm.xlu0 %7824, %v7310
        %v7826 = vpop.permute.xlu0 %7825
        %7828 = vset.pattern.permute.xlu0 4
        %7829 = vperm.xlu0 %7828, %v7311
        %v7830 = vpop.permute.xlu0 %7829
        %7832 = vset.pattern.permute.xlu0 4
        %7833 = vperm.xlu0 %7832, %v7312
        %v7834 = vpop.permute.xlu0 %7833
        %v7836 = vmul.f32 %v7822, %v7812
        %v7837 = vmul.f32 %v7822, %v7813
        %v7838 = vmul.f32 %v7826, %v7814
        %v7839 = vmul.f32 %v7826, %v7815
        %v7840 = vmul.f32 %v7830, %v7816
        %v7841 = vmul.f32 %v7830, %v7817
        %v7842 = vmul.f32 %v7834, %v7818
        %v7843 = vmul.f32 %v7834, %v7819
        %vm7844 = vcmp.ge.s32.totalorder %v267, 64
        %vm7845 = vcmp.ge.s32.totalorder %v268, 64
        %7846 = vrot.lane.b32.xlu0 %v7812, 64
        %v7847 = vpop.permute.xlu0 %7846
        %7848 = vrot.lane.b32.xlu0 %v7814, 64
        %v7849 = vpop.permute.xlu0 %7848
        %7850 = vrot.lane.b32.xlu0 %v7816, 64
        %v7851 = vpop.permute.xlu0 %7850
        %7852 = vrot.lane.b32.xlu0 %v7818, 64
        %v7853 = vpop.permute.xlu0 %7852
        %7854 = vrot.lane.b32.xlu0 %v7813, 64
        %v7855 = vpop.permute.xlu0 %7854
        %7856 = vrot.lane.b32.xlu0 %v7815, 64
        %v7857 = vpop.permute.xlu0 %7856
        %7858 = vrot.lane.b32.xlu0 %v7817, 64
        %v7859 = vpop.permute.xlu0 %7858
        %7860 = vrot.lane.b32.xlu0 %v7819, 64
        %v7861 = vpop.permute.xlu0 %7860
        %vm7862 = vcmp.lt.s32.totalorder %v267, 64
        %v7863 = vsel %vm7862, %v7847, %v7855
        %v7864 = vsel %vm7862, %v7849, %v7857
        %v7865 = vsel %vm7862, %v7851, %v7859
        %v7866 = vsel %vm7862, %v7853, %v7861
        %v7867 = vsel %vm7862, %v7855, %v7847
        %v7868 = vsel %vm7862, %v7857, %v7849
        %v7869 = vsel %vm7862, %v7859, %v7851
        %v7870 = vsel %vm7862, %v7861, %v7853
        %v7871 = vsel %vm7844, 1, 0
        %v7872 = vsel %vm7845, 1, 0
        %vm7873 = vcmp.eq.s32.totalorder %v7871, 1
        %vm7874 = vcmp.eq.s32.totalorder %v7872, 1
        %v7875 = vsel %vm7873, %v7867, 0.0
        %v7876 = vsel %vm7874, %v7863, 0.0
        %v7877 = vsel %vm7873, %v7868, 0.0
        %v7878 = vsel %vm7874, %v7864, 0.0
        %v7879 = vsel %vm7873, %v7869, 0.0
        %v7880 = vsel %vm7874, %v7865, 0.0
        %v7881 = vsel %vm7873, %v7870, 0.0
        %v7882 = vsel %vm7874, %v7866, 0.0
        %7883 = vset.pattern.permute.xlu0 3
        %7884 = vperm.xlu0 %7883, %v7309
        %v7885 = vpop.permute.xlu0 %7884
        %7887 = vset.pattern.permute.xlu0 3
        %7888 = vperm.xlu0 %7887, %v7310
        %v7889 = vpop.permute.xlu0 %7888
        %7891 = vset.pattern.permute.xlu0 3
        %7892 = vperm.xlu0 %7891, %v7311
        %v7893 = vpop.permute.xlu0 %7892
        %7895 = vset.pattern.permute.xlu0 3
        %7896 = vperm.xlu0 %7895, %v7312
        %v7897 = vpop.permute.xlu0 %7896
        %v7899 = vmul.f32 %v7885, %v7875
        %v7900 = vmul.f32 %v7885, %v7876
        %v7901 = vmul.f32 %v7889, %v7877
        %v7902 = vmul.f32 %v7889, %v7878
        %v7903 = vmul.f32 %v7893, %v7879
        %v7904 = vmul.f32 %v7893, %v7880
        %v7905 = vmul.f32 %v7897, %v7881
        %v7906 = vmul.f32 %v7897, %v7882
        %v7907 = vadd.f32 %v7836, %v7899
        %v7908 = vadd.f32 %v7837, %v7900
        %v7909 = vadd.f32 %v7838, %v7901
        %v7910 = vadd.f32 %v7839, %v7902
        %v7911 = vadd.f32 %v7840, %v7903
        %v7912 = vadd.f32 %v7841, %v7904
        %v7913 = vadd.f32 %v7842, %v7905
        %v7914 = vadd.f32 %v7843, %v7906
        %vm7915 = vcmp.lt.s32.totalorder %v267, 192
        %vm7916 = vcmp.lt.s32.totalorder %v268, 192
        %v7917 = vsel %vm7915, 1, 0
        %v7918 = vsel %vm7916, 1, 0
        %vm7919 = vcmp.eq.s32.totalorder %v7917, 1
        %vm7920 = vcmp.eq.s32.totalorder %v7918, 1
        %v7921 = vsel %vm7919, %v7863, 0.0
        %v7922 = vsel %vm7920, %v7867, 0.0
        %v7923 = vsel %vm7919, %v7864, 0.0
        %v7924 = vsel %vm7920, %v7868, 0.0
        %v7925 = vsel %vm7919, %v7865, 0.0
        %v7926 = vsel %vm7920, %v7869, 0.0
        %v7927 = vsel %vm7919, %v7866, 0.0
        %v7928 = vsel %vm7920, %v7870, 0.0
        %7929 = vset.pattern.permute.xlu0 5
        %7930 = vperm.xlu0 %7929, %v7309
        %v7931 = vpop.permute.xlu0 %7930
        %7933 = vset.pattern.permute.xlu0 5
        %7934 = vperm.xlu0 %7933, %v7310
        %v7935 = vpop.permute.xlu0 %7934
        %7937 = vset.pattern.permute.xlu0 5
        %7938 = vperm.xlu0 %7937, %v7311
        %v7939 = vpop.permute.xlu0 %7938
        %7941 = vset.pattern.permute.xlu0 5
        %7942 = vperm.xlu0 %7941, %v7312
        %v7943 = vpop.permute.xlu0 %7942
        %v7945 = vmul.f32 %v7931, %v7921
        %v7946 = vmul.f32 %v7931, %v7922
        %v7947 = vmul.f32 %v7935, %v7923
        %v7948 = vmul.f32 %v7935, %v7924
        %v7949 = vmul.f32 %v7939, %v7925
        %v7950 = vmul.f32 %v7939, %v7926
        %v7951 = vmul.f32 %v7943, %v7927
        %v7952 = vmul.f32 %v7943, %v7928
        %v7953 = vadd.f32 %v7907, %v7945
        %v7954 = vadd.f32 %v7908, %v7946
        %v7955 = vadd.f32 %v7909, %v7947
        %v7956 = vadd.f32 %v7910, %v7948
        %v7957 = vadd.f32 %v7911, %v7949
        %v7958 = vadd.f32 %v7912, %v7950
        %v7959 = vadd.f32 %v7913, %v7951
        %v7960 = vadd.f32 %v7914, %v7952
        %vm7961 = vcmp.ge.f32.partialorder %v7953, 0.0
        %vm7962 = vcmp.ge.f32.partialorder %v7954, 0.0
        %vm7963 = vcmp.ge.f32.partialorder %v7955, 0.0
        %vm7964 = vcmp.ge.f32.partialorder %v7956, 0.0
        %vm7965 = vcmp.ge.f32.partialorder %v7957, 0.0
        %vm7966 = vcmp.ge.f32.partialorder %v7958, 0.0
        %vm7967 = vcmp.ge.f32.partialorder %v7959, 0.0
        %vm7968 = vcmp.ge.f32.partialorder %v7960, 0.0
        %7969 = vset.pattern.permute.xlu0 6
        %7970 = vperm.xlu0 %7969, %v7309
        %v7971 = vpop.permute.xlu0 %7970
        %7973 = vset.pattern.permute.xlu0 6
        %7974 = vperm.xlu0 %7973, %v7310
        %v7975 = vpop.permute.xlu0 %7974
        %7977 = vset.pattern.permute.xlu0 6
        %7978 = vperm.xlu0 %7977, %v7311
        %v7979 = vpop.permute.xlu0 %7978
        %7981 = vset.pattern.permute.xlu0 6
        %7982 = vperm.xlu0 %7981, %v7312
        %v7983 = vpop.permute.xlu0 %7982
        %v7985 = vmul.f32 %v7971, %v7953
        %v7986 = vmul.f32 %v7971, %v7954
        %v7987 = vmul.f32 %v7975, %v7955
        %v7988 = vmul.f32 %v7975, %v7956
        %v7989 = vmul.f32 %v7979, %v7957
        %v7990 = vmul.f32 %v7979, %v7958
        %v7991 = vmul.f32 %v7983, %v7959
        %v7992 = vmul.f32 %v7983, %v7960
        %v7993 = vsel %vm7961, %v7953, %v7985
        %v7994 = vsel %vm7962, %v7954, %v7986
        %v7995 = vsel %vm7963, %v7955, %v7987
        %v7996 = vsel %vm7964, %v7956, %v7988
        %v7997 = vsel %vm7965, %v7957, %v7989
        %v7998 = vsel %vm7966, %v7958, %v7990
        %v7999 = vsel %vm7967, %v7959, %v7991
        %v8000 = vsel %vm7968, %v7960, %v7992
        %8001 = vmatprep.subr.mxu0 %v7994
        %8002 = vmatpush1.msra.mxu0 %v7993
        %8003 = vmatprep.subr.mxu0 %v7996
        %8004 = vmatpush1.msra.mxu0 %v7995
        %8005 = vmatprep.subr.mxu0 %v7998
        %8006 = vmatpush1.msra.mxu0 %v7997
        %8007 = vmatprep.subr.mxu0 %v8000
        %8008 = vmatpush1.msra.mxu0 %v7999
        %8009 = vmatprep.subr.mxu0 0.0
        %8010 = vmatpush1.msra.mxu0 0.0
        %8011 = vmatprep.subr.mxu0 0.0
        %8012 = vmatpush1.msra.mxu0 0.0
        %8013 = vmatprep.subr.mxu0 0.0
        %8014 = vmatpush1.msra.mxu0 0.0
        %8015 = vmatprep.subr.mxu0 0.0
        %8016 = vmatpush1.msra.mxu0 0.0
        %8017 = vmatprep.subr.mxu0 0.0
        %8018 = vmatpush1.msra.mxu0 0.0
        %8019 = vmatprep.subr.mxu0 0.0
        %8020 = vmatpush1.msra.mxu0 0.0
        %8021 = vmatprep.subr.mxu0 0.0
        %8022 = vmatpush1.msra.mxu0 0.0
        %8023 = vmatprep.subr.mxu0 0.0
        %8024 = vmatpush1.msra.mxu0 0.0
        %8025 = vmatprep.subr.mxu0 0.0
        %8026 = vmatpush1.msra.mxu0 0.0
        %8027 = vmatprep.subr.mxu0 0.0
        %8028 = vmatpush1.msra.mxu0 0.0
        %8029 = vmatprep.subr.mxu0 0.0
        %8030 = vmatpush1.msra.mxu0 0.0
        %8031 = vmatprep.subr.mxu0 0.0
        %8032 = vmatpush1.msra.mxu0 0.0
        %8033 = vmatprep.subr.mxu0 0.0
        %8034 = vmatpush1.msra.mxu0 0.0
        %8035 = vmatprep.subr.mxu0 0.0
        %8036 = vmatpush1.msra.mxu0 0.0
        %8037 = vmatprep.subr.mxu0 0.0
        %8038 = vmatpush1.msra.mxu0 0.0
        %8039 = vmatprep.subr.mxu0 0.0
        %8040 = vmatpush1.msra.mxu0 0.0
        %8041 = vmatprep.subr.mxu0 0.0
        %8042 = vmatpush1.msra.mxu0 0.0
        %8043 = vmatprep.subr.mxu0 0.0
        %8044 = vmatpush1.msra.mxu0 0.0
        %8045 = vmatprep.subr.mxu0 0.0
        %8046 = vmatpush1.msra.mxu0 0.0
        %8047 = vmatprep.subr.mxu0 0.0
        %8048 = vmatpush1.msra.mxu0 0.0
        %8049 = vmatprep.subr.mxu0 0.0
        %8050 = vmatpush1.msra.mxu0 0.0
        %8051 = vmatprep.subr.mxu0 0.0
        %8052 = vmatpush1.msra.mxu0 0.0
        %8053 = vmatprep.subr.mxu0 0.0
        %8054 = vmatpush1.msra.mxu0 0.0
        %8055 = vmatprep.subr.mxu0 0.0
        %8056 = vmatpush1.msra.mxu0 0.0
        %8057 = vmatprep.subr.mxu0 0.0
        %8058 = vmatpush1.msra.mxu0 0.0
        %8059 = vmatprep.subr.mxu0 0.0
        %8060 = vmatpush1.msra.mxu0 0.0
        %8061 = vmatprep.subr.mxu0 0.0
        %8062 = vmatpush1.msra.mxu0 0.0
        %8063 = vmatprep.subr.mxu0 0.0
        %8064 = vmatpush1.msra.mxu0 0.0
        %8065 = vmatprep.mubr.f32.mxu0 0.0
        %8066 = vmatmul.mubr.f32.gmra.mrb[0].mxu0 %v395
        %v8067 = vpop.f32.mrb[0].mxu0
        %v8068 = vadd.f32 0.0, %v8067
        %v8069 = vpop.f32.mrb[0].mxu0
        %v8070 = vadd.f32 0.0, %v8069
        %8071 = vdwg.mxu0
        %v8072 = vmul.f32 %v7993, %v7993
        %v8073 = vmul.f32 %v7994, %v7994
        %v8074 = vmul.f32 %v7995, %v7995
        %v8075 = vmul.f32 %v7996, %v7996
        %v8076 = vmul.f32 %v7997, %v7997
        %v8077 = vmul.f32 %v7998, %v7998
        %v8078 = vmul.f32 %v7999, %v7999
        %v8079 = vmul.f32 %v8000, %v8000
        %8080 = vmatprep.subr.mxu0 %v8073
        %8081 = vmatpush1.msra.mxu0 %v8072
        %8082 = vmatprep.subr.mxu0 %v8075
        %8083 = vmatpush1.msra.mxu0 %v8074
        %8084 = vmatprep.subr.mxu0 %v8077
        %8085 = vmatpush1.msra.mxu0 %v8076
        %8086 = vmatprep.subr.mxu0 %v8079
        %8087 = vmatpush1.msra.mxu0 %v8078
        %8088 = vmatprep.subr.mxu0 0.0
        %8089 = vmatpush1.msra.mxu0 0.0
        %8090 = vmatprep.subr.mxu0 0.0
        %8091 = vmatpush1.msra.mxu0 0.0
        %8092 = vmatprep.subr.mxu0 0.0
        %8093 = vmatpush1.msra.mxu0 0.0
        %8094 = vmatprep.subr.mxu0 0.0
        %8095 = vmatpush1.msra.mxu0 0.0
        %8096 = vmatprep.subr.mxu0 0.0
        %8097 = vmatpush1.msra.mxu0 0.0
        %8098 = vmatprep.subr.mxu0 0.0
        %8099 = vmatpush1.msra.mxu0 0.0
        %8100 = vmatprep.subr.mxu0 0.0
        %8101 = vmatpush1.msra.mxu0 0.0
        %8102 = vmatprep.subr.mxu0 0.0
        %8103 = vmatpush1.msra.mxu0 0.0
        %8104 = vmatprep.subr.mxu0 0.0
        %8105 = vmatpush1.msra.mxu0 0.0
        %8106 = vmatprep.subr.mxu0 0.0
        %8107 = vmatpush1.msra.mxu0 0.0
        %8108 = vmatprep.subr.mxu0 0.0
        %8109 = vmatpush1.msra.mxu0 0.0
        %8110 = vmatprep.subr.mxu0 0.0
        %8111 = vmatpush1.msra.mxu0 0.0
        %8112 = vmatprep.subr.mxu0 0.0
        %8113 = vmatpush1.msra.mxu0 0.0
        %8114 = vmatprep.subr.mxu0 0.0
        %8115 = vmatpush1.msra.mxu0 0.0
        %8116 = vmatprep.subr.mxu0 0.0
        %8117 = vmatpush1.msra.mxu0 0.0
        %8118 = vmatprep.subr.mxu0 0.0
        %8119 = vmatpush1.msra.mxu0 0.0
        %8120 = vmatprep.subr.mxu0 0.0
        %8121 = vmatpush1.msra.mxu0 0.0
        %8122 = vmatprep.subr.mxu0 0.0
        %8123 = vmatpush1.msra.mxu0 0.0
        %8124 = vmatprep.subr.mxu0 0.0
        %8125 = vmatpush1.msra.mxu0 0.0
        %8126 = vmatprep.subr.mxu0 0.0
        %8127 = vmatpush1.msra.mxu0 0.0
        %8128 = vmatprep.subr.mxu0 0.0
        %8129 = vmatpush1.msra.mxu0 0.0
        %8130 = vmatprep.subr.mxu0 0.0
        %8131 = vmatpush1.msra.mxu0 0.0
        %8132 = vmatprep.subr.mxu0 0.0
        %8133 = vmatpush1.msra.mxu0 0.0
        %8134 = vmatprep.subr.mxu0 0.0
        %8135 = vmatpush1.msra.mxu0 0.0
        %8136 = vmatprep.subr.mxu0 0.0
        %8137 = vmatpush1.msra.mxu0 0.0
        %8138 = vmatprep.subr.mxu0 0.0
        %8139 = vmatpush1.msra.mxu0 0.0
        %8140 = vmatprep.subr.mxu0 0.0
        %8141 = vmatpush1.msra.mxu0 0.0
        %8142 = vmatprep.subr.mxu0 0.0
        %8143 = vmatpush1.msra.mxu0 0.0
        %8144 = vmatprep.mubr.f32.mxu0 0.0
        %8145 = vmatmul.mubr.f32.gmra.mrb[0].mxu0 %v395
        %v8146 = vpop.f32.mrb[0].mxu0
        %v8147 = vadd.f32 0.0, %v8146
        %v8148 = vpop.f32.mrb[0].mxu0
        %v8149 = vadd.f32 0.0, %v8148
        %8150 = vdwg.mxu0
        %8151 = vmatprep.subr.mxu0 0.0
        %8152 = vmatpush1.msra.mxu0 1.0
        %8153 = vmatprep.subr.mxu0 0.0
        %8154 = vmatpush1.msra.mxu0 1.0
        %8155 = vmatprep.subr.mxu0 0.0
        %8156 = vmatpush1.msra.mxu0 1.0
        %8157 = vmatprep.subr.mxu0 0.0
        %8158 = vmatpush1.msra.mxu0 1.0
        %8159 = vmatprep.subr.mxu0 0.0
        %8160 = vmatpush1.msra.mxu0 1.0
        %8161 = vmatprep.subr.mxu0 0.0
        %8162 = vmatpush1.msra.mxu0 1.0
        %8163 = vmatprep.subr.mxu0 0.0
        %8164 = vmatpush1.msra.mxu0 1.0
        %8165 = vmatprep.subr.mxu0 0.0
        %8166 = vmatpush1.msra.mxu0 1.0
        %8167 = vmatprep.subr.mxu0 0.0
        %8168 = vmatpush1.msra.mxu0 1.0
        %8169 = vmatprep.subr.mxu0 0.0
        %8170 = vmatpush1.msra.mxu0 1.0
        %8171 = vmatprep.subr.mxu0 0.0
        %8172 = vmatpush1.msra.mxu0 1.0
        %8173 = vmatprep.subr.mxu0 0.0
        %8174 = vmatpush1.msra.mxu0 1.0
        %8175 = vmatprep.subr.mxu0 0.0
        %8176 = vmatpush1.msra.mxu0 1.0
        %8177 = vmatprep.subr.mxu0 0.0
        %8178 = vmatpush1.msra.mxu0 1.0
        %8179 = vmatprep.subr.mxu0 0.0
        %8180 = vmatpush1.msra.mxu0 1.0
        %8181 = vmatprep.subr.mxu0 0.0
        %8182 = vmatpush1.msra.mxu0 1.0
        %8183 = vmatprep.subr.mxu0 0.0
        %8184 = vmatpush1.msra.mxu0 1.0
        %8185 = vmatprep.subr.mxu0 0.0
        %8186 = vmatpush1.msra.mxu0 1.0
        %8187 = vmatprep.subr.mxu0 0.0
        %8188 = vmatpush1.msra.mxu0 1.0
        %8189 = vmatprep.subr.mxu0 0.0
        %8190 = vmatpush1.msra.mxu0 1.0
        %8191 = vmatprep.subr.mxu0 0.0
        %8192 = vmatpush1.msra.mxu0 1.0
        %8193 = vmatprep.subr.mxu0 0.0
        %8194 = vmatpush1.msra.mxu0 1.0
        %8195 = vmatprep.subr.mxu0 0.0
        %8196 = vmatpush1.msra.mxu0 1.0
        %8197 = vmatprep.subr.mxu0 0.0
        %8198 = vmatpush1.msra.mxu0 1.0
        %8199 = vmatprep.subr.mxu0 0.0
        %8200 = vmatpush1.msra.mxu0 1.0
        %8201 = vmatprep.subr.mxu0 0.0
        %8202 = vmatpush1.msra.mxu0 1.0
        %8203 = vmatprep.subr.mxu0 0.0
        %8204 = vmatpush1.msra.mxu0 1.0
        %8205 = vmatprep.subr.mxu0 0.0
        %8206 = vmatpush1.msra.mxu0 1.0
        %8207 = vmatprep.subr.mxu0 0.0
        %8208 = vmatpush1.msra.mxu0 1.0
        %8209 = vmatprep.subr.mxu0 0.0
        %8210 = vmatpush1.msra.mxu0 1.0
        %8211 = vmatprep.subr.mxu0 0.0
        %8212 = vmatpush1.msra.mxu0 1.0
        %8213 = vmatprep.subr.mxu0 0.0
        %8214 = vmatpush1.msra.mxu0 1.0
        %8215 = vmatprep.mubr.f32.mxu0 %v8070
        %8216 = vmatmul.mubr.f32.gmra.mrb[0].mxu0 %v8068
        %v8217 = vpop.f32.mrb[0].mxu0
        %v8218 = vadd.f32 0.0, %v8217
        %v8219 = vpop.f32.mrb[0].mxu0
        %8220 = vdwg.mxu0
        %s8221 = vtos %v8218
        %8222 = vmatprep.subr.mxu0 0.0
        %8223 = vmatpush1.msra.mxu0 1.0
        %8224 = vmatprep.subr.mxu0 0.0
        %8225 = vmatpush1.msra.mxu0 1.0
        %8226 = vmatprep.subr.mxu0 0.0
        %8227 = vmatpush1.msra.mxu0 1.0
        %8228 = vmatprep.subr.mxu0 0.0
        %8229 = vmatpush1.msra.mxu0 1.0
        %8230 = vmatprep.subr.mxu0 0.0
        %8231 = vmatpush1.msra.mxu0 1.0
        %8232 = vmatprep.subr.mxu0 0.0
        %8233 = vmatpush1.msra.mxu0 1.0
        %8234 = vmatprep.subr.mxu0 0.0
        %8235 = vmatpush1.msra.mxu0 1.0
        %8236 = vmatprep.subr.mxu0 0.0
        %8237 = vmatpush1.msra.mxu0 1.0
        %8238 = vmatprep.subr.mxu0 0.0
        %8239 = vmatpush1.msra.mxu0 1.0
        %8240 = vmatprep.subr.mxu0 0.0
        %8241 = vmatpush1.msra.mxu0 1.0
        %8242 = vmatprep.subr.mxu0 0.0
        %8243 = vmatpush1.msra.mxu0 1.0
        %8244 = vmatprep.subr.mxu0 0.0
        %8245 = vmatpush1.msra.mxu0 1.0
        %8246 = vmatprep.subr.mxu0 0.0
        %8247 = vmatpush1.msra.mxu0 1.0
        %8248 = vmatprep.subr.mxu0 0.0
        %8249 = vmatpush1.msra.mxu0 1.0
        %8250 = vmatprep.subr.mxu0 0.0
        %8251 = vmatpush1.msra.mxu0 1.0
        %8252 = vmatprep.subr.mxu0 0.0
        %8253 = vmatpush1.msra.mxu0 1.0
        %8254 = vmatprep.subr.mxu0 0.0
        %8255 = vmatpush1.msra.mxu0 1.0
        %8256 = vmatprep.subr.mxu0 0.0
        %8257 = vmatpush1.msra.mxu0 1.0
        %8258 = vmatprep.subr.mxu0 0.0
        %8259 = vmatpush1.msra.mxu0 1.0
        %8260 = vmatprep.subr.mxu0 0.0
        %8261 = vmatpush1.msra.mxu0 1.0
        %8262 = vmatprep.subr.mxu0 0.0
        %8263 = vmatpush1.msra.mxu0 1.0
        %8264 = vmatprep.subr.mxu0 0.0
        %8265 = vmatpush1.msra.mxu0 1.0
        %8266 = vmatprep.subr.mxu0 0.0
        %8267 = vmatpush1.msra.mxu0 1.0
        %8268 = vmatprep.subr.mxu0 0.0
        %8269 = vmatpush1.msra.mxu0 1.0
        %8270 = vmatprep.subr.mxu0 0.0
        %8271 = vmatpush1.msra.mxu0 1.0
        %8272 = vmatprep.subr.mxu0 0.0
        %8273 = vmatpush1.msra.mxu0 1.0
        %8274 = vmatprep.subr.mxu0 0.0
        %8275 = vmatpush1.msra.mxu0 1.0
        %8276 = vmatprep.subr.mxu0 0.0
        %8277 = vmatpush1.msra.mxu0 1.0
        %8278 = vmatprep.subr.mxu0 0.0
        %8279 = vmatpush1.msra.mxu0 1.0
        %8280 = vmatprep.subr.mxu0 0.0
        %8281 = vmatpush1.msra.mxu0 1.0
        %8282 = vmatprep.subr.mxu0 0.0
        %8283 = vmatpush1.msra.mxu0 1.0
        %8284 = vmatprep.subr.mxu0 0.0
        %8285 = vmatpush1.msra.mxu0 1.0
        %8286 = vmatprep.mubr.f32.mxu0 %v8149
        %8287 = vmatmul.mubr.f32.gmra.mrb[0].mxu0 %v8147
        %v8288 = vpop.f32.mrb[0].mxu0
        %v8289 = vadd.f32 0.0, %v8288
        %v8290 = vpop.f32.mrb[0].mxu0
        %8291 = vdwg.mxu0
        %s8292 = vtos %v8289
        %s8293 = smul.f32 %s8221, 0.00012207031
        %s8294 = smul.f32 %s8292, 0.00012207031
        %s8295 = smul.f32 %s8293, %s8293
        %s8296 = ssub.f32 %s8294, %s8295
        %s8297 = smax.f32 %s8296, 0.0
        %s8298 = sadd.f32 %s8297, 1e-16
        %v8299 = vstv %s8298
        %v8300 = vrsqrt.pop %v8299
        %s8301 = vtos %v8300
        %s8302 = scalar_lea.vmem %s3, 96
        %v8303 = vld [vmem:[%s8302] sm:$0xf]
        %v8304 = vld [vmem:[%s8302 + $0x4] sm:$0xf]
        %v8305 = vld [vmem:[%s8302 + $0x8] sm:$0xf]
        %v8306 = vld [vmem:[%s8302 + $0xc] sm:$0xf]
        %v8307 = vpack.c.bf16 %v7995, %v7993
        %v8308 = vpack.c.bf16 %v7996, %v7994
        %v8309 = vpack.c.bf16 %v7999, %v7997
        %v8310 = vpack.c.bf16 %v8000, %v7998
        %v8315 = vunpack.c.l.b16 %v8303
        %v8316 = vunpack.c.l.b16 %v8304
        %v8317 = vunpack.c.l.b16 %v8305
        %v8318 = vunpack.c.l.b16 %v8306
        %v8319 = vpack.c.b16 %v8316, %v8315
        %v8320 = vpack.c.b16 %v8318, %v8317
        %v8322 = vsel %vm393, %v8319, 0
        %v8325 = vsel %vm393, %v8320, 0
        %8327 = vmatprep.subr.bf16.mxu0 %v8308
        %8328 = vmatpush1.bf16.msra.mxu0 %v8307
        %8329 = vmatprep.subr.bf16.mxu0 %v8310
        %8330 = vmatpush1.bf16.msra.mxu0 %v8309
        %8331 = vmatprep.subr.bf16.mxu0 0
        %8332 = vmatpush1.bf16.msra.mxu0 0
        %8333 = vmatprep.subr.bf16.mxu0 0
        %8334 = vmatpush1.bf16.msra.mxu0 0
        %8335 = vmatprep.subr.bf16.mxu0 0
        %8336 = vmatpush1.bf16.msra.mxu0 0
        %8337 = vmatprep.subr.bf16.mxu0 0
        %8338 = vmatpush1.bf16.msra.mxu0 0
        %8339 = vmatprep.subr.bf16.mxu0 0
        %8340 = vmatpush1.bf16.msra.mxu0 0
        %8341 = vmatprep.subr.bf16.mxu0 0
        %8342 = vmatpush1.bf16.msra.mxu0 0
        %8343 = vmatprep.subr.bf16.mxu0 0
        %8344 = vmatpush1.bf16.msra.mxu0 0
        %8345 = vmatprep.subr.bf16.mxu0 0
        %8346 = vmatpush1.bf16.msra.mxu0 0
        %8347 = vmatprep.subr.bf16.mxu0 0
        %8348 = vmatpush1.bf16.msra.mxu0 0
        %8349 = vmatprep.subr.bf16.mxu0 0
        %8350 = vmatpush1.bf16.msra.mxu0 0
        %8351 = vmatprep.subr.bf16.mxu0 0
        %8352 = vmatpush1.bf16.msra.mxu0 0
        %8353 = vmatprep.subr.bf16.mxu0 0
        %8354 = vmatpush1.bf16.msra.mxu0 0
        %8355 = vmatprep.subr.bf16.mxu0 0
        %8356 = vmatpush1.bf16.msra.mxu0 0
        %8357 = vmatprep.subr.bf16.mxu0 0
        %8358 = vmatpush1.bf16.msra.mxu0 0
        %8359 = vmatprep.mubr.bf16.mxu0 0
        %8360 = vmatmul.mubr.bf16.gmra.mrb[0].mxu0 %v8322
        %v8361 = vpop.f32.mrb[0].mxu0
        %v8362 = vadd.f32 0.0, %v8361
        %v8363 = vpop.f32.mrb[0].mxu0
        %v8364 = vadd.f32 0.0, %v8363
        %v8365 = vpop.f32.mrb[0].mxu0
        %v8366 = vadd.f32 0.0, %v8365
        %v8367 = vpop.f32.mrb[0].mxu0
        %v8368 = vadd.f32 0.0, %v8367
        %8369 = vmatprep.mubr.bf16.mxu0 0
        %8370 = vmatmul.mubr.bf16.gmra.mrb[0].mxu0 %v8325
        %v8371 = vpop.f32.mrb[0].mxu0
        %v8372 = vadd.f32 0.0, %v8371
        %v8373 = vpop.f32.mrb[0].mxu0
        %v8374 = vadd.f32 0.0, %v8373
        %v8375 = vpop.f32.mrb[0].mxu0
        %v8376 = vadd.f32 0.0, %v8375
        %v8377 = vpop.f32.mrb[0].mxu0
        %v8378 = vadd.f32 0.0, %v8377
        %8379 = vdwg.mxu0
        %s8380 = scalar_lea.vmem %s4, 192
        %v8381 = vld [vmem:[%s8380] sm:$0xff]
        %v8382 = vld [vmem:[%s8380 + $0x8] sm:$0xff]
        %v8383 = vld [vmem:[%s8380 + $0x10] sm:$0xff]
        %v8384 = vld [vmem:[%s8380 + $0x18] sm:$0xff]
        %s8385 = smul.f32 %s8293, %s8301
        %v8386 = vstv %s8385
        %v8387 = vmul.f32 %v8386, %v8381
        %v8388 = vmul.f32 %v8386, %v8382
        %v8389 = vmul.f32 %v8386, %v8383
        %v8390 = vmul.f32 %v8386, %v8384
        %8395 = vrot.lane.b32.xlu0 %v8387, 1
        %v8396 = vpop.permute.xlu0 %8395
        %8397 = vrot.lane.b32.xlu0 %v8388, 1
        %v8398 = vpop.permute.xlu0 %8397
        %8399 = vrot.lane.b32.xlu0 %v8389, 1
        %v8400 = vpop.permute.xlu0 %8399
        %8401 = vrot.lane.b32.xlu0 %v8390, 1
        %v8402 = vpop.permute.xlu0 %8401
        %v8407 = vsub.f32 %v8381, %v8396
        %v8408 = vsub.f32 %v8382, %v8398
        %v8409 = vsub.f32 %v8383, %v8400
        %v8410 = vsub.f32 %v8384, %v8402
        %v8411 = vstv %s8301
        %v8412 = vmul.f32 %v8362, %v8411
        %v8413 = vmul.f32 %v8364, %v8411
        %v8414 = vmul.f32 %v8366, %v8411
        %v8415 = vmul.f32 %v8368, %v8411
        %v8416 = vmul.f32 %v8372, %v8411
        %v8417 = vmul.f32 %v8374, %v8411
        %v8418 = vmul.f32 %v8376, %v8411
        %v8419 = vmul.f32 %v8378, %v8411
        %8421 = vset.pattern.permute.xlu0 1
        %8422 = vperm.xlu0 %8421, %v8407
        %v8423 = vpop.permute.xlu0 %8422
        %8426 = vset.pattern.permute.xlu0 1
        %8427 = vperm.xlu0 %8426, %v8408
        %v8428 = vpop.permute.xlu0 %8427
        %8431 = vset.pattern.permute.xlu0 1
        %8432 = vperm.xlu0 %8431, %v8409
        %v8433 = vpop.permute.xlu0 %8432
        %8436 = vset.pattern.permute.xlu0 1
        %8437 = vperm.xlu0 %8436, %v8410
        %v8438 = vpop.permute.xlu0 %8437
        %v8440 = vadd.f32 %v8412, %v8423
        %v8441 = vadd.f32 %v8413, %v8423
        %v8442 = vadd.f32 %v8414, %v8428
        %v8443 = vadd.f32 %v8415, %v8428
        %v8444 = vadd.f32 %v8416, %v8433
        %v8445 = vadd.f32 %v8417, %v8433
        %v8446 = vadd.f32 %v8418, %v8438
        %v8447 = vadd.f32 %v8419, %v8438
        %v8448 = vadd.f32 %v8440, %v7300
        %v8449 = vadd.f32 %v8441, %v7301
        %v8450 = vadd.f32 %v8442, %v7302
        %v8451 = vadd.f32 %v8443, %v7303
        %v8452 = vadd.f32 %v7304, %v8444
        %v8453 = vadd.f32 %v7305, %v8445
        %v8454 = vadd.f32 %v7306, %v8446
        %v8455 = vadd.f32 %v7307, %v8447
        %s8456 = scalar_lea.vmem %s2, 224
        %v8457 = vld [vmem:[%s8456] sm:$0xff]
        %v8458 = vld [vmem:[%s8456 + $0x8] sm:$0xff]
        %v8459 = vld [vmem:[%s8456 + $0x10] sm:$0xff]
        %v8460 = vld [vmem:[%s8456 + $0x18] sm:$0xff]
        %s8461 = scalar_lea.vmem %s1, 112
        %v8462 = vld [vmem:[%s8461] sm:$0xf]
        %v8463 = vld [vmem:[%s8461 + $0x4] sm:$0xf]
        %v8464 = vld [vmem:[%s8461 + $0x8] sm:$0xf]
        %v8465 = vld [vmem:[%s8461 + $0xc] sm:$0xf]
        %v8466 = vpack.c.bf16 %v8450, %v8448
        %v8467 = vpack.c.bf16 %v8451, %v8449
        %v8472 = vunpack.c.l.b16 %v8462
        %v8473 = vunpack.c.l.b16 %v8463
        %v8474 = vunpack.c.l.b16 %v8464
        %v8475 = vunpack.c.l.b16 %v8465
        %v8476 = vpack.c.b16 %v8473, %v8472
        %v8477 = vpack.c.b16 %v8475, %v8474
        %v8479 = vsel %vm289, %v8476, 0
        %v8482 = vsel %vm289, %v8477, 0
        %8484 = vmatprep.subr.bf16.mxu0 %v8467
        %8485 = vmatpush1.bf16.msra.mxu0 %v8466
        %8486 = vmatprep.subr.bf16.mxu0 0
        %8487 = vmatpush1.bf16.msra.mxu0 0
        %8488 = vmatprep.subr.bf16.mxu0 0
        %8489 = vmatpush1.bf16.msra.mxu0 0
        %8490 = vmatprep.subr.bf16.mxu0 0
        %8491 = vmatpush1.bf16.msra.mxu0 0
        %8492 = vmatprep.subr.bf16.mxu0 0
        %8493 = vmatpush1.bf16.msra.mxu0 0
        %8494 = vmatprep.subr.bf16.mxu0 0
        %8495 = vmatpush1.bf16.msra.mxu0 0
        %8496 = vmatprep.subr.bf16.mxu0 0
        %8497 = vmatpush1.bf16.msra.mxu0 0
        %8498 = vmatprep.subr.bf16.mxu0 0
        %8499 = vmatpush1.bf16.msra.mxu0 0
        %8500 = vmatprep.subr.bf16.mxu0 0
        %8501 = vmatpush1.bf16.msra.mxu0 0
        %8502 = vmatprep.subr.bf16.mxu0 0
        %8503 = vmatpush1.bf16.msra.mxu0 0
        %8504 = vmatprep.subr.bf16.mxu0 0
        %8505 = vmatpush1.bf16.msra.mxu0 0
        %8506 = vmatprep.subr.bf16.mxu0 0
        %8507 = vmatpush1.bf16.msra.mxu0 0
        %8508 = vmatprep.subr.bf16.mxu0 0
        %8509 = vmatpush1.bf16.msra.mxu0 0
        %8510 = vmatprep.subr.bf16.mxu0 0
        %8511 = vmatpush1.bf16.msra.mxu0 0
        %8512 = vmatprep.subr.bf16.mxu0 0
        %8513 = vmatpush1.bf16.msra.mxu0 0
        %8514 = vmatprep.subr.bf16.mxu0 0
        %8515 = vmatpush1.bf16.msra.mxu0 0
        %8516 = vmatprep.mubr.bf16.mxu0 0
        %8517 = vmatmul.mubr.bf16.gmra.mrb[0].mxu0 %v8479
        %v8518 = vpop.f32.mrb[0].mxu0
        %v8519 = vadd.f32 0.0, %v8518
        %v8520 = vpop.f32.mrb[0].mxu0
        %v8521 = vadd.f32 0.0, %v8520
        %v8522 = vpop.f32.mrb[0].mxu0
        %v8523 = vadd.f32 0.0, %v8522
        %v8524 = vpop.f32.mrb[0].mxu0
        %v8525 = vadd.f32 0.0, %v8524
        %8526 = vmatprep.mubr.bf16.mxu0 0
        %8527 = vmatmul.mubr.bf16.gmra.mrb[0].mxu0 %v8482
        %v8528 = vpop.f32.mrb[0].mxu0
        %v8529 = vadd.f32 0.0, %v8528
        %v8530 = vpop.f32.mrb[0].mxu0
        %v8531 = vadd.f32 0.0, %v8530
        %v8532 = vpop.f32.mrb[0].mxu0
        %v8533 = vadd.f32 0.0, %v8532
        %v8534 = vpop.f32.mrb[0].mxu0
        %v8535 = vadd.f32 0.0, %v8534
        %8536 = vdwg.mxu0
        %vm8537 = vcmp.ge.f32.partialorder %v8519, 0.0
        %vm8538 = vcmp.ge.f32.partialorder %v8521, 0.0
        %vm8539 = vcmp.ge.f32.partialorder %v8523, 0.0
        %vm8540 = vcmp.ge.f32.partialorder %v8525, 0.0
        %vm8541 = vcmp.ge.f32.partialorder %v8529, 0.0
        %vm8542 = vcmp.ge.f32.partialorder %v8531, 0.0
        %vm8543 = vcmp.ge.f32.partialorder %v8533, 0.0
        %vm8544 = vcmp.ge.f32.partialorder %v8535, 0.0
        %8546 = vset.pattern.permute.xlu0 0
        %8547 = vperm.xlu0 %8546, %v8457
        %v8548 = vpop.permute.xlu0 %8547
        %8551 = vset.pattern.permute.xlu0 0
        %8552 = vperm.xlu0 %8551, %v8458
        %v8553 = vpop.permute.xlu0 %8552
        %8556 = vset.pattern.permute.xlu0 0
        %8557 = vperm.xlu0 %8556, %v8459
        %v8558 = vpop.permute.xlu0 %8557
        %8561 = vset.pattern.permute.xlu0 0
        %8562 = vperm.xlu0 %8561, %v8460
        %v8563 = vpop.permute.xlu0 %8562
        %v8565 = vmul.f32 %v8548, %v8519
        %v8566 = vmul.f32 %v8548, %v8521
        %v8567 = vmul.f32 %v8553, %v8523
        %v8568 = vmul.f32 %v8553, %v8525
        %v8569 = vmul.f32 %v8558, %v8529
        %v8570 = vmul.f32 %v8558, %v8531
        %v8571 = vmul.f32 %v8563, %v8533
        %v8572 = vmul.f32 %v8563, %v8535
        %v8573 = vsel %vm8537, %v8519, %v8565
        %v8574 = vsel %vm8538, %v8521, %v8566
        %v8575 = vsel %vm8539, %v8523, %v8567
        %v8576 = vsel %vm8540, %v8525, %v8568
        %v8577 = vsel %vm8541, %v8529, %v8569
        %v8578 = vsel %vm8542, %v8531, %v8570
        %v8579 = vsel %vm8543, %v8533, %v8571
        %v8580 = vsel %vm8544, %v8535, %v8572
        %8581 = vmatprep.subr.mxu0 %v8574
        %8582 = vmatpush1.msra.mxu0 %v8573
        %8583 = vmatprep.subr.mxu0 %v8576
        %8584 = vmatpush1.msra.mxu0 %v8575
        %8585 = vmatprep.subr.mxu0 %v8578
        %8586 = vmatpush1.msra.mxu0 %v8577
        %8587 = vmatprep.subr.mxu0 %v8580
        %8588 = vmatpush1.msra.mxu0 %v8579
        %8589 = vmatprep.subr.mxu0 0.0
        %8590 = vmatpush1.msra.mxu0 0.0
        %8591 = vmatprep.subr.mxu0 0.0
        %8592 = vmatpush1.msra.mxu0 0.0
        %8593 = vmatprep.subr.mxu0 0.0
        %8594 = vmatpush1.msra.mxu0 0.0
        %8595 = vmatprep.subr.mxu0 0.0
        %8596 = vmatpush1.msra.mxu0 0.0
        %8597 = vmatprep.subr.mxu0 0.0
        %8598 = vmatpush1.msra.mxu0 0.0
        %8599 = vmatprep.subr.mxu0 0.0
        %8600 = vmatpush1.msra.mxu0 0.0
        %8601 = vmatprep.subr.mxu0 0.0
        %8602 = vmatpush1.msra.mxu0 0.0
        %8603 = vmatprep.subr.mxu0 0.0
        %8604 = vmatpush1.msra.mxu0 0.0
        %8605 = vmatprep.subr.mxu0 0.0
        %8606 = vmatpush1.msra.mxu0 0.0
        %8607 = vmatprep.subr.mxu0 0.0
        %8608 = vmatpush1.msra.mxu0 0.0
        %8609 = vmatprep.subr.mxu0 0.0
        %8610 = vmatpush1.msra.mxu0 0.0
        %8611 = vmatprep.subr.mxu0 0.0
        %8612 = vmatpush1.msra.mxu0 0.0
        %8613 = vmatprep.subr.mxu0 0.0
        %8614 = vmatpush1.msra.mxu0 0.0
        %8615 = vmatprep.subr.mxu0 0.0
        %8616 = vmatpush1.msra.mxu0 0.0
        %8617 = vmatprep.subr.mxu0 0.0
        %8618 = vmatpush1.msra.mxu0 0.0
        %8619 = vmatprep.subr.mxu0 0.0
        %8620 = vmatpush1.msra.mxu0 0.0
        %8621 = vmatprep.subr.mxu0 0.0
        %8622 = vmatpush1.msra.mxu0 0.0
        %8623 = vmatprep.subr.mxu0 0.0
        %8624 = vmatpush1.msra.mxu0 0.0
        %8625 = vmatprep.subr.mxu0 0.0
        %8626 = vmatpush1.msra.mxu0 0.0
        %8627 = vmatprep.subr.mxu0 0.0
        %8628 = vmatpush1.msra.mxu0 0.0
        %8629 = vmatprep.subr.mxu0 0.0
        %8630 = vmatpush1.msra.mxu0 0.0
        %8631 = vmatprep.subr.mxu0 0.0
        %8632 = vmatpush1.msra.mxu0 0.0
        %8633 = vmatprep.subr.mxu0 0.0
        %8634 = vmatpush1.msra.mxu0 0.0
        %8635 = vmatprep.subr.mxu0 0.0
        %8636 = vmatpush1.msra.mxu0 0.0
        %8637 = vmatprep.subr.mxu0 0.0
        %8638 = vmatpush1.msra.mxu0 0.0
        %8639 = vmatprep.subr.mxu0 0.0
        %8640 = vmatpush1.msra.mxu0 0.0
        %8641 = vmatprep.subr.mxu0 0.0
        %8642 = vmatpush1.msra.mxu0 0.0
        %8643 = vmatprep.subr.mxu0 0.0
        %8644 = vmatpush1.msra.mxu0 0.0
        %8645 = vmatprep.mubr.f32.mxu0 0.0
        %8646 = vmatmul.mubr.f32.gmra.mrb[0].mxu0 %v395
        %v8647 = vpop.f32.mrb[0].mxu0
        %v8648 = vadd.f32 0.0, %v8647
        %v8649 = vpop.f32.mrb[0].mxu0
        %v8650 = vadd.f32 0.0, %v8649
        %8651 = vdwg.mxu0
        %v8652 = vmul.f32 %v8573, %v8573
        %v8653 = vmul.f32 %v8574, %v8574
        %v8654 = vmul.f32 %v8575, %v8575
        %v8655 = vmul.f32 %v8576, %v8576
        %v8656 = vmul.f32 %v8577, %v8577
        %v8657 = vmul.f32 %v8578, %v8578
        %v8658 = vmul.f32 %v8579, %v8579
        %v8659 = vmul.f32 %v8580, %v8580
        %8660 = vmatprep.subr.mxu0 %v8653
        %8661 = vmatpush1.msra.mxu0 %v8652
        %8662 = vmatprep.subr.mxu0 %v8655
        %8663 = vmatpush1.msra.mxu0 %v8654
        %8664 = vmatprep.subr.mxu0 %v8657
        %8665 = vmatpush1.msra.mxu0 %v8656
        %8666 = vmatprep.subr.mxu0 %v8659
        %8667 = vmatpush1.msra.mxu0 %v8658
        %8668 = vmatprep.subr.mxu0 0.0
        %8669 = vmatpush1.msra.mxu0 0.0
        %8670 = vmatprep.subr.mxu0 0.0
        %8671 = vmatpush1.msra.mxu0 0.0
        %8672 = vmatprep.subr.mxu0 0.0
        %8673 = vmatpush1.msra.mxu0 0.0
        %8674 = vmatprep.subr.mxu0 0.0
        %8675 = vmatpush1.msra.mxu0 0.0
        %8676 = vmatprep.subr.mxu0 0.0
        %8677 = vmatpush1.msra.mxu0 0.0
        %8678 = vmatprep.subr.mxu0 0.0
        %8679 = vmatpush1.msra.mxu0 0.0
        %8680 = vmatprep.subr.mxu0 0.0
        %8681 = vmatpush1.msra.mxu0 0.0
        %8682 = vmatprep.subr.mxu0 0.0
        %8683 = vmatpush1.msra.mxu0 0.0
        %8684 = vmatprep.subr.mxu0 0.0
        %8685 = vmatpush1.msra.mxu0 0.0
        %8686 = vmatprep.subr.mxu0 0.0
        %8687 = vmatpush1.msra.mxu0 0.0
        %8688 = vmatprep.subr.mxu0 0.0
        %8689 = vmatpush1.msra.mxu0 0.0
        %8690 = vmatprep.subr.mxu0 0.0
        %8691 = vmatpush1.msra.mxu0 0.0
        %8692 = vmatprep.subr.mxu0 0.0
        %8693 = vmatpush1.msra.mxu0 0.0
        %8694 = vmatprep.subr.mxu0 0.0
        %8695 = vmatpush1.msra.mxu0 0.0
        %8696 = vmatprep.subr.mxu0 0.0
        %8697 = vmatpush1.msra.mxu0 0.0
        %8698 = vmatprep.subr.mxu0 0.0
        %8699 = vmatpush1.msra.mxu0 0.0
        %8700 = vmatprep.subr.mxu0 0.0
        %8701 = vmatpush1.msra.mxu0 0.0
        %8702 = vmatprep.subr.mxu0 0.0
        %8703 = vmatpush1.msra.mxu0 0.0
        %8704 = vmatprep.subr.mxu0 0.0
        %8705 = vmatpush1.msra.mxu0 0.0
        %8706 = vmatprep.subr.mxu0 0.0
        %8707 = vmatpush1.msra.mxu0 0.0
        %8708 = vmatprep.subr.mxu0 0.0
        %8709 = vmatpush1.msra.mxu0 0.0
        %8710 = vmatprep.subr.mxu0 0.0
        %8711 = vmatpush1.msra.mxu0 0.0
        %8712 = vmatprep.subr.mxu0 0.0
        %8713 = vmatpush1.msra.mxu0 0.0
        %8714 = vmatprep.subr.mxu0 0.0
        %8715 = vmatpush1.msra.mxu0 0.0
        %8716 = vmatprep.subr.mxu0 0.0
        %8717 = vmatpush1.msra.mxu0 0.0
        %8718 = vmatprep.subr.mxu0 0.0
        %8719 = vmatpush1.msra.mxu0 0.0
        %8720 = vmatprep.subr.mxu0 0.0
        %8721 = vmatpush1.msra.mxu0 0.0
        %8722 = vmatprep.subr.mxu0 0.0
        %8723 = vmatpush1.msra.mxu0 0.0
        %8724 = vmatprep.mubr.f32.mxu0 0.0
        %8725 = vmatmul.mubr.f32.gmra.mrb[0].mxu0 %v395
        %v8726 = vpop.f32.mrb[0].mxu0
        %v8727 = vadd.f32 0.0, %v8726
        %v8728 = vpop.f32.mrb[0].mxu0
        %v8729 = vadd.f32 0.0, %v8728
        %8730 = vdwg.mxu0
        %8731 = vmatprep.subr.mxu0 0.0
        %8732 = vmatpush1.msra.mxu0 1.0
        %8733 = vmatprep.subr.mxu0 0.0
        %8734 = vmatpush1.msra.mxu0 1.0
        %8735 = vmatprep.subr.mxu0 0.0
        %8736 = vmatpush1.msra.mxu0 1.0
        %8737 = vmatprep.subr.mxu0 0.0
        %8738 = vmatpush1.msra.mxu0 1.0
        %8739 = vmatprep.subr.mxu0 0.0
        %8740 = vmatpush1.msra.mxu0 1.0
        %8741 = vmatprep.subr.mxu0 0.0
        %8742 = vmatpush1.msra.mxu0 1.0
        %8743 = vmatprep.subr.mxu0 0.0
        %8744 = vmatpush1.msra.mxu0 1.0
        %8745 = vmatprep.subr.mxu0 0.0
        %8746 = vmatpush1.msra.mxu0 1.0
        %8747 = vmatprep.subr.mxu0 0.0
        %8748 = vmatpush1.msra.mxu0 1.0
        %8749 = vmatprep.subr.mxu0 0.0
        %8750 = vmatpush1.msra.mxu0 1.0
        %8751 = vmatprep.subr.mxu0 0.0
        %8752 = vmatpush1.msra.mxu0 1.0
        %8753 = vmatprep.subr.mxu0 0.0
        %8754 = vmatpush1.msra.mxu0 1.0
        %8755 = vmatprep.subr.mxu0 0.0
        %8756 = vmatpush1.msra.mxu0 1.0
        %8757 = vmatprep.subr.mxu0 0.0
        %8758 = vmatpush1.msra.mxu0 1.0
        %8759 = vmatprep.subr.mxu0 0.0
        %8760 = vmatpush1.msra.mxu0 1.0
        %8761 = vmatprep.subr.mxu0 0.0
        %8762 = vmatpush1.msra.mxu0 1.0
        %8763 = vmatprep.subr.mxu0 0.0
        %8764 = vmatpush1.msra.mxu0 1.0
        %8765 = vmatprep.subr.mxu0 0.0
        %8766 = vmatpush1.msra.mxu0 1.0
        %8767 = vmatprep.subr.mxu0 0.0
        %8768 = vmatpush1.msra.mxu0 1.0
        %8769 = vmatprep.subr.mxu0 0.0
        %8770 = vmatpush1.msra.mxu0 1.0
        %8771 = vmatprep.subr.mxu0 0.0
        %8772 = vmatpush1.msra.mxu0 1.0
        %8773 = vmatprep.subr.mxu0 0.0
        %8774 = vmatpush1.msra.mxu0 1.0
        %8775 = vmatprep.subr.mxu0 0.0
        %8776 = vmatpush1.msra.mxu0 1.0
        %8777 = vmatprep.subr.mxu0 0.0
        %8778 = vmatpush1.msra.mxu0 1.0
        %8779 = vmatprep.subr.mxu0 0.0
        %8780 = vmatpush1.msra.mxu0 1.0
        %8781 = vmatprep.subr.mxu0 0.0
        %8782 = vmatpush1.msra.mxu0 1.0
        %8783 = vmatprep.subr.mxu0 0.0
        %8784 = vmatpush1.msra.mxu0 1.0
        %8785 = vmatprep.subr.mxu0 0.0
        %8786 = vmatpush1.msra.mxu0 1.0
        %8787 = vmatprep.subr.mxu0 0.0
        %8788 = vmatpush1.msra.mxu0 1.0
        %8789 = vmatprep.subr.mxu0 0.0
        %8790 = vmatpush1.msra.mxu0 1.0
        %8791 = vmatprep.subr.mxu0 0.0
        %8792 = vmatpush1.msra.mxu0 1.0
        %8793 = vmatprep.subr.mxu0 0.0
        %8794 = vmatpush1.msra.mxu0 1.0
        %8795 = vmatprep.mubr.f32.mxu0 %v8650
        %8796 = vmatmul.mubr.f32.gmra.mrb[0].mxu0 %v8648
        %v8797 = vpop.f32.mrb[0].mxu0
        %v8798 = vadd.f32 0.0, %v8797
        %v8799 = vpop.f32.mrb[0].mxu0
        %8800 = vdwg.mxu0
        %s8801 = vtos %v8798
        %8802 = vmatprep.subr.mxu0 0.0
        %8803 = vmatpush1.msra.mxu0 1.0
        %8804 = vmatprep.subr.mxu0 0.0
        %8805 = vmatpush1.msra.mxu0 1.0
        %8806 = vmatprep.subr.mxu0 0.0
        %8807 = vmatpush1.msra.mxu0 1.0
        %8808 = vmatprep.subr.mxu0 0.0
        %8809 = vmatpush1.msra.mxu0 1.0
        %8810 = vmatprep.subr.mxu0 0.0
        %8811 = vmatpush1.msra.mxu0 1.0
        %8812 = vmatprep.subr.mxu0 0.0
        %8813 = vmatpush1.msra.mxu0 1.0
        %8814 = vmatprep.subr.mxu0 0.0
        %8815 = vmatpush1.msra.mxu0 1.0
        %8816 = vmatprep.subr.mxu0 0.0
        %8817 = vmatpush1.msra.mxu0 1.0
        %8818 = vmatprep.subr.mxu0 0.0
        %8819 = vmatpush1.msra.mxu0 1.0
        %8820 = vmatprep.subr.mxu0 0.0
        %8821 = vmatpush1.msra.mxu0 1.0
        %8822 = vmatprep.subr.mxu0 0.0
        %8823 = vmatpush1.msra.mxu0 1.0
        %8824 = vmatprep.subr.mxu0 0.0
        %8825 = vmatpush1.msra.mxu0 1.0
        %8826 = vmatprep.subr.mxu0 0.0
        %8827 = vmatpush1.msra.mxu0 1.0
        %8828 = vmatprep.subr.mxu0 0.0
        %8829 = vmatpush1.msra.mxu0 1.0
        %8830 = vmatprep.subr.mxu0 0.0
        %8831 = vmatpush1.msra.mxu0 1.0
        %8832 = vmatprep.subr.mxu0 0.0
        %8833 = vmatpush1.msra.mxu0 1.0
        %8834 = vmatprep.subr.mxu0 0.0
        %8835 = vmatpush1.msra.mxu0 1.0
        %8836 = vmatprep.subr.mxu0 0.0
        %8837 = vmatpush1.msra.mxu0 1.0
        %8838 = vmatprep.subr.mxu0 0.0
        %8839 = vmatpush1.msra.mxu0 1.0
        %8840 = vmatprep.subr.mxu0 0.0
        %8841 = vmatpush1.msra.mxu0 1.0
        %8842 = vmatprep.subr.mxu0 0.0
        %8843 = vmatpush1.msra.mxu0 1.0
        %8844 = vmatprep.subr.mxu0 0.0
        %8845 = vmatpush1.msra.mxu0 1.0
        %8846 = vmatprep.subr.mxu0 0.0
        %8847 = vmatpush1.msra.mxu0 1.0
        %8848 = vmatprep.subr.mxu0 0.0
        %8849 = vmatpush1.msra.mxu0 1.0
        %8850 = vmatprep.subr.mxu0 0.0
        %8851 = vmatpush1.msra.mxu0 1.0
        %8852 = vmatprep.subr.mxu0 0.0
        %8853 = vmatpush1.msra.mxu0 1.0
        %8854 = vmatprep.subr.mxu0 0.0
        %8855 = vmatpush1.msra.mxu0 1.0
        %8856 = vmatprep.subr.mxu0 0.0
        %8857 = vmatpush1.msra.mxu0 1.0
        %8858 = vmatprep.subr.mxu0 0.0
        %8859 = vmatpush1.msra.mxu0 1.0
        %8860 = vmatprep.subr.mxu0 0.0
        %8861 = vmatpush1.msra.mxu0 1.0
        %8862 = vmatprep.subr.mxu0 0.0
        %8863 = vmatpush1.msra.mxu0 1.0
        %8864 = vmatprep.subr.mxu0 0.0
        %8865 = vmatpush1.msra.mxu0 1.0
        %8866 = vmatprep.mubr.f32.mxu0 %v8729
        %8867 = vmatmul.mubr.f32.gmra.mrb[0].mxu0 %v8727
        %v8868 = vpop.f32.mrb[0].mxu0
        %v8869 = vadd.f32 0.0, %v8868
        %v8870 = vpop.f32.mrb[0].mxu0
        %8871 = vdwg.mxu0
        %s8872 = vtos %v8869
        %s8873 = smul.f32 %s8801, 0.00012207031
        %s8874 = smul.f32 %s8872, 0.00012207031
        %s8875 = smul.f32 %s8873, %s8873
        %s8876 = ssub.f32 %s8874, %s8875
        %s8877 = smax.f32 %s8876, 0.0
        %s8878 = sadd.f32 %s8877, 1e-16
        %v8879 = vstv %s8878
        %v8880 = vrsqrt.pop %v8879
        %s8881 = vtos %v8880
        %v8882 = vstv %s8881
        %v8883 = vmul.f32 %v8457, %v8882
        %v8884 = vmul.f32 %v8458, %v8882
        %v8885 = vmul.f32 %v8459, %v8882
        %v8886 = vmul.f32 %v8460, %v8882
        %v8887 = vstv %s8873
        %v8888 = vmul.f32 %v8887, %v8883
        %v8889 = vmul.f32 %v8887, %v8884
        %v8890 = vmul.f32 %v8887, %v8885
        %v8891 = vmul.f32 %v8887, %v8886
        %8896 = vrot.lane.b32.xlu0 %v8888, 1
        %v8897 = vpop.permute.xlu0 %8896
        %8898 = vrot.lane.b32.xlu0 %v8889, 1
        %v8899 = vpop.permute.xlu0 %8898
        %8900 = vrot.lane.b32.xlu0 %v8890, 1
        %v8901 = vpop.permute.xlu0 %8900
        %8902 = vrot.lane.b32.xlu0 %v8891, 1
        %v8903 = vpop.permute.xlu0 %8902
        %v8908 = vsub.f32 %v8457, %v8897
        %v8909 = vsub.f32 %v8458, %v8899
        %v8910 = vsub.f32 %v8459, %v8901
        %v8911 = vsub.f32 %v8460, %v8903
        %8913 = vset.pattern.permute.xlu0 1
        %8914 = vperm.xlu0 %8913, %v8883
        %v8915 = vpop.permute.xlu0 %8914
        %8918 = vset.pattern.permute.xlu0 1
        %8919 = vperm.xlu0 %8918, %v8884
        %v8920 = vpop.permute.xlu0 %8919
        %8923 = vset.pattern.permute.xlu0 1
        %8924 = vperm.xlu0 %8923, %v8885
        %v8925 = vpop.permute.xlu0 %8924
        %8928 = vset.pattern.permute.xlu0 1
        %8929 = vperm.xlu0 %8928, %v8886
        %v8930 = vpop.permute.xlu0 %8929
        %v8932 = vmul.f32 %v8573, %v8915
        %v8933 = vmul.f32 %v8574, %v8915
        %v8934 = vmul.f32 %v8575, %v8920
        %v8935 = vmul.f32 %v8576, %v8920
        %v8936 = vmul.f32 %v8577, %v8925
        %v8937 = vmul.f32 %v8578, %v8925
        %v8938 = vmul.f32 %v8579, %v8930
        %v8939 = vmul.f32 %v8580, %v8930
        %8941 = vset.pattern.permute.xlu0 2
        %8942 = vperm.xlu0 %8941, %v8908
        %v8943 = vpop.permute.xlu0 %8942
        %8946 = vset.pattern.permute.xlu0 2
        %8947 = vperm.xlu0 %8946, %v8909
        %v8948 = vpop.permute.xlu0 %8947
        %8951 = vset.pattern.permute.xlu0 2
        %8952 = vperm.xlu0 %8951, %v8910
        %v8953 = vpop.permute.xlu0 %8952
        %8956 = vset.pattern.permute.xlu0 2
        %8957 = vperm.xlu0 %8956, %v8911
        %v8958 = vpop.permute.xlu0 %8957
        %v8960 = vadd.f32 %v8932, %v8943
        %v8961 = vadd.f32 %v8933, %v8943
        %v8962 = vadd.f32 %v8934, %v8948
        %v8963 = vadd.f32 %v8935, %v8948
        %v8964 = vadd.f32 %v8936, %v8953
        %v8965 = vadd.f32 %v8937, %v8953
        %v8966 = vadd.f32 %v8938, %v8958
        %v8967 = vadd.f32 %v8939, %v8958
        %8968 = vset.pattern.permute.xlu0 4
        %8969 = vperm.xlu0 %8968, %v8457
        %v8970 = vpop.permute.xlu0 %8969
        %8972 = vset.pattern.permute.xlu0 4
        %8973 = vperm.xlu0 %8972, %v8458
        %v8974 = vpop.permute.xlu0 %8973
        %8976 = vset.pattern.permute.xlu0 4
        %8977 = vperm.xlu0 %8976, %v8459
        %v8978 = vpop.permute.xlu0 %8977
        %8980 = vset.pattern.permute.xlu0 4
        %8981 = vperm.xlu0 %8980, %v8460
        %v8982 = vpop.permute.xlu0 %8981
        %v8984 = vmul.f32 %v8970, %v8960
        %v8985 = vmul.f32 %v8970, %v8961
        %v8986 = vmul.f32 %v8974, %v8962
        %v8987 = vmul.f32 %v8974, %v8963
        %v8988 = vmul.f32 %v8978, %v8964
        %v8989 = vmul.f32 %v8978, %v8965
        %v8990 = vmul.f32 %v8982, %v8966
        %v8991 = vmul.f32 %v8982, %v8967
        %vm8992 = vcmp.ge.s32.totalorder %v267, 128
        %vm8993 = vcmp.ge.s32.totalorder %v268, 128
        %v8994 = vsel %vm8992, 1, 0
        %v8995 = vsel %vm8993, 1, 0
        %vm8996 = vcmp.eq.s32.totalorder %v8994, 1
        %vm8997 = vcmp.eq.s32.totalorder %v8995, 1
        %v8998 = vsel %vm8996, %v8961, 0.0
        %v8999 = vsel %vm8997, %v8960, 0.0
        %v9000 = vsel %vm8996, %v8963, 0.0
        %v9001 = vsel %vm8997, %v8962, 0.0
        %v9002 = vsel %vm8996, %v8965, 0.0
        %v9003 = vsel %vm8997, %v8964, 0.0
        %v9004 = vsel %vm8996, %v8967, 0.0
        %v9005 = vsel %vm8997, %v8966, 0.0
        %9006 = vset.pattern.permute.xlu0 3
        %9007 = vperm.xlu0 %9006, %v8457
        %v9008 = vpop.permute.xlu0 %9007
        %9010 = vset.pattern.permute.xlu0 3
        %9011 = vperm.xlu0 %9010, %v8458
        %v9012 = vpop.permute.xlu0 %9011
        %9014 = vset.pattern.permute.xlu0 3
        %9015 = vperm.xlu0 %9014, %v8459
        %v9016 = vpop.permute.xlu0 %9015
        %9018 = vset.pattern.permute.xlu0 3
        %9019 = vperm.xlu0 %9018, %v8460
        %v9020 = vpop.permute.xlu0 %9019
        %v9022 = vmul.f32 %v9008, %v8998
        %v9023 = vmul.f32 %v9008, %v8999
        %v9024 = vmul.f32 %v9012, %v9000
        %v9025 = vmul.f32 %v9012, %v9001
        %v9026 = vmul.f32 %v9016, %v9002
        %v9027 = vmul.f32 %v9016, %v9003
        %v9028 = vmul.f32 %v9020, %v9004
        %v9029 = vmul.f32 %v9020, %v9005
        %v9030 = vadd.f32 %v8984, %v9022
        %v9031 = vadd.f32 %v8985, %v9023
        %v9032 = vadd.f32 %v8986, %v9024
        %v9033 = vadd.f32 %v8987, %v9025
        %v9034 = vadd.f32 %v8988, %v9026
        %v9035 = vadd.f32 %v8989, %v9027
        %v9036 = vadd.f32 %v8990, %v9028
        %v9037 = vadd.f32 %v8991, %v9029
        %vm9038 = vcmp.lt.s32.totalorder %v267, 128
        %vm9039 = vcmp.lt.s32.totalorder %v268, 128
        %v9040 = vsel %vm9038, 1, 0
        %v9041 = vsel %vm9039, 1, 0
        %vm9042 = vcmp.eq.s32.totalorder %v9040, 1
        %vm9043 = vcmp.eq.s32.totalorder %v9041, 1
        %v9044 = vsel %vm9042, %v8961, 0.0
        %v9045 = vsel %vm9043, %v8960, 0.0
        %v9046 = vsel %vm9042, %v8963, 0.0
        %v9047 = vsel %vm9043, %v8962, 0.0
        %v9048 = vsel %vm9042, %v8965, 0.0
        %v9049 = vsel %vm9043, %v8964, 0.0
        %v9050 = vsel %vm9042, %v8967, 0.0
        %v9051 = vsel %vm9043, %v8966, 0.0
        %9052 = vset.pattern.permute.xlu0 5
        %9053 = vperm.xlu0 %9052, %v8457
        %v9054 = vpop.permute.xlu0 %9053
        %9056 = vset.pattern.permute.xlu0 5
        %9057 = vperm.xlu0 %9056, %v8458
        %v9058 = vpop.permute.xlu0 %9057
        %9060 = vset.pattern.permute.xlu0 5
        %9061 = vperm.xlu0 %9060, %v8459
        %v9062 = vpop.permute.xlu0 %9061
        %9064 = vset.pattern.permute.xlu0 5
        %9065 = vperm.xlu0 %9064, %v8460
        %v9066 = vpop.permute.xlu0 %9065
        %v9068 = vmul.f32 %v9054, %v9044
        %v9069 = vmul.f32 %v9054, %v9045
        %v9070 = vmul.f32 %v9058, %v9046
        %v9071 = vmul.f32 %v9058, %v9047
        %v9072 = vmul.f32 %v9062, %v9048
        %v9073 = vmul.f32 %v9062, %v9049
        %v9074 = vmul.f32 %v9066, %v9050
        %v9075 = vmul.f32 %v9066, %v9051
        %v9076 = vadd.f32 %v9030, %v9068
        %v9077 = vadd.f32 %v9031, %v9069
        %v9078 = vadd.f32 %v9032, %v9070
        %v9079 = vadd.f32 %v9033, %v9071
        %v9080 = vadd.f32 %v9034, %v9072
        %v9081 = vadd.f32 %v9035, %v9073
        %v9082 = vadd.f32 %v9036, %v9074
        %v9083 = vadd.f32 %v9037, %v9075
        %vm9084 = vcmp.ge.f32.partialorder %v9076, 0.0
        %vm9085 = vcmp.ge.f32.partialorder %v9077, 0.0
        %vm9086 = vcmp.ge.f32.partialorder %v9078, 0.0
        %vm9087 = vcmp.ge.f32.partialorder %v9079, 0.0
        %vm9088 = vcmp.ge.f32.partialorder %v9080, 0.0
        %vm9089 = vcmp.ge.f32.partialorder %v9081, 0.0
        %vm9090 = vcmp.ge.f32.partialorder %v9082, 0.0
        %vm9091 = vcmp.ge.f32.partialorder %v9083, 0.0
        %9092 = vset.pattern.permute.xlu0 6
        %9093 = vperm.xlu0 %9092, %v8457
        %v9094 = vpop.permute.xlu0 %9093
        %9096 = vset.pattern.permute.xlu0 6
        %9097 = vperm.xlu0 %9096, %v8458
        %v9098 = vpop.permute.xlu0 %9097
        %9100 = vset.pattern.permute.xlu0 6
        %9101 = vperm.xlu0 %9100, %v8459
        %v9102 = vpop.permute.xlu0 %9101
        %9104 = vset.pattern.permute.xlu0 6
        %9105 = vperm.xlu0 %9104, %v8460
        %v9106 = vpop.permute.xlu0 %9105
        %v9108 = vmul.f32 %v9094, %v9076
        %v9109 = vmul.f32 %v9094, %v9077
        %v9110 = vmul.f32 %v9098, %v9078
        %v9111 = vmul.f32 %v9098, %v9079
        %v9112 = vmul.f32 %v9102, %v9080
        %v9113 = vmul.f32 %v9102, %v9081
        %v9114 = vmul.f32 %v9106, %v9082
        %v9115 = vmul.f32 %v9106, %v9083
        %v9116 = vsel %vm9084, %v9076, %v9108
        %v9117 = vsel %vm9085, %v9077, %v9109
        %v9118 = vsel %vm9086, %v9078, %v9110
        %v9119 = vsel %vm9087, %v9079, %v9111
        %v9120 = vsel %vm9088, %v9080, %v9112
        %v9121 = vsel %vm9089, %v9081, %v9113
        %v9122 = vsel %vm9090, %v9082, %v9114
        %v9123 = vsel %vm9091, %v9083, %v9115
        %9124 = vmatprep.subr.mxu0 %v9117
        %9125 = vmatpush1.msra.mxu0 %v9116
        %9126 = vmatprep.subr.mxu0 %v9119
        %9127 = vmatpush1.msra.mxu0 %v9118
        %9128 = vmatprep.subr.mxu0 %v9121
        %9129 = vmatpush1.msra.mxu0 %v9120
        %9130 = vmatprep.subr.mxu0 %v9123
        %9131 = vmatpush1.msra.mxu0 %v9122
        %9132 = vmatprep.subr.mxu0 0.0
        %9133 = vmatpush1.msra.mxu0 0.0
        %9134 = vmatprep.subr.mxu0 0.0
        %9135 = vmatpush1.msra.mxu0 0.0
        %9136 = vmatprep.subr.mxu0 0.0
        %9137 = vmatpush1.msra.mxu0 0.0
        %9138 = vmatprep.subr.mxu0 0.0
        %9139 = vmatpush1.msra.mxu0 0.0
        %9140 = vmatprep.subr.mxu0 0.0
        %9141 = vmatpush1.msra.mxu0 0.0
        %9142 = vmatprep.subr.mxu0 0.0
        %9143 = vmatpush1.msra.mxu0 0.0
        %9144 = vmatprep.subr.mxu0 0.0
        %9145 = vmatpush1.msra.mxu0 0.0
        %9146 = vmatprep.subr.mxu0 0.0
        %9147 = vmatpush1.msra.mxu0 0.0
        %9148 = vmatprep.subr.mxu0 0.0
        %9149 = vmatpush1.msra.mxu0 0.0
        %9150 = vmatprep.subr.mxu0 0.0
        %9151 = vmatpush1.msra.mxu0 0.0
        %9152 = vmatprep.subr.mxu0 0.0
        %9153 = vmatpush1.msra.mxu0 0.0
        %9154 = vmatprep.subr.mxu0 0.0
        %9155 = vmatpush1.msra.mxu0 0.0
        %9156 = vmatprep.subr.mxu0 0.0
        %9157 = vmatpush1.msra.mxu0 0.0
        %9158 = vmatprep.subr.mxu0 0.0
        %9159 = vmatpush1.msra.mxu0 0.0
        %9160 = vmatprep.subr.mxu0 0.0
        %9161 = vmatpush1.msra.mxu0 0.0
        %9162 = vmatprep.subr.mxu0 0.0
        %9163 = vmatpush1.msra.mxu0 0.0
        %9164 = vmatprep.subr.mxu0 0.0
        %9165 = vmatpush1.msra.mxu0 0.0
        %9166 = vmatprep.subr.mxu0 0.0
        %9167 = vmatpush1.msra.mxu0 0.0
        %9168 = vmatprep.subr.mxu0 0.0
        %9169 = vmatpush1.msra.mxu0 0.0
        %9170 = vmatprep.subr.mxu0 0.0
        %9171 = vmatpush1.msra.mxu0 0.0
        %9172 = vmatprep.subr.mxu0 0.0
        %9173 = vmatpush1.msra.mxu0 0.0
        %9174 = vmatprep.subr.mxu0 0.0
        %9175 = vmatpush1.msra.mxu0 0.0
        %9176 = vmatprep.subr.mxu0 0.0
        %9177 = vmatpush1.msra.mxu0 0.0
        %9178 = vmatprep.subr.mxu0 0.0
        %9179 = vmatpush1.msra.mxu0 0.0
        %9180 = vmatprep.subr.mxu0 0.0
        %9181 = vmatpush1.msra.mxu0 0.0
        %9182 = vmatprep.subr.mxu0 0.0
        %9183 = vmatpush1.msra.mxu0 0.0
        %9184 = vmatprep.subr.mxu0 0.0
        %9185 = vmatpush1.msra.mxu0 0.0
        %9186 = vmatprep.subr.mxu0 0.0
        %9187 = vmatpush1.msra.mxu0 0.0
        %9188 = vmatprep.mubr.f32.mxu0 0.0
        %9189 = vmatmul.mubr.f32.gmra.mrb[0].mxu0 %v395
        %v9190 = vpop.f32.mrb[0].mxu0
        %v9191 = vadd.f32 0.0, %v9190
        %v9192 = vpop.f32.mrb[0].mxu0
        %v9193 = vadd.f32 0.0, %v9192
        %9194 = vdwg.mxu0
        %v9195 = vmul.f32 %v9116, %v9116
        %v9196 = vmul.f32 %v9117, %v9117
        %v9197 = vmul.f32 %v9118, %v9118
        %v9198 = vmul.f32 %v9119, %v9119
        %v9199 = vmul.f32 %v9120, %v9120
        %v9200 = vmul.f32 %v9121, %v9121
        %v9201 = vmul.f32 %v9122, %v9122
        %v9202 = vmul.f32 %v9123, %v9123
        %9203 = vmatprep.subr.mxu0 %v9196
        %9204 = vmatpush1.msra.mxu0 %v9195
        %9205 = vmatprep.subr.mxu0 %v9198
        %9206 = vmatpush1.msra.mxu0 %v9197
        %9207 = vmatprep.subr.mxu0 %v9200
        %9208 = vmatpush1.msra.mxu0 %v9199
        %9209 = vmatprep.subr.mxu0 %v9202
        %9210 = vmatpush1.msra.mxu0 %v9201
        %9211 = vmatprep.subr.mxu0 0.0
        %9212 = vmatpush1.msra.mxu0 0.0
        %9213 = vmatprep.subr.mxu0 0.0
        %9214 = vmatpush1.msra.mxu0 0.0
        %9215 = vmatprep.subr.mxu0 0.0
        %9216 = vmatpush1.msra.mxu0 0.0
        %9217 = vmatprep.subr.mxu0 0.0
        %9218 = vmatpush1.msra.mxu0 0.0
        %9219 = vmatprep.subr.mxu0 0.0
        %9220 = vmatpush1.msra.mxu0 0.0
        %9221 = vmatprep.subr.mxu0 0.0
        %9222 = vmatpush1.msra.mxu0 0.0
        %9223 = vmatprep.subr.mxu0 0.0
        %9224 = vmatpush1.msra.mxu0 0.0
        %9225 = vmatprep.subr.mxu0 0.0
        %9226 = vmatpush1.msra.mxu0 0.0
        %9227 = vmatprep.subr.mxu0 0.0
        %9228 = vmatpush1.msra.mxu0 0.0
        %9229 = vmatprep.subr.mxu0 0.0
        %9230 = vmatpush1.msra.mxu0 0.0
        %9231 = vmatprep.subr.mxu0 0.0
        %9232 = vmatpush1.msra.mxu0 0.0
        %9233 = vmatprep.subr.mxu0 0.0
        %9234 = vmatpush1.msra.mxu0 0.0
        %9235 = vmatprep.subr.mxu0 0.0
        %9236 = vmatpush1.msra.mxu0 0.0
        %9237 = vmatprep.subr.mxu0 0.0
        %9238 = vmatpush1.msra.mxu0 0.0
        %9239 = vmatprep.subr.mxu0 0.0
        %9240 = vmatpush1.msra.mxu0 0.0
        %9241 = vmatprep.subr.mxu0 0.0
        %9242 = vmatpush1.msra.mxu0 0.0
        %9243 = vmatprep.subr.mxu0 0.0
        %9244 = vmatpush1.msra.mxu0 0.0
        %9245 = vmatprep.subr.mxu0 0.0
        %9246 = vmatpush1.msra.mxu0 0.0
        %9247 = vmatprep.subr.mxu0 0.0
        %9248 = vmatpush1.msra.mxu0 0.0
        %9249 = vmatprep.subr.mxu0 0.0
        %9250 = vmatpush1.msra.mxu0 0.0
        %9251 = vmatprep.subr.mxu0 0.0
        %9252 = vmatpush1.msra.mxu0 0.0
        %9253 = vmatprep.subr.mxu0 0.0
        %9254 = vmatpush1.msra.mxu0 0.0
        %9255 = vmatprep.subr.mxu0 0.0
        %9256 = vmatpush1.msra.mxu0 0.0
        %9257 = vmatprep.subr.mxu0 0.0
        %9258 = vmatpush1.msra.mxu0 0.0
        %9259 = vmatprep.subr.mxu0 0.0
        %9260 = vmatpush1.msra.mxu0 0.0
        %9261 = vmatprep.subr.mxu0 0.0
        %9262 = vmatpush1.msra.mxu0 0.0
        %9263 = vmatprep.subr.mxu0 0.0
        %9264 = vmatpush1.msra.mxu0 0.0
        %9265 = vmatprep.subr.mxu0 0.0
        %9266 = vmatpush1.msra.mxu0 0.0
        %9267 = vmatprep.mubr.f32.mxu0 0.0
        %9268 = vmatmul.mubr.f32.gmra.mrb[0].mxu0 %v395
        %v9269 = vpop.f32.mrb[0].mxu0
        %v9270 = vadd.f32 0.0, %v9269
        %v9271 = vpop.f32.mrb[0].mxu0
        %v9272 = vadd.f32 0.0, %v9271
        %9273 = vdwg.mxu0
        %9274 = vmatprep.subr.mxu0 0.0
        %9275 = vmatpush1.msra.mxu0 1.0
        %9276 = vmatprep.subr.mxu0 0.0
        %9277 = vmatpush1.msra.mxu0 1.0
        %9278 = vmatprep.subr.mxu0 0.0
        %9279 = vmatpush1.msra.mxu0 1.0
        %9280 = vmatprep.subr.mxu0 0.0
        %9281 = vmatpush1.msra.mxu0 1.0
        %9282 = vmatprep.subr.mxu0 0.0
        %9283 = vmatpush1.msra.mxu0 1.0
        %9284 = vmatprep.subr.mxu0 0.0
        %9285 = vmatpush1.msra.mxu0 1.0
        %9286 = vmatprep.subr.mxu0 0.0
        %9287 = vmatpush1.msra.mxu0 1.0
        %9288 = vmatprep.subr.mxu0 0.0
        %9289 = vmatpush1.msra.mxu0 1.0
        %9290 = vmatprep.subr.mxu0 0.0
        %9291 = vmatpush1.msra.mxu0 1.0
        %9292 = vmatprep.subr.mxu0 0.0
        %9293 = vmatpush1.msra.mxu0 1.0
        %9294 = vmatprep.subr.mxu0 0.0
        %9295 = vmatpush1.msra.mxu0 1.0
        %9296 = vmatprep.subr.mxu0 0.0
        %9297 = vmatpush1.msra.mxu0 1.0
        %9298 = vmatprep.subr.mxu0 0.0
        %9299 = vmatpush1.msra.mxu0 1.0
        %9300 = vmatprep.subr.mxu0 0.0
        %9301 = vmatpush1.msra.mxu0 1.0
        %9302 = vmatprep.subr.mxu0 0.0
        %9303 = vmatpush1.msra.mxu0 1.0
        %9304 = vmatprep.subr.mxu0 0.0
        %9305 = vmatpush1.msra.mxu0 1.0
        %9306 = vmatprep.subr.mxu0 0.0
        %9307 = vmatpush1.msra.mxu0 1.0
        %9308 = vmatprep.subr.mxu0 0.0
        %9309 = vmatpush1.msra.mxu0 1.0
        %9310 = vmatprep.subr.mxu0 0.0
        %9311 = vmatpush1.msra.mxu0 1.0
        %9312 = vmatprep.subr.mxu0 0.0
        %9313 = vmatpush1.msra.mxu0 1.0
        %9314 = vmatprep.subr.mxu0 0.0
        %9315 = vmatpush1.msra.mxu0 1.0
        %9316 = vmatprep.subr.mxu0 0.0
        %9317 = vmatpush1.msra.mxu0 1.0
        %9318 = vmatprep.subr.mxu0 0.0
        %9319 = vmatpush1.msra.mxu0 1.0
        %9320 = vmatprep.subr.mxu0 0.0
        %9321 = vmatpush1.msra.mxu0 1.0
        %9322 = vmatprep.subr.mxu0 0.0
        %9323 = vmatpush1.msra.mxu0 1.0
        %9324 = vmatprep.subr.mxu0 0.0
        %9325 = vmatpush1.msra.mxu0 1.0
        %9326 = vmatprep.subr.mxu0 0.0
        %9327 = vmatpush1.msra.mxu0 1.0
        %9328 = vmatprep.subr.mxu0 0.0
        %9329 = vmatpush1.msra.mxu0 1.0
        %9330 = vmatprep.subr.mxu0 0.0
        %9331 = vmatpush1.msra.mxu0 1.0
        %9332 = vmatprep.subr.mxu0 0.0
        %9333 = vmatpush1.msra.mxu0 1.0
        %9334 = vmatprep.subr.mxu0 0.0
        %9335 = vmatpush1.msra.mxu0 1.0
        %9336 = vmatprep.subr.mxu0 0.0
        %9337 = vmatpush1.msra.mxu0 1.0
        %9338 = vmatprep.mubr.f32.mxu0 %v9193
        %9339 = vmatmul.mubr.f32.gmra.mrb[0].mxu0 %v9191
        %v9340 = vpop.f32.mrb[0].mxu0
        %v9341 = vadd.f32 0.0, %v9340
        %v9342 = vpop.f32.mrb[0].mxu0
        %9343 = vdwg.mxu0
        %s9344 = vtos %v9341
        %9345 = vmatprep.subr.mxu0 0.0
        %9346 = vmatpush1.msra.mxu0 1.0
        %9347 = vmatprep.subr.mxu0 0.0
        %9348 = vmatpush1.msra.mxu0 1.0
        %9349 = vmatprep.subr.mxu0 0.0
        %9350 = vmatpush1.msra.mxu0 1.0
        %9351 = vmatprep.subr.mxu0 0.0
        %9352 = vmatpush1.msra.mxu0 1.0
        %9353 = vmatprep.subr.mxu0 0.0
        %9354 = vmatpush1.msra.mxu0 1.0
        %9355 = vmatprep.subr.mxu0 0.0
        %9356 = vmatpush1.msra.mxu0 1.0
        %9357 = vmatprep.subr.mxu0 0.0
        %9358 = vmatpush1.msra.mxu0 1.0
        %9359 = vmatprep.subr.mxu0 0.0
        %9360 = vmatpush1.msra.mxu0 1.0
        %9361 = vmatprep.subr.mxu0 0.0
        %9362 = vmatpush1.msra.mxu0 1.0
        %9363 = vmatprep.subr.mxu0 0.0
        %9364 = vmatpush1.msra.mxu0 1.0
        %9365 = vmatprep.subr.mxu0 0.0
        %9366 = vmatpush1.msra.mxu0 1.0
        %9367 = vmatprep.subr.mxu0 0.0
        %9368 = vmatpush1.msra.mxu0 1.0
        %9369 = vmatprep.subr.mxu0 0.0
        %9370 = vmatpush1.msra.mxu0 1.0
        %9371 = vmatprep.subr.mxu0 0.0
        %9372 = vmatpush1.msra.mxu0 1.0
        %9373 = vmatprep.subr.mxu0 0.0
        %9374 = vmatpush1.msra.mxu0 1.0
        %9375 = vmatprep.subr.mxu0 0.0
        %9376 = vmatpush1.msra.mxu0 1.0
        %9377 = vmatprep.subr.mxu0 0.0
        %9378 = vmatpush1.msra.mxu0 1.0
        %9379 = vmatprep.subr.mxu0 0.0
        %9380 = vmatpush1.msra.mxu0 1.0
        %9381 = vmatprep.subr.mxu0 0.0
        %9382 = vmatpush1.msra.mxu0 1.0
        %9383 = vmatprep.subr.mxu0 0.0
        %9384 = vmatpush1.msra.mxu0 1.0
        %9385 = vmatprep.subr.mxu0 0.0
        %9386 = vmatpush1.msra.mxu0 1.0
        %9387 = vmatprep.subr.mxu0 0.0
        %9388 = vmatpush1.msra.mxu0 1.0
        %9389 = vmatprep.subr.mxu0 0.0
        %9390 = vmatpush1.msra.mxu0 1.0
        %9391 = vmatprep.subr.mxu0 0.0
        %9392 = vmatpush1.msra.mxu0 1.0
        %9393 = vmatprep.subr.mxu0 0.0
        %9394 = vmatpush1.msra.mxu0 1.0
        %9395 = vmatprep.subr.mxu0 0.0
        %9396 = vmatpush1.msra.mxu0 1.0
        %9397 = vmatprep.subr.mxu0 0.0
        %9398 = vmatpush1.msra.mxu0 1.0
        %9399 = vmatprep.subr.mxu0 0.0
        %9400 = vmatpush1.msra.mxu0 1.0
        %9401 = vmatprep.subr.mxu0 0.0
        %9402 = vmatpush1.msra.mxu0 1.0
        %9403 = vmatprep.subr.mxu0 0.0
        %9404 = vmatpush1.msra.mxu0 1.0
        %9405 = vmatprep.subr.mxu0 0.0
        %9406 = vmatpush1.msra.mxu0 1.0
        %9407 = vmatprep.subr.mxu0 0.0
        %9408 = vmatpush1.msra.mxu0 1.0
        %9409 = vmatprep.mubr.f32.mxu0 %v9272
        %9410 = vmatmul.mubr.f32.gmra.mrb[0].mxu0 %v9270
        %v9411 = vpop.f32.mrb[0].mxu0
        %v9412 = vadd.f32 0.0, %v9411
        %v9413 = vpop.f32.mrb[0].mxu0
        %9414 = vdwg.mxu0
        %s9415 = vtos %v9412
        %s9416 = smul.f32 %s9344, 0.00012207031
        %s9417 = smul.f32 %s9415, 0.00012207031
        %s9418 = smul.f32 %s9416, %s9416
        %s9419 = ssub.f32 %s9417, %s9418
        %s9420 = smax.f32 %s9419, 0.0
        %s9421 = sadd.f32 %s9420, 1e-16
        %v9422 = vstv %s9421
        %v9423 = vrsqrt.pop %v9422
        %s9424 = vtos %v9423
        %s9425 = scalar_lea.vmem %s3, 112
        %v9426 = vld [vmem:[%s9425] sm:$0xf]
        %v9427 = vld [vmem:[%s9425 + $0x4] sm:$0xf]
        %v9428 = vld [vmem:[%s9425 + $0x8] sm:$0xf]
        %v9429 = vld [vmem:[%s9425 + $0xc] sm:$0xf]
        %v9430 = vpack.c.bf16 %v9118, %v9116
        %v9431 = vpack.c.bf16 %v9119, %v9117
        %v9432 = vpack.c.bf16 %v9122, %v9120
        %v9433 = vpack.c.bf16 %v9123, %v9121
        %v9438 = vunpack.c.l.b16 %v9426
        %v9439 = vunpack.c.l.b16 %v9427
        %v9440 = vunpack.c.l.b16 %v9428
        %v9441 = vunpack.c.l.b16 %v9429
        %v9442 = vpack.c.b16 %v9439, %v9438
        %v9443 = vpack.c.b16 %v9441, %v9440
        %v9445 = vsel %vm393, %v9442, 0
        %v9448 = vsel %vm393, %v9443, 0
        %9450 = vmatprep.subr.bf16.mxu0 %v9431
        %9451 = vmatpush1.bf16.msra.mxu0 %v9430
        %9452 = vmatprep.subr.bf16.mxu0 %v9433
        %9453 = vmatpush1.bf16.msra.mxu0 %v9432
        %9454 = vmatprep.subr.bf16.mxu0 0
        %9455 = vmatpush1.bf16.msra.mxu0 0
        %9456 = vmatprep.subr.bf16.mxu0 0
        %9457 = vmatpush1.bf16.msra.mxu0 0
        %9458 = vmatprep.subr.bf16.mxu0 0
        %9459 = vmatpush1.bf16.msra.mxu0 0
        %9460 = vmatprep.subr.bf16.mxu0 0
        %9461 = vmatpush1.bf16.msra.mxu0 0
        %9462 = vmatprep.subr.bf16.mxu0 0
        %9463 = vmatpush1.bf16.msra.mxu0 0
        %9464 = vmatprep.subr.bf16.mxu0 0
        %9465 = vmatpush1.bf16.msra.mxu0 0
        %9466 = vmatprep.subr.bf16.mxu0 0
        %9467 = vmatpush1.bf16.msra.mxu0 0
        %9468 = vmatprep.subr.bf16.mxu0 0
        %9469 = vmatpush1.bf16.msra.mxu0 0
        %9470 = vmatprep.subr.bf16.mxu0 0
        %9471 = vmatpush1.bf16.msra.mxu0 0
        %9472 = vmatprep.subr.bf16.mxu0 0
        %9473 = vmatpush1.bf16.msra.mxu0 0
        %9474 = vmatprep.subr.bf16.mxu0 0
        %9475 = vmatpush1.bf16.msra.mxu0 0
        %9476 = vmatprep.subr.bf16.mxu0 0
        %9477 = vmatpush1.bf16.msra.mxu0 0
        %9478 = vmatprep.subr.bf16.mxu0 0
        %9479 = vmatpush1.bf16.msra.mxu0 0
        %9480 = vmatprep.subr.bf16.mxu0 0
        %9481 = vmatpush1.bf16.msra.mxu0 0
        %9482 = vmatprep.mubr.bf16.mxu0 0
        %9483 = vmatmul.mubr.bf16.gmra.mrb[0].mxu0 %v9445
        %v9484 = vpop.f32.mrb[0].mxu0
        %v9485 = vadd.f32 0.0, %v9484
        %v9486 = vpop.f32.mrb[0].mxu0
        %v9487 = vadd.f32 0.0, %v9486
        %v9488 = vpop.f32.mrb[0].mxu0
        %v9489 = vadd.f32 0.0, %v9488
        %v9490 = vpop.f32.mrb[0].mxu0
        %v9491 = vadd.f32 0.0, %v9490
        %9492 = vmatprep.mubr.bf16.mxu0 0
        %9493 = vmatmul.mubr.bf16.gmra.mrb[0].mxu0 %v9448
        %v9494 = vpop.f32.mrb[0].mxu0
        %v9495 = vadd.f32 0.0, %v9494
        %v9496 = vpop.f32.mrb[0].mxu0
        %v9497 = vadd.f32 0.0, %v9496
        %v9498 = vpop.f32.mrb[0].mxu0
        %v9499 = vadd.f32 0.0, %v9498
        %v9500 = vpop.f32.mrb[0].mxu0
        %v9501 = vadd.f32 0.0, %v9500
        %9502 = vdwg.mxu0
        %s9503 = scalar_lea.vmem %s4, 224
        %v9504 = vld [vmem:[%s9503] sm:$0xff]
        %v9505 = vld [vmem:[%s9503 + $0x8] sm:$0xff]
        %v9506 = vld [vmem:[%s9503 + $0x10] sm:$0xff]
        %v9507 = vld [vmem:[%s9503 + $0x18] sm:$0xff]
        %s9508 = smul.f32 %s9416, %s9424
        %v9509 = vstv %s9508
        %v9510 = vmul.f32 %v9509, %v9504
        %v9511 = vmul.f32 %v9509, %v9505
        %v9512 = vmul.f32 %v9509, %v9506
        %v9513 = vmul.f32 %v9509, %v9507
        %9518 = vrot.lane.b32.xlu0 %v9510, 1
        %v9519 = vpop.permute.xlu0 %9518
        %9520 = vrot.lane.b32.xlu0 %v9511, 1
        %v9521 = vpop.permute.xlu0 %9520
        %9522 = vrot.lane.b32.xlu0 %v9512, 1
        %v9523 = vpop.permute.xlu0 %9522
        %9524 = vrot.lane.b32.xlu0 %v9513, 1
        %v9525 = vpop.permute.xlu0 %9524
        %v9530 = vsub.f32 %v9504, %v9519
        %v9531 = vsub.f32 %v9505, %v9521
        %v9532 = vsub.f32 %v9506, %v9523
        %v9533 = vsub.f32 %v9507, %v9525
        %v9534 = vstv %s9424
        %v9535 = vmul.f32 %v9485, %v9534
        %v9536 = vmul.f32 %v9487, %v9534
        %v9537 = vmul.f32 %v9489, %v9534
        %v9538 = vmul.f32 %v9491, %v9534
        %v9539 = vmul.f32 %v9495, %v9534
        %v9540 = vmul.f32 %v9497, %v9534
        %v9541 = vmul.f32 %v9499, %v9534
        %v9542 = vmul.f32 %v9501, %v9534
        %9544 = vset.pattern.permute.xlu0 1
        %9545 = vperm.xlu0 %9544, %v9530
        %v9546 = vpop.permute.xlu0 %9545
        %9549 = vset.pattern.permute.xlu0 1
        %9550 = vperm.xlu0 %9549, %v9531
        %v9551 = vpop.permute.xlu0 %9550
        %9554 = vset.pattern.permute.xlu0 1
        %9555 = vperm.xlu0 %9554, %v9532
        %v9556 = vpop.permute.xlu0 %9555
        %9559 = vset.pattern.permute.xlu0 1
        %9560 = vperm.xlu0 %9559, %v9533
        %v9561 = vpop.permute.xlu0 %9560
        %v9563 = vadd.f32 %v9535, %v9546
        %v9564 = vadd.f32 %v9536, %v9546
        %v9565 = vadd.f32 %v9537, %v9551
        %v9566 = vadd.f32 %v9538, %v9551
        %v9567 = vadd.f32 %v9539, %v9556
        %v9568 = vadd.f32 %v9540, %v9556
        %v9569 = vadd.f32 %v9541, %v9561
        %v9570 = vadd.f32 %v9542, %v9561
        %v9571 = vadd.f32 %v9563, %v8448
        %v9572 = vadd.f32 %v9564, %v8449
        %v9573 = vadd.f32 %v9565, %v8450
        %v9574 = vadd.f32 %v9566, %v8451
        %v9575 = vadd.f32 %v8452, %v9567
        %v9576 = vadd.f32 %v8453, %v9568
        %v9577 = vadd.f32 %v8454, %v9569
        %v9578 = vadd.f32 %v8455, %v9570
        %9579 = vst [vmem:[%s248] sm:$0xff] %v9571
        %9580 = vst [vmem:[%s248 + $0x8] sm:$0xff] %v9572
        %9581 = vst [vmem:[%s248 + $0x10] sm:$0xff] %v9573
        %9582 = vst [vmem:[%s248 + $0x18] sm:$0xff] %v9574
        %9583 = vst [vmem:[%s255] sm:$0xff] %v9575
        %9584 = vst [vmem:[%s255 + $0x8] sm:$0xff] %v9576
        %9585 = vst [vmem:[%s255 + $0x10] sm:$0xff] %v9577
        %9586 = vst [vmem:[%s255 + $0x18] sm:$0xff] %v9578
        %s9587 = sand.u32 %s142, 1
        %s9588 = scalar_lea.sflag [#allocation3], %s9587
        %s9589 = sand.u32 %s142, 1
        %s9590 = smul.addr %s9589, 32
        %s9591 = scalar_lea.vmem [#allocation2], %s9590
        %s9592 = sand.u32 %s168, 1
        %s9593 = scalar_lea.sflag [#allocation5], %s9592
        %s9594 = sand.u32 %s168, 1
        %s9595 = smul.addr %s9594, 32
        %s9596 = scalar_lea.vmem [#allocation4], %s9595
        // Predicated region
        $region41: #{tpu_custom_call.1} parent=39 // pred_check
          %p9597 = pneg %p152
        $region42: #{tpu_custom_call.1} parent=39 // pred_check_branch
          %9599 = sbr.rel (%p9597) target = $region44
        $region43: #{tpu_custom_call.1} parent=39 // pred_region
          %s9601 = ssub.s32 512, 512
          %9602 = vsyncadd %s9588, %s9601
          %s9603 = smul.addr %s24, 4
          %s9604 = smul.addr %s9603, 128
          %s9605 = scalar_lea.hbm %s5, %s9604
          %s9606 = sshll.u32 %s9591, 4
          %s9607 = int_to_ptr.vmem [resolvable:$true] %s9606
          %9612 = dma.vmem_to_hbm [thread:$0]  %s9607, 512, %s9605, %s9588, 256, 256, 16
        $region44: #{tpu_custom_call.1} parent=39 // pred_fallthru
          _
        // Predicated region
        $region45: #{tpu_custom_call.1} parent=39 // pred_check
          %p9613 = pneg %p178
        $region46: #{tpu_custom_call.1} parent=39 // pred_check_branch
          %9615 = sbr.rel (%p9613) target = $region48
        $region47: #{tpu_custom_call.1} parent=39 // pred_region
          %s9617 = ssub.s32 512, 512
          %9618 = vsyncadd %s9593, %s9617
          %s9619 = smul.addr %s24, 4
          %s9620 = smul.addr %s9619, 128
          %s9621 = scalar_lea.hbm %s6, %s9620
          %s9622 = sshll.u32 %s9596, 4
          %s9623 = int_to_ptr.vmem [resolvable:$true] %s9622
          %9628 = dma.vmem_to_hbm [thread:$0]  %s9623, 512, %s9621, %s9593, 256, 256, 16
        $region48: #{tpu_custom_call.1} parent=39 // pred_fallthru
          _
      $region40: #{tpu_custom_call.1} parent=5 // pred_fallthru
        _
      %p9629 = scmp.le.s32.totalorder 2, %s19
      // Predicated region
      $region49: #{tpu_custom_call.1} parent=5 // pred_check
        %p9630 = pneg %p9629
      $region50: #{tpu_custom_call.1} parent=5 // pred_check_branch
        %9632 = sbr.rel (%p9630) target = $region52
      $region51: #{tpu_custom_call.1} parent=5 // pred_region
        %s9633 = ssub.s32 %s19, 2
        // Predicated region
        $region53: #{tpu_custom_call.1} parent=51 // pred_check
          %p9634 = pneg %p158
        $region54: #{tpu_custom_call.1} parent=51 // pred_check_branch
          %9636 = sbr.rel (%p9634) target = $region56
        $region55: #{tpu_custom_call.1} parent=51 // pred_region
          %s9637 = sand.u32 %s143, 1
          %s9638 = scalar_lea.sflag [#allocation3], %s9637
          %s9639 = sand.u32 %s143, 1
          %s9640 = smul.addr %s9639, 32
          %s9641 = scalar_lea.vmem [#allocation2], %s9640
          %9642 = dma.done %s9638, 512
        $region56: #{tpu_custom_call.1} parent=51 // pred_fallthru
          _
        // Predicated region
        $region57: #{tpu_custom_call.1} parent=51 // pred_check
          %p9643 = pneg %p184
        $region58: #{tpu_custom_call.1} parent=51 // pred_check_branch
          %9645 = sbr.rel (%p9643) target = $region60
        $region59: #{tpu_custom_call.1} parent=51 // pred_region
          %s9646 = sand.u32 %s169, 1
          %s9647 = scalar_lea.sflag [#allocation5], %s9646
          %s9648 = sand.u32 %s169, 1
          %s9649 = smul.addr %s9648, 32
          %s9650 = scalar_lea.vmem [#allocation4], %s9649
          %9651 = dma.done %s9647, 512
        $region60: #{tpu_custom_call.1} parent=51 // pred_fallthru
          _
      $region52: #{tpu_custom_call.1} parent=5 // pred_fallthru
        _
    $region6: #{tpu_custom_call.1} parent=1 // loop_footer
      %s23 = sadd.s32 1, %s19
    $region7: #{tpu_custom_call.1} parent=1 // loop_footer_branch
      %18 = sbr.rel target = $region3
    $region8: #{tpu_custom_call.1} parent=1 // loop_exit
      _
    %9652 = vsyncpa [#allocation3], 1
    %s9653 = scalar_lea.sflag [#allocation3], 1
    %9654 = vsyncpa %s9653, 1
    %9655 = vsyncpa [#allocation5], 1
    %s9656 = scalar_lea.sflag [#allocation5], 1
    %9657 = vsyncpa %s9656, 1

</llo_original>
